<compile_context>
chip_gen: v6e
topology: v6e:2x2x1
jax: 0.10.0
libtpu: 0.0.40
codegen_flags: <defaults>
</compile_context>

<pallas_src>
import jax
import jax.numpy as jnp
import numpy as np
from jax import lax
from jax.experimental import pallas as pl
from jax.experimental.pallas import tpu as pltpu

IMG = 28       # spatial size forced by fc1 = Linear(64*7*7, 128)
B_IMGS = 8     # images per grid step (multiple of 8 keeps all slices tile-aligned)


# ------------------------------- Pallas kernel -------------------------------

def _cnn_fused_kernel(x_ref, m1_ref, b1_ref, m2_ref, b2_ref,
                      w1_ref, fb1_ref, w2_ref, fb2_ref, o_ref, a1p_ref):
    # x_ref : (1, 30*B, 28) f32   input block, rows ordered (padded row, image)
    # m1_ref: (6, 28, 448)  bf16  conv1 Toeplitz matrices, leading dim = kh*2+jj
    # m2_ref: (6, 448, 448) bf16  conv2 Toeplitz matrices
    # b1_ref/b2_ref: (1, 448) f32 per-column bias tiles
    # w1_ref: (7, 448, 128) bf16  fc1 weight row-blocks (one per pooled row)
    # fb1_ref: (1,128) f32, w2_ref: (128,10) bf16, fb2_ref: (1,10) f32
    # o_ref : (B, 10) f32
    # a1p_ref: (16*B, 448) f32 VMEM scratch -- height-padded conv1 activations
    B = o_ref.shape[0]

    def conv_pool(xmat, m_ref, b_ref, out_rows):
        # xmat: (rows*B, K) bf16, rows ordered (input row, image).
        # Returns relu(maxpool2x2(conv2d_3x3) + bias): (out_rows//2, B, C) f32.
        s = [None, None]
        for jj in range(2):                 # pooling width phase
            for kh in range(3):             # kernel row
                u = jnp.dot(xmat, m_ref[kh * 2 + jj],
                            preferred_element_type=jnp.float32)
                u = u[kh * B: kh * B + out_rows * B]        # 8-aligned row shift
                s[jj] = u if s[jj] is None else s[jj] + u
        smax = jnp.maximum(s[0], s[1])                      # max over width taps
        c = smax.shape[-1]
        smax = smax.reshape(out_rows // 2, 2 * B, c)
        pooled = jnp.maximum(smax[:, :B, :], smax[:, B:, :])  # max over row taps
        return jnp.maximum(pooled + b_ref[...].reshape(1, 1, c), 0.0)

    # conv1 + ReLU + 2x2 max-pool: 28x28x1 -> (14, B, 14*32)
    x1 = x_ref[0].astype(jnp.bfloat16)                       # (30*B, 28)
    a1 = conv_pool(x1, m1_ref, b1_ref, 28)                   # (14, B, 448)

    # Height-halo zero padding of the conv1 activations, entirely in VMEM
    # (all row slices are 8-aligned full-lane stores).
    a1p_ref[0:B, :] = jnp.zeros((B, 448), jnp.float32)
    a1p_ref[15 * B:16 * B, :] = jnp.zeros((B, 448), jnp.float32)
    a1p_ref[B:15 * B, :] = a1.reshape(14 * B, 448)

    # conv2 + ReLU + 2x2 max-pool: 14x14x32 -> (7, B, 7*64)  (fc1-flatten layout)
    x2 = a1p_ref[...].astype(jnp.bfloat16)                   # (16*B, 448)
    a2 = conv_pool(x2, m2_ref, b2_ref, 14)                   # (7, B, 448)

    # fc1 + ReLU + fc2 -- the flatten is just a sum over the 7 pooled row blocks.
    a2b = a2.astype(jnp.bfloat16)
    h = jnp.dot(a2b[0], w1_ref[0], preferred_element_type=jnp.float32)
    for r in range(1, 7):
        h = h + jnp.dot(a2b[r], w1_ref[r], preferred_element_type=jnp.float32)
    h = jnp.maximum(h + fb1_ref[...], 0.0)                   # (B, 128) f32
    o = jnp.dot(h.astype(jnp.bfloat16), w2_ref[...],
                preferred_element_type=jnp.float32)
    o_ref[...] = o + fb2_ref[...]


# ------------------------------ pallas_call wrapper --------------------------

def _round_up(x, m):
    return ((x + m - 1) // m) * m


@jax.jit
def cnn_forward(x_nchw, prepared):
    N = x_nchw.shape[0]
    B = B_IMGS
    npad = _round_up(N, B)
    G = npad // B

    # Tiny XLA glue on the raw 3 KB/image input only: height pad + interleave
    # images so each grid block is a contiguous (30*B, 28) slab with rows
    # ordered (padded row, image).
    x = x_nchw.reshape(N, IMG, IMG)
    x = jnp.pad(x, ((0, npad - N), (1, 1), (0, 0)))          # (npad, 30, 28)
    x = x.reshape(G, B, 30, IMG).transpose(0, 2, 1, 3).reshape(G, 30 * B, IMG)

    out = pl.pallas_call(
        _cnn_fused_kernel,
        out_shape=jax.ShapeDtypeStruct((npad, 10), jnp.float32),
        grid=(G,),
        in_specs=[
            pl.BlockSpec((1, 30 * B, IMG), lambda n: (n, 0, 0)),   # images
            pl.BlockSpec((6, IMG, 448), lambda n: (0, 0, 0)),      # conv1 Toeplitz
            pl.BlockSpec((1, 448), lambda n: (0, 0)),              # conv1 bias tile
            pl.BlockSpec((6, 448, 448), lambda n: (0, 0, 0)),      # conv2 Toeplitz
            pl.BlockSpec((1, 448), lambda n: (0, 0)),              # conv2 bias tile
            pl.BlockSpec((7, 448, 128), lambda n: (0, 0, 0)),      # fc1 row blocks
            pl.BlockSpec((1, 128), lambda n: (0, 0)),              # fc1 bias
            pl.BlockSpec((128, 10), lambda n: (0, 0)),             # fc2 weight
            pl.BlockSpec((1, 10), lambda n: (0, 0)),               # fc2 bias
        ],
        out_specs=pl.BlockSpec((B, 10), lambda n: (n, 0)),
        scratch_shapes=[pltpu.VMEM((16 * B, 448), jnp.float32)],
        compiler_params=pltpu.CompilerParams(
            dimension_semantics=("parallel",),
            vmem_limit_bytes=32 * 1024 * 1024),
    )(x, prepared['m1'], prepared['b1t'], prepared['m2'], prepared['b2t'],
      prepared['w1r'], prepared['fb1'], prepared['w2'], prepared['fb2'])
    return out[:N]


# --------------------------- params (PyTorch layout) --------------------------

def init_params(key):
    # Synthetic weights in PyTorch conventions: conv weights OIHW, fc weights
    # stored (in, out) with fc1 input rows in (C, H, W) flatten order.
    ks = jax.random.split(key, 8)
    s = 0.1
    return {
        'conv1_w': s * jax.random.normal(ks[0], (32, 1, 3, 3), jnp.float32),
        'conv1_b': s * jax.random.normal(ks[1], (32,), jnp.float32),
        'conv2_w': s * jax.random.normal(ks[2], (64, 32, 3, 3), jnp.float32),
        'conv2_b': s * jax.random.normal(ks[3], (64,), jnp.float32),
        'fc1_w': s * jax.random.normal(ks[4], (64 * 7 * 7, 128), jnp.float32),
        'fc1_b': s * jax.random.normal(ks[5], (128,), jnp.float32),
        'fc2_w': s * jax.random.normal(ks[6], (128, 10), jnp.float32),
        'fc2_b': s * jax.random.normal(ks[7], (10,), jnp.float32),
    }


def _conv_toeplitz(w_oihw, win, pout):
    """Banded conv-as-matmul-over-width matrices, one per (kernel row kh, pool
    width-phase jj).  mats[kh*2+jj][w_in*Cin + ci, b*Cout + co] =
    w[co, ci, kh, kw] with w_in = 2*b + jj + kw - 1; out-of-range taps (the
    zero padding) are simply omitted.  Built once offline on the host."""
    w = np.asarray(w_oihw, np.float32)                       # (Cout, Cin, 3, 3)
    cout, cin = w.shape[0], w.shape[1]
    mats = np.zeros((3, 2, win * cin, pout * cout), np.float32)
    for kh in range(3):
        for jj in range(2):
            for b in range(pout):
                for kw in range(3):
                    w_in = 2 * b + jj + kw - 1
                    if 0 <= w_in < win:
                        mats[kh, jj,
                             w_in * cin:(w_in + 1) * cin,
                             b * cout:(b + 1) * cout] = w[:, :, kh, kw].T
    return jnp.asarray(mats.reshape(6, win * cin, pout * cout), jnp.bfloat16)


def prepare_params(params):
    # One-time offline re-layout for the Pallas path.
    # fc1 rows permuted from PyTorch's (C, H, W) flatten order to the kernel's
    # (pooled row, pooled col, channel) order -> (7, 448, 128) row blocks.
    w1r = (np.asarray(params['fc1_w'], np.float32)
           .reshape(64, 7, 7, 128).transpose(1, 2, 0, 3).reshape(7, 448, 128))
    return {
        'm1': _conv_toeplitz(params['conv1_w'], 28, 14),     # (6, 28, 448)
        'b1t': jnp.tile(params['conv1_b'], 14).reshape(1, 448).astype(jnp.float32),
        'm2': _conv_toeplitz(params['conv2_w'], 14, 7),      # (6, 448, 448)
        'b2t': jnp.tile(params['conv2_b'], 7).reshape(1, 448).astype(jnp.float32),
        'w1r': jnp.asarray(w1r, jnp.bfloat16),
        'fb1': params['fc1_b'].reshape(1, 128).astype(jnp.float32),
        'w2': params['fc2_w'].astype(jnp.bfloat16),
        'fb2': params['fc2_b'].reshape(1, 10).astype(jnp.float32),
    }


# ---------------------------------- reference ---------------------------------

def reference_forward(x_nchw, params):
    # Independent pure-JAX f32 reference matching the PyTorch module exactly.
    dn = ('NCHW', 'OIHW', 'NCHW')
    y = lax.conv_general_dilated(x_nchw, params['conv1_w'], (1, 1),
                                 ((1, 1), (1, 1)), dimension_numbers=dn)
    y = jax.nn.relu(y + params['conv1_b'].reshape(1, -1, 1, 1))
    y = lax.reduce_window(y, -jnp.inf, lax.max, (1, 1, 2, 2), (1, 1, 2, 2), 'VALID')
    y = lax.conv_general_dilated(y, params['conv2_w'], (1, 1),
                                 ((1, 1), (1, 1)), dimension_numbers=dn)
    y = jax.nn.relu(y + params['conv2_b'].reshape(1, -1, 1, 1))
    y = lax.reduce_window(y, -jnp.inf, lax.max, (1, 1, 2, 2), (1, 1, 2, 2), 'VALID')
    y = y.reshape(y.shape[0], -1)                            # NCHW (C, H, W) flatten
    y = jax.nn.relu(y @ params['fc1_w'] + params['fc1_b'])
    return y @ params['fc2_w'] + params['fc2_b']


if __name__ == "__main__":
    key = jax.random.PRNGKey(0)
    kx, kp = jax.random.split(key)
    # 28x28 input is forced by fc1 = Linear(64*7*7, 128); small batch of 2.
    x = jax.random.normal(kx, (2, 1, 28, 28), jnp.float32)
    params = init_params(kp)
    prepared = prepare_params(params)

    out = jax.block_until_ready(cnn_forward(x, prepared))
    assert out.shape == (2, 10) and out.dtype == jnp.float32

    ref = reference_forward(x, params)
    # bf16 MXU operands (f32 accumulation) across 4 layers -> ~1-3% relative
    # error budget vs. the pure-f32 reference.
    assert jnp.allclose(out, ref, rtol=5e-2, atol=5e-2), (
        float(jnp.max(jnp.abs(out - ref))))

    print("KERNEL_OK")
</pallas_src>

<mosaic_0001>
module attributes {stable_mosaic.version = 11 : i64} {
  func.func @_cnn_fused_kernel(%arg0: i32, %arg1: memref<1x240x28xf32, #tpu.memory_space<vmem>>, %arg2: memref<6x28x448xbf16, #tpu.memory_space<vmem>>, %arg3: memref<1x448xf32, #tpu.memory_space<vmem>>, %arg4: memref<6x448x448xbf16, #tpu.memory_space<vmem>>, %arg5: memref<1x448xf32, #tpu.memory_space<vmem>>, %arg6: memref<7x448x128xbf16, #tpu.memory_space<vmem>>, %arg7: memref<1x128xf32, #tpu.memory_space<vmem>>, %arg8: memref<128x10xbf16, #tpu.memory_space<vmem>>, %arg9: memref<1x10xf32, #tpu.memory_space<vmem>>, %arg10: memref<8x10xf32, #tpu.memory_space<vmem>>, %arg11: memref<128x448xf32, #tpu.memory_space<vmem>>) attributes {dimension_semantics = [#tpu.dimension_semantics<parallel>], iteration_bounds = array<i64: 1>, scalar_prefetch = 0 : i64, scratch_operands = 1 : i64, tpu.core_type = #tpu.core_type<tc>, window_params = [{transform_indices = @transform_0, window_bounds = array<i64: 1, 240, 28>}, {pipeline_mode = #tpu.pipeline_mode<synchronous>, transform_indices = @transform_1, window_bounds = array<i64: 6, 28, 448>}, {pipeline_mode = #tpu.pipeline_mode<synchronous>, transform_indices = @transform_2, window_bounds = array<i64: 1, 448>}, {pipeline_mode = #tpu.pipeline_mode<synchronous>, transform_indices = @transform_3, window_bounds = array<i64: 6, 448, 448>}, {pipeline_mode = #tpu.pipeline_mode<synchronous>, transform_indices = @transform_4, window_bounds = array<i64: 1, 448>}, {pipeline_mode = #tpu.pipeline_mode<synchronous>, transform_indices = @transform_5, window_bounds = array<i64: 7, 448, 128>}, {pipeline_mode = #tpu.pipeline_mode<synchronous>, transform_indices = @transform_6, window_bounds = array<i64: 1, 128>}, {pipeline_mode = #tpu.pipeline_mode<synchronous>, transform_indices = @transform_7, window_bounds = array<i64: 128, 10>}, {pipeline_mode = #tpu.pipeline_mode<synchronous>, transform_indices = @transform_8, window_bounds = array<i64: 1, 10>}, {transform_indices = @transform_9, window_bounds = array<i64: 8, 10>}]} {
    %c0 = arith.constant 0 : index
    %c0_0 = arith.constant 0 : index
    %c0_1 = arith.constant 0 : index
    %0 = vector.load %arg1[%c0, %c0_0, %c0_1] : memref<1x240x28xf32, #tpu.memory_space<vmem>>, vector<1x240x28xf32>
    %1 = vector.shape_cast %0 : vector<1x240x28xf32> to vector<240x28xf32>
    %2 = arith.truncf %1 : vector<240x28xf32> to vector<240x28xbf16>
    %c0_2 = arith.constant 0 : index
    %c0_3 = arith.constant 0 : index
    %c0_4 = arith.constant 0 : index
    %3 = vector.load %arg2[%c0_2, %c0_3, %c0_4] : memref<6x28x448xbf16, #tpu.memory_space<vmem>>, vector<1x28x448xbf16>
    %4 = vector.shape_cast %3 : vector<1x28x448xbf16> to vector<28x448xbf16>
    %cst = arith.constant dense<0.000000e+00> : vector<240x448xf32>
    %5 = tpu.matmul %2, %4, %cst {dimension_numbers = #tpu.dot_dimension_numbers<[1], [0], [0], [1], [0, 0, 1, 1], [], []>} : vector<240x28xbf16>, vector<28x448xbf16>, vector<240x448xf32> -> vector<240x448xf32>
    %6 = vector.extract_strided_slice %5 {offsets = [0, 0], sizes = [224, 448], strides = [1, 1]} : vector<240x448xf32> to vector<224x448xf32>
    %c2 = arith.constant 2 : index
    %c0_5 = arith.constant 0 : index
    %c0_6 = arith.constant 0 : index
    %7 = vector.load %arg2[%c2, %c0_5, %c0_6] : memref<6x28x448xbf16, #tpu.memory_space<vmem>>, vector<1x28x448xbf16>
    %8 = vector.shape_cast %7 : vector<1x28x448xbf16> to vector<28x448xbf16>
    %cst_7 = arith.constant dense<0.000000e+00> : vector<240x448xf32>
    %9 = tpu.matmul %2, %8, %cst_7 {dimension_numbers = #tpu.dot_dimension_numbers<[1], [0], [0], [1], [0, 0, 1, 1], [], []>} : vector<240x28xbf16>, vector<28x448xbf16>, vector<240x448xf32> -> vector<240x448xf32>
    %10 = vector.extract_strided_slice %9 {offsets = [8, 0], sizes = [224, 448], strides = [1, 1]} : vector<240x448xf32> to vector<224x448xf32>
    %11 = arith.addf %6, %10 : vector<224x448xf32>
    %c4 = arith.constant 4 : index
    %c0_8 = arith.constant 0 : index
    %c0_9 = arith.constant 0 : index
    %12 = vector.load %arg2[%c4, %c0_8, %c0_9] : memref<6x28x448xbf16, #tpu.memory_space<vmem>>, vector<1x28x448xbf16>
    %13 = vector.shape_cast %12 : vector<1x28x448xbf16> to vector<28x448xbf16>
    %cst_10 = arith.constant dense<0.000000e+00> : vector<240x448xf32>
    %14 = tpu.matmul %2, %13, %cst_10 {dimension_numbers = #tpu.dot_dimension_numbers<[1], [0], [0], [1], [0, 0, 1, 1], [], []>} : vector<240x28xbf16>, vector<28x448xbf16>, vector<240x448xf32> -> vector<240x448xf32>
    %15 = vector.extract_strided_slice %14 {offsets = [16, 0], sizes = [224, 448], strides = [1, 1]} : vector<240x448xf32> to vector<224x448xf32>
    %16 = arith.addf %11, %15 : vector<224x448xf32>
    %c1 = arith.constant 1 : index
    %c0_11 = arith.constant 0 : index
    %c0_12 = arith.constant 0 : index
    %17 = vector.load %arg2[%c1, %c0_11, %c0_12] : memref<6x28x448xbf16, #tpu.memory_space<vmem>>, vector<1x28x448xbf16>
    %18 = vector.shape_cast %17 : vector<1x28x448xbf16> to vector<28x448xbf16>
    %cst_13 = arith.constant dense<0.000000e+00> : vector<240x448xf32>
    %19 = tpu.matmul %2, %18, %cst_13 {dimension_numbers = #tpu.dot_dimension_numbers<[1], [0], [0], [1], [0, 0, 1, 1], [], []>} : vector<240x28xbf16>, vector<28x448xbf16>, vector<240x448xf32> -> vector<240x448xf32>
    %20 = vector.extract_strided_slice %19 {offsets = [0, 0], sizes = [224, 448], strides = [1, 1]} : vector<240x448xf32> to vector<224x448xf32>
    %c3 = arith.constant 3 : index
    %c0_14 = arith.constant 0 : index
    %c0_15 = arith.constant 0 : index
    %21 = vector.load %arg2[%c3, %c0_14, %c0_15] : memref<6x28x448xbf16, #tpu.memory_space<vmem>>, vector<1x28x448xbf16>
    %22 = vector.shape_cast %21 : vector<1x28x448xbf16> to vector<28x448xbf16>
    %cst_16 = arith.constant dense<0.000000e+00> : vector<240x448xf32>
    %23 = tpu.matmul %2, %22, %cst_16 {dimension_numbers = #tpu.dot_dimension_numbers<[1], [0], [0], [1], [0, 0, 1, 1], [], []>} : vector<240x28xbf16>, vector<28x448xbf16>, vector<240x448xf32> -> vector<240x448xf32>
    %24 = vector.extract_strided_slice %23 {offsets = [8, 0], sizes = [224, 448], strides = [1, 1]} : vector<240x448xf32> to vector<224x448xf32>
    %25 = arith.addf %20, %24 : vector<224x448xf32>
    %c5 = arith.constant 5 : index
    %c0_17 = arith.constant 0 : index
    %c0_18 = arith.constant 0 : index
    %26 = vector.load %arg2[%c5, %c0_17, %c0_18] : memref<6x28x448xbf16, #tpu.memory_space<vmem>>, vector<1x28x448xbf16>
    %27 = vector.shape_cast %26 : vector<1x28x448xbf16> to vector<28x448xbf16>
    %cst_19 = arith.constant dense<0.000000e+00> : vector<240x448xf32>
    %28 = tpu.matmul %2, %27, %cst_19 {dimension_numbers = #tpu.dot_dimension_numbers<[1], [0], [0], [1], [0, 0, 1, 1], [], []>} : vector<240x28xbf16>, vector<28x448xbf16>, vector<240x448xf32> -> vector<240x448xf32>
    %29 = vector.extract_strided_slice %28 {offsets = [16, 0], sizes = [224, 448], strides = [1, 1]} : vector<240x448xf32> to vector<224x448xf32>
    %30 = arith.addf %25, %29 : vector<224x448xf32>
    %31 = arith.maximumf %16, %30 : vector<224x448xf32>
    %32 = vector.shape_cast %31 : vector<224x448xf32> to vector<14x16x448xf32>
    %33 = vector.extract_strided_slice %32 {offsets = [0, 0, 0], sizes = [14, 8, 448], strides = [1, 1, 1]} : vector<14x16x448xf32> to vector<14x8x448xf32>
    %34 = vector.extract_strided_slice %32 {offsets = [0, 8, 0], sizes = [14, 8, 448], strides = [1, 1, 1]} : vector<14x16x448xf32> to vector<14x8x448xf32>
    %35 = arith.maximumf %33, %34 : vector<14x8x448xf32>
    %c0_20 = arith.constant 0 : index
    %c0_21 = arith.constant 0 : index
    %36 = vector.load %arg3[%c0_20, %c0_21] : memref<1x448xf32, #tpu.memory_space<vmem>>, vector<1x448xf32>
    %37 = vector.shape_cast %36 : vector<1x448xf32> to vector<1x1x448xf32>
    %38 = vector.broadcast %37 : vector<1x1x448xf32> to vector<14x8x448xf32>
    %39 = arith.addf %35, %38 : vector<14x8x448xf32>
    %cst_22 = arith.constant 0.000000e+00 : f32
    %40 = vector.broadcast %cst_22 : f32 to vector<14x8x448xf32>
    %41 = arith.maximumf %39, %40 : vector<14x8x448xf32>
    %cst_23 = arith.constant 0.000000e+00 : f32
    %42 = vector.broadcast %cst_23 : f32 to vector<8x448xf32>
    %c0_24 = arith.constant 0 : index
    %c0_25 = arith.constant 0 : index
    %43 = vector.load %arg11[%c0_24, %c0_25] : memref<128x448xf32, #tpu.memory_space<vmem>>, vector<8x448xf32>
    tpu.vector_store %arg11[%c0_24, %c0_25], %42 {strides = array<i32>} : memref<128x448xf32, #tpu.memory_space<vmem>>, vector<8x448xf32>,
    %cst_26 = arith.constant 0.000000e+00 : f32
    %44 = vector.broadcast %cst_26 : f32 to vector<8x448xf32>
    %c120 = arith.constant 120 : index
    %c0_27 = arith.constant 0 : index
    %45 = vector.load %arg11[%c120, %c0_27] : memref<128x448xf32, #tpu.memory_space<vmem>>, vector<8x448xf32>
    tpu.vector_store %arg11[%c120, %c0_27], %44 {strides = array<i32>} : memref<128x448xf32, #tpu.memory_space<vmem>>, vector<8x448xf32>,
    %46 = vector.shape_cast %41 : vector<14x8x448xf32> to vector<112x448xf32>
    %c8 = arith.constant 8 : index
    %c0_28 = arith.constant 0 : index
    %47 = vector.load %arg11[%c8, %c0_28] : memref<128x448xf32, #tpu.memory_space<vmem>>, vector<112x448xf32>
    tpu.vector_store %arg11[%c8, %c0_28], %46 {strides = array<i32>} : memref<128x448xf32, #tpu.memory_space<vmem>>, vector<112x448xf32>,
    %c0_29 = arith.constant 0 : index
    %c0_30 = arith.constant 0 : index
    %48 = vector.load %arg11[%c0_29, %c0_30] : memref<128x448xf32, #tpu.memory_space<vmem>>, vector<128x448xf32>
    %49 = arith.truncf %48 : vector<128x448xf32> to vector<128x448xbf16>
    %c0_31 = arith.constant 0 : index
    %c0_32 = arith.constant 0 : index
    %c0_33 = arith.constant 0 : index
    %50 = vector.load %arg4[%c0_31, %c0_32, %c0_33] : memref<6x448x448xbf16, #tpu.memory_space<vmem>>, vector<1x448x448xbf16>
    %51 = vector.shape_cast %50 : vector<1x448x448xbf16> to vector<448x448xbf16>
    %cst_34 = arith.constant dense<0.000000e+00> : vector<128x448xf32>
    %52 = tpu.matmul %49, %51, %cst_34 {dimension_numbers = #tpu.dot_dimension_numbers<[1], [0], [0], [1], [0, 0, 1, 1], [], []>} : vector<128x448xbf16>, vector<448x448xbf16>, vector<128x448xf32> -> vector<128x448xf32>
    %53 = vector.extract_strided_slice %52 {offsets = [0, 0], sizes = [112, 448], strides = [1, 1]} : vector<128x448xf32> to vector<112x448xf32>
    %c2_35 = arith.constant 2 : index
    %c0_36 = arith.constant 0 : index
    %c0_37 = arith.constant 0 : index
    %54 = vector.load %arg4[%c2_35, %c0_36, %c0_37] : memref<6x448x448xbf16, #tpu.memory_space<vmem>>, vector<1x448x448xbf16>
    %55 = vector.shape_cast %54 : vector<1x448x448xbf16> to vector<448x448xbf16>
    %cst_38 = arith.constant dense<0.000000e+00> : vector<128x448xf32>
    %56 = tpu.matmul %49, %55, %cst_38 {dimension_numbers = #tpu.dot_dimension_numbers<[1], [0], [0], [1], [0, 0, 1, 1], [], []>} : vector<128x448xbf16>, vector<448x448xbf16>, vector<128x448xf32> -> vector<128x448xf32>
    %57 = vector.extract_strided_slice %56 {offsets = [8, 0], sizes = [112, 448], strides = [1, 1]} : vector<128x448xf32> to vector<112x448xf32>
    %58 = arith.addf %53, %57 : vector<112x448xf32>
    %c4_39 = arith.constant 4 : index
    %c0_40 = arith.constant 0 : index
    %c0_41 = arith.constant 0 : index
    %59 = vector.load %arg4[%c4_39, %c0_40, %c0_41] : memref<6x448x448xbf16, #tpu.memory_space<vmem>>, vector<1x448x448xbf16>
    %60 = vector.shape_cast %59 : vector<1x448x448xbf16> to vector<448x448xbf16>
    %cst_42 = arith.constant dense<0.000000e+00> : vector<128x448xf32>
    %61 = tpu.matmul %49, %60, %cst_42 {dimension_numbers = #tpu.dot_dimension_numbers<[1], [0], [0], [1], [0, 0, 1, 1], [], []>} : vector<128x448xbf16>, vector<448x448xbf16>, vector<128x448xf32> -> vector<128x448xf32>
    %62 = vector.extract_strided_slice %61 {offsets = [16, 0], sizes = [112, 448], strides = [1, 1]} : vector<128x448xf32> to vector<112x448xf32>
    %63 = arith.addf %58, %62 : vector<112x448xf32>
    %c1_43 = arith.constant 1 : index
    %c0_44 = arith.constant 0 : index
    %c0_45 = arith.constant 0 : index
    %64 = vector.load %arg4[%c1_43, %c0_44, %c0_45] : memref<6x448x448xbf16, #tpu.memory_space<vmem>>, vector<1x448x448xbf16>
    %65 = vector.shape_cast %64 : vector<1x448x448xbf16> to vector<448x448xbf16>
    %cst_46 = arith.constant dense<0.000000e+00> : vector<128x448xf32>
    %66 = tpu.matmul %49, %65, %cst_46 {dimension_numbers = #tpu.dot_dimension_numbers<[1], [0], [0], [1], [0, 0, 1, 1], [], []>} : vector<128x448xbf16>, vector<448x448xbf16>, vector<128x448xf32> -> vector<128x448xf32>
    %67 = vector.extract_strided_slice %66 {offsets = [0, 0], sizes = [112, 448], strides = [1, 1]} : vector<128x448xf32> to vector<112x448xf32>
    %c3_47 = arith.constant 3 : index
    %c0_48 = arith.constant 0 : index
    %c0_49 = arith.constant 0 : index
    %68 = vector.load %arg4[%c3_47, %c0_48, %c0_49] : memref<6x448x448xbf16, #tpu.memory_space<vmem>>, vector<1x448x448xbf16>
    %69 = vector.shape_cast %68 : vector<1x448x448xbf16> to vector<448x448xbf16>
    %cst_50 = arith.constant dense<0.000000e+00> : vector<128x448xf32>
    %70 = tpu.matmul %49, %69, %cst_50 {dimension_numbers = #tpu.dot_dimension_numbers<[1], [0], [0], [1], [0, 0, 1, 1], [], []>} : vector<128x448xbf16>, vector<448x448xbf16>, vector<128x448xf32> -> vector<128x448xf32>
    %71 = vector.extract_strided_slice %70 {offsets = [8, 0], sizes = [112, 448], strides = [1, 1]} : vector<128x448xf32> to vector<112x448xf32>
    %72 = arith.addf %67, %71 : vector<112x448xf32>
    %c5_51 = arith.constant 5 : index
    %c0_52 = arith.constant 0 : index
    %c0_53 = arith.constant 0 : index
    %73 = vector.load %arg4[%c5_51, %c0_52, %c0_53] : memref<6x448x448xbf16, #tpu.memory_space<vmem>>, vector<1x448x448xbf16>
    %74 = vector.shape_cast %73 : vector<1x448x448xbf16> to vector<448x448xbf16>
    %cst_54 = arith.constant dense<0.000000e+00> : vector<128x448xf32>
    %75 = tpu.matmul %49, %74, %cst_54 {dimension_numbers = #tpu.dot_dimension_numbers<[1], [0], [0], [1], [0, 0, 1, 1], [], []>} : vector<128x448xbf16>, vector<448x448xbf16>, vector<128x448xf32> -> vector<128x448xf32>
    %76 = vector.extract_strided_slice %75 {offsets = [16, 0], sizes = [112, 448], strides = [1, 1]} : vector<128x448xf32> to vector<112x448xf32>
    %77 = arith.addf %72, %76 : vector<112x448xf32>
    %78 = arith.maximumf %63, %77 : vector<112x448xf32>
    %79 = vector.shape_cast %78 : vector<112x448xf32> to vector<7x16x448xf32>
    %80 = vector.extract_strided_slice %79 {offsets = [0, 0, 0], sizes = [7, 8, 448], strides = [1, 1, 1]} : vector<7x16x448xf32> to vector<7x8x448xf32>
    %81 = vector.extract_strided_slice %79 {offsets = [0, 8, 0], sizes = [7, 8, 448], strides = [1, 1, 1]} : vector<7x16x448xf32> to vector<7x8x448xf32>
    %82 = arith.maximumf %80, %81 : vector<7x8x448xf32>
    %c0_55 = arith.constant 0 : index
    %c0_56 = arith.constant 0 : index
    %83 = vector.load %arg5[%c0_55, %c0_56] : memref<1x448xf32, #tpu.memory_space<vmem>>, vector<1x448xf32>
    %84 = vector.shape_cast %83 : vector<1x448xf32> to vector<1x1x448xf32>
    %85 = vector.broadcast %84 : vector<1x1x448xf32> to vector<7x8x448xf32>
    %86 = arith.addf %82, %85 : vector<7x8x448xf32>
    %cst_57 = arith.constant 0.000000e+00 : f32
    %87 = vector.broadcast %cst_57 : f32 to vector<7x8x448xf32>
    %88 = arith.maximumf %86, %87 : vector<7x8x448xf32>
    %89 = arith.truncf %88 : vector<7x8x448xf32> to vector<7x8x448xbf16>
    %90 = vector.extract_strided_slice %89 {offsets = [0, 0, 0], sizes = [1, 8, 448], strides = [1, 1, 1]} : vector<7x8x448xbf16> to vector<1x8x448xbf16>
    %91 = vector.shape_cast %90 : vector<1x8x448xbf16> to vector<8x448xbf16>
    %c0_58 = arith.constant 0 : index
    %c0_59 = arith.constant 0 : index
    %c0_60 = arith.constant 0 : index
    %92 = vector.load %arg6[%c0_58, %c0_59, %c0_60] : memref<7x448x128xbf16, #tpu.memory_space<vmem>>, vector<1x448x128xbf16>
    %93 = vector.shape_cast %92 : vector<1x448x128xbf16> to vector<448x128xbf16>
    %cst_61 = arith.constant dense<0.000000e+00> : vector<8x128xf32>
    %94 = tpu.matmul %91, %93, %cst_61 {dimension_numbers = #tpu.dot_dimension_numbers<[1], [0], [0], [1], [0, 0, 1, 1], [], []>} : vector<8x448xbf16>, vector<448x128xbf16>, vector<8x128xf32> -> vector<8x128xf32>
    %95 = vector.extract_strided_slice %89 {offsets = [1, 0, 0], sizes = [1, 8, 448], strides = [1, 1, 1]} : vector<7x8x448xbf16> to vector<1x8x448xbf16>
    %96 = vector.shape_cast %95 : vector<1x8x448xbf16> to vector<8x448xbf16>
    %c1_62 = arith.constant 1 : index
    %c0_63 = arith.constant 0 : index
    %c0_64 = arith.constant 0 : index
    %97 = vector.load %arg6[%c1_62, %c0_63, %c0_64] : memref<7x448x128xbf16, #tpu.memory_space<vmem>>, vector<1x448x128xbf16>
    %98 = vector.shape_cast %97 : vector<1x448x128xbf16> to vector<448x128xbf16>
    %cst_65 = arith.constant dense<0.000000e+00> : vector<8x128xf32>
    %99 = tpu.matmul %96, %98, %cst_65 {dimension_numbers = #tpu.dot_dimension_numbers<[1], [0], [0], [1], [0, 0, 1, 1], [], []>} : vector<8x448xbf16>, vector<448x128xbf16>, vector<8x128xf32> -> vector<8x128xf32>
    %100 = arith.addf %94, %99 : vector<8x128xf32>
    %101 = vector.extract_strided_slice %89 {offsets = [2, 0, 0], sizes = [1, 8, 448], strides = [1, 1, 1]} : vector<7x8x448xbf16> to vector<1x8x448xbf16>
    %102 = vector.shape_cast %101 : vector<1x8x448xbf16> to vector<8x448xbf16>
    %c2_66 = arith.constant 2 : index
    %c0_67 = arith.constant 0 : index
    %c0_68 = arith.constant 0 : index
    %103 = vector.load %arg6[%c2_66, %c0_67, %c0_68] : memref<7x448x128xbf16, #tpu.memory_space<vmem>>, vector<1x448x128xbf16>
    %104 = vector.shape_cast %103 : vector<1x448x128xbf16> to vector<448x128xbf16>
    %cst_69 = arith.constant dense<0.000000e+00> : vector<8x128xf32>
    %105 = tpu.matmul %102, %104, %cst_69 {dimension_numbers = #tpu.dot_dimension_numbers<[1], [0], [0], [1], [0, 0, 1, 1], [], []>} : vector<8x448xbf16>, vector<448x128xbf16>, vector<8x128xf32> -> vector<8x128xf32>
    %106 = arith.addf %100, %105 : vector<8x128xf32>
    %107 = vector.extract_strided_slice %89 {offsets = [3, 0, 0], sizes = [1, 8, 448], strides = [1, 1, 1]} : vector<7x8x448xbf16> to vector<1x8x448xbf16>
    %108 = vector.shape_cast %107 : vector<1x8x448xbf16> to vector<8x448xbf16>
    %c3_70 = arith.constant 3 : index
    %c0_71 = arith.constant 0 : index
    %c0_72 = arith.constant 0 : index
    %109 = vector.load %arg6[%c3_70, %c0_71, %c0_72] : memref<7x448x128xbf16, #tpu.memory_space<vmem>>, vector<1x448x128xbf16>
    %110 = vector.shape_cast %109 : vector<1x448x128xbf16> to vector<448x128xbf16>
    %cst_73 = arith.constant dense<0.000000e+00> : vector<8x128xf32>
    %111 = tpu.matmul %108, %110, %cst_73 {dimension_numbers = #tpu.dot_dimension_numbers<[1], [0], [0], [1], [0, 0, 1, 1], [], []>} : vector<8x448xbf16>, vector<448x128xbf16>, vector<8x128xf32> -> vector<8x128xf32>
    %112 = arith.addf %106, %111 : vector<8x128xf32>
    %113 = vector.extract_strided_slice %89 {offsets = [4, 0, 0], sizes = [1, 8, 448], strides = [1, 1, 1]} : vector<7x8x448xbf16> to vector<1x8x448xbf16>
    %114 = vector.shape_cast %113 : vector<1x8x448xbf16> to vector<8x448xbf16>
    %c4_74 = arith.constant 4 : index
    %c0_75 = arith.constant 0 : index
    %c0_76 = arith.constant 0 : index
    %115 = vector.load %arg6[%c4_74, %c0_75, %c0_76] : memref<7x448x128xbf16, #tpu.memory_space<vmem>>, vector<1x448x128xbf16>
    %116 = vector.shape_cast %115 : vector<1x448x128xbf16> to vector<448x128xbf16>
    %cst_77 = arith.constant dense<0.000000e+00> : vector<8x128xf32>
    %117 = tpu.matmul %114, %116, %cst_77 {dimension_numbers = #tpu.dot_dimension_numbers<[1], [0], [0], [1], [0, 0, 1, 1], [], []>} : vector<8x448xbf16>, vector<448x128xbf16>, vector<8x128xf32> -> vector<8x128xf32>
    %118 = arith.addf %112, %117 : vector<8x128xf32>
    %119 = vector.extract_strided_slice %89 {offsets = [5, 0, 0], sizes = [1, 8, 448], strides = [1, 1, 1]} : vector<7x8x448xbf16> to vector<1x8x448xbf16>
    %120 = vector.shape_cast %119 : vector<1x8x448xbf16> to vector<8x448xbf16>
    %c5_78 = arith.constant 5 : index
    %c0_79 = arith.constant 0 : index
    %c0_80 = arith.constant 0 : index
    %121 = vector.load %arg6[%c5_78, %c0_79, %c0_80] : memref<7x448x128xbf16, #tpu.memory_space<vmem>>, vector<1x448x128xbf16>
    %122 = vector.shape_cast %121 : vector<1x448x128xbf16> to vector<448x128xbf16>
    %cst_81 = arith.constant dense<0.000000e+00> : vector<8x128xf32>
    %123 = tpu.matmul %120, %122, %cst_81 {dimension_numbers = #tpu.dot_dimension_numbers<[1], [0], [0], [1], [0, 0, 1, 1], [], []>} : vector<8x448xbf16>, vector<448x128xbf16>, vector<8x128xf32> -> vector<8x128xf32>
    %124 = arith.addf %118, %123 : vector<8x128xf32>
    %125 = vector.extract_strided_slice %89 {offsets = [6, 0, 0], sizes = [1, 8, 448], strides = [1, 1, 1]} : vector<7x8x448xbf16> to vector<1x8x448xbf16>
    %126 = vector.shape_cast %125 : vector<1x8x448xbf16> to vector<8x448xbf16>
    %c6 = arith.constant 6 : index
    %c0_82 = arith.constant 0 : index
    %c0_83 = arith.constant 0 : index
    %127 = vector.load %arg6[%c6, %c0_82, %c0_83] : memref<7x448x128xbf16, #tpu.memory_space<vmem>>, vector<1x448x128xbf16>
    %128 = vector.shape_cast %127 : vector<1x448x128xbf16> to vector<448x128xbf16>
    %cst_84 = arith.constant dense<0.000000e+00> : vector<8x128xf32>
    %129 = tpu.matmul %126, %128, %cst_84 {dimension_numbers = #tpu.dot_dimension_numbers<[1], [0], [0], [1], [0, 0, 1, 1], [], []>} : vector<8x448xbf16>, vector<448x128xbf16>, vector<8x128xf32> -> vector<8x128xf32>
    %130 = arith.addf %124, %129 : vector<8x128xf32>
    %c0_85 = arith.constant 0 : index
    %c0_86 = arith.constant 0 : index
    %131 = vector.load %arg7[%c0_85, %c0_86] : memref<1x128xf32, #tpu.memory_space<vmem>>, vector<1x128xf32>
    %132 = vector.broadcast %131 : vector<1x128xf32> to vector<8x128xf32>
    %133 = arith.addf %130, %132 : vector<8x128xf32>
    %cst_87 = arith.constant 0.000000e+00 : f32
    %134 = vector.broadcast %cst_87 : f32 to vector<8x128xf32>
    %135 = arith.maximumf %133, %134 : vector<8x128xf32>
    %136 = arith.truncf %135 : vector<8x128xf32> to vector<8x128xbf16>
    %c0_88 = arith.constant 0 : index
    %c0_89 = arith.constant 0 : index
    %137 = vector.load %arg8[%c0_88, %c0_89] : memref<128x10xbf16, #tpu.memory_space<vmem>>, vector<128x10xbf16>
    %cst_90 = arith.constant dense<0.000000e+00> : vector<8x10xf32>
    %138 = tpu.matmul %136, %137, %cst_90 {dimension_numbers = #tpu.dot_dimension_numbers<[1], [0], [0], [1], [0, 0, 1, 1], [], []>} : vector<8x128xbf16>, vector<128x10xbf16>, vector<8x10xf32> -> vector<8x10xf32>
    %c0_91 = arith.constant 0 : index
    %c0_92 = arith.constant 0 : index
    %139 = vector.load %arg9[%c0_91, %c0_92] : memref<1x10xf32, #tpu.memory_space<vmem>>, vector<1x10xf32>
    %140 = vector.broadcast %139 : vector<1x10xf32> to vector<8x10xf32>
    %141 = arith.addf %138, %140 : vector<8x10xf32>
    %c0_93 = arith.constant 0 : index
    %c0_94 = arith.constant 0 : index
    %142 = vector.load %arg10[%c0_93, %c0_94] : memref<8x10xf32, #tpu.memory_space<vmem>>, vector<8x10xf32>
    tpu.vector_store %arg10[%c0_93, %c0_94], %141 {strides = array<i32>} : memref<8x10xf32, #tpu.memory_space<vmem>>, vector<8x10xf32>,
    return
  }
  func.func @transform_0(%arg0: i32) -> (i32, i32, i32) {
    %c0_i32 = arith.constant 0 : i32
    %c0_i32_0 = arith.constant 0 : i32
    %c0_i32_1 = arith.constant 0 : i32
    return %arg0, %c0_i32, %c0_i32_0 : i32, i32, i32
  }
  func.func @transform_1(%arg0: i32) -> (i32, i32, i32) {
    %c0_i32 = arith.constant 0 : i32
    %c0_i32_0 = arith.constant 0 : i32
    %c0_i32_1 = arith.constant 0 : i32
    %c0_i32_2 = arith.constant 0 : i32
    return %c0_i32, %c0_i32_0, %c0_i32_1 : i32, i32, i32
  }
  func.func @transform_2(%arg0: i32) -> (i32, i32) {
    %c0_i32 = arith.constant 0 : i32
    %c0_i32_0 = arith.constant 0 : i32
    %c0_i32_1 = arith.constant 0 : i32
    return %c0_i32, %c0_i32_0 : i32, i32
  }
  func.func @transform_3(%arg0: i32) -> (i32, i32, i32) {
    %c0_i32 = arith.constant 0 : i32
    %c0_i32_0 = arith.constant 0 : i32
    %c0_i32_1 = arith.constant 0 : i32
    %c0_i32_2 = arith.constant 0 : i32
    return %c0_i32, %c0_i32_0, %c0_i32_1 : i32, i32, i32
  }
  func.func @transform_4(%arg0: i32) -> (i32, i32) {
    %c0_i32 = arith.constant 0 : i32
    %c0_i32_0 = arith.constant 0 : i32
    %c0_i32_1 = arith.constant 0 : i32
    return %c0_i32, %c0_i32_0 : i32, i32
  }
  func.func @transform_5(%arg0: i32) -> (i32, i32, i32) {
    %c0_i32 = arith.constant 0 : i32
    %c0_i32_0 = arith.constant 0 : i32
    %c0_i32_1 = arith.constant 0 : i32
    %c0_i32_2 = arith.constant 0 : i32
    return %c0_i32, %c0_i32_0, %c0_i32_1 : i32, i32, i32
  }
  func.func @transform_6(%arg0: i32) -> (i32, i32) {
    %c0_i32 = arith.constant 0 : i32
    %c0_i32_0 = arith.constant 0 : i32
    %c0_i32_1 = arith.constant 0 : i32
    return %c0_i32, %c0_i32_0 : i32, i32
  }
  func.func @transform_7(%arg0: i32) -> (i32, i32) {
    %c0_i32 = arith.constant 0 : i32
    %c0_i32_0 = arith.constant 0 : i32
    %c0_i32_1 = arith.constant 0 : i32
    return %c0_i32, %c0_i32_0 : i32, i32
  }
  func.func @transform_8(%arg0: i32) -> (i32, i32) {
    %c0_i32 = arith.constant 0 : i32
    %c0_i32_0 = arith.constant 0 : i32
    %c0_i32_1 = arith.constant 0 : i32
    return %c0_i32, %c0_i32_0 : i32, i32
  }
  func.func @transform_9(%arg0: i32) -> (i32, i32) {
    %c0_i32 = arith.constant 0 : i32
    %c0_i32_0 = arith.constant 0 : i32
    return %arg0, %c0_i32 : i32, i32
  }
}

</mosaic_0001>

<llo_original>
// kernel: cnn_forward.1
$region0: #{cnn_forward.1}
  #allocation0 [shape = 'u32[]', space=smem, size = 0x4, offset = 0x4, fixed_abs, tag = 'smem constant byte address 0x4 - core index']
  #allocation1 [shape = 'u32[144,128]{1,0:T(1,128)}', space=vmem, size = 0x12000, scoped, tag = 'internal scratch']
  #allocation2 [shape = 'f32[128,448]{1,0:T(8,128)}', space=vmem, size = 0x40000, scoped, tag = 'scratch operand']
  %s0 = inlined_call_operand.vmem [shape: f32[1,240,28], index: 0, kind: input, shape index: {}]
  %s1 = inlined_call_operand.hbm [shape: bf16[6,28,448], index: 1, kind: input, shape index: {}]
  %s2 = inlined_call_operand.hbm [shape: f32[1,448], index: 2, kind: input, shape index: {}]
  %s3 = inlined_call_operand.hbm [shape: bf16[6,448,448], index: 3, kind: input, shape index: {}]
  %s4 = inlined_call_operand.hbm [shape: f32[1,448], index: 4, kind: input, shape index: {}]
  %s5 = inlined_call_operand.hbm [shape: bf16[7,448,128], index: 5, kind: input, shape index: {}]
  %s6 = inlined_call_operand.hbm [shape: f32[1,128], index: 6, kind: input, shape index: {}]
  %s7 = inlined_call_operand.vmem [shape: bf16[128,10], index: 7, kind: input, shape index: {}]
  %s8 = inlined_call_operand.hbm [shape: f32[1,10], index: 8, kind: input, shape index: {}]
  %s9 = inlined_call_operand.vmem [shape: f32[8,10], index: 9, kind: output, shape index: {}]
  %s10 = sld [smem:[#allocation0]]
  $region74: #{cnn_forward.1} parent=0
    _
  %s12 = ssub.s32 1, %s10
  %s13 = scalar_select 0, %s12, %s10
  $region1: #{cnn_forward.1} parent=0
    #allocation3 [shape = 'u8[196608]{0}', space=vmem, size = 0x30000, scoped, tag = 'input window, operand 1, single buffered']
    #allocation4 [shape = 's32[1]{0}', space=sflag, size = 0x4, scoped, tag = 'scoped memory for cnn_forward.1']
    #allocation5 [shape = 'u8[2048]{0}', space=vmem, size = 0x800, scoped, tag = 'input window, operand 2, single buffered']
    #allocation6 [shape = 's32[1]{0}', space=sflag, size = 0x4, scoped, tag = 'scoped memory for cnn_forward.1']
    #allocation7 [shape = 'u8[2752512]{0}', space=vmem, size = 0x2a0000, scoped, tag = 'input window, operand 3, single buffered']
    #allocation8 [shape = 'u8[2048]{0}', space=vmem, size = 0x800, scoped, tag = 'input window, operand 4, single buffered']
    #allocation9 [shape = 's32[1]{0}', space=sflag, size = 0x4, scoped, tag = 'scoped memory for cnn_forward.1']
    #allocation10 [shape = 'u8[802816]{0}', space=vmem, size = 0xc4000, scoped, tag = 'input window, operand 5, single buffered']
    #allocation11 [shape = 'u8[512]{0}', space=vmem, size = 0x400, scoped, tag = 'input window, operand 6, single buffered']
    #allocation12 [shape = 's32[1]{0}', space=sflag, size = 0x4, scoped, tag = 'scoped memory for cnn_forward.1']
    #allocation13 [shape = 'u8[512]{0}', space=vmem, size = 0x400, scoped, tag = 'input window, operand 8, single buffered']
    %14 = vsyncpa [#allocation4], 0
    %15 = vsyncpa [#allocation6], 0
    %16 = vsyncpa [#allocation9], 0
    %17 = vsyncpa [#allocation12], 0
    // Predicated region
    $region2: #{cnn_forward.1} parent=1 // pred_check
      _
    $region3: #{cnn_forward.1} parent=1 // pred_check_branch
      %19 = sbr.rel (0) target = $region5
    $region4: #{cnn_forward.1} parent=1 // pred_region
      _
    $region5: #{cnn_forward.1} parent=1 // pred_fallthru
      _
    // Predicated region
    $region6: #{cnn_forward.1} parent=1 // pred_check
      _
    $region7: #{cnn_forward.1} parent=1 // pred_check_branch
      %21 = sbr.rel (0) target = $region9
    $region8: #{cnn_forward.1} parent=1 // pred_region
      %s23 = ssub.s32 6144, 6144
      %24 = vsyncadd [#allocation4], %s23
      %s25 = sshll.u32 [#allocation3], 4
      %s26 = int_to_ptr.vmem [resolvable:$true] %s25
      %31 = dma.hbm_to_vmem [thread:$0]  %s1, 6144, %s26, [#allocation4], 256, 256, 16
    $region9: #{cnn_forward.1} parent=1 // pred_fallthru
      _
    // Predicated region
    $region10: #{cnn_forward.1} parent=1 // pred_check
      _
    $region11: #{cnn_forward.1} parent=1 // pred_check_branch
      %33 = sbr.rel (0) target = $region13
    $region12: #{cnn_forward.1} parent=1 // pred_region
      %s35 = ssub.s32 64, 64
      %36 = vsyncadd [#allocation6], %s35
      %s38 = sshll.u32 [#allocation5], 4
      %s39 = int_to_ptr.vmem [resolvable:$true] %s38
      %41 = dma.hbm_to_vmem [thread:$0]  %s2, 64, %s39, [#allocation6]
    $region13: #{cnn_forward.1} parent=1 // pred_fallthru
      _
    // Predicated region
    $region14: #{cnn_forward.1} parent=1 // pred_check
      _
    $region15: #{cnn_forward.1} parent=1 // pred_check_branch
      %43 = sbr.rel (0) target = $region17
    $region16: #{cnn_forward.1} parent=1 // pred_region
      %s45 = ssub.s32 86016, 86016
      %46 = vsyncadd [#allocation6], %s45
      %s47 = sshll.u32 [#allocation7], 4
      %s48 = int_to_ptr.vmem [resolvable:$true] %s47
      %53 = dma.hbm_to_vmem [thread:$0]  %s3, 86016, %s48, [#allocation6], 256, 256, 16
    $region17: #{cnn_forward.1} parent=1 // pred_fallthru
      _
    // Predicated region
    $region18: #{cnn_forward.1} parent=1 // pred_check
      _
    $region19: #{cnn_forward.1} parent=1 // pred_check_branch
      %55 = sbr.rel (0) target = $region21
    $region20: #{cnn_forward.1} parent=1 // pred_region
      %s57 = ssub.s32 64, 64
      %58 = vsyncadd [#allocation9], %s57
      %s60 = sshll.u32 [#allocation8], 4
      %s61 = int_to_ptr.vmem [resolvable:$true] %s60
      %63 = dma.hbm_to_vmem [thread:$0]  %s4, 64, %s61, [#allocation9]
    $region21: #{cnn_forward.1} parent=1 // pred_fallthru
      _
    // Predicated region
    $region22: #{cnn_forward.1} parent=1 // pred_check
      _
    $region23: #{cnn_forward.1} parent=1 // pred_check_branch
      %65 = sbr.rel (0) target = $region25
    $region24: #{cnn_forward.1} parent=1 // pred_region
      %s67 = ssub.s32 25088, 25088
      %68 = vsyncadd [#allocation9], %s67
      %s69 = sshll.u32 [#allocation10], 4
      %s70 = int_to_ptr.vmem [resolvable:$true] %s69
      %75 = dma.hbm_to_vmem [thread:$0]  %s5, 25088, %s70, [#allocation9], 64, 64, 4
    $region25: #{cnn_forward.1} parent=1 // pred_fallthru
      _
    // Predicated region
    $region26: #{cnn_forward.1} parent=1 // pred_check
      _
    $region27: #{cnn_forward.1} parent=1 // pred_check_branch
      %77 = sbr.rel (0) target = $region29
    $region28: #{cnn_forward.1} parent=1 // pred_region
      %s79 = ssub.s32 16, 16
      %80 = vsyncadd [#allocation12], %s79
      %s82 = sshll.u32 [#allocation11], 4
      %s83 = int_to_ptr.vmem [resolvable:$true] %s82
      %85 = dma.hbm_to_vmem [thread:$0]  %s6, 16, %s83, [#allocation12]
    $region29: #{cnn_forward.1} parent=1 // pred_fallthru
      _
    // Predicated region
    $region30: #{cnn_forward.1} parent=1 // pred_check
      _
    $region31: #{cnn_forward.1} parent=1 // pred_check_branch
      %87 = sbr.rel (0) target = $region33
    $region32: #{cnn_forward.1} parent=1 // pred_region
      _
    $region33: #{cnn_forward.1} parent=1 // pred_fallthru
      _
    // Predicated region
    $region34: #{cnn_forward.1} parent=1 // pred_check
      _
    $region35: #{cnn_forward.1} parent=1 // pred_check_branch
      %89 = sbr.rel (0) target = $region37
    $region36: #{cnn_forward.1} parent=1 // pred_region
      %s91 = ssub.s32 16, 16
      %92 = vsyncadd [#allocation12], %s91
      %s94 = sshll.u32 [#allocation13], 4
      %s95 = int_to_ptr.vmem [resolvable:$true] %s94
      %97 = dma.hbm_to_vmem [thread:$0]  %s8, 16, %s95, [#allocation12]
    $region37: #{cnn_forward.1} parent=1 // pred_fallthru
      _
    // Predicated region
    $region38: #{cnn_forward.1} parent=1 // pred_check
      _
    $region39: #{cnn_forward.1} parent=1 // pred_check_branch
      %99 = sbr.rel (0) target = $region41
    $region40: #{cnn_forward.1} parent=1 // pred_region
      %100 = dma.done [#allocation4], 6144
    $region41: #{cnn_forward.1} parent=1 // pred_fallthru
      _
    // Predicated region
    $region42: #{cnn_forward.1} parent=1 // pred_check
      _
    $region43: #{cnn_forward.1} parent=1 // pred_check_branch
      %102 = sbr.rel (0) target = $region45
    $region44: #{cnn_forward.1} parent=1 // pred_region
      %103 = dma.done [#allocation6], 64
    $region45: #{cnn_forward.1} parent=1 // pred_fallthru
      _
    // Predicated region
    $region46: #{cnn_forward.1} parent=1 // pred_check
      _
    $region47: #{cnn_forward.1} parent=1 // pred_check_branch
      %105 = sbr.rel (0) target = $region49
    $region48: #{cnn_forward.1} parent=1 // pred_region
      %106 = dma.done [#allocation6], 86016
    $region49: #{cnn_forward.1} parent=1 // pred_fallthru
      _
    // Predicated region
    $region50: #{cnn_forward.1} parent=1 // pred_check
      _
    $region51: #{cnn_forward.1} parent=1 // pred_check_branch
      %108 = sbr.rel (0) target = $region53
    $region52: #{cnn_forward.1} parent=1 // pred_region
      %109 = dma.done [#allocation9], 64
    $region53: #{cnn_forward.1} parent=1 // pred_fallthru
      _
    // Predicated region
    $region54: #{cnn_forward.1} parent=1 // pred_check
      _
    $region55: #{cnn_forward.1} parent=1 // pred_check_branch
      %111 = sbr.rel (0) target = $region57
    $region56: #{cnn_forward.1} parent=1 // pred_region
      %112 = dma.done [#allocation9], 25088
    $region57: #{cnn_forward.1} parent=1 // pred_fallthru
      _
    // Predicated region
    $region58: #{cnn_forward.1} parent=1 // pred_check
      _
    $region59: #{cnn_forward.1} parent=1 // pred_check_branch
      %114 = sbr.rel (0) target = $region61
    $region60: #{cnn_forward.1} parent=1 // pred_region
      %115 = dma.done [#allocation12], 16
    $region61: #{cnn_forward.1} parent=1 // pred_fallthru
      _
    // Predicated region
    $region62: #{cnn_forward.1} parent=1 // pred_check
      _
    $region63: #{cnn_forward.1} parent=1 // pred_check_branch
      %117 = sbr.rel (0) target = $region65
    $region64: #{cnn_forward.1} parent=1 // pred_region
      %118 = dma.done [#allocation12], 16
    $region65: #{cnn_forward.1} parent=1 // pred_fallthru
      _
    %v120 = vld [vmem:[%s0] sm:$0xff]
    %v121 = vld [vmem:[%s0 + $0x8] sm:$0xff]
    %v122 = vld [vmem:[%s0 + $0x10] sm:$0xff]
    %v123 = vld [vmem:[%s0 + $0x18] sm:$0xff]
    %v124 = vld [vmem:[%s0 + $0x20] sm:$0xff]
    %v125 = vld [vmem:[%s0 + $0x28] sm:$0xff]
    %v126 = vld [vmem:[%s0 + $0x30] sm:$0xff]
    %v127 = vld [vmem:[%s0 + $0x38] sm:$0xff]
    %v128 = vld [vmem:[%s0 + $0x40] sm:$0xff]
    %v129 = vld [vmem:[%s0 + $0x48] sm:$0xff]
    %v130 = vld [vmem:[%s0 + $0x50] sm:$0xff]
    %v131 = vld [vmem:[%s0 + $0x58] sm:$0xff]
    %v132 = vld [vmem:[%s0 + $0x60] sm:$0xff]
    %v133 = vld [vmem:[%s0 + $0x68] sm:$0xff]
    %v134 = vld [vmem:[%s0 + $0x70] sm:$0xff]
    %v135 = vld [vmem:[%s0 + $0x78] sm:$0xff]
    %v136 = vld [vmem:[%s0 + $0x80] sm:$0xff]
    %v137 = vld [vmem:[%s0 + $0x88] sm:$0xff]
    %v138 = vld [vmem:[%s0 + $0x90] sm:$0xff]
    %v139 = vld [vmem:[%s0 + $0x98] sm:$0xff]
    %v140 = vld [vmem:[%s0 + $0xa0] sm:$0xff]
    %v141 = vld [vmem:[%s0 + $0xa8] sm:$0xff]
    %v142 = vld [vmem:[%s0 + $0xb0] sm:$0xff]
    %v143 = vld [vmem:[%s0 + $0xb8] sm:$0xff]
    %v144 = vld [vmem:[%s0 + $0xc0] sm:$0xff]
    %v145 = vld [vmem:[%s0 + $0xc8] sm:$0xff]
    %v146 = vld [vmem:[%s0 + $0xd0] sm:$0xff]
    %v147 = vld [vmem:[%s0 + $0xd8] sm:$0xff]
    %v148 = vld [vmem:[%s0 + $0xe0] sm:$0xff]
    %v149 = vld [vmem:[%s0 + $0xe8] sm:$0xff]
    %v150 = vpack.c.bf16 %v121, %v120
    %v151 = vpack.c.bf16 %v123, %v122
    %v152 = vpack.c.bf16 %v125, %v124
    %v153 = vpack.c.bf16 %v127, %v126
    %v154 = vpack.c.bf16 %v129, %v128
    %v155 = vpack.c.bf16 %v131, %v130
    %v156 = vpack.c.bf16 %v133, %v132
    %v157 = vpack.c.bf16 %v135, %v134
    %v158 = vpack.c.bf16 %v137, %v136
    %v159 = vpack.c.bf16 %v139, %v138
    %v160 = vpack.c.bf16 %v141, %v140
    %v161 = vpack.c.bf16 %v143, %v142
    %v162 = vpack.c.bf16 %v145, %v144
    %v163 = vpack.c.bf16 %v147, %v146
    %v164 = vpack.c.bf16 %v149, %v148
    %v165 = vld [vmem:[#allocation3] sm:$0xff]
    %v166 = vld [vmem:[#allocation3 + $0x8] sm:$0xff]
    %v167 = vld [vmem:[#allocation3 + $0x10] sm:$0xff]
    %v168 = vld [vmem:[#allocation3 + $0x18] sm:$0xff]
    %v169 = vld [vmem:[#allocation3 + $0x20] sm:$0xff]
    %v170 = vld [vmem:[#allocation3 + $0x28] sm:$0xff]
    %v171 = vld [vmem:[#allocation3 + $0x30] sm:$0x33]
    %v172 = vld [vmem:[#allocation3 + $0x38] sm:$0x33]
    %v181 = vunpack.c.l.b16 %v165
    %v182 = vunpack.c.h.b16 %v165
    %v183 = vunpack.c.l.b16 %v166
    %v184 = vunpack.c.h.b16 %v166
    %v185 = vunpack.c.l.b16 %v167
    %v186 = vunpack.c.h.b16 %v167
    %v187 = vunpack.c.l.b16 %v168
    %v188 = vunpack.c.h.b16 %v168
    %v189 = vunpack.c.l.b16 %v169
    %v190 = vunpack.c.h.b16 %v169
    %v191 = vunpack.c.l.b16 %v170
    %v192 = vunpack.c.h.b16 %v170
    %v193 = vunpack.c.l.b16 %v171
    %v194 = vunpack.c.h.b16 %v171
    %v195 = vunpack.c.l.b16 %v172
    %v196 = vunpack.c.h.b16 %v172
    %v197 = vpack.c.b16 %v185, %v181
    %v198 = vpack.c.b16 %v186, %v182
    %v199 = vpack.c.b16 %v187, %v183
    %v200 = vpack.c.b16 %v188, %v184
    %v201 = vpack.c.b16 %v193, %v189
    %v202 = vpack.c.b16 %v194, %v190
    %v203 = vpack.c.b16 %v195, %v191
    %v204 = vpack.c.b16 %v196, %v192
    %vm209 = vcmask 228352
    %v211 = vsel %vm209, %v150, 0
    %v214 = vsel %vm209, %v151, 0
    %v217 = vsel %vm209, %v152, 0
    %v220 = vsel %vm209, %v153, 0
    %v223 = vsel %vm209, %v154, 0
    %v226 = vsel %vm209, %v155, 0
    %v229 = vsel %vm209, %v156, 0
    %v232 = vsel %vm209, %v157, 0
    %v235 = vsel %vm209, %v158, 0
    %v238 = vsel %vm209, %v159, 0
    %v241 = vsel %vm209, %v160, 0
    %v244 = vsel %vm209, %v161, 0
    %v247 = vsel %vm209, %v162, 0
    %v250 = vsel %vm209, %v163, 0
    %v253 = vsel %vm209, %v164, 0
    %vm255 = vcmask 1045504
    %v257 = vsel %vm255, %v201, 0
    %v260 = vsel %vm255, %v202, 0
    %v263 = vsel %vm255, %v203, 0
    %v266 = vsel %vm255, %v204, 0
    %268 = vmatprep.subr.bf16.mxu0 0
    %269 = vmatpush1.bf16.msra.mxu0 0
    %270 = vmatprep.subr.bf16.mxu0 0
    %271 = vmatpush1.bf16.msra.mxu0 0
    %272 = vmatprep.subr.bf16.mxu0 0
    %273 = vmatpush1.bf16.msra.mxu0 0
    %274 = vmatprep.subr.bf16.mxu0 0
    %275 = vmatpush1.bf16.msra.mxu0 0
    %276 = vmatprep.subr.bf16.mxu0 0
    %277 = vmatpush1.bf16.msra.mxu0 0
    %278 = vmatprep.subr.bf16.mxu0 0
    %279 = vmatpush1.bf16.msra.mxu0 0
    %280 = vmatprep.subr.bf16.mxu0 %v260
    %281 = vmatpush1.bf16.msra.mxu0 %v257
    %282 = vmatprep.subr.bf16.mxu0 %v198
    %283 = vmatpush1.bf16.msra.mxu0 %v197
    %284 = vmatprep.subr.bf16.mxu0 0
    %285 = vmatpush2.bf16.msra.mxu0 0
    %286 = vmatprep.subr.bf16.mxu0 0
    %287 = vmatpush2.bf16.msra.mxu0 0
    %288 = vmatprep.subr.bf16.mxu0 0
    %289 = vmatpush2.bf16.msra.mxu0 0
    %290 = vmatprep.subr.bf16.mxu0 0
    %291 = vmatpush2.bf16.msra.mxu0 0
    %292 = vmatprep.subr.bf16.mxu0 0
    %293 = vmatpush2.bf16.msra.mxu0 0
    %294 = vmatprep.subr.bf16.mxu0 0
    %295 = vmatpush2.bf16.msra.mxu0 0
    %296 = vmatprep.subr.bf16.mxu0 0
    %297 = vmatpush2.bf16.msra.mxu0 0
    %298 = vmatprep.subr.bf16.mxu0 0
    %299 = vmatpush2.bf16.msra.mxu0 0
    %300 = vmatprep.mubr.bf16.mxu0 0
    %301 = vmatmul.mubr.bf16.gmra.mxu0 %v211
    %v302 = vpop.f32.mrf.mxu0
    %v303 = vadd.f32 0.0, %v302
    %v304 = vpop.f32.mrf.mxu0
    %v305 = vadd.f32 0.0, %v304
    %v306 = vpop.f32.mrf.mxu0
    %v307 = vadd.f32 0.0, %v306
    %v308 = vpop.f32.mrf.mxu0
    %v309 = vadd.f32 0.0, %v308
    %310 = vmatprep.mubr.bf16.mxu0 0
    %311 = vmatmul.mubr.bf16.gmra.mxu0 %v214
    %v312 = vpop.f32.mrf.mxu0
    %v313 = vadd.f32 0.0, %v312
    %v314 = vpop.f32.mrf.mxu0
    %v315 = vadd.f32 0.0, %v314
    %v316 = vpop.f32.mrf.mxu0
    %v317 = vadd.f32 0.0, %v316
    %v318 = vpop.f32.mrf.mxu0
    %v319 = vadd.f32 0.0, %v318
    %320 = vmatprep.mubr.bf16.mxu0 0
    %321 = vmatmul.mubr.bf16.gmra.mxu0 %v217
    %v322 = vpop.f32.mrf.mxu0
    %v323 = vadd.f32 0.0, %v322
    %v324 = vpop.f32.mrf.mxu0
    %v325 = vadd.f32 0.0, %v324
    %v326 = vpop.f32.mrf.mxu0
    %v327 = vadd.f32 0.0, %v326
    %v328 = vpop.f32.mrf.mxu0
    %v329 = vadd.f32 0.0, %v328
    %330 = vmatprep.mubr.bf16.mxu0 0
    %331 = vmatmul.mubr.bf16.gmra.mxu0 %v220
    %v332 = vpop.f32.mrf.mxu0
    %v333 = vadd.f32 0.0, %v332
    %v334 = vpop.f32.mrf.mxu0
    %v335 = vadd.f32 0.0, %v334
    %v336 = vpop.f32.mrf.mxu0
    %v337 = vadd.f32 0.0, %v336
    %v338 = vpop.f32.mrf.mxu0
    %v339 = vadd.f32 0.0, %v338
    %340 = vmatprep.mubr.bf16.mxu0 0
    %341 = vmatmul.mubr.bf16.gmra.mxu0 %v223
    %v342 = vpop.f32.mrf.mxu0
    %v343 = vadd.f32 0.0, %v342
    %v344 = vpop.f32.mrf.mxu0
    %v345 = vadd.f32 0.0, %v344
    %v346 = vpop.f32.mrf.mxu0
    %v347 = vadd.f32 0.0, %v346
    %v348 = vpop.f32.mrf.mxu0
    %v349 = vadd.f32 0.0, %v348
    %350 = vmatprep.mubr.bf16.mxu0 0
    %351 = vmatmul.mubr.bf16.gmra.mxu0 %v226
    %v352 = vpop.f32.mrf.mxu0
    %v353 = vadd.f32 0.0, %v352
    %v354 = vpop.f32.mrf.mxu0
    %v355 = vadd.f32 0.0, %v354
    %v356 = vpop.f32.mrf.mxu0
    %v357 = vadd.f32 0.0, %v356
    %v358 = vpop.f32.mrf.mxu0
    %v359 = vadd.f32 0.0, %v358
    %360 = vmatprep.mubr.bf16.mxu0 0
    %361 = vmatmul.mubr.bf16.gmra.mxu0 %v229
    %v362 = vpop.f32.mrf.mxu0
    %v363 = vadd.f32 0.0, %v362
    %v364 = vpop.f32.mrf.mxu0
    %v365 = vadd.f32 0.0, %v364
    %v366 = vpop.f32.mrf.mxu0
    %v367 = vadd.f32 0.0, %v366
    %v368 = vpop.f32.mrf.mxu0
    %v369 = vadd.f32 0.0, %v368
    %370 = vmatprep.mubr.bf16.mxu0 0
    %371 = vmatmul.mubr.bf16.gmra.mxu0 %v232
    %v372 = vpop.f32.mrf.mxu0
    %v373 = vadd.f32 0.0, %v372
    %v374 = vpop.f32.mrf.mxu0
    %v375 = vadd.f32 0.0, %v374
    %v376 = vpop.f32.mrf.mxu0
    %v377 = vadd.f32 0.0, %v376
    %v378 = vpop.f32.mrf.mxu0
    %v379 = vadd.f32 0.0, %v378
    %380 = vmatprep.mubr.bf16.mxu0 0
    %381 = vmatmul.mubr.bf16.gmra.mxu0 %v235
    %v382 = vpop.f32.mrf.mxu0
    %v383 = vadd.f32 0.0, %v382
    %v384 = vpop.f32.mrf.mxu0
    %v385 = vadd.f32 0.0, %v384
    %v386 = vpop.f32.mrf.mxu0
    %v387 = vadd.f32 0.0, %v386
    %v388 = vpop.f32.mrf.mxu0
    %v389 = vadd.f32 0.0, %v388
    %390 = vmatprep.mubr.bf16.mxu0 0
    %391 = vmatmul.mubr.bf16.gmra.mxu0 %v238
    %v392 = vpop.f32.mrf.mxu0
    %v393 = vadd.f32 0.0, %v392
    %v394 = vpop.f32.mrf.mxu0
    %v395 = vadd.f32 0.0, %v394
    %v396 = vpop.f32.mrf.mxu0
    %v397 = vadd.f32 0.0, %v396
    %v398 = vpop.f32.mrf.mxu0
    %v399 = vadd.f32 0.0, %v398
    %400 = vmatprep.mubr.bf16.mxu0 0
    %401 = vmatmul.mubr.bf16.gmra.mxu0 %v241
    %v402 = vpop.f32.mrf.mxu0
    %v403 = vadd.f32 0.0, %v402
    %v404 = vpop.f32.mrf.mxu0
    %v405 = vadd.f32 0.0, %v404
    %v406 = vpop.f32.mrf.mxu0
    %v407 = vadd.f32 0.0, %v406
    %v408 = vpop.f32.mrf.mxu0
    %v409 = vadd.f32 0.0, %v408
    %410 = vmatprep.mubr.bf16.mxu0 0
    %411 = vmatmul.mubr.bf16.gmra.mxu0 %v244
    %v412 = vpop.f32.mrf.mxu0
    %v413 = vadd.f32 0.0, %v412
    %v414 = vpop.f32.mrf.mxu0
    %v415 = vadd.f32 0.0, %v414
    %v416 = vpop.f32.mrf.mxu0
    %v417 = vadd.f32 0.0, %v416
    %v418 = vpop.f32.mrf.mxu0
    %v419 = vadd.f32 0.0, %v418
    %420 = vmatprep.mubr.bf16.mxu0 0
    %421 = vmatmul.mubr.bf16.gmra.mxu0 %v247
    %v422 = vpop.f32.mrf.mxu0
    %v423 = vadd.f32 0.0, %v422
    %v424 = vpop.f32.mrf.mxu0
    %v425 = vadd.f32 0.0, %v424
    %v426 = vpop.f32.mrf.mxu0
    %v427 = vadd.f32 0.0, %v426
    %v428 = vpop.f32.mrf.mxu0
    %v429 = vadd.f32 0.0, %v428
    %430 = vmatprep.mubr.bf16.mxu0 0
    %431 = vmatmul.mubr.bf16.gmra.mxu0 %v250
    %v432 = vpop.f32.mrf.mxu0
    %v433 = vadd.f32 0.0, %v432
    %v434 = vpop.f32.mrf.mxu0
    %v435 = vadd.f32 0.0, %v434
    %v436 = vpop.f32.mrf.mxu0
    %v437 = vadd.f32 0.0, %v436
    %v438 = vpop.f32.mrf.mxu0
    %v439 = vadd.f32 0.0, %v438
    %440 = vmatprep.mubr.bf16.mxu0 0
    %441 = vmatmul.mubr.bf16.gmra.mxu0 %v253
    %v442 = vpop.f32.mrf.mxu0
    %v443 = vpop.f32.mrf.mxu0
    %v444 = vpop.f32.mrf.mxu0
    %v445 = vpop.f32.mrf.mxu0
    %446 = vdwg.mxu0
    %447 = vmatprep.subr.bf16.mxu0 0
    %448 = vmatpush1.bf16.msra.mxu0 0
    %449 = vmatprep.subr.bf16.mxu0 0
    %450 = vmatpush1.bf16.msra.mxu0 0
    %451 = vmatprep.subr.bf16.mxu0 0
    %452 = vmatpush1.bf16.msra.mxu0 0
    %453 = vmatprep.subr.bf16.mxu0 0
    %454 = vmatpush1.bf16.msra.mxu0 0
    %455 = vmatprep.subr.bf16.mxu0 0
    %456 = vmatpush1.bf16.msra.mxu0 0
    %457 = vmatprep.subr.bf16.mxu0 0
    %458 = vmatpush1.bf16.msra.mxu0 0
    %459 = vmatprep.subr.bf16.mxu0 %v266
    %460 = vmatpush1.bf16.msra.mxu0 %v263
    %461 = vmatprep.subr.bf16.mxu0 %v200
    %462 = vmatpush1.bf16.msra.mxu0 %v199
    %463 = vmatprep.subr.bf16.mxu0 0
    %464 = vmatpush2.bf16.msra.mxu0 0
    %465 = vmatprep.subr.bf16.mxu0 0
    %466 = vmatpush2.bf16.msra.mxu0 0
    %467 = vmatprep.subr.bf16.mxu0 0
    %468 = vmatpush2.bf16.msra.mxu0 0
    %469 = vmatprep.subr.bf16.mxu0 0
    %470 = vmatpush2.bf16.msra.mxu0 0
    %471 = vmatprep.subr.bf16.mxu0 0
    %472 = vmatpush2.bf16.msra.mxu0 0
    %473 = vmatprep.subr.bf16.mxu0 0
    %474 = vmatpush2.bf16.msra.mxu0 0
    %475 = vmatprep.subr.bf16.mxu0 0
    %476 = vmatpush2.bf16.msra.mxu0 0
    %477 = vmatprep.subr.bf16.mxu0 0
    %478 = vmatpush2.bf16.msra.mxu0 0
    %479 = vmatprep.mubr.bf16.mxu0 0
    %480 = vmatmul.mubr.bf16.gmra.mxu0 %v211
    %v481 = vpop.f32.mrf.mxu0
    %v482 = vadd.f32 0.0, %v481
    %v483 = vpop.f32.mrf.mxu0
    %v484 = vadd.f32 0.0, %v483
    %v485 = vpop.f32.mrf.mxu0
    %v486 = vadd.f32 0.0, %v485
    %v487 = vpop.f32.mrf.mxu0
    %v488 = vadd.f32 0.0, %v487
    %489 = vmatprep.mubr.bf16.mxu0 0
    %490 = vmatmul.mubr.bf16.gmra.mxu0 %v214
    %v491 = vpop.f32.mrf.mxu0
    %v492 = vadd.f32 0.0, %v491
    %v493 = vpop.f32.mrf.mxu0
    %v494 = vadd.f32 0.0, %v493
    %v495 = vpop.f32.mrf.mxu0
    %v496 = vadd.f32 0.0, %v495
    %v497 = vpop.f32.mrf.mxu0
    %v498 = vadd.f32 0.0, %v497
    %499 = vmatprep.mubr.bf16.mxu0 0
    %500 = vmatmul.mubr.bf16.gmra.mxu0 %v217
    %v501 = vpop.f32.mrf.mxu0
    %v502 = vadd.f32 0.0, %v501
    %v503 = vpop.f32.mrf.mxu0
    %v504 = vadd.f32 0.0, %v503
    %v505 = vpop.f32.mrf.mxu0
    %v506 = vadd.f32 0.0, %v505
    %v507 = vpop.f32.mrf.mxu0
    %v508 = vadd.f32 0.0, %v507
    %509 = vmatprep.mubr.bf16.mxu0 0
    %510 = vmatmul.mubr.bf16.gmra.mxu0 %v220
    %v511 = vpop.f32.mrf.mxu0
    %v512 = vadd.f32 0.0, %v511
    %v513 = vpop.f32.mrf.mxu0
    %v514 = vadd.f32 0.0, %v513
    %v515 = vpop.f32.mrf.mxu0
    %v516 = vadd.f32 0.0, %v515
    %v517 = vpop.f32.mrf.mxu0
    %v518 = vadd.f32 0.0, %v517
    %519 = vmatprep.mubr.bf16.mxu0 0
    %520 = vmatmul.mubr.bf16.gmra.mxu0 %v223
    %v521 = vpop.f32.mrf.mxu0
    %v522 = vadd.f32 0.0, %v521
    %v523 = vpop.f32.mrf.mxu0
    %v524 = vadd.f32 0.0, %v523
    %v525 = vpop.f32.mrf.mxu0
    %v526 = vadd.f32 0.0, %v525
    %v527 = vpop.f32.mrf.mxu0
    %v528 = vadd.f32 0.0, %v527
    %529 = vmatprep.mubr.bf16.mxu0 0
    %530 = vmatmul.mubr.bf16.gmra.mxu0 %v226
    %v531 = vpop.f32.mrf.mxu0
    %v532 = vadd.f32 0.0, %v531
    %v533 = vpop.f32.mrf.mxu0
    %v534 = vadd.f32 0.0, %v533
    %v535 = vpop.f32.mrf.mxu0
    %v536 = vadd.f32 0.0, %v535
    %v537 = vpop.f32.mrf.mxu0
    %v538 = vadd.f32 0.0, %v537
    %539 = vmatprep.mubr.bf16.mxu0 0
    %540 = vmatmul.mubr.bf16.gmra.mxu0 %v229
    %v541 = vpop.f32.mrf.mxu0
    %v542 = vadd.f32 0.0, %v541
    %v543 = vpop.f32.mrf.mxu0
    %v544 = vadd.f32 0.0, %v543
    %v545 = vpop.f32.mrf.mxu0
    %v546 = vadd.f32 0.0, %v545
    %v547 = vpop.f32.mrf.mxu0
    %v548 = vadd.f32 0.0, %v547
    %549 = vmatprep.mubr.bf16.mxu0 0
    %550 = vmatmul.mubr.bf16.gmra.mxu0 %v232
    %v551 = vpop.f32.mrf.mxu0
    %v552 = vadd.f32 0.0, %v551
    %v553 = vpop.f32.mrf.mxu0
    %v554 = vadd.f32 0.0, %v553
    %v555 = vpop.f32.mrf.mxu0
    %v556 = vadd.f32 0.0, %v555
    %v557 = vpop.f32.mrf.mxu0
    %v558 = vadd.f32 0.0, %v557
    %559 = vmatprep.mubr.bf16.mxu0 0
    %560 = vmatmul.mubr.bf16.gmra.mxu0 %v235
    %v561 = vpop.f32.mrf.mxu0
    %v562 = vadd.f32 0.0, %v561
    %v563 = vpop.f32.mrf.mxu0
    %v564 = vadd.f32 0.0, %v563
    %v565 = vpop.f32.mrf.mxu0
    %v566 = vadd.f32 0.0, %v565
    %v567 = vpop.f32.mrf.mxu0
    %v568 = vadd.f32 0.0, %v567
    %569 = vmatprep.mubr.bf16.mxu0 0
    %570 = vmatmul.mubr.bf16.gmra.mxu0 %v238
    %v571 = vpop.f32.mrf.mxu0
    %v572 = vadd.f32 0.0, %v571
    %v573 = vpop.f32.mrf.mxu0
    %v574 = vadd.f32 0.0, %v573
    %v575 = vpop.f32.mrf.mxu0
    %v576 = vadd.f32 0.0, %v575
    %v577 = vpop.f32.mrf.mxu0
    %v578 = vadd.f32 0.0, %v577
    %579 = vmatprep.mubr.bf16.mxu0 0
    %580 = vmatmul.mubr.bf16.gmra.mxu0 %v241
    %v581 = vpop.f32.mrf.mxu0
    %v582 = vadd.f32 0.0, %v581
    %v583 = vpop.f32.mrf.mxu0
    %v584 = vadd.f32 0.0, %v583
    %v585 = vpop.f32.mrf.mxu0
    %v586 = vadd.f32 0.0, %v585
    %v587 = vpop.f32.mrf.mxu0
    %v588 = vadd.f32 0.0, %v587
    %589 = vmatprep.mubr.bf16.mxu0 0
    %590 = vmatmul.mubr.bf16.gmra.mxu0 %v244
    %v591 = vpop.f32.mrf.mxu0
    %v592 = vadd.f32 0.0, %v591
    %v593 = vpop.f32.mrf.mxu0
    %v594 = vadd.f32 0.0, %v593
    %v595 = vpop.f32.mrf.mxu0
    %v596 = vadd.f32 0.0, %v595
    %v597 = vpop.f32.mrf.mxu0
    %v598 = vadd.f32 0.0, %v597
    %599 = vmatprep.mubr.bf16.mxu0 0
    %600 = vmatmul.mubr.bf16.gmra.mxu0 %v247
    %v601 = vpop.f32.mrf.mxu0
    %v602 = vadd.f32 0.0, %v601
    %v603 = vpop.f32.mrf.mxu0
    %v604 = vadd.f32 0.0, %v603
    %v605 = vpop.f32.mrf.mxu0
    %v606 = vadd.f32 0.0, %v605
    %v607 = vpop.f32.mrf.mxu0
    %v608 = vadd.f32 0.0, %v607
    %609 = vmatprep.mubr.bf16.mxu0 0
    %610 = vmatmul.mubr.bf16.gmra.mxu0 %v250
    %v611 = vpop.f32.mrf.mxu0
    %v612 = vadd.f32 0.0, %v611
    %v613 = vpop.f32.mrf.mxu0
    %v614 = vadd.f32 0.0, %v613
    %v615 = vpop.f32.mrf.mxu0
    %v616 = vadd.f32 0.0, %v615
    %v617 = vpop.f32.mrf.mxu0
    %v618 = vadd.f32 0.0, %v617
    %619 = vmatprep.mubr.bf16.mxu0 0
    %620 = vmatmul.mubr.bf16.gmra.mxu0 %v253
    %v621 = vpop.f32.mrf.mxu0
    %v622 = vpop.f32.mrf.mxu0
    %v623 = vpop.f32.mrf.mxu0
    %v624 = vpop.f32.mrf.mxu0
    %625 = vdwg.mxu0
    %s626 = scalar_lea.vmem [#allocation3], 128
    %v627 = vld [vmem:[%s626] sm:$0xff]
    %v628 = vld [vmem:[%s626 + $0x8] sm:$0xff]
    %v629 = vld [vmem:[%s626 + $0x10] sm:$0xff]
    %v630 = vld [vmem:[%s626 + $0x18] sm:$0xff]
    %v631 = vld [vmem:[%s626 + $0x20] sm:$0xff]
    %v632 = vld [vmem:[%s626 + $0x28] sm:$0xff]
    %v633 = vld [vmem:[%s626 + $0x30] sm:$0x33]
    %v634 = vld [vmem:[%s626 + $0x38] sm:$0x33]
    %v643 = vunpack.c.l.b16 %v627
    %v644 = vunpack.c.h.b16 %v627
    %v645 = vunpack.c.l.b16 %v628
    %v646 = vunpack.c.h.b16 %v628
    %v647 = vunpack.c.l.b16 %v629
    %v648 = vunpack.c.h.b16 %v629
    %v649 = vunpack.c.l.b16 %v630
    %v650 = vunpack.c.h.b16 %v630
    %v651 = vunpack.c.l.b16 %v631
    %v652 = vunpack.c.h.b16 %v631
    %v653 = vunpack.c.l.b16 %v632
    %v654 = vunpack.c.h.b16 %v632
    %v655 = vunpack.c.l.b16 %v633
    %v656 = vunpack.c.h.b16 %v633
    %v657 = vunpack.c.l.b16 %v634
    %v658 = vunpack.c.h.b16 %v634
    %v659 = vpack.c.b16 %v647, %v643
    %v660 = vpack.c.b16 %v648, %v644
    %v661 = vpack.c.b16 %v649, %v645
    %v662 = vpack.c.b16 %v650, %v646
    %v663 = vpack.c.b16 %v655, %v651
    %v664 = vpack.c.b16 %v656, %v652
    %v665 = vpack.c.b16 %v657, %v653
    %v666 = vpack.c.b16 %v658, %v654
    %v672 = vsel %vm255, %v663, 0
    %v675 = vsel %vm255, %v664, 0
    %v678 = vsel %vm255, %v665, 0
    %v681 = vsel %vm255, %v666, 0
    %683 = vmatprep.subr.bf16.mxu0 0
    %684 = vmatpush1.bf16.msra.mxu0 0
    %685 = vmatprep.subr.bf16.mxu0 0
    %686 = vmatpush1.bf16.msra.mxu0 0
    %687 = vmatprep.subr.bf16.mxu0 0
    %688 = vmatpush1.bf16.msra.mxu0 0
    %689 = vmatprep.subr.bf16.mxu0 0
    %690 = vmatpush1.bf16.msra.mxu0 0
    %691 = vmatprep.subr.bf16.mxu0 0
    %692 = vmatpush1.bf16.msra.mxu0 0
    %693 = vmatprep.subr.bf16.mxu0 0
    %694 = vmatpush1.bf16.msra.mxu0 0
    %695 = vmatprep.subr.bf16.mxu0 %v675
    %696 = vmatpush1.bf16.msra.mxu0 %v672
    %697 = vmatprep.subr.bf16.mxu0 %v660
    %698 = vmatpush1.bf16.msra.mxu0 %v659
    %699 = vmatprep.subr.bf16.mxu0 0
    %700 = vmatpush2.bf16.msra.mxu0 0
    %701 = vmatprep.subr.bf16.mxu0 0
    %702 = vmatpush2.bf16.msra.mxu0 0
    %703 = vmatprep.subr.bf16.mxu0 0
    %704 = vmatpush2.bf16.msra.mxu0 0
    %705 = vmatprep.subr.bf16.mxu0 0
    %706 = vmatpush2.bf16.msra.mxu0 0
    %707 = vmatprep.subr.bf16.mxu0 0
    %708 = vmatpush2.bf16.msra.mxu0 0
    %709 = vmatprep.subr.bf16.mxu0 0
    %710 = vmatpush2.bf16.msra.mxu0 0
    %711 = vmatprep.subr.bf16.mxu0 0
    %712 = vmatpush2.bf16.msra.mxu0 0
    %713 = vmatprep.subr.bf16.mxu0 0
    %714 = vmatpush2.bf16.msra.mxu0 0
    %715 = vmatprep.mubr.bf16.mxu0 0
    %716 = vmatmul.mubr.bf16.gmra.mxu0 %v211
    %v717 = vpop.f32.mrf.mxu0
    %v718 = vpop.f32.mrf.mxu0
    %v719 = vpop.f32.mrf.mxu0
    %v720 = vadd.f32 0.0, %v719
    %v721 = vpop.f32.mrf.mxu0
    %v722 = vadd.f32 0.0, %v721
    %723 = vmatprep.mubr.bf16.mxu0 0
    %724 = vmatmul.mubr.bf16.gmra.mxu0 %v214
    %v725 = vpop.f32.mrf.mxu0
    %v726 = vadd.f32 0.0, %v725
    %v727 = vpop.f32.mrf.mxu0
    %v728 = vadd.f32 0.0, %v727
    %v729 = vpop.f32.mrf.mxu0
    %v730 = vadd.f32 0.0, %v729
    %v731 = vpop.f32.mrf.mxu0
    %v732 = vadd.f32 0.0, %v731
    %733 = vmatprep.mubr.bf16.mxu0 0
    %734 = vmatmul.mubr.bf16.gmra.mxu0 %v217
    %v735 = vpop.f32.mrf.mxu0
    %v736 = vadd.f32 0.0, %v735
    %v737 = vpop.f32.mrf.mxu0
    %v738 = vadd.f32 0.0, %v737
    %v739 = vpop.f32.mrf.mxu0
    %v740 = vadd.f32 0.0, %v739
    %v741 = vpop.f32.mrf.mxu0
    %v742 = vadd.f32 0.0, %v741
    %743 = vmatprep.mubr.bf16.mxu0 0
    %744 = vmatmul.mubr.bf16.gmra.mxu0 %v220
    %v745 = vpop.f32.mrf.mxu0
    %v746 = vadd.f32 0.0, %v745
    %v747 = vpop.f32.mrf.mxu0
    %v748 = vadd.f32 0.0, %v747
    %v749 = vpop.f32.mrf.mxu0
    %v750 = vadd.f32 0.0, %v749
    %v751 = vpop.f32.mrf.mxu0
    %v752 = vadd.f32 0.0, %v751
    %753 = vmatprep.mubr.bf16.mxu0 0
    %754 = vmatmul.mubr.bf16.gmra.mxu0 %v223
    %v755 = vpop.f32.mrf.mxu0
    %v756 = vadd.f32 0.0, %v755
    %v757 = vpop.f32.mrf.mxu0
    %v758 = vadd.f32 0.0, %v757
    %v759 = vpop.f32.mrf.mxu0
    %v760 = vadd.f32 0.0, %v759
    %v761 = vpop.f32.mrf.mxu0
    %v762 = vadd.f32 0.0, %v761
    %763 = vmatprep.mubr.bf16.mxu0 0
    %764 = vmatmul.mubr.bf16.gmra.mxu0 %v226
    %v765 = vpop.f32.mrf.mxu0
    %v766 = vadd.f32 0.0, %v765
    %v767 = vpop.f32.mrf.mxu0
    %v768 = vadd.f32 0.0, %v767
    %v769 = vpop.f32.mrf.mxu0
    %v770 = vadd.f32 0.0, %v769
    %v771 = vpop.f32.mrf.mxu0
    %v772 = vadd.f32 0.0, %v771
    %773 = vmatprep.mubr.bf16.mxu0 0
    %774 = vmatmul.mubr.bf16.gmra.mxu0 %v229
    %v775 = vpop.f32.mrf.mxu0
    %v776 = vadd.f32 0.0, %v775
    %v777 = vpop.f32.mrf.mxu0
    %v778 = vadd.f32 0.0, %v777
    %v779 = vpop.f32.mrf.mxu0
    %v780 = vadd.f32 0.0, %v779
    %v781 = vpop.f32.mrf.mxu0
    %v782 = vadd.f32 0.0, %v781
    %783 = vmatprep.mubr.bf16.mxu0 0
    %784 = vmatmul.mubr.bf16.gmra.mxu0 %v232
    %v785 = vpop.f32.mrf.mxu0
    %v786 = vadd.f32 0.0, %v785
    %v787 = vpop.f32.mrf.mxu0
    %v788 = vadd.f32 0.0, %v787
    %v789 = vpop.f32.mrf.mxu0
    %v790 = vadd.f32 0.0, %v789
    %v791 = vpop.f32.mrf.mxu0
    %v792 = vadd.f32 0.0, %v791
    %793 = vmatprep.mubr.bf16.mxu0 0
    %794 = vmatmul.mubr.bf16.gmra.mxu0 %v235
    %v795 = vpop.f32.mrf.mxu0
    %v796 = vadd.f32 0.0, %v795
    %v797 = vpop.f32.mrf.mxu0
    %v798 = vadd.f32 0.0, %v797
    %v799 = vpop.f32.mrf.mxu0
    %v800 = vadd.f32 0.0, %v799
    %v801 = vpop.f32.mrf.mxu0
    %v802 = vadd.f32 0.0, %v801
    %803 = vmatprep.mubr.bf16.mxu0 0
    %804 = vmatmul.mubr.bf16.gmra.mxu0 %v238
    %v805 = vpop.f32.mrf.mxu0
    %v806 = vadd.f32 0.0, %v805
    %v807 = vpop.f32.mrf.mxu0
    %v808 = vadd.f32 0.0, %v807
    %v809 = vpop.f32.mrf.mxu0
    %v810 = vadd.f32 0.0, %v809
    %v811 = vpop.f32.mrf.mxu0
    %v812 = vadd.f32 0.0, %v811
    %813 = vmatprep.mubr.bf16.mxu0 0
    %814 = vmatmul.mubr.bf16.gmra.mxu0 %v241
    %v815 = vpop.f32.mrf.mxu0
    %v816 = vadd.f32 0.0, %v815
    %v817 = vpop.f32.mrf.mxu0
    %v818 = vadd.f32 0.0, %v817
    %v819 = vpop.f32.mrf.mxu0
    %v820 = vadd.f32 0.0, %v819
    %v821 = vpop.f32.mrf.mxu0
    %v822 = vadd.f32 0.0, %v821
    %823 = vmatprep.mubr.bf16.mxu0 0
    %824 = vmatmul.mubr.bf16.gmra.mxu0 %v244
    %v825 = vpop.f32.mrf.mxu0
    %v826 = vadd.f32 0.0, %v825
    %v827 = vpop.f32.mrf.mxu0
    %v828 = vadd.f32 0.0, %v827
    %v829 = vpop.f32.mrf.mxu0
    %v830 = vadd.f32 0.0, %v829
    %v831 = vpop.f32.mrf.mxu0
    %v832 = vadd.f32 0.0, %v831
    %833 = vmatprep.mubr.bf16.mxu0 0
    %834 = vmatmul.mubr.bf16.gmra.mxu0 %v247
    %v835 = vpop.f32.mrf.mxu0
    %v836 = vadd.f32 0.0, %v835
    %v837 = vpop.f32.mrf.mxu0
    %v838 = vadd.f32 0.0, %v837
    %v839 = vpop.f32.mrf.mxu0
    %v840 = vadd.f32 0.0, %v839
    %v841 = vpop.f32.mrf.mxu0
    %v842 = vadd.f32 0.0, %v841
    %843 = vmatprep.mubr.bf16.mxu0 0
    %844 = vmatmul.mubr.bf16.gmra.mxu0 %v250
    %v845 = vpop.f32.mrf.mxu0
    %v846 = vadd.f32 0.0, %v845
    %v847 = vpop.f32.mrf.mxu0
    %v848 = vadd.f32 0.0, %v847
    %v849 = vpop.f32.mrf.mxu0
    %v850 = vadd.f32 0.0, %v849
    %v851 = vpop.f32.mrf.mxu0
    %v852 = vadd.f32 0.0, %v851
    %853 = vmatprep.mubr.bf16.mxu0 0
    %854 = vmatmul.mubr.bf16.gmra.mxu0 %v253
    %v855 = vpop.f32.mrf.mxu0
    %v856 = vadd.f32 0.0, %v855
    %v857 = vpop.f32.mrf.mxu0
    %v858 = vadd.f32 0.0, %v857
    %v859 = vpop.f32.mrf.mxu0
    %v860 = vpop.f32.mrf.mxu0
    %861 = vdwg.mxu0
    %862 = vmatprep.subr.bf16.mxu0 0
    %863 = vmatpush1.bf16.msra.mxu0 0
    %864 = vmatprep.subr.bf16.mxu0 0
    %865 = vmatpush1.bf16.msra.mxu0 0
    %866 = vmatprep.subr.bf16.mxu0 0
    %867 = vmatpush1.bf16.msra.mxu0 0
    %868 = vmatprep.subr.bf16.mxu0 0
    %869 = vmatpush1.bf16.msra.mxu0 0
    %870 = vmatprep.subr.bf16.mxu0 0
    %871 = vmatpush1.bf16.msra.mxu0 0
    %872 = vmatprep.subr.bf16.mxu0 0
    %873 = vmatpush1.bf16.msra.mxu0 0
    %874 = vmatprep.subr.bf16.mxu0 %v681
    %875 = vmatpush1.bf16.msra.mxu0 %v678
    %876 = vmatprep.subr.bf16.mxu0 %v662
    %877 = vmatpush1.bf16.msra.mxu0 %v661
    %878 = vmatprep.subr.bf16.mxu0 0
    %879 = vmatpush2.bf16.msra.mxu0 0
    %880 = vmatprep.subr.bf16.mxu0 0
    %881 = vmatpush2.bf16.msra.mxu0 0
    %882 = vmatprep.subr.bf16.mxu0 0
    %883 = vmatpush2.bf16.msra.mxu0 0
    %884 = vmatprep.subr.bf16.mxu0 0
    %885 = vmatpush2.bf16.msra.mxu0 0
    %886 = vmatprep.subr.bf16.mxu0 0
    %887 = vmatpush2.bf16.msra.mxu0 0
    %888 = vmatprep.subr.bf16.mxu0 0
    %889 = vmatpush2.bf16.msra.mxu0 0
    %890 = vmatprep.subr.bf16.mxu0 0
    %891 = vmatpush2.bf16.msra.mxu0 0
    %892 = vmatprep.subr.bf16.mxu0 0
    %893 = vmatpush2.bf16.msra.mxu0 0
    %894 = vmatprep.mubr.bf16.mxu0 0
    %895 = vmatmul.mubr.bf16.gmra.mxu0 %v211
    %v896 = vpop.f32.mrf.mxu0
    %v897 = vpop.f32.mrf.mxu0
    %v898 = vpop.f32.mrf.mxu0
    %v899 = vadd.f32 0.0, %v898
    %v900 = vpop.f32.mrf.mxu0
    %v901 = vadd.f32 0.0, %v900
    %902 = vmatprep.mubr.bf16.mxu0 0
    %903 = vmatmul.mubr.bf16.gmra.mxu0 %v214
    %v904 = vpop.f32.mrf.mxu0
    %v905 = vadd.f32 0.0, %v904
    %v906 = vpop.f32.mrf.mxu0
    %v907 = vadd.f32 0.0, %v906
    %v908 = vpop.f32.mrf.mxu0
    %v909 = vadd.f32 0.0, %v908
    %v910 = vpop.f32.mrf.mxu0
    %v911 = vadd.f32 0.0, %v910
    %912 = vmatprep.mubr.bf16.mxu0 0
    %913 = vmatmul.mubr.bf16.gmra.mxu0 %v217
    %v914 = vpop.f32.mrf.mxu0
    %v915 = vadd.f32 0.0, %v914
    %v916 = vpop.f32.mrf.mxu0
    %v917 = vadd.f32 0.0, %v916
    %v918 = vpop.f32.mrf.mxu0
    %v919 = vadd.f32 0.0, %v918
    %v920 = vpop.f32.mrf.mxu0
    %v921 = vadd.f32 0.0, %v920
    %922 = vmatprep.mubr.bf16.mxu0 0
    %923 = vmatmul.mubr.bf16.gmra.mxu0 %v220
    %v924 = vpop.f32.mrf.mxu0
    %v925 = vadd.f32 0.0, %v924
    %v926 = vpop.f32.mrf.mxu0
    %v927 = vadd.f32 0.0, %v926
    %v928 = vpop.f32.mrf.mxu0
    %v929 = vadd.f32 0.0, %v928
    %v930 = vpop.f32.mrf.mxu0
    %v931 = vadd.f32 0.0, %v930
    %932 = vmatprep.mubr.bf16.mxu0 0
    %933 = vmatmul.mubr.bf16.gmra.mxu0 %v223
    %v934 = vpop.f32.mrf.mxu0
    %v935 = vadd.f32 0.0, %v934
    %v936 = vpop.f32.mrf.mxu0
    %v937 = vadd.f32 0.0, %v936
    %v938 = vpop.f32.mrf.mxu0
    %v939 = vadd.f32 0.0, %v938
    %v940 = vpop.f32.mrf.mxu0
    %v941 = vadd.f32 0.0, %v940
    %942 = vmatprep.mubr.bf16.mxu0 0
    %943 = vmatmul.mubr.bf16.gmra.mxu0 %v226
    %v944 = vpop.f32.mrf.mxu0
    %v945 = vadd.f32 0.0, %v944
    %v946 = vpop.f32.mrf.mxu0
    %v947 = vadd.f32 0.0, %v946
    %v948 = vpop.f32.mrf.mxu0
    %v949 = vadd.f32 0.0, %v948
    %v950 = vpop.f32.mrf.mxu0
    %v951 = vadd.f32 0.0, %v950
    %952 = vmatprep.mubr.bf16.mxu0 0
    %953 = vmatmul.mubr.bf16.gmra.mxu0 %v229
    %v954 = vpop.f32.mrf.mxu0
    %v955 = vadd.f32 0.0, %v954
    %v956 = vpop.f32.mrf.mxu0
    %v957 = vadd.f32 0.0, %v956
    %v958 = vpop.f32.mrf.mxu0
    %v959 = vadd.f32 0.0, %v958
    %v960 = vpop.f32.mrf.mxu0
    %v961 = vadd.f32 0.0, %v960
    %962 = vmatprep.mubr.bf16.mxu0 0
    %963 = vmatmul.mubr.bf16.gmra.mxu0 %v232
    %v964 = vpop.f32.mrf.mxu0
    %v965 = vadd.f32 0.0, %v964
    %v966 = vpop.f32.mrf.mxu0
    %v967 = vadd.f32 0.0, %v966
    %v968 = vpop.f32.mrf.mxu0
    %v969 = vadd.f32 0.0, %v968
    %v970 = vpop.f32.mrf.mxu0
    %v971 = vadd.f32 0.0, %v970
    %972 = vmatprep.mubr.bf16.mxu0 0
    %973 = vmatmul.mubr.bf16.gmra.mxu0 %v235
    %v974 = vpop.f32.mrf.mxu0
    %v975 = vadd.f32 0.0, %v974
    %v976 = vpop.f32.mrf.mxu0
    %v977 = vadd.f32 0.0, %v976
    %v978 = vpop.f32.mrf.mxu0
    %v979 = vadd.f32 0.0, %v978
    %v980 = vpop.f32.mrf.mxu0
    %v981 = vadd.f32 0.0, %v980
    %982 = vmatprep.mubr.bf16.mxu0 0
    %983 = vmatmul.mubr.bf16.gmra.mxu0 %v238
    %v984 = vpop.f32.mrf.mxu0
    %v985 = vadd.f32 0.0, %v984
    %v986 = vpop.f32.mrf.mxu0
    %v987 = vadd.f32 0.0, %v986
    %v988 = vpop.f32.mrf.mxu0
    %v989 = vadd.f32 0.0, %v988
    %v990 = vpop.f32.mrf.mxu0
    %v991 = vadd.f32 0.0, %v990
    %992 = vmatprep.mubr.bf16.mxu0 0
    %993 = vmatmul.mubr.bf16.gmra.mxu0 %v241
    %v994 = vpop.f32.mrf.mxu0
    %v995 = vadd.f32 0.0, %v994
    %v996 = vpop.f32.mrf.mxu0
    %v997 = vadd.f32 0.0, %v996
    %v998 = vpop.f32.mrf.mxu0
    %v999 = vadd.f32 0.0, %v998
    %v1000 = vpop.f32.mrf.mxu0
    %v1001 = vadd.f32 0.0, %v1000
    %1002 = vmatprep.mubr.bf16.mxu0 0
    %1003 = vmatmul.mubr.bf16.gmra.mxu0 %v244
    %v1004 = vpop.f32.mrf.mxu0
    %v1005 = vadd.f32 0.0, %v1004
    %v1006 = vpop.f32.mrf.mxu0
    %v1007 = vadd.f32 0.0, %v1006
    %v1008 = vpop.f32.mrf.mxu0
    %v1009 = vadd.f32 0.0, %v1008
    %v1010 = vpop.f32.mrf.mxu0
    %v1011 = vadd.f32 0.0, %v1010
    %1012 = vmatprep.mubr.bf16.mxu0 0
    %1013 = vmatmul.mubr.bf16.gmra.mxu0 %v247
    %v1014 = vpop.f32.mrf.mxu0
    %v1015 = vadd.f32 0.0, %v1014
    %v1016 = vpop.f32.mrf.mxu0
    %v1017 = vadd.f32 0.0, %v1016
    %v1018 = vpop.f32.mrf.mxu0
    %v1019 = vadd.f32 0.0, %v1018
    %v1020 = vpop.f32.mrf.mxu0
    %v1021 = vadd.f32 0.0, %v1020
    %1022 = vmatprep.mubr.bf16.mxu0 0
    %1023 = vmatmul.mubr.bf16.gmra.mxu0 %v250
    %v1024 = vpop.f32.mrf.mxu0
    %v1025 = vadd.f32 0.0, %v1024
    %v1026 = vpop.f32.mrf.mxu0
    %v1027 = vadd.f32 0.0, %v1026
    %v1028 = vpop.f32.mrf.mxu0
    %v1029 = vadd.f32 0.0, %v1028
    %v1030 = vpop.f32.mrf.mxu0
    %v1031 = vadd.f32 0.0, %v1030
    %1032 = vmatprep.mubr.bf16.mxu0 0
    %1033 = vmatmul.mubr.bf16.gmra.mxu0 %v253
    %v1034 = vpop.f32.mrf.mxu0
    %v1035 = vadd.f32 0.0, %v1034
    %v1036 = vpop.f32.mrf.mxu0
    %v1037 = vadd.f32 0.0, %v1036
    %v1038 = vpop.f32.mrf.mxu0
    %v1039 = vpop.f32.mrf.mxu0
    %1040 = vdwg.mxu0
    %v1041 = vadd.f32 %v303, %v720
    %v1042 = vadd.f32 %v305, %v722
    %v1043 = vadd.f32 %v482, %v899
    %v1044 = vadd.f32 %v484, %v901
    %v1045 = vadd.f32 %v307, %v726
    %v1046 = vadd.f32 %v309, %v728
    %v1047 = vadd.f32 %v486, %v905
    %v1048 = vadd.f32 %v488, %v907
    %v1049 = vadd.f32 %v313, %v730
    %v1050 = vadd.f32 %v315, %v732
    %v1051 = vadd.f32 %v492, %v909
    %v1052 = vadd.f32 %v494, %v911
    %v1053 = vadd.f32 %v317, %v736
    %v1054 = vadd.f32 %v319, %v738
    %v1055 = vadd.f32 %v496, %v915
    %v1056 = vadd.f32 %v498, %v917
    %v1057 = vadd.f32 %v323, %v740
    %v1058 = vadd.f32 %v325, %v742
    %v1059 = vadd.f32 %v502, %v919
    %v1060 = vadd.f32 %v504, %v921
    %v1061 = vadd.f32 %v327, %v746
    %v1062 = vadd.f32 %v329, %v748
    %v1063 = vadd.f32 %v506, %v925
    %v1064 = vadd.f32 %v508, %v927
    %v1065 = vadd.f32 %v333, %v750
    %v1066 = vadd.f32 %v335, %v752
    %v1067 = vadd.f32 %v512, %v929
    %v1068 = vadd.f32 %v514, %v931
    %v1069 = vadd.f32 %v337, %v756
    %v1070 = vadd.f32 %v339, %v758
    %v1071 = vadd.f32 %v516, %v935
    %v1072 = vadd.f32 %v518, %v937
    %v1073 = vadd.f32 %v343, %v760
    %v1074 = vadd.f32 %v345, %v762
    %v1075 = vadd.f32 %v522, %v939
    %v1076 = vadd.f32 %v524, %v941
    %v1077 = vadd.f32 %v347, %v766
    %v1078 = vadd.f32 %v349, %v768
    %v1079 = vadd.f32 %v526, %v945
    %v1080 = vadd.f32 %v528, %v947
    %v1081 = vadd.f32 %v353, %v770
    %v1082 = vadd.f32 %v355, %v772
    %v1083 = vadd.f32 %v532, %v949
    %v1084 = vadd.f32 %v534, %v951
    %v1085 = vadd.f32 %v357, %v776
    %v1086 = vadd.f32 %v359, %v778
    %v1087 = vadd.f32 %v536, %v955
    %v1088 = vadd.f32 %v538, %v957
    %v1089 = vadd.f32 %v363, %v780
    %v1090 = vadd.f32 %v365, %v782
    %v1091 = vadd.f32 %v542, %v959
    %v1092 = vadd.f32 %v544, %v961
    %v1093 = vadd.f32 %v367, %v786
    %v1094 = vadd.f32 %v369, %v788
    %v1095 = vadd.f32 %v546, %v965
    %v1096 = vadd.f32 %v548, %v967
    %v1097 = vadd.f32 %v373, %v790
    %v1098 = vadd.f32 %v375, %v792
    %v1099 = vadd.f32 %v552, %v969
    %v1100 = vadd.f32 %v554, %v971
    %v1101 = vadd.f32 %v377, %v796
    %v1102 = vadd.f32 %v379, %v798
    %v1103 = vadd.f32 %v556, %v975
    %v1104 = vadd.f32 %v558, %v977
    %v1105 = vadd.f32 %v383, %v800
    %v1106 = vadd.f32 %v385, %v802
    %v1107 = vadd.f32 %v562, %v979
    %v1108 = vadd.f32 %v564, %v981
    %v1109 = vadd.f32 %v387, %v806
    %v1110 = vadd.f32 %v389, %v808
    %v1111 = vadd.f32 %v566, %v985
    %v1112 = vadd.f32 %v568, %v987
    %v1113 = vadd.f32 %v393, %v810
    %v1114 = vadd.f32 %v395, %v812
    %v1115 = vadd.f32 %v572, %v989
    %v1116 = vadd.f32 %v574, %v991
    %v1117 = vadd.f32 %v397, %v816
    %v1118 = vadd.f32 %v399, %v818
    %v1119 = vadd.f32 %v576, %v995
    %v1120 = vadd.f32 %v578, %v997
    %v1121 = vadd.f32 %v403, %v820
    %v1122 = vadd.f32 %v405, %v822
    %v1123 = vadd.f32 %v582, %v999
    %v1124 = vadd.f32 %v584, %v1001
    %v1125 = vadd.f32 %v407, %v826
    %v1126 = vadd.f32 %v409, %v828
    %v1127 = vadd.f32 %v586, %v1005
    %v1128 = vadd.f32 %v588, %v1007
    %v1129 = vadd.f32 %v413, %v830
    %v1130 = vadd.f32 %v415, %v832
    %v1131 = vadd.f32 %v592, %v1009
    %v1132 = vadd.f32 %v594, %v1011
    %v1133 = vadd.f32 %v417, %v836
    %v1134 = vadd.f32 %v419, %v838
    %v1135 = vadd.f32 %v596, %v1015
    %v1136 = vadd.f32 %v598, %v1017
    %v1137 = vadd.f32 %v423, %v840
    %v1138 = vadd.f32 %v425, %v842
    %v1139 = vadd.f32 %v602, %v1019
    %v1140 = vadd.f32 %v604, %v1021
    %v1141 = vadd.f32 %v427, %v846
    %v1142 = vadd.f32 %v429, %v848
    %v1143 = vadd.f32 %v606, %v1025
    %v1144 = vadd.f32 %v608, %v1027
    %v1145 = vadd.f32 %v433, %v850
    %v1146 = vadd.f32 %v435, %v852
    %v1147 = vadd.f32 %v612, %v1029
    %v1148 = vadd.f32 %v614, %v1031
    %v1149 = vadd.f32 %v437, %v856
    %v1150 = vadd.f32 %v439, %v858
    %v1151 = vadd.f32 %v616, %v1035
    %v1152 = vadd.f32 %v618, %v1037
    %s1153 = scalar_lea.vmem [#allocation3], 256
    %v1154 = vld [vmem:[%s1153] sm:$0xff]
    %v1155 = vld [vmem:[%s1153 + $0x8] sm:$0xff]
    %v1156 = vld [vmem:[%s1153 + $0x10] sm:$0xff]
    %v1157 = vld [vmem:[%s1153 + $0x18] sm:$0xff]
    %v1158 = vld [vmem:[%s1153 + $0x20] sm:$0xff]
    %v1159 = vld [vmem:[%s1153 + $0x28] sm:$0xff]
    %v1160 = vld [vmem:[%s1153 + $0x30] sm:$0x33]
    %v1161 = vld [vmem:[%s1153 + $0x38] sm:$0x33]
    %v1170 = vunpack.c.l.b16 %v1154
    %v1171 = vunpack.c.h.b16 %v1154
    %v1172 = vunpack.c.l.b16 %v1155
    %v1173 = vunpack.c.h.b16 %v1155
    %v1174 = vunpack.c.l.b16 %v1156
    %v1175 = vunpack.c.h.b16 %v1156
    %v1176 = vunpack.c.l.b16 %v1157
    %v1177 = vunpack.c.h.b16 %v1157
    %v1178 = vunpack.c.l.b16 %v1158
    %v1179 = vunpack.c.h.b16 %v1158
    %v1180 = vunpack.c.l.b16 %v1159
    %v1181 = vunpack.c.h.b16 %v1159
    %v1182 = vunpack.c.l.b16 %v1160
    %v1183 = vunpack.c.h.b16 %v1160
    %v1184 = vunpack.c.l.b16 %v1161
    %v1185 = vunpack.c.h.b16 %v1161
    %v1186 = vpack.c.b16 %v1174, %v1170
    %v1187 = vpack.c.b16 %v1175, %v1171
    %v1188 = vpack.c.b16 %v1176, %v1172
    %v1189 = vpack.c.b16 %v1177, %v1173
    %v1190 = vpack.c.b16 %v1182, %v1178
    %v1191 = vpack.c.b16 %v1183, %v1179
    %v1192 = vpack.c.b16 %v1184, %v1180
    %v1193 = vpack.c.b16 %v1185, %v1181
    %v1199 = vsel %vm255, %v1190, 0
    %v1202 = vsel %vm255, %v1191, 0
    %v1205 = vsel %vm255, %v1192, 0
    %v1208 = vsel %vm255, %v1193, 0
    %1210 = vmatprep.subr.bf16.mxu0 0
    %1211 = vmatpush1.bf16.msra.mxu0 0
    %1212 = vmatprep.subr.bf16.mxu0 0
    %1213 = vmatpush1.bf16.msra.mxu0 0
    %1214 = vmatprep.subr.bf16.mxu0 0
    %1215 = vmatpush1.bf16.msra.mxu0 0
    %1216 = vmatprep.subr.bf16.mxu0 0
    %1217 = vmatpush1.bf16.msra.mxu0 0
    %1218 = vmatprep.subr.bf16.mxu0 0
    %1219 = vmatpush1.bf16.msra.mxu0 0
    %1220 = vmatprep.subr.bf16.mxu0 0
    %1221 = vmatpush1.bf16.msra.mxu0 0
    %1222 = vmatprep.subr.bf16.mxu0 %v1202
    %1223 = vmatpush1.bf16.msra.mxu0 %v1199
    %1224 = vmatprep.subr.bf16.mxu0 %v1187
    %1225 = vmatpush1.bf16.msra.mxu0 %v1186
    %1226 = vmatprep.subr.bf16.mxu0 0
    %1227 = vmatpush2.bf16.msra.mxu0 0
    %1228 = vmatprep.subr.bf16.mxu0 0
    %1229 = vmatpush2.bf16.msra.mxu0 0
    %1230 = vmatprep.subr.bf16.mxu0 0
    %1231 = vmatpush2.bf16.msra.mxu0 0
    %1232 = vmatprep.subr.bf16.mxu0 0
    %1233 = vmatpush2.bf16.msra.mxu0 0
    %1234 = vmatprep.subr.bf16.mxu0 0
    %1235 = vmatpush2.bf16.msra.mxu0 0
    %1236 = vmatprep.subr.bf16.mxu0 0
    %1237 = vmatpush2.bf16.msra.mxu0 0
    %1238 = vmatprep.subr.bf16.mxu0 0
    %1239 = vmatpush2.bf16.msra.mxu0 0
    %1240 = vmatprep.subr.bf16.mxu0 0
    %1241 = vmatpush2.bf16.msra.mxu0 0
    %1242 = vmatprep.mubr.bf16.mxu0 0
    %1243 = vmatmul.mubr.bf16.gmra.mxu0 %v211
    %v1244 = vpop.f32.mrf.mxu0
    %v1245 = vpop.f32.mrf.mxu0
    %v1246 = vpop.f32.mrf.mxu0
    %v1247 = vpop.f32.mrf.mxu0
    %1248 = vmatprep.mubr.bf16.mxu0 0
    %1249 = vmatmul.mubr.bf16.gmra.mxu0 %v214
    %v1250 = vpop.f32.mrf.mxu0
    %v1251 = vadd.f32 0.0, %v1250
    %v1252 = vpop.f32.mrf.mxu0
    %v1253 = vadd.f32 0.0, %v1252
    %v1254 = vpop.f32.mrf.mxu0
    %v1255 = vadd.f32 0.0, %v1254
    %v1256 = vpop.f32.mrf.mxu0
    %v1257 = vadd.f32 0.0, %v1256
    %1258 = vmatprep.mubr.bf16.mxu0 0
    %1259 = vmatmul.mubr.bf16.gmra.mxu0 %v217
    %v1260 = vpop.f32.mrf.mxu0
    %v1261 = vadd.f32 0.0, %v1260
    %v1262 = vpop.f32.mrf.mxu0
    %v1263 = vadd.f32 0.0, %v1262
    %v1264 = vpop.f32.mrf.mxu0
    %v1265 = vadd.f32 0.0, %v1264
    %v1266 = vpop.f32.mrf.mxu0
    %v1267 = vadd.f32 0.0, %v1266
    %1268 = vmatprep.mubr.bf16.mxu0 0
    %1269 = vmatmul.mubr.bf16.gmra.mxu0 %v220
    %v1270 = vpop.f32.mrf.mxu0
    %v1271 = vadd.f32 0.0, %v1270
    %v1272 = vpop.f32.mrf.mxu0
    %v1273 = vadd.f32 0.0, %v1272
    %v1274 = vpop.f32.mrf.mxu0
    %v1275 = vadd.f32 0.0, %v1274
    %v1276 = vpop.f32.mrf.mxu0
    %v1277 = vadd.f32 0.0, %v1276
    %1278 = vmatprep.mubr.bf16.mxu0 0
    %1279 = vmatmul.mubr.bf16.gmra.mxu0 %v223
    %v1280 = vpop.f32.mrf.mxu0
    %v1281 = vadd.f32 0.0, %v1280
    %v1282 = vpop.f32.mrf.mxu0
    %v1283 = vadd.f32 0.0, %v1282
    %v1284 = vpop.f32.mrf.mxu0
    %v1285 = vadd.f32 0.0, %v1284
    %v1286 = vpop.f32.mrf.mxu0
    %v1287 = vadd.f32 0.0, %v1286
    %1288 = vmatprep.mubr.bf16.mxu0 0
    %1289 = vmatmul.mubr.bf16.gmra.mxu0 %v226
    %v1290 = vpop.f32.mrf.mxu0
    %v1291 = vadd.f32 0.0, %v1290
    %v1292 = vpop.f32.mrf.mxu0
    %v1293 = vadd.f32 0.0, %v1292
    %v1294 = vpop.f32.mrf.mxu0
    %v1295 = vadd.f32 0.0, %v1294
    %v1296 = vpop.f32.mrf.mxu0
    %v1297 = vadd.f32 0.0, %v1296
    %1298 = vmatprep.mubr.bf16.mxu0 0
    %1299 = vmatmul.mubr.bf16.gmra.mxu0 %v229
    %v1300 = vpop.f32.mrf.mxu0
    %v1301 = vadd.f32 0.0, %v1300
    %v1302 = vpop.f32.mrf.mxu0
    %v1303 = vadd.f32 0.0, %v1302
    %v1304 = vpop.f32.mrf.mxu0
    %v1305 = vadd.f32 0.0, %v1304
    %v1306 = vpop.f32.mrf.mxu0
    %v1307 = vadd.f32 0.0, %v1306
    %1308 = vmatprep.mubr.bf16.mxu0 0
    %1309 = vmatmul.mubr.bf16.gmra.mxu0 %v232
    %v1310 = vpop.f32.mrf.mxu0
    %v1311 = vadd.f32 0.0, %v1310
    %v1312 = vpop.f32.mrf.mxu0
    %v1313 = vadd.f32 0.0, %v1312
    %v1314 = vpop.f32.mrf.mxu0
    %v1315 = vadd.f32 0.0, %v1314
    %v1316 = vpop.f32.mrf.mxu0
    %v1317 = vadd.f32 0.0, %v1316
    %1318 = vmatprep.mubr.bf16.mxu0 0
    %1319 = vmatmul.mubr.bf16.gmra.mxu0 %v235
    %v1320 = vpop.f32.mrf.mxu0
    %v1321 = vadd.f32 0.0, %v1320
    %v1322 = vpop.f32.mrf.mxu0
    %v1323 = vadd.f32 0.0, %v1322
    %v1324 = vpop.f32.mrf.mxu0
    %v1325 = vadd.f32 0.0, %v1324
    %v1326 = vpop.f32.mrf.mxu0
    %v1327 = vadd.f32 0.0, %v1326
    %1328 = vmatprep.mubr.bf16.mxu0 0
    %1329 = vmatmul.mubr.bf16.gmra.mxu0 %v238
    %v1330 = vpop.f32.mrf.mxu0
    %v1331 = vadd.f32 0.0, %v1330
    %v1332 = vpop.f32.mrf.mxu0
    %v1333 = vadd.f32 0.0, %v1332
    %v1334 = vpop.f32.mrf.mxu0
    %v1335 = vadd.f32 0.0, %v1334
    %v1336 = vpop.f32.mrf.mxu0
    %v1337 = vadd.f32 0.0, %v1336
    %1338 = vmatprep.mubr.bf16.mxu0 0
    %1339 = vmatmul.mubr.bf16.gmra.mxu0 %v241
    %v1340 = vpop.f32.mrf.mxu0
    %v1341 = vadd.f32 0.0, %v1340
    %v1342 = vpop.f32.mrf.mxu0
    %v1343 = vadd.f32 0.0, %v1342
    %v1344 = vpop.f32.mrf.mxu0
    %v1345 = vadd.f32 0.0, %v1344
    %v1346 = vpop.f32.mrf.mxu0
    %v1347 = vadd.f32 0.0, %v1346
    %1348 = vmatprep.mubr.bf16.mxu0 0
    %1349 = vmatmul.mubr.bf16.gmra.mxu0 %v244
    %v1350 = vpop.f32.mrf.mxu0
    %v1351 = vadd.f32 0.0, %v1350
    %v1352 = vpop.f32.mrf.mxu0
    %v1353 = vadd.f32 0.0, %v1352
    %v1354 = vpop.f32.mrf.mxu0
    %v1355 = vadd.f32 0.0, %v1354
    %v1356 = vpop.f32.mrf.mxu0
    %v1357 = vadd.f32 0.0, %v1356
    %1358 = vmatprep.mubr.bf16.mxu0 0
    %1359 = vmatmul.mubr.bf16.gmra.mxu0 %v247
    %v1360 = vpop.f32.mrf.mxu0
    %v1361 = vadd.f32 0.0, %v1360
    %v1362 = vpop.f32.mrf.mxu0
    %v1363 = vadd.f32 0.0, %v1362
    %v1364 = vpop.f32.mrf.mxu0
    %v1365 = vadd.f32 0.0, %v1364
    %v1366 = vpop.f32.mrf.mxu0
    %v1367 = vadd.f32 0.0, %v1366
    %1368 = vmatprep.mubr.bf16.mxu0 0
    %1369 = vmatmul.mubr.bf16.gmra.mxu0 %v250
    %v1370 = vpop.f32.mrf.mxu0
    %v1371 = vadd.f32 0.0, %v1370
    %v1372 = vpop.f32.mrf.mxu0
    %v1373 = vadd.f32 0.0, %v1372
    %v1374 = vpop.f32.mrf.mxu0
    %v1375 = vadd.f32 0.0, %v1374
    %v1376 = vpop.f32.mrf.mxu0
    %v1377 = vadd.f32 0.0, %v1376
    %1378 = vmatprep.mubr.bf16.mxu0 0
    %1379 = vmatmul.mubr.bf16.gmra.mxu0 %v253
    %v1380 = vpop.f32.mrf.mxu0
    %v1381 = vadd.f32 0.0, %v1380
    %v1382 = vpop.f32.mrf.mxu0
    %v1383 = vadd.f32 0.0, %v1382
    %v1384 = vpop.f32.mrf.mxu0
    %v1385 = vadd.f32 0.0, %v1384
    %v1386 = vpop.f32.mrf.mxu0
    %v1387 = vadd.f32 0.0, %v1386
    %1388 = vdwg.mxu0
    %1389 = vmatprep.subr.bf16.mxu0 0
    %1390 = vmatpush1.bf16.msra.mxu0 0
    %1391 = vmatprep.subr.bf16.mxu0 0
    %1392 = vmatpush1.bf16.msra.mxu0 0
    %1393 = vmatprep.subr.bf16.mxu0 0
    %1394 = vmatpush1.bf16.msra.mxu0 0
    %1395 = vmatprep.subr.bf16.mxu0 0
    %1396 = vmatpush1.bf16.msra.mxu0 0
    %1397 = vmatprep.subr.bf16.mxu0 0
    %1398 = vmatpush1.bf16.msra.mxu0 0
    %1399 = vmatprep.subr.bf16.mxu0 0
    %1400 = vmatpush1.bf16.msra.mxu0 0
    %1401 = vmatprep.subr.bf16.mxu0 %v1208
    %1402 = vmatpush1.bf16.msra.mxu0 %v1205
    %1403 = vmatprep.subr.bf16.mxu0 %v1189
    %1404 = vmatpush1.bf16.msra.mxu0 %v1188
    %1405 = vmatprep.subr.bf16.mxu0 0
    %1406 = vmatpush2.bf16.msra.mxu0 0
    %1407 = vmatprep.subr.bf16.mxu0 0
    %1408 = vmatpush2.bf16.msra.mxu0 0
    %1409 = vmatprep.subr.bf16.mxu0 0
    %1410 = vmatpush2.bf16.msra.mxu0 0
    %1411 = vmatprep.subr.bf16.mxu0 0
    %1412 = vmatpush2.bf16.msra.mxu0 0
    %1413 = vmatprep.subr.bf16.mxu0 0
    %1414 = vmatpush2.bf16.msra.mxu0 0
    %1415 = vmatprep.subr.bf16.mxu0 0
    %1416 = vmatpush2.bf16.msra.mxu0 0
    %1417 = vmatprep.subr.bf16.mxu0 0
    %1418 = vmatpush2.bf16.msra.mxu0 0
    %1419 = vmatprep.subr.bf16.mxu0 0
    %1420 = vmatpush2.bf16.msra.mxu0 0
    %1421 = vmatprep.mubr.bf16.mxu0 0
    %1422 = vmatmul.mubr.bf16.gmra.mxu0 %v211
    %v1423 = vpop.f32.mrf.mxu0
    %v1424 = vpop.f32.mrf.mxu0
    %v1425 = vpop.f32.mrf.mxu0
    %v1426 = vpop.f32.mrf.mxu0
    %1427 = vmatprep.mubr.bf16.mxu0 0
    %1428 = vmatmul.mubr.bf16.gmra.mxu0 %v214
    %v1429 = vpop.f32.mrf.mxu0
    %v1430 = vadd.f32 0.0, %v1429
    %v1431 = vpop.f32.mrf.mxu0
    %v1432 = vadd.f32 0.0, %v1431
    %v1433 = vpop.f32.mrf.mxu0
    %v1434 = vadd.f32 0.0, %v1433
    %v1435 = vpop.f32.mrf.mxu0
    %v1436 = vadd.f32 0.0, %v1435
    %1437 = vmatprep.mubr.bf16.mxu0 0
    %1438 = vmatmul.mubr.bf16.gmra.mxu0 %v217
    %v1439 = vpop.f32.mrf.mxu0
    %v1440 = vadd.f32 0.0, %v1439
    %v1441 = vpop.f32.mrf.mxu0
    %v1442 = vadd.f32 0.0, %v1441
    %v1443 = vpop.f32.mrf.mxu0
    %v1444 = vadd.f32 0.0, %v1443
    %v1445 = vpop.f32.mrf.mxu0
    %v1446 = vadd.f32 0.0, %v1445
    %1447 = vmatprep.mubr.bf16.mxu0 0
    %1448 = vmatmul.mubr.bf16.gmra.mxu0 %v220
    %v1449 = vpop.f32.mrf.mxu0
    %v1450 = vadd.f32 0.0, %v1449
    %v1451 = vpop.f32.mrf.mxu0
    %v1452 = vadd.f32 0.0, %v1451
    %v1453 = vpop.f32.mrf.mxu0
    %v1454 = vadd.f32 0.0, %v1453
    %v1455 = vpop.f32.mrf.mxu0
    %v1456 = vadd.f32 0.0, %v1455
    %1457 = vmatprep.mubr.bf16.mxu0 0
    %1458 = vmatmul.mubr.bf16.gmra.mxu0 %v223
    %v1459 = vpop.f32.mrf.mxu0
    %v1460 = vadd.f32 0.0, %v1459
    %v1461 = vpop.f32.mrf.mxu0
    %v1462 = vadd.f32 0.0, %v1461
    %v1463 = vpop.f32.mrf.mxu0
    %v1464 = vadd.f32 0.0, %v1463
    %v1465 = vpop.f32.mrf.mxu0
    %v1466 = vadd.f32 0.0, %v1465
    %1467 = vmatprep.mubr.bf16.mxu0 0
    %1468 = vmatmul.mubr.bf16.gmra.mxu0 %v226
    %v1469 = vpop.f32.mrf.mxu0
    %v1470 = vadd.f32 0.0, %v1469
    %v1471 = vpop.f32.mrf.mxu0
    %v1472 = vadd.f32 0.0, %v1471
    %v1473 = vpop.f32.mrf.mxu0
    %v1474 = vadd.f32 0.0, %v1473
    %v1475 = vpop.f32.mrf.mxu0
    %v1476 = vadd.f32 0.0, %v1475
    %1477 = vmatprep.mubr.bf16.mxu0 0
    %1478 = vmatmul.mubr.bf16.gmra.mxu0 %v229
    %v1479 = vpop.f32.mrf.mxu0
    %v1480 = vadd.f32 0.0, %v1479
    %v1481 = vpop.f32.mrf.mxu0
    %v1482 = vadd.f32 0.0, %v1481
    %v1483 = vpop.f32.mrf.mxu0
    %v1484 = vadd.f32 0.0, %v1483
    %v1485 = vpop.f32.mrf.mxu0
    %v1486 = vadd.f32 0.0, %v1485
    %1487 = vmatprep.mubr.bf16.mxu0 0
    %1488 = vmatmul.mubr.bf16.gmra.mxu0 %v232
    %v1489 = vpop.f32.mrf.mxu0
    %v1490 = vadd.f32 0.0, %v1489
    %v1491 = vpop.f32.mrf.mxu0
    %v1492 = vadd.f32 0.0, %v1491
    %v1493 = vpop.f32.mrf.mxu0
    %v1494 = vadd.f32 0.0, %v1493
    %v1495 = vpop.f32.mrf.mxu0
    %v1496 = vadd.f32 0.0, %v1495
    %1497 = vmatprep.mubr.bf16.mxu0 0
    %1498 = vmatmul.mubr.bf16.gmra.mxu0 %v235
    %v1499 = vpop.f32.mrf.mxu0
    %v1500 = vadd.f32 0.0, %v1499
    %v1501 = vpop.f32.mrf.mxu0
    %v1502 = vadd.f32 0.0, %v1501
    %v1503 = vpop.f32.mrf.mxu0
    %v1504 = vadd.f32 0.0, %v1503
    %v1505 = vpop.f32.mrf.mxu0
    %v1506 = vadd.f32 0.0, %v1505
    %1507 = vmatprep.mubr.bf16.mxu0 0
    %1508 = vmatmul.mubr.bf16.gmra.mxu0 %v238
    %v1509 = vpop.f32.mrf.mxu0
    %v1510 = vadd.f32 0.0, %v1509
    %v1511 = vpop.f32.mrf.mxu0
    %v1512 = vadd.f32 0.0, %v1511
    %v1513 = vpop.f32.mrf.mxu0
    %v1514 = vadd.f32 0.0, %v1513
    %v1515 = vpop.f32.mrf.mxu0
    %v1516 = vadd.f32 0.0, %v1515
    %1517 = vmatprep.mubr.bf16.mxu0 0
    %1518 = vmatmul.mubr.bf16.gmra.mxu0 %v241
    %v1519 = vpop.f32.mrf.mxu0
    %v1520 = vadd.f32 0.0, %v1519
    %v1521 = vpop.f32.mrf.mxu0
    %v1522 = vadd.f32 0.0, %v1521
    %v1523 = vpop.f32.mrf.mxu0
    %v1524 = vadd.f32 0.0, %v1523
    %v1525 = vpop.f32.mrf.mxu0
    %v1526 = vadd.f32 0.0, %v1525
    %1527 = vmatprep.mubr.bf16.mxu0 0
    %1528 = vmatmul.mubr.bf16.gmra.mxu0 %v244
    %v1529 = vpop.f32.mrf.mxu0
    %v1530 = vadd.f32 0.0, %v1529
    %v1531 = vpop.f32.mrf.mxu0
    %v1532 = vadd.f32 0.0, %v1531
    %v1533 = vpop.f32.mrf.mxu0
    %v1534 = vadd.f32 0.0, %v1533
    %v1535 = vpop.f32.mrf.mxu0
    %v1536 = vadd.f32 0.0, %v1535
    %1537 = vmatprep.mubr.bf16.mxu0 0
    %1538 = vmatmul.mubr.bf16.gmra.mxu0 %v247
    %v1539 = vpop.f32.mrf.mxu0
    %v1540 = vadd.f32 0.0, %v1539
    %v1541 = vpop.f32.mrf.mxu0
    %v1542 = vadd.f32 0.0, %v1541
    %v1543 = vpop.f32.mrf.mxu0
    %v1544 = vadd.f32 0.0, %v1543
    %v1545 = vpop.f32.mrf.mxu0
    %v1546 = vadd.f32 0.0, %v1545
    %1547 = vmatprep.mubr.bf16.mxu0 0
    %1548 = vmatmul.mubr.bf16.gmra.mxu0 %v250
    %v1549 = vpop.f32.mrf.mxu0
    %v1550 = vadd.f32 0.0, %v1549
    %v1551 = vpop.f32.mrf.mxu0
    %v1552 = vadd.f32 0.0, %v1551
    %v1553 = vpop.f32.mrf.mxu0
    %v1554 = vadd.f32 0.0, %v1553
    %v1555 = vpop.f32.mrf.mxu0
    %v1556 = vadd.f32 0.0, %v1555
    %1557 = vmatprep.mubr.bf16.mxu0 0
    %1558 = vmatmul.mubr.bf16.gmra.mxu0 %v253
    %v1559 = vpop.f32.mrf.mxu0
    %v1560 = vadd.f32 0.0, %v1559
    %v1561 = vpop.f32.mrf.mxu0
    %v1562 = vadd.f32 0.0, %v1561
    %v1563 = vpop.f32.mrf.mxu0
    %v1564 = vadd.f32 0.0, %v1563
    %v1565 = vpop.f32.mrf.mxu0
    %v1566 = vadd.f32 0.0, %v1565
    %1567 = vdwg.mxu0
    %v1568 = vadd.f32 %v1041, %v1251
    %v1569 = vadd.f32 %v1042, %v1253
    %v1570 = vadd.f32 %v1043, %v1430
    %v1571 = vadd.f32 %v1044, %v1432
    %v1572 = vadd.f32 %v1045, %v1255
    %v1573 = vadd.f32 %v1046, %v1257
    %v1574 = vadd.f32 %v1047, %v1434
    %v1575 = vadd.f32 %v1048, %v1436
    %v1576 = vadd.f32 %v1049, %v1261
    %v1577 = vadd.f32 %v1050, %v1263
    %v1578 = vadd.f32 %v1051, %v1440
    %v1579 = vadd.f32 %v1052, %v1442
    %v1580 = vadd.f32 %v1053, %v1265
    %v1581 = vadd.f32 %v1054, %v1267
    %v1582 = vadd.f32 %v1055, %v1444
    %v1583 = vadd.f32 %v1056, %v1446
    %v1584 = vadd.f32 %v1057, %v1271
    %v1585 = vadd.f32 %v1058, %v1273
    %v1586 = vadd.f32 %v1059, %v1450
    %v1587 = vadd.f32 %v1060, %v1452
    %v1588 = vadd.f32 %v1061, %v1275
    %v1589 = vadd.f32 %v1062, %v1277
    %v1590 = vadd.f32 %v1063, %v1454
    %v1591 = vadd.f32 %v1064, %v1456
    %v1592 = vadd.f32 %v1065, %v1281
    %v1593 = vadd.f32 %v1066, %v1283
    %v1594 = vadd.f32 %v1067, %v1460
    %v1595 = vadd.f32 %v1068, %v1462
    %v1596 = vadd.f32 %v1069, %v1285
    %v1597 = vadd.f32 %v1070, %v1287
    %v1598 = vadd.f32 %v1071, %v1464
    %v1599 = vadd.f32 %v1072, %v1466
    %v1600 = vadd.f32 %v1073, %v1291
    %v1601 = vadd.f32 %v1074, %v1293
    %v1602 = vadd.f32 %v1075, %v1470
    %v1603 = vadd.f32 %v1076, %v1472
    %v1604 = vadd.f32 %v1077, %v1295
    %v1605 = vadd.f32 %v1078, %v1297
    %v1606 = vadd.f32 %v1079, %v1474
    %v1607 = vadd.f32 %v1080, %v1476
    %v1608 = vadd.f32 %v1081, %v1301
    %v1609 = vadd.f32 %v1082, %v1303
    %v1610 = vadd.f32 %v1083, %v1480
    %v1611 = vadd.f32 %v1084, %v1482
    %v1612 = vadd.f32 %v1085, %v1305
    %v1613 = vadd.f32 %v1086, %v1307
    %v1614 = vadd.f32 %v1087, %v1484
    %v1615 = vadd.f32 %v1088, %v1486
    %v1616 = vadd.f32 %v1089, %v1311
    %v1617 = vadd.f32 %v1090, %v1313
    %v1618 = vadd.f32 %v1091, %v1490
    %v1619 = vadd.f32 %v1092, %v1492
    %v1620 = vadd.f32 %v1093, %v1315
    %v1621 = vadd.f32 %v1094, %v1317
    %v1622 = vadd.f32 %v1095, %v1494
    %v1623 = vadd.f32 %v1096, %v1496
    %v1624 = vadd.f32 %v1097, %v1321
    %v1625 = vadd.f32 %v1098, %v1323
    %v1626 = vadd.f32 %v1099, %v1500
    %v1627 = vadd.f32 %v1100, %v1502
    %v1628 = vadd.f32 %v1101, %v1325
    %v1629 = vadd.f32 %v1102, %v1327
    %v1630 = vadd.f32 %v1103, %v1504
    %v1631 = vadd.f32 %v1104, %v1506
    %v1632 = vadd.f32 %v1105, %v1331
    %v1633 = vadd.f32 %v1106, %v1333
    %v1634 = vadd.f32 %v1107, %v1510
    %v1635 = vadd.f32 %v1108, %v1512
    %v1636 = vadd.f32 %v1109, %v1335
    %v1637 = vadd.f32 %v1110, %v1337
    %v1638 = vadd.f32 %v1111, %v1514
    %v1639 = vadd.f32 %v1112, %v1516
    %v1640 = vadd.f32 %v1113, %v1341
    %v1641 = vadd.f32 %v1114, %v1343
    %v1642 = vadd.f32 %v1115, %v1520
    %v1643 = vadd.f32 %v1116, %v1522
    %v1644 = vadd.f32 %v1117, %v1345
    %v1645 = vadd.f32 %v1118, %v1347
    %v1646 = vadd.f32 %v1119, %v1524
    %v1647 = vadd.f32 %v1120, %v1526
    %v1648 = vadd.f32 %v1121, %v1351
    %v1649 = vadd.f32 %v1122, %v1353
    %v1650 = vadd.f32 %v1123, %v1530
    %v1651 = vadd.f32 %v1124, %v1532
    %v1652 = vadd.f32 %v1125, %v1355
    %v1653 = vadd.f32 %v1126, %v1357
    %v1654 = vadd.f32 %v1127, %v1534
    %v1655 = vadd.f32 %v1128, %v1536
    %v1656 = vadd.f32 %v1129, %v1361
    %v1657 = vadd.f32 %v1130, %v1363
    %v1658 = vadd.f32 %v1131, %v1540
    %v1659 = vadd.f32 %v1132, %v1542
    %v1660 = vadd.f32 %v1133, %v1365
    %v1661 = vadd.f32 %v1134, %v1367
    %v1662 = vadd.f32 %v1135, %v1544
    %v1663 = vadd.f32 %v1136, %v1546
    %v1664 = vadd.f32 %v1137, %v1371
    %v1665 = vadd.f32 %v1138, %v1373
    %v1666 = vadd.f32 %v1139, %v1550
    %v1667 = vadd.f32 %v1140, %v1552
    %v1668 = vadd.f32 %v1141, %v1375
    %v1669 = vadd.f32 %v1142, %v1377
    %v1670 = vadd.f32 %v1143, %v1554
    %v1671 = vadd.f32 %v1144, %v1556
    %v1672 = vadd.f32 %v1145, %v1381
    %v1673 = vadd.f32 %v1146, %v1383
    %v1674 = vadd.f32 %v1147, %v1560
    %v1675 = vadd.f32 %v1148, %v1562
    %v1676 = vadd.f32 %v1149, %v1385
    %v1677 = vadd.f32 %v1150, %v1387
    %v1678 = vadd.f32 %v1151, %v1564
    %v1679 = vadd.f32 %v1152, %v1566
    %s1680 = scalar_lea.vmem [#allocation3], 64
    %v1681 = vld [vmem:[%s1680] sm:$0xff]
    %v1682 = vld [vmem:[%s1680 + $0x8] sm:$0xff]
    %v1683 = vld [vmem:[%s1680 + $0x10] sm:$0xff]
    %v1684 = vld [vmem:[%s1680 + $0x18] sm:$0xff]
    %v1685 = vld [vmem:[%s1680 + $0x20] sm:$0xff]
    %v1686 = vld [vmem:[%s1680 + $0x28] sm:$0xff]
    %v1687 = vld [vmem:[%s1680 + $0x30] sm:$0x33]
    %v1688 = vld [vmem:[%s1680 + $0x38] sm:$0x33]
    %v1697 = vunpack.c.l.b16 %v1681
    %v1698 = vunpack.c.h.b16 %v1681
    %v1699 = vunpack.c.l.b16 %v1682
    %v1700 = vunpack.c.h.b16 %v1682
    %v1701 = vunpack.c.l.b16 %v1683
    %v1702 = vunpack.c.h.b16 %v1683
    %v1703 = vunpack.c.l.b16 %v1684
    %v1704 = vunpack.c.h.b16 %v1684
    %v1705 = vunpack.c.l.b16 %v1685
    %v1706 = vunpack.c.h.b16 %v1685
    %v1707 = vunpack.c.l.b16 %v1686
    %v1708 = vunpack.c.h.b16 %v1686
    %v1709 = vunpack.c.l.b16 %v1687
    %v1710 = vunpack.c.h.b16 %v1687
    %v1711 = vunpack.c.l.b16 %v1688
    %v1712 = vunpack.c.h.b16 %v1688
    %v1713 = vpack.c.b16 %v1701, %v1697
    %v1714 = vpack.c.b16 %v1702, %v1698
    %v1715 = vpack.c.b16 %v1703, %v1699
    %v1716 = vpack.c.b16 %v1704, %v1700
    %v1717 = vpack.c.b16 %v1709, %v1705
    %v1718 = vpack.c.b16 %v1710, %v1706
    %v1719 = vpack.c.b16 %v1711, %v1707
    %v1720 = vpack.c.b16 %v1712, %v1708
    %v1726 = vsel %vm255, %v1717, 0
    %v1729 = vsel %vm255, %v1718, 0
    %v1732 = vsel %vm255, %v1719, 0
    %v1735 = vsel %vm255, %v1720, 0
    %1737 = vmatprep.subr.bf16.mxu0 0
    %1738 = vmatpush1.bf16.msra.mxu0 0
    %1739 = vmatprep.subr.bf16.mxu0 0
    %1740 = vmatpush1.bf16.msra.mxu0 0
    %1741 = vmatprep.subr.bf16.mxu0 0
    %1742 = vmatpush1.bf16.msra.mxu0 0
    %1743 = vmatprep.subr.bf16.mxu0 0
    %1744 = vmatpush1.bf16.msra.mxu0 0
    %1745 = vmatprep.subr.bf16.mxu0 0
    %1746 = vmatpush1.bf16.msra.mxu0 0
    %1747 = vmatprep.subr.bf16.mxu0 0
    %1748 = vmatpush1.bf16.msra.mxu0 0
    %1749 = vmatprep.subr.bf16.mxu0 %v1729
    %1750 = vmatpush1.bf16.msra.mxu0 %v1726
    %1751 = vmatprep.subr.bf16.mxu0 %v1714
    %1752 = vmatpush1.bf16.msra.mxu0 %v1713
    %1753 = vmatprep.subr.bf16.mxu0 0
    %1754 = vmatpush2.bf16.msra.mxu0 0
    %1755 = vmatprep.subr.bf16.mxu0 0
    %1756 = vmatpush2.bf16.msra.mxu0 0
    %1757 = vmatprep.subr.bf16.mxu0 0
    %1758 = vmatpush2.bf16.msra.mxu0 0
    %1759 = vmatprep.subr.bf16.mxu0 0
    %1760 = vmatpush2.bf16.msra.mxu0 0
    %1761 = vmatprep.subr.bf16.mxu0 0
    %1762 = vmatpush2.bf16.msra.mxu0 0
    %1763 = vmatprep.subr.bf16.mxu0 0
    %1764 = vmatpush2.bf16.msra.mxu0 0
    %1765 = vmatprep.subr.bf16.mxu0 0
    %1766 = vmatpush2.bf16.msra.mxu0 0
    %1767 = vmatprep.subr.bf16.mxu0 0
    %1768 = vmatpush2.bf16.msra.mxu0 0
    %1769 = vmatprep.mubr.bf16.mxu0 0
    %1770 = vmatmul.mubr.bf16.gmra.mxu0 %v211
    %v1771 = vpop.f32.mrf.mxu0
    %v1772 = vadd.f32 0.0, %v1771
    %v1773 = vpop.f32.mrf.mxu0
    %v1774 = vadd.f32 0.0, %v1773
    %v1775 = vpop.f32.mrf.mxu0
    %v1776 = vadd.f32 0.0, %v1775
    %v1777 = vpop.f32.mrf.mxu0
    %v1778 = vadd.f32 0.0, %v1777
    %1779 = vmatprep.mubr.bf16.mxu0 0
    %1780 = vmatmul.mubr.bf16.gmra.mxu0 %v214
    %v1781 = vpop.f32.mrf.mxu0
    %v1782 = vadd.f32 0.0, %v1781
    %v1783 = vpop.f32.mrf.mxu0
    %v1784 = vadd.f32 0.0, %v1783
    %v1785 = vpop.f32.mrf.mxu0
    %v1786 = vadd.f32 0.0, %v1785
    %v1787 = vpop.f32.mrf.mxu0
    %v1788 = vadd.f32 0.0, %v1787
    %1789 = vmatprep.mubr.bf16.mxu0 0
    %1790 = vmatmul.mubr.bf16.gmra.mxu0 %v217
    %v1791 = vpop.f32.mrf.mxu0
    %v1792 = vadd.f32 0.0, %v1791
    %v1793 = vpop.f32.mrf.mxu0
    %v1794 = vadd.f32 0.0, %v1793
    %v1795 = vpop.f32.mrf.mxu0
    %v1796 = vadd.f32 0.0, %v1795
    %v1797 = vpop.f32.mrf.mxu0
    %v1798 = vadd.f32 0.0, %v1797
    %1799 = vmatprep.mubr.bf16.mxu0 0
    %1800 = vmatmul.mubr.bf16.gmra.mxu0 %v220
    %v1801 = vpop.f32.mrf.mxu0
    %v1802 = vadd.f32 0.0, %v1801
    %v1803 = vpop.f32.mrf.mxu0
    %v1804 = vadd.f32 0.0, %v1803
    %v1805 = vpop.f32.mrf.mxu0
    %v1806 = vadd.f32 0.0, %v1805
    %v1807 = vpop.f32.mrf.mxu0
    %v1808 = vadd.f32 0.0, %v1807
    %1809 = vmatprep.mubr.bf16.mxu0 0
    %1810 = vmatmul.mubr.bf16.gmra.mxu0 %v223
    %v1811 = vpop.f32.mrf.mxu0
    %v1812 = vadd.f32 0.0, %v1811
    %v1813 = vpop.f32.mrf.mxu0
    %v1814 = vadd.f32 0.0, %v1813
    %v1815 = vpop.f32.mrf.mxu0
    %v1816 = vadd.f32 0.0, %v1815
    %v1817 = vpop.f32.mrf.mxu0
    %v1818 = vadd.f32 0.0, %v1817
    %1819 = vmatprep.mubr.bf16.mxu0 0
    %1820 = vmatmul.mubr.bf16.gmra.mxu0 %v226
    %v1821 = vpop.f32.mrf.mxu0
    %v1822 = vadd.f32 0.0, %v1821
    %v1823 = vpop.f32.mrf.mxu0
    %v1824 = vadd.f32 0.0, %v1823
    %v1825 = vpop.f32.mrf.mxu0
    %v1826 = vadd.f32 0.0, %v1825
    %v1827 = vpop.f32.mrf.mxu0
    %v1828 = vadd.f32 0.0, %v1827
    %1829 = vmatprep.mubr.bf16.mxu0 0
    %1830 = vmatmul.mubr.bf16.gmra.mxu0 %v229
    %v1831 = vpop.f32.mrf.mxu0
    %v1832 = vadd.f32 0.0, %v1831
    %v1833 = vpop.f32.mrf.mxu0
    %v1834 = vadd.f32 0.0, %v1833
    %v1835 = vpop.f32.mrf.mxu0
    %v1836 = vadd.f32 0.0, %v1835
    %v1837 = vpop.f32.mrf.mxu0
    %v1838 = vadd.f32 0.0, %v1837
    %1839 = vmatprep.mubr.bf16.mxu0 0
    %1840 = vmatmul.mubr.bf16.gmra.mxu0 %v232
    %v1841 = vpop.f32.mrf.mxu0
    %v1842 = vadd.f32 0.0, %v1841
    %v1843 = vpop.f32.mrf.mxu0
    %v1844 = vadd.f32 0.0, %v1843
    %v1845 = vpop.f32.mrf.mxu0
    %v1846 = vadd.f32 0.0, %v1845
    %v1847 = vpop.f32.mrf.mxu0
    %v1848 = vadd.f32 0.0, %v1847
    %1849 = vmatprep.mubr.bf16.mxu0 0
    %1850 = vmatmul.mubr.bf16.gmra.mxu0 %v235
    %v1851 = vpop.f32.mrf.mxu0
    %v1852 = vadd.f32 0.0, %v1851
    %v1853 = vpop.f32.mrf.mxu0
    %v1854 = vadd.f32 0.0, %v1853
    %v1855 = vpop.f32.mrf.mxu0
    %v1856 = vadd.f32 0.0, %v1855
    %v1857 = vpop.f32.mrf.mxu0
    %v1858 = vadd.f32 0.0, %v1857
    %1859 = vmatprep.mubr.bf16.mxu0 0
    %1860 = vmatmul.mubr.bf16.gmra.mxu0 %v238
    %v1861 = vpop.f32.mrf.mxu0
    %v1862 = vadd.f32 0.0, %v1861
    %v1863 = vpop.f32.mrf.mxu0
    %v1864 = vadd.f32 0.0, %v1863
    %v1865 = vpop.f32.mrf.mxu0
    %v1866 = vadd.f32 0.0, %v1865
    %v1867 = vpop.f32.mrf.mxu0
    %v1868 = vadd.f32 0.0, %v1867
    %1869 = vmatprep.mubr.bf16.mxu0 0
    %1870 = vmatmul.mubr.bf16.gmra.mxu0 %v241
    %v1871 = vpop.f32.mrf.mxu0
    %v1872 = vadd.f32 0.0, %v1871
    %v1873 = vpop.f32.mrf.mxu0
    %v1874 = vadd.f32 0.0, %v1873
    %v1875 = vpop.f32.mrf.mxu0
    %v1876 = vadd.f32 0.0, %v1875
    %v1877 = vpop.f32.mrf.mxu0
    %v1878 = vadd.f32 0.0, %v1877
    %1879 = vmatprep.mubr.bf16.mxu0 0
    %1880 = vmatmul.mubr.bf16.gmra.mxu0 %v244
    %v1881 = vpop.f32.mrf.mxu0
    %v1882 = vadd.f32 0.0, %v1881
    %v1883 = vpop.f32.mrf.mxu0
    %v1884 = vadd.f32 0.0, %v1883
    %v1885 = vpop.f32.mrf.mxu0
    %v1886 = vadd.f32 0.0, %v1885
    %v1887 = vpop.f32.mrf.mxu0
    %v1888 = vadd.f32 0.0, %v1887
    %1889 = vmatprep.mubr.bf16.mxu0 0
    %1890 = vmatmul.mubr.bf16.gmra.mxu0 %v247
    %v1891 = vpop.f32.mrf.mxu0
    %v1892 = vadd.f32 0.0, %v1891
    %v1893 = vpop.f32.mrf.mxu0
    %v1894 = vadd.f32 0.0, %v1893
    %v1895 = vpop.f32.mrf.mxu0
    %v1896 = vadd.f32 0.0, %v1895
    %v1897 = vpop.f32.mrf.mxu0
    %v1898 = vadd.f32 0.0, %v1897
    %1899 = vmatprep.mubr.bf16.mxu0 0
    %1900 = vmatmul.mubr.bf16.gmra.mxu0 %v250
    %v1901 = vpop.f32.mrf.mxu0
    %v1902 = vadd.f32 0.0, %v1901
    %v1903 = vpop.f32.mrf.mxu0
    %v1904 = vadd.f32 0.0, %v1903
    %v1905 = vpop.f32.mrf.mxu0
    %v1906 = vadd.f32 0.0, %v1905
    %v1907 = vpop.f32.mrf.mxu0
    %v1908 = vadd.f32 0.0, %v1907
    %1909 = vmatprep.mubr.bf16.mxu0 0
    %1910 = vmatmul.mubr.bf16.gmra.mxu0 %v253
    %v1911 = vpop.f32.mrf.mxu0
    %v1912 = vpop.f32.mrf.mxu0
    %v1913 = vpop.f32.mrf.mxu0
    %v1914 = vpop.f32.mrf.mxu0
    %1915 = vdwg.mxu0
    %1916 = vmatprep.subr.bf16.mxu0 0
    %1917 = vmatpush1.bf16.msra.mxu0 0
    %1918 = vmatprep.subr.bf16.mxu0 0
    %1919 = vmatpush1.bf16.msra.mxu0 0
    %1920 = vmatprep.subr.bf16.mxu0 0
    %1921 = vmatpush1.bf16.msra.mxu0 0
    %1922 = vmatprep.subr.bf16.mxu0 0
    %1923 = vmatpush1.bf16.msra.mxu0 0
    %1924 = vmatprep.subr.bf16.mxu0 0
    %1925 = vmatpush1.bf16.msra.mxu0 0
    %1926 = vmatprep.subr.bf16.mxu0 0
    %1927 = vmatpush1.bf16.msra.mxu0 0
    %1928 = vmatprep.subr.bf16.mxu0 %v1735
    %1929 = vmatpush1.bf16.msra.mxu0 %v1732
    %1930 = vmatprep.subr.bf16.mxu0 %v1716
    %1931 = vmatpush1.bf16.msra.mxu0 %v1715
    %1932 = vmatprep.subr.bf16.mxu0 0
    %1933 = vmatpush2.bf16.msra.mxu0 0
    %1934 = vmatprep.subr.bf16.mxu0 0
    %1935 = vmatpush2.bf16.msra.mxu0 0
    %1936 = vmatprep.subr.bf16.mxu0 0
    %1937 = vmatpush2.bf16.msra.mxu0 0
    %1938 = vmatprep.subr.bf16.mxu0 0
    %1939 = vmatpush2.bf16.msra.mxu0 0
    %1940 = vmatprep.subr.bf16.mxu0 0
    %1941 = vmatpush2.bf16.msra.mxu0 0
    %1942 = vmatprep.subr.bf16.mxu0 0
    %1943 = vmatpush2.bf16.msra.mxu0 0
    %1944 = vmatprep.subr.bf16.mxu0 0
    %1945 = vmatpush2.bf16.msra.mxu0 0
    %1946 = vmatprep.subr.bf16.mxu0 0
    %1947 = vmatpush2.bf16.msra.mxu0 0
    %1948 = vmatprep.mubr.bf16.mxu0 0
    %1949 = vmatmul.mubr.bf16.gmra.mxu0 %v211
    %v1950 = vpop.f32.mrf.mxu0
    %v1951 = vadd.f32 0.0, %v1950
    %v1952 = vpop.f32.mrf.mxu0
    %v1953 = vadd.f32 0.0, %v1952
    %v1954 = vpop.f32.mrf.mxu0
    %v1955 = vadd.f32 0.0, %v1954
    %v1956 = vpop.f32.mrf.mxu0
    %v1957 = vadd.f32 0.0, %v1956
    %1958 = vmatprep.mubr.bf16.mxu0 0
    %1959 = vmatmul.mubr.bf16.gmra.mxu0 %v214
    %v1960 = vpop.f32.mrf.mxu0
    %v1961 = vadd.f32 0.0, %v1960
    %v1962 = vpop.f32.mrf.mxu0
    %v1963 = vadd.f32 0.0, %v1962
    %v1964 = vpop.f32.mrf.mxu0
    %v1965 = vadd.f32 0.0, %v1964
    %v1966 = vpop.f32.mrf.mxu0
    %v1967 = vadd.f32 0.0, %v1966
    %1968 = vmatprep.mubr.bf16.mxu0 0
    %1969 = vmatmul.mubr.bf16.gmra.mxu0 %v217
    %v1970 = vpop.f32.mrf.mxu0
    %v1971 = vadd.f32 0.0, %v1970
    %v1972 = vpop.f32.mrf.mxu0
    %v1973 = vadd.f32 0.0, %v1972
    %v1974 = vpop.f32.mrf.mxu0
    %v1975 = vadd.f32 0.0, %v1974
    %v1976 = vpop.f32.mrf.mxu0
    %v1977 = vadd.f32 0.0, %v1976
    %1978 = vmatprep.mubr.bf16.mxu0 0
    %1979 = vmatmul.mubr.bf16.gmra.mxu0 %v220
    %v1980 = vpop.f32.mrf.mxu0
    %v1981 = vadd.f32 0.0, %v1980
    %v1982 = vpop.f32.mrf.mxu0
    %v1983 = vadd.f32 0.0, %v1982
    %v1984 = vpop.f32.mrf.mxu0
    %v1985 = vadd.f32 0.0, %v1984
    %v1986 = vpop.f32.mrf.mxu0
    %v1987 = vadd.f32 0.0, %v1986
    %1988 = vmatprep.mubr.bf16.mxu0 0
    %1989 = vmatmul.mubr.bf16.gmra.mxu0 %v223
    %v1990 = vpop.f32.mrf.mxu0
    %v1991 = vadd.f32 0.0, %v1990
    %v1992 = vpop.f32.mrf.mxu0
    %v1993 = vadd.f32 0.0, %v1992
    %v1994 = vpop.f32.mrf.mxu0
    %v1995 = vadd.f32 0.0, %v1994
    %v1996 = vpop.f32.mrf.mxu0
    %v1997 = vadd.f32 0.0, %v1996
    %1998 = vmatprep.mubr.bf16.mxu0 0
    %1999 = vmatmul.mubr.bf16.gmra.mxu0 %v226
    %v2000 = vpop.f32.mrf.mxu0
    %v2001 = vadd.f32 0.0, %v2000
    %v2002 = vpop.f32.mrf.mxu0
    %v2003 = vadd.f32 0.0, %v2002
    %v2004 = vpop.f32.mrf.mxu0
    %v2005 = vadd.f32 0.0, %v2004
    %v2006 = vpop.f32.mrf.mxu0
    %v2007 = vadd.f32 0.0, %v2006
    %2008 = vmatprep.mubr.bf16.mxu0 0
    %2009 = vmatmul.mubr.bf16.gmra.mxu0 %v229
    %v2010 = vpop.f32.mrf.mxu0
    %v2011 = vadd.f32 0.0, %v2010
    %v2012 = vpop.f32.mrf.mxu0
    %v2013 = vadd.f32 0.0, %v2012
    %v2014 = vpop.f32.mrf.mxu0
    %v2015 = vadd.f32 0.0, %v2014
    %v2016 = vpop.f32.mrf.mxu0
    %v2017 = vadd.f32 0.0, %v2016
    %2018 = vmatprep.mubr.bf16.mxu0 0
    %2019 = vmatmul.mubr.bf16.gmra.mxu0 %v232
    %v2020 = vpop.f32.mrf.mxu0
    %v2021 = vadd.f32 0.0, %v2020
    %v2022 = vpop.f32.mrf.mxu0
    %v2023 = vadd.f32 0.0, %v2022
    %v2024 = vpop.f32.mrf.mxu0
    %v2025 = vadd.f32 0.0, %v2024
    %v2026 = vpop.f32.mrf.mxu0
    %v2027 = vadd.f32 0.0, %v2026
    %2028 = vmatprep.mubr.bf16.mxu0 0
    %2029 = vmatmul.mubr.bf16.gmra.mxu0 %v235
    %v2030 = vpop.f32.mrf.mxu0
    %v2031 = vadd.f32 0.0, %v2030
    %v2032 = vpop.f32.mrf.mxu0
    %v2033 = vadd.f32 0.0, %v2032
    %v2034 = vpop.f32.mrf.mxu0
    %v2035 = vadd.f32 0.0, %v2034
    %v2036 = vpop.f32.mrf.mxu0
    %v2037 = vadd.f32 0.0, %v2036
    %2038 = vmatprep.mubr.bf16.mxu0 0
    %2039 = vmatmul.mubr.bf16.gmra.mxu0 %v238
    %v2040 = vpop.f32.mrf.mxu0
    %v2041 = vadd.f32 0.0, %v2040
    %v2042 = vpop.f32.mrf.mxu0
    %v2043 = vadd.f32 0.0, %v2042
    %v2044 = vpop.f32.mrf.mxu0
    %v2045 = vadd.f32 0.0, %v2044
    %v2046 = vpop.f32.mrf.mxu0
    %v2047 = vadd.f32 0.0, %v2046
    %2048 = vmatprep.mubr.bf16.mxu0 0
    %2049 = vmatmul.mubr.bf16.gmra.mxu0 %v241
    %v2050 = vpop.f32.mrf.mxu0
    %v2051 = vadd.f32 0.0, %v2050
    %v2052 = vpop.f32.mrf.mxu0
    %v2053 = vadd.f32 0.0, %v2052
    %v2054 = vpop.f32.mrf.mxu0
    %v2055 = vadd.f32 0.0, %v2054
    %v2056 = vpop.f32.mrf.mxu0
    %v2057 = vadd.f32 0.0, %v2056
    %2058 = vmatprep.mubr.bf16.mxu0 0
    %2059 = vmatmul.mubr.bf16.gmra.mxu0 %v244
    %v2060 = vpop.f32.mrf.mxu0
    %v2061 = vadd.f32 0.0, %v2060
    %v2062 = vpop.f32.mrf.mxu0
    %v2063 = vadd.f32 0.0, %v2062
    %v2064 = vpop.f32.mrf.mxu0
    %v2065 = vadd.f32 0.0, %v2064
    %v2066 = vpop.f32.mrf.mxu0
    %v2067 = vadd.f32 0.0, %v2066
    %2068 = vmatprep.mubr.bf16.mxu0 0
    %2069 = vmatmul.mubr.bf16.gmra.mxu0 %v247
    %v2070 = vpop.f32.mrf.mxu0
    %v2071 = vadd.f32 0.0, %v2070
    %v2072 = vpop.f32.mrf.mxu0
    %v2073 = vadd.f32 0.0, %v2072
    %v2074 = vpop.f32.mrf.mxu0
    %v2075 = vadd.f32 0.0, %v2074
    %v2076 = vpop.f32.mrf.mxu0
    %v2077 = vadd.f32 0.0, %v2076
    %2078 = vmatprep.mubr.bf16.mxu0 0
    %2079 = vmatmul.mubr.bf16.gmra.mxu0 %v250
    %v2080 = vpop.f32.mrf.mxu0
    %v2081 = vadd.f32 0.0, %v2080
    %v2082 = vpop.f32.mrf.mxu0
    %v2083 = vadd.f32 0.0, %v2082
    %v2084 = vpop.f32.mrf.mxu0
    %v2085 = vadd.f32 0.0, %v2084
    %v2086 = vpop.f32.mrf.mxu0
    %v2087 = vadd.f32 0.0, %v2086
    %2088 = vmatprep.mubr.bf16.mxu0 0
    %2089 = vmatmul.mubr.bf16.gmra.mxu0 %v253
    %v2090 = vpop.f32.mrf.mxu0
    %v2091 = vpop.f32.mrf.mxu0
    %v2092 = vpop.f32.mrf.mxu0
    %v2093 = vpop.f32.mrf.mxu0
    %2094 = vdwg.mxu0
    %s2095 = scalar_lea.vmem [#allocation3], 192
    %v2096 = vld [vmem:[%s2095] sm:$0xff]
    %v2097 = vld [vmem:[%s2095 + $0x8] sm:$0xff]
    %v2098 = vld [vmem:[%s2095 + $0x10] sm:$0xff]
    %v2099 = vld [vmem:[%s2095 + $0x18] sm:$0xff]
    %v2100 = vld [vmem:[%s2095 + $0x20] sm:$0xff]
    %v2101 = vld [vmem:[%s2095 + $0x28] sm:$0xff]
    %v2102 = vld [vmem:[%s2095 + $0x30] sm:$0x33]
    %v2103 = vld [vmem:[%s2095 + $0x38] sm:$0x33]
    %v2112 = vunpack.c.l.b16 %v2096
    %v2113 = vunpack.c.h.b16 %v2096
    %v2114 = vunpack.c.l.b16 %v2097
    %v2115 = vunpack.c.h.b16 %v2097
    %v2116 = vunpack.c.l.b16 %v2098
    %v2117 = vunpack.c.h.b16 %v2098
    %v2118 = vunpack.c.l.b16 %v2099
    %v2119 = vunpack.c.h.b16 %v2099
    %v2120 = vunpack.c.l.b16 %v2100
    %v2121 = vunpack.c.h.b16 %v2100
    %v2122 = vunpack.c.l.b16 %v2101
    %v2123 = vunpack.c.h.b16 %v2101
    %v2124 = vunpack.c.l.b16 %v2102
    %v2125 = vunpack.c.h.b16 %v2102
    %v2126 = vunpack.c.l.b16 %v2103
    %v2127 = vunpack.c.h.b16 %v2103
    %v2128 = vpack.c.b16 %v2116, %v2112
    %v2129 = vpack.c.b16 %v2117, %v2113
    %v2130 = vpack.c.b16 %v2118, %v2114
    %v2131 = vpack.c.b16 %v2119, %v2115
    %v2132 = vpack.c.b16 %v2124, %v2120
    %v2133 = vpack.c.b16 %v2125, %v2121
    %v2134 = vpack.c.b16 %v2126, %v2122
    %v2135 = vpack.c.b16 %v2127, %v2123
    %v2141 = vsel %vm255, %v2132, 0
    %v2144 = vsel %vm255, %v2133, 0
    %v2147 = vsel %vm255, %v2134, 0
    %v2150 = vsel %vm255, %v2135, 0
    %2152 = vmatprep.subr.bf16.mxu0 0
    %2153 = vmatpush1.bf16.msra.mxu0 0
    %2154 = vmatprep.subr.bf16.mxu0 0
    %2155 = vmatpush1.bf16.msra.mxu0 0
    %2156 = vmatprep.subr.bf16.mxu0 0
    %2157 = vmatpush1.bf16.msra.mxu0 0
    %2158 = vmatprep.subr.bf16.mxu0 0
    %2159 = vmatpush1.bf16.msra.mxu0 0
    %2160 = vmatprep.subr.bf16.mxu0 0
    %2161 = vmatpush1.bf16.msra.mxu0 0
    %2162 = vmatprep.subr.bf16.mxu0 0
    %2163 = vmatpush1.bf16.msra.mxu0 0
    %2164 = vmatprep.subr.bf16.mxu0 %v2144
    %2165 = vmatpush1.bf16.msra.mxu0 %v2141
    %2166 = vmatprep.subr.bf16.mxu0 %v2129
    %2167 = vmatpush1.bf16.msra.mxu0 %v2128
    %2168 = vmatprep.subr.bf16.mxu0 0
    %2169 = vmatpush2.bf16.msra.mxu0 0
    %2170 = vmatprep.subr.bf16.mxu0 0
    %2171 = vmatpush2.bf16.msra.mxu0 0
    %2172 = vmatprep.subr.bf16.mxu0 0
    %2173 = vmatpush2.bf16.msra.mxu0 0
    %2174 = vmatprep.subr.bf16.mxu0 0
    %2175 = vmatpush2.bf16.msra.mxu0 0
    %2176 = vmatprep.subr.bf16.mxu0 0
    %2177 = vmatpush2.bf16.msra.mxu0 0
    %2178 = vmatprep.subr.bf16.mxu0 0
    %2179 = vmatpush2.bf16.msra.mxu0 0
    %2180 = vmatprep.subr.bf16.mxu0 0
    %2181 = vmatpush2.bf16.msra.mxu0 0
    %2182 = vmatprep.subr.bf16.mxu0 0
    %2183 = vmatpush2.bf16.msra.mxu0 0
    %2184 = vmatprep.mubr.bf16.mxu0 0
    %2185 = vmatmul.mubr.bf16.gmra.mxu0 %v211
    %v2186 = vpop.f32.mrf.mxu0
    %v2187 = vpop.f32.mrf.mxu0
    %v2188 = vpop.f32.mrf.mxu0
    %v2189 = vadd.f32 0.0, %v2188
    %v2190 = vpop.f32.mrf.mxu0
    %v2191 = vadd.f32 0.0, %v2190
    %2192 = vmatprep.mubr.bf16.mxu0 0
    %2193 = vmatmul.mubr.bf16.gmra.mxu0 %v214
    %v2194 = vpop.f32.mrf.mxu0
    %v2195 = vadd.f32 0.0, %v2194
    %v2196 = vpop.f32.mrf.mxu0
    %v2197 = vadd.f32 0.0, %v2196
    %v2198 = vpop.f32.mrf.mxu0
    %v2199 = vadd.f32 0.0, %v2198
    %v2200 = vpop.f32.mrf.mxu0
    %v2201 = vadd.f32 0.0, %v2200
    %2202 = vmatprep.mubr.bf16.mxu0 0
    %2203 = vmatmul.mubr.bf16.gmra.mxu0 %v217
    %v2204 = vpop.f32.mrf.mxu0
    %v2205 = vadd.f32 0.0, %v2204
    %v2206 = vpop.f32.mrf.mxu0
    %v2207 = vadd.f32 0.0, %v2206
    %v2208 = vpop.f32.mrf.mxu0
    %v2209 = vadd.f32 0.0, %v2208
    %v2210 = vpop.f32.mrf.mxu0
    %v2211 = vadd.f32 0.0, %v2210
    %2212 = vmatprep.mubr.bf16.mxu0 0
    %2213 = vmatmul.mubr.bf16.gmra.mxu0 %v220
    %v2214 = vpop.f32.mrf.mxu0
    %v2215 = vadd.f32 0.0, %v2214
    %v2216 = vpop.f32.mrf.mxu0
    %v2217 = vadd.f32 0.0, %v2216
    %v2218 = vpop.f32.mrf.mxu0
    %v2219 = vadd.f32 0.0, %v2218
    %v2220 = vpop.f32.mrf.mxu0
    %v2221 = vadd.f32 0.0, %v2220
    %2222 = vmatprep.mubr.bf16.mxu0 0
    %2223 = vmatmul.mubr.bf16.gmra.mxu0 %v223
    %v2224 = vpop.f32.mrf.mxu0
    %v2225 = vadd.f32 0.0, %v2224
    %v2226 = vpop.f32.mrf.mxu0
    %v2227 = vadd.f32 0.0, %v2226
    %v2228 = vpop.f32.mrf.mxu0
    %v2229 = vadd.f32 0.0, %v2228
    %v2230 = vpop.f32.mrf.mxu0
    %v2231 = vadd.f32 0.0, %v2230
    %2232 = vmatprep.mubr.bf16.mxu0 0
    %2233 = vmatmul.mubr.bf16.gmra.mxu0 %v226
    %v2234 = vpop.f32.mrf.mxu0
    %v2235 = vadd.f32 0.0, %v2234
    %v2236 = vpop.f32.mrf.mxu0
    %v2237 = vadd.f32 0.0, %v2236
    %v2238 = vpop.f32.mrf.mxu0
    %v2239 = vadd.f32 0.0, %v2238
    %v2240 = vpop.f32.mrf.mxu0
    %v2241 = vadd.f32 0.0, %v2240
    %2242 = vmatprep.mubr.bf16.mxu0 0
    %2243 = vmatmul.mubr.bf16.gmra.mxu0 %v229
    %v2244 = vpop.f32.mrf.mxu0
    %v2245 = vadd.f32 0.0, %v2244
    %v2246 = vpop.f32.mrf.mxu0
    %v2247 = vadd.f32 0.0, %v2246
    %v2248 = vpop.f32.mrf.mxu0
    %v2249 = vadd.f32 0.0, %v2248
    %v2250 = vpop.f32.mrf.mxu0
    %v2251 = vadd.f32 0.0, %v2250
    %2252 = vmatprep.mubr.bf16.mxu0 0
    %2253 = vmatmul.mubr.bf16.gmra.mxu0 %v232
    %v2254 = vpop.f32.mrf.mxu0
    %v2255 = vadd.f32 0.0, %v2254
    %v2256 = vpop.f32.mrf.mxu0
    %v2257 = vadd.f32 0.0, %v2256
    %v2258 = vpop.f32.mrf.mxu0
    %v2259 = vadd.f32 0.0, %v2258
    %v2260 = vpop.f32.mrf.mxu0
    %v2261 = vadd.f32 0.0, %v2260
    %2262 = vmatprep.mubr.bf16.mxu0 0
    %2263 = vmatmul.mubr.bf16.gmra.mxu0 %v235
    %v2264 = vpop.f32.mrf.mxu0
    %v2265 = vadd.f32 0.0, %v2264
    %v2266 = vpop.f32.mrf.mxu0
    %v2267 = vadd.f32 0.0, %v2266
    %v2268 = vpop.f32.mrf.mxu0
    %v2269 = vadd.f32 0.0, %v2268
    %v2270 = vpop.f32.mrf.mxu0
    %v2271 = vadd.f32 0.0, %v2270
    %2272 = vmatprep.mubr.bf16.mxu0 0
    %2273 = vmatmul.mubr.bf16.gmra.mxu0 %v238
    %v2274 = vpop.f32.mrf.mxu0
    %v2275 = vadd.f32 0.0, %v2274
    %v2276 = vpop.f32.mrf.mxu0
    %v2277 = vadd.f32 0.0, %v2276
    %v2278 = vpop.f32.mrf.mxu0
    %v2279 = vadd.f32 0.0, %v2278
    %v2280 = vpop.f32.mrf.mxu0
    %v2281 = vadd.f32 0.0, %v2280
    %2282 = vmatprep.mubr.bf16.mxu0 0
    %2283 = vmatmul.mubr.bf16.gmra.mxu0 %v241
    %v2284 = vpop.f32.mrf.mxu0
    %v2285 = vadd.f32 0.0, %v2284
    %v2286 = vpop.f32.mrf.mxu0
    %v2287 = vadd.f32 0.0, %v2286
    %v2288 = vpop.f32.mrf.mxu0
    %v2289 = vadd.f32 0.0, %v2288
    %v2290 = vpop.f32.mrf.mxu0
    %v2291 = vadd.f32 0.0, %v2290
    %2292 = vmatprep.mubr.bf16.mxu0 0
    %2293 = vmatmul.mubr.bf16.gmra.mxu0 %v244
    %v2294 = vpop.f32.mrf.mxu0
    %v2295 = vadd.f32 0.0, %v2294
    %v2296 = vpop.f32.mrf.mxu0
    %v2297 = vadd.f32 0.0, %v2296
    %v2298 = vpop.f32.mrf.mxu0
    %v2299 = vadd.f32 0.0, %v2298
    %v2300 = vpop.f32.mrf.mxu0
    %v2301 = vadd.f32 0.0, %v2300
    %2302 = vmatprep.mubr.bf16.mxu0 0
    %2303 = vmatmul.mubr.bf16.gmra.mxu0 %v247
    %v2304 = vpop.f32.mrf.mxu0
    %v2305 = vadd.f32 0.0, %v2304
    %v2306 = vpop.f32.mrf.mxu0
    %v2307 = vadd.f32 0.0, %v2306
    %v2308 = vpop.f32.mrf.mxu0
    %v2309 = vadd.f32 0.0, %v2308
    %v2310 = vpop.f32.mrf.mxu0
    %v2311 = vadd.f32 0.0, %v2310
    %2312 = vmatprep.mubr.bf16.mxu0 0
    %2313 = vmatmul.mubr.bf16.gmra.mxu0 %v250
    %v2314 = vpop.f32.mrf.mxu0
    %v2315 = vadd.f32 0.0, %v2314
    %v2316 = vpop.f32.mrf.mxu0
    %v2317 = vadd.f32 0.0, %v2316
    %v2318 = vpop.f32.mrf.mxu0
    %v2319 = vadd.f32 0.0, %v2318
    %v2320 = vpop.f32.mrf.mxu0
    %v2321 = vadd.f32 0.0, %v2320
    %2322 = vmatprep.mubr.bf16.mxu0 0
    %2323 = vmatmul.mubr.bf16.gmra.mxu0 %v253
    %v2324 = vpop.f32.mrf.mxu0
    %v2325 = vadd.f32 0.0, %v2324
    %v2326 = vpop.f32.mrf.mxu0
    %v2327 = vadd.f32 0.0, %v2326
    %v2328 = vpop.f32.mrf.mxu0
    %v2329 = vpop.f32.mrf.mxu0
    %2330 = vdwg.mxu0
    %2331 = vmatprep.subr.bf16.mxu0 0
    %2332 = vmatpush1.bf16.msra.mxu0 0
    %2333 = vmatprep.subr.bf16.mxu0 0
    %2334 = vmatpush1.bf16.msra.mxu0 0
    %2335 = vmatprep.subr.bf16.mxu0 0
    %2336 = vmatpush1.bf16.msra.mxu0 0
    %2337 = vmatprep.subr.bf16.mxu0 0
    %2338 = vmatpush1.bf16.msra.mxu0 0
    %2339 = vmatprep.subr.bf16.mxu0 0
    %2340 = vmatpush1.bf16.msra.mxu0 0
    %2341 = vmatprep.subr.bf16.mxu0 0
    %2342 = vmatpush1.bf16.msra.mxu0 0
    %2343 = vmatprep.subr.bf16.mxu0 %v2150
    %2344 = vmatpush1.bf16.msra.mxu0 %v2147
    %2345 = vmatprep.subr.bf16.mxu0 %v2131
    %2346 = vmatpush1.bf16.msra.mxu0 %v2130
    %2347 = vmatprep.subr.bf16.mxu0 0
    %2348 = vmatpush2.bf16.msra.mxu0 0
    %2349 = vmatprep.subr.bf16.mxu0 0
    %2350 = vmatpush2.bf16.msra.mxu0 0
    %2351 = vmatprep.subr.bf16.mxu0 0
    %2352 = vmatpush2.bf16.msra.mxu0 0
    %2353 = vmatprep.subr.bf16.mxu0 0
    %2354 = vmatpush2.bf16.msra.mxu0 0
    %2355 = vmatprep.subr.bf16.mxu0 0
    %2356 = vmatpush2.bf16.msra.mxu0 0
    %2357 = vmatprep.subr.bf16.mxu0 0
    %2358 = vmatpush2.bf16.msra.mxu0 0
    %2359 = vmatprep.subr.bf16.mxu0 0
    %2360 = vmatpush2.bf16.msra.mxu0 0
    %2361 = vmatprep.subr.bf16.mxu0 0
    %2362 = vmatpush2.bf16.msra.mxu0 0
    %2363 = vmatprep.mubr.bf16.mxu0 0
    %2364 = vmatmul.mubr.bf16.gmra.mxu0 %v211
    %v2365 = vpop.f32.mrf.mxu0
    %v2366 = vpop.f32.mrf.mxu0
    %v2367 = vpop.f32.mrf.mxu0
    %v2368 = vadd.f32 0.0, %v2367
    %v2369 = vpop.f32.mrf.mxu0
    %v2370 = vadd.f32 0.0, %v2369
    %2371 = vmatprep.mubr.bf16.mxu0 0
    %2372 = vmatmul.mubr.bf16.gmra.mxu0 %v214
    %v2373 = vpop.f32.mrf.mxu0
    %v2374 = vadd.f32 0.0, %v2373
    %v2375 = vpop.f32.mrf.mxu0
    %v2376 = vadd.f32 0.0, %v2375
    %v2377 = vpop.f32.mrf.mxu0
    %v2378 = vadd.f32 0.0, %v2377
    %v2379 = vpop.f32.mrf.mxu0
    %v2380 = vadd.f32 0.0, %v2379
    %2381 = vmatprep.mubr.bf16.mxu0 0
    %2382 = vmatmul.mubr.bf16.gmra.mxu0 %v217
    %v2383 = vpop.f32.mrf.mxu0
    %v2384 = vadd.f32 0.0, %v2383
    %v2385 = vpop.f32.mrf.mxu0
    %v2386 = vadd.f32 0.0, %v2385
    %v2387 = vpop.f32.mrf.mxu0
    %v2388 = vadd.f32 0.0, %v2387
    %v2389 = vpop.f32.mrf.mxu0
    %v2390 = vadd.f32 0.0, %v2389
    %2391 = vmatprep.mubr.bf16.mxu0 0
    %2392 = vmatmul.mubr.bf16.gmra.mxu0 %v220
    %v2393 = vpop.f32.mrf.mxu0
    %v2394 = vadd.f32 0.0, %v2393
    %v2395 = vpop.f32.mrf.mxu0
    %v2396 = vadd.f32 0.0, %v2395
    %v2397 = vpop.f32.mrf.mxu0
    %v2398 = vadd.f32 0.0, %v2397
    %v2399 = vpop.f32.mrf.mxu0
    %v2400 = vadd.f32 0.0, %v2399
    %2401 = vmatprep.mubr.bf16.mxu0 0
    %2402 = vmatmul.mubr.bf16.gmra.mxu0 %v223
    %v2403 = vpop.f32.mrf.mxu0
    %v2404 = vadd.f32 0.0, %v2403
    %v2405 = vpop.f32.mrf.mxu0
    %v2406 = vadd.f32 0.0, %v2405
    %v2407 = vpop.f32.mrf.mxu0
    %v2408 = vadd.f32 0.0, %v2407
    %v2409 = vpop.f32.mrf.mxu0
    %v2410 = vadd.f32 0.0, %v2409
    %2411 = vmatprep.mubr.bf16.mxu0 0
    %2412 = vmatmul.mubr.bf16.gmra.mxu0 %v226
    %v2413 = vpop.f32.mrf.mxu0
    %v2414 = vadd.f32 0.0, %v2413
    %v2415 = vpop.f32.mrf.mxu0
    %v2416 = vadd.f32 0.0, %v2415
    %v2417 = vpop.f32.mrf.mxu0
    %v2418 = vadd.f32 0.0, %v2417
    %v2419 = vpop.f32.mrf.mxu0
    %v2420 = vadd.f32 0.0, %v2419
    %2421 = vmatprep.mubr.bf16.mxu0 0
    %2422 = vmatmul.mubr.bf16.gmra.mxu0 %v229
    %v2423 = vpop.f32.mrf.mxu0
    %v2424 = vadd.f32 0.0, %v2423
    %v2425 = vpop.f32.mrf.mxu0
    %v2426 = vadd.f32 0.0, %v2425
    %v2427 = vpop.f32.mrf.mxu0
    %v2428 = vadd.f32 0.0, %v2427
    %v2429 = vpop.f32.mrf.mxu0
    %v2430 = vadd.f32 0.0, %v2429
    %2431 = vmatprep.mubr.bf16.mxu0 0
    %2432 = vmatmul.mubr.bf16.gmra.mxu0 %v232
    %v2433 = vpop.f32.mrf.mxu0
    %v2434 = vadd.f32 0.0, %v2433
    %v2435 = vpop.f32.mrf.mxu0
    %v2436 = vadd.f32 0.0, %v2435
    %v2437 = vpop.f32.mrf.mxu0
    %v2438 = vadd.f32 0.0, %v2437
    %v2439 = vpop.f32.mrf.mxu0
    %v2440 = vadd.f32 0.0, %v2439
    %2441 = vmatprep.mubr.bf16.mxu0 0
    %2442 = vmatmul.mubr.bf16.gmra.mxu0 %v235
    %v2443 = vpop.f32.mrf.mxu0
    %v2444 = vadd.f32 0.0, %v2443
    %v2445 = vpop.f32.mrf.mxu0
    %v2446 = vadd.f32 0.0, %v2445
    %v2447 = vpop.f32.mrf.mxu0
    %v2448 = vadd.f32 0.0, %v2447
    %v2449 = vpop.f32.mrf.mxu0
    %v2450 = vadd.f32 0.0, %v2449
    %2451 = vmatprep.mubr.bf16.mxu0 0
    %2452 = vmatmul.mubr.bf16.gmra.mxu0 %v238
    %v2453 = vpop.f32.mrf.mxu0
    %v2454 = vadd.f32 0.0, %v2453
    %v2455 = vpop.f32.mrf.mxu0
    %v2456 = vadd.f32 0.0, %v2455
    %v2457 = vpop.f32.mrf.mxu0
    %v2458 = vadd.f32 0.0, %v2457
    %v2459 = vpop.f32.mrf.mxu0
    %v2460 = vadd.f32 0.0, %v2459
    %2461 = vmatprep.mubr.bf16.mxu0 0
    %2462 = vmatmul.mubr.bf16.gmra.mxu0 %v241
    %v2463 = vpop.f32.mrf.mxu0
    %v2464 = vadd.f32 0.0, %v2463
    %v2465 = vpop.f32.mrf.mxu0
    %v2466 = vadd.f32 0.0, %v2465
    %v2467 = vpop.f32.mrf.mxu0
    %v2468 = vadd.f32 0.0, %v2467
    %v2469 = vpop.f32.mrf.mxu0
    %v2470 = vadd.f32 0.0, %v2469
    %2471 = vmatprep.mubr.bf16.mxu0 0
    %2472 = vmatmul.mubr.bf16.gmra.mxu0 %v244
    %v2473 = vpop.f32.mrf.mxu0
    %v2474 = vadd.f32 0.0, %v2473
    %v2475 = vpop.f32.mrf.mxu0
    %v2476 = vadd.f32 0.0, %v2475
    %v2477 = vpop.f32.mrf.mxu0
    %v2478 = vadd.f32 0.0, %v2477
    %v2479 = vpop.f32.mrf.mxu0
    %v2480 = vadd.f32 0.0, %v2479
    %2481 = vmatprep.mubr.bf16.mxu0 0
    %2482 = vmatmul.mubr.bf16.gmra.mxu0 %v247
    %v2483 = vpop.f32.mrf.mxu0
    %v2484 = vadd.f32 0.0, %v2483
    %v2485 = vpop.f32.mrf.mxu0
    %v2486 = vadd.f32 0.0, %v2485
    %v2487 = vpop.f32.mrf.mxu0
    %v2488 = vadd.f32 0.0, %v2487
    %v2489 = vpop.f32.mrf.mxu0
    %v2490 = vadd.f32 0.0, %v2489
    %2491 = vmatprep.mubr.bf16.mxu0 0
    %2492 = vmatmul.mubr.bf16.gmra.mxu0 %v250
    %v2493 = vpop.f32.mrf.mxu0
    %v2494 = vadd.f32 0.0, %v2493
    %v2495 = vpop.f32.mrf.mxu0
    %v2496 = vadd.f32 0.0, %v2495
    %v2497 = vpop.f32.mrf.mxu0
    %v2498 = vadd.f32 0.0, %v2497
    %v2499 = vpop.f32.mrf.mxu0
    %v2500 = vadd.f32 0.0, %v2499
    %2501 = vmatprep.mubr.bf16.mxu0 0
    %2502 = vmatmul.mubr.bf16.gmra.mxu0 %v253
    %v2503 = vpop.f32.mrf.mxu0
    %v2504 = vadd.f32 0.0, %v2503
    %v2505 = vpop.f32.mrf.mxu0
    %v2506 = vadd.f32 0.0, %v2505
    %v2507 = vpop.f32.mrf.mxu0
    %v2508 = vpop.f32.mrf.mxu0
    %2509 = vdwg.mxu0
    %v2510 = vadd.f32 %v1772, %v2189
    %v2511 = vadd.f32 %v1774, %v2191
    %v2512 = vadd.f32 %v1951, %v2368
    %v2513 = vadd.f32 %v1953, %v2370
    %v2514 = vadd.f32 %v1776, %v2195
    %v2515 = vadd.f32 %v1778, %v2197
    %v2516 = vadd.f32 %v1955, %v2374
    %v2517 = vadd.f32 %v1957, %v2376
    %v2518 = vadd.f32 %v1782, %v2199
    %v2519 = vadd.f32 %v1784, %v2201
    %v2520 = vadd.f32 %v1961, %v2378
    %v2521 = vadd.f32 %v1963, %v2380
    %v2522 = vadd.f32 %v1786, %v2205
    %v2523 = vadd.f32 %v1788, %v2207
    %v2524 = vadd.f32 %v1965, %v2384
    %v2525 = vadd.f32 %v1967, %v2386
    %v2526 = vadd.f32 %v1792, %v2209
    %v2527 = vadd.f32 %v1794, %v2211
    %v2528 = vadd.f32 %v1971, %v2388
    %v2529 = vadd.f32 %v1973, %v2390
    %v2530 = vadd.f32 %v1796, %v2215
    %v2531 = vadd.f32 %v1798, %v2217
    %v2532 = vadd.f32 %v1975, %v2394
    %v2533 = vadd.f32 %v1977, %v2396
    %v2534 = vadd.f32 %v1802, %v2219
    %v2535 = vadd.f32 %v1804, %v2221
    %v2536 = vadd.f32 %v1981, %v2398
    %v2537 = vadd.f32 %v1983, %v2400
    %v2538 = vadd.f32 %v1806, %v2225
    %v2539 = vadd.f32 %v1808, %v2227
    %v2540 = vadd.f32 %v1985, %v2404
    %v2541 = vadd.f32 %v1987, %v2406
    %v2542 = vadd.f32 %v1812, %v2229
    %v2543 = vadd.f32 %v1814, %v2231
    %v2544 = vadd.f32 %v1991, %v2408
    %v2545 = vadd.f32 %v1993, %v2410
    %v2546 = vadd.f32 %v1816, %v2235
    %v2547 = vadd.f32 %v1818, %v2237
    %v2548 = vadd.f32 %v1995, %v2414
    %v2549 = vadd.f32 %v1997, %v2416
    %v2550 = vadd.f32 %v1822, %v2239
    %v2551 = vadd.f32 %v1824, %v2241
    %v2552 = vadd.f32 %v2001, %v2418
    %v2553 = vadd.f32 %v2003, %v2420
    %v2554 = vadd.f32 %v1826, %v2245
    %v2555 = vadd.f32 %v1828, %v2247
    %v2556 = vadd.f32 %v2005, %v2424
    %v2557 = vadd.f32 %v2007, %v2426
    %v2558 = vadd.f32 %v1832, %v2249
    %v2559 = vadd.f32 %v1834, %v2251
    %v2560 = vadd.f32 %v2011, %v2428
    %v2561 = vadd.f32 %v2013, %v2430
    %v2562 = vadd.f32 %v1836, %v2255
    %v2563 = vadd.f32 %v1838, %v2257
    %v2564 = vadd.f32 %v2015, %v2434
    %v2565 = vadd.f32 %v2017, %v2436
    %v2566 = vadd.f32 %v1842, %v2259
    %v2567 = vadd.f32 %v1844, %v2261
    %v2568 = vadd.f32 %v2021, %v2438
    %v2569 = vadd.f32 %v2023, %v2440
    %v2570 = vadd.f32 %v1846, %v2265
    %v2571 = vadd.f32 %v1848, %v2267
    %v2572 = vadd.f32 %v2025, %v2444
    %v2573 = vadd.f32 %v2027, %v2446
    %v2574 = vadd.f32 %v1852, %v2269
    %v2575 = vadd.f32 %v1854, %v2271
    %v2576 = vadd.f32 %v2031, %v2448
    %v2577 = vadd.f32 %v2033, %v2450
    %v2578 = vadd.f32 %v1856, %v2275
    %v2579 = vadd.f32 %v1858, %v2277
    %v2580 = vadd.f32 %v2035, %v2454
    %v2581 = vadd.f32 %v2037, %v2456
    %v2582 = vadd.f32 %v1862, %v2279
    %v2583 = vadd.f32 %v1864, %v2281
    %v2584 = vadd.f32 %v2041, %v2458
    %v2585 = vadd.f32 %v2043, %v2460
    %v2586 = vadd.f32 %v1866, %v2285
    %v2587 = vadd.f32 %v1868, %v2287
    %v2588 = vadd.f32 %v2045, %v2464
    %v2589 = vadd.f32 %v2047, %v2466
    %v2590 = vadd.f32 %v1872, %v2289
    %v2591 = vadd.f32 %v1874, %v2291
    %v2592 = vadd.f32 %v2051, %v2468
    %v2593 = vadd.f32 %v2053, %v2470
    %v2594 = vadd.f32 %v1876, %v2295
    %v2595 = vadd.f32 %v1878, %v2297
    %v2596 = vadd.f32 %v2055, %v2474
    %v2597 = vadd.f32 %v2057, %v2476
    %v2598 = vadd.f32 %v1882, %v2299
    %v2599 = vadd.f32 %v1884, %v2301
    %v2600 = vadd.f32 %v2061, %v2478
    %v2601 = vadd.f32 %v2063, %v2480
    %v2602 = vadd.f32 %v1886, %v2305
    %v2603 = vadd.f32 %v1888, %v2307
    %v2604 = vadd.f32 %v2065, %v2484
    %v2605 = vadd.f32 %v2067, %v2486
    %v2606 = vadd.f32 %v1892, %v2309
    %v2607 = vadd.f32 %v1894, %v2311
    %v2608 = vadd.f32 %v2071, %v2488
    %v2609 = vadd.f32 %v2073, %v2490
    %v2610 = vadd.f32 %v1896, %v2315
    %v2611 = vadd.f32 %v1898, %v2317
    %v2612 = vadd.f32 %v2075, %v2494
    %v2613 = vadd.f32 %v2077, %v2496
    %v2614 = vadd.f32 %v1902, %v2319
    %v2615 = vadd.f32 %v1904, %v2321
    %v2616 = vadd.f32 %v2081, %v2498
    %v2617 = vadd.f32 %v2083, %v2500
    %v2618 = vadd.f32 %v1906, %v2325
    %v2619 = vadd.f32 %v1908, %v2327
    %v2620 = vadd.f32 %v2085, %v2504
    %v2621 = vadd.f32 %v2087, %v2506
    %s2622 = scalar_lea.vmem [#allocation3], 320
    %v2623 = vld [vmem:[%s2622] sm:$0xff]
    %v2624 = vld [vmem:[%s2622 + $0x8] sm:$0xff]
    %v2625 = vld [vmem:[%s2622 + $0x10] sm:$0xff]
    %v2626 = vld [vmem:[%s2622 + $0x18] sm:$0xff]
    %v2627 = vld [vmem:[%s2622 + $0x20] sm:$0xff]
    %v2628 = vld [vmem:[%s2622 + $0x28] sm:$0xff]
    %v2629 = vld [vmem:[%s2622 + $0x30] sm:$0x33]
    %v2630 = vld [vmem:[%s2622 + $0x38] sm:$0x33]
    %v2639 = vunpack.c.l.b16 %v2623
    %v2640 = vunpack.c.h.b16 %v2623
    %v2641 = vunpack.c.l.b16 %v2624
    %v2642 = vunpack.c.h.b16 %v2624
    %v2643 = vunpack.c.l.b16 %v2625
    %v2644 = vunpack.c.h.b16 %v2625
    %v2645 = vunpack.c.l.b16 %v2626
    %v2646 = vunpack.c.h.b16 %v2626
    %v2647 = vunpack.c.l.b16 %v2627
    %v2648 = vunpack.c.h.b16 %v2627
    %v2649 = vunpack.c.l.b16 %v2628
    %v2650 = vunpack.c.h.b16 %v2628
    %v2651 = vunpack.c.l.b16 %v2629
    %v2652 = vunpack.c.h.b16 %v2629
    %v2653 = vunpack.c.l.b16 %v2630
    %v2654 = vunpack.c.h.b16 %v2630
    %v2655 = vpack.c.b16 %v2643, %v2639
    %v2656 = vpack.c.b16 %v2644, %v2640
    %v2657 = vpack.c.b16 %v2645, %v2641
    %v2658 = vpack.c.b16 %v2646, %v2642
    %v2659 = vpack.c.b16 %v2651, %v2647
    %v2660 = vpack.c.b16 %v2652, %v2648
    %v2661 = vpack.c.b16 %v2653, %v2649
    %v2662 = vpack.c.b16 %v2654, %v2650
    %v2668 = vsel %vm255, %v2659, 0
    %v2671 = vsel %vm255, %v2660, 0
    %v2674 = vsel %vm255, %v2661, 0
    %v2677 = vsel %vm255, %v2662, 0
    %2679 = vmatprep.subr.bf16.mxu0 0
    %2680 = vmatpush1.bf16.msra.mxu0 0
    %2681 = vmatprep.subr.bf16.mxu0 0
    %2682 = vmatpush1.bf16.msra.mxu0 0
    %2683 = vmatprep.subr.bf16.mxu0 0
    %2684 = vmatpush1.bf16.msra.mxu0 0
    %2685 = vmatprep.subr.bf16.mxu0 0
    %2686 = vmatpush1.bf16.msra.mxu0 0
    %2687 = vmatprep.subr.bf16.mxu0 0
    %2688 = vmatpush1.bf16.msra.mxu0 0
    %2689 = vmatprep.subr.bf16.mxu0 0
    %2690 = vmatpush1.bf16.msra.mxu0 0
    %2691 = vmatprep.subr.bf16.mxu0 %v2671
    %2692 = vmatpush1.bf16.msra.mxu0 %v2668
    %2693 = vmatprep.subr.bf16.mxu0 %v2656
    %2694 = vmatpush1.bf16.msra.mxu0 %v2655
    %2695 = vmatprep.subr.bf16.mxu0 0
    %2696 = vmatpush2.bf16.msra.mxu0 0
    %2697 = vmatprep.subr.bf16.mxu0 0
    %2698 = vmatpush2.bf16.msra.mxu0 0
    %2699 = vmatprep.subr.bf16.mxu0 0
    %2700 = vmatpush2.bf16.msra.mxu0 0
    %2701 = vmatprep.subr.bf16.mxu0 0
    %2702 = vmatpush2.bf16.msra.mxu0 0
    %2703 = vmatprep.subr.bf16.mxu0 0
    %2704 = vmatpush2.bf16.msra.mxu0 0
    %2705 = vmatprep.subr.bf16.mxu0 0
    %2706 = vmatpush2.bf16.msra.mxu0 0
    %2707 = vmatprep.subr.bf16.mxu0 0
    %2708 = vmatpush2.bf16.msra.mxu0 0
    %2709 = vmatprep.subr.bf16.mxu0 0
    %2710 = vmatpush2.bf16.msra.mxu0 0
    %2711 = vmatprep.mubr.bf16.mxu0 0
    %2712 = vmatmul.mubr.bf16.gmra.mxu0 %v211
    %v2713 = vpop.f32.mrf.mxu0
    %v2714 = vpop.f32.mrf.mxu0
    %v2715 = vpop.f32.mrf.mxu0
    %v2716 = vpop.f32.mrf.mxu0
    %2717 = vmatprep.mubr.bf16.mxu0 0
    %2718 = vmatmul.mubr.bf16.gmra.mxu0 %v214
    %v2719 = vpop.f32.mrf.mxu0
    %v2720 = vadd.f32 0.0, %v2719
    %v2721 = vpop.f32.mrf.mxu0
    %v2722 = vadd.f32 0.0, %v2721
    %v2723 = vpop.f32.mrf.mxu0
    %v2724 = vadd.f32 0.0, %v2723
    %v2725 = vpop.f32.mrf.mxu0
    %v2726 = vadd.f32 0.0, %v2725
    %2727 = vmatprep.mubr.bf16.mxu0 0
    %2728 = vmatmul.mubr.bf16.gmra.mxu0 %v217
    %v2729 = vpop.f32.mrf.mxu0
    %v2730 = vadd.f32 0.0, %v2729
    %v2731 = vpop.f32.mrf.mxu0
    %v2732 = vadd.f32 0.0, %v2731
    %v2733 = vpop.f32.mrf.mxu0
    %v2734 = vadd.f32 0.0, %v2733
    %v2735 = vpop.f32.mrf.mxu0
    %v2736 = vadd.f32 0.0, %v2735
    %2737 = vmatprep.mubr.bf16.mxu0 0
    %2738 = vmatmul.mubr.bf16.gmra.mxu0 %v220
    %v2739 = vpop.f32.mrf.mxu0
    %v2740 = vadd.f32 0.0, %v2739
    %v2741 = vpop.f32.mrf.mxu0
    %v2742 = vadd.f32 0.0, %v2741
    %v2743 = vpop.f32.mrf.mxu0
    %v2744 = vadd.f32 0.0, %v2743
    %v2745 = vpop.f32.mrf.mxu0
    %v2746 = vadd.f32 0.0, %v2745
    %2747 = vmatprep.mubr.bf16.mxu0 0
    %2748 = vmatmul.mubr.bf16.gmra.mxu0 %v223
    %v2749 = vpop.f32.mrf.mxu0
    %v2750 = vadd.f32 0.0, %v2749
    %v2751 = vpop.f32.mrf.mxu0
    %v2752 = vadd.f32 0.0, %v2751
    %v2753 = vpop.f32.mrf.mxu0
    %v2754 = vadd.f32 0.0, %v2753
    %v2755 = vpop.f32.mrf.mxu0
    %v2756 = vadd.f32 0.0, %v2755
    %2757 = vmatprep.mubr.bf16.mxu0 0
    %2758 = vmatmul.mubr.bf16.gmra.mxu0 %v226
    %v2759 = vpop.f32.mrf.mxu0
    %v2760 = vadd.f32 0.0, %v2759
    %v2761 = vpop.f32.mrf.mxu0
    %v2762 = vadd.f32 0.0, %v2761
    %v2763 = vpop.f32.mrf.mxu0
    %v2764 = vadd.f32 0.0, %v2763
    %v2765 = vpop.f32.mrf.mxu0
    %v2766 = vadd.f32 0.0, %v2765
    %2767 = vmatprep.mubr.bf16.mxu0 0
    %2768 = vmatmul.mubr.bf16.gmra.mxu0 %v229
    %v2769 = vpop.f32.mrf.mxu0
    %v2770 = vadd.f32 0.0, %v2769
    %v2771 = vpop.f32.mrf.mxu0
    %v2772 = vadd.f32 0.0, %v2771
    %v2773 = vpop.f32.mrf.mxu0
    %v2774 = vadd.f32 0.0, %v2773
    %v2775 = vpop.f32.mrf.mxu0
    %v2776 = vadd.f32 0.0, %v2775
    %2777 = vmatprep.mubr.bf16.mxu0 0
    %2778 = vmatmul.mubr.bf16.gmra.mxu0 %v232
    %v2779 = vpop.f32.mrf.mxu0
    %v2780 = vadd.f32 0.0, %v2779
    %v2781 = vpop.f32.mrf.mxu0
    %v2782 = vadd.f32 0.0, %v2781
    %v2783 = vpop.f32.mrf.mxu0
    %v2784 = vadd.f32 0.0, %v2783
    %v2785 = vpop.f32.mrf.mxu0
    %v2786 = vadd.f32 0.0, %v2785
    %2787 = vmatprep.mubr.bf16.mxu0 0
    %2788 = vmatmul.mubr.bf16.gmra.mxu0 %v235
    %v2789 = vpop.f32.mrf.mxu0
    %v2790 = vadd.f32 0.0, %v2789
    %v2791 = vpop.f32.mrf.mxu0
    %v2792 = vadd.f32 0.0, %v2791
    %v2793 = vpop.f32.mrf.mxu0
    %v2794 = vadd.f32 0.0, %v2793
    %v2795 = vpop.f32.mrf.mxu0
    %v2796 = vadd.f32 0.0, %v2795
    %2797 = vmatprep.mubr.bf16.mxu0 0
    %2798 = vmatmul.mubr.bf16.gmra.mxu0 %v238
    %v2799 = vpop.f32.mrf.mxu0
    %v2800 = vadd.f32 0.0, %v2799
    %v2801 = vpop.f32.mrf.mxu0
    %v2802 = vadd.f32 0.0, %v2801
    %v2803 = vpop.f32.mrf.mxu0
    %v2804 = vadd.f32 0.0, %v2803
    %v2805 = vpop.f32.mrf.mxu0
    %v2806 = vadd.f32 0.0, %v2805
    %2807 = vmatprep.mubr.bf16.mxu0 0
    %2808 = vmatmul.mubr.bf16.gmra.mxu0 %v241
    %v2809 = vpop.f32.mrf.mxu0
    %v2810 = vadd.f32 0.0, %v2809
    %v2811 = vpop.f32.mrf.mxu0
    %v2812 = vadd.f32 0.0, %v2811
    %v2813 = vpop.f32.mrf.mxu0
    %v2814 = vadd.f32 0.0, %v2813
    %v2815 = vpop.f32.mrf.mxu0
    %v2816 = vadd.f32 0.0, %v2815
    %2817 = vmatprep.mubr.bf16.mxu0 0
    %2818 = vmatmul.mubr.bf16.gmra.mxu0 %v244
    %v2819 = vpop.f32.mrf.mxu0
    %v2820 = vadd.f32 0.0, %v2819
    %v2821 = vpop.f32.mrf.mxu0
    %v2822 = vadd.f32 0.0, %v2821
    %v2823 = vpop.f32.mrf.mxu0
    %v2824 = vadd.f32 0.0, %v2823
    %v2825 = vpop.f32.mrf.mxu0
    %v2826 = vadd.f32 0.0, %v2825
    %2827 = vmatprep.mubr.bf16.mxu0 0
    %2828 = vmatmul.mubr.bf16.gmra.mxu0 %v247
    %v2829 = vpop.f32.mrf.mxu0
    %v2830 = vadd.f32 0.0, %v2829
    %v2831 = vpop.f32.mrf.mxu0
    %v2832 = vadd.f32 0.0, %v2831
    %v2833 = vpop.f32.mrf.mxu0
    %v2834 = vadd.f32 0.0, %v2833
    %v2835 = vpop.f32.mrf.mxu0
    %v2836 = vadd.f32 0.0, %v2835
    %2837 = vmatprep.mubr.bf16.mxu0 0
    %2838 = vmatmul.mubr.bf16.gmra.mxu0 %v250
    %v2839 = vpop.f32.mrf.mxu0
    %v2840 = vadd.f32 0.0, %v2839
    %v2841 = vpop.f32.mrf.mxu0
    %v2842 = vadd.f32 0.0, %v2841
    %v2843 = vpop.f32.mrf.mxu0
    %v2844 = vadd.f32 0.0, %v2843
    %v2845 = vpop.f32.mrf.mxu0
    %v2846 = vadd.f32 0.0, %v2845
    %2847 = vmatprep.mubr.bf16.mxu0 0
    %2848 = vmatmul.mubr.bf16.gmra.mxu0 %v253
    %v2849 = vpop.f32.mrf.mxu0
    %v2850 = vadd.f32 0.0, %v2849
    %v2851 = vpop.f32.mrf.mxu0
    %v2852 = vadd.f32 0.0, %v2851
    %v2853 = vpop.f32.mrf.mxu0
    %v2854 = vadd.f32 0.0, %v2853
    %v2855 = vpop.f32.mrf.mxu0
    %v2856 = vadd.f32 0.0, %v2855
    %2857 = vdwg.mxu0
    %2858 = vmatprep.subr.bf16.mxu0 0
    %2859 = vmatpush1.bf16.msra.mxu0 0
    %2860 = vmatprep.subr.bf16.mxu0 0
    %2861 = vmatpush1.bf16.msra.mxu0 0
    %2862 = vmatprep.subr.bf16.mxu0 0
    %2863 = vmatpush1.bf16.msra.mxu0 0
    %2864 = vmatprep.subr.bf16.mxu0 0
    %2865 = vmatpush1.bf16.msra.mxu0 0
    %2866 = vmatprep.subr.bf16.mxu0 0
    %2867 = vmatpush1.bf16.msra.mxu0 0
    %2868 = vmatprep.subr.bf16.mxu0 0
    %2869 = vmatpush1.bf16.msra.mxu0 0
    %2870 = vmatprep.subr.bf16.mxu0 %v2677
    %2871 = vmatpush1.bf16.msra.mxu0 %v2674
    %2872 = vmatprep.subr.bf16.mxu0 %v2658
    %2873 = vmatpush1.bf16.msra.mxu0 %v2657
    %2874 = vmatprep.subr.bf16.mxu0 0
    %2875 = vmatpush2.bf16.msra.mxu0 0
    %2876 = vmatprep.subr.bf16.mxu0 0
    %2877 = vmatpush2.bf16.msra.mxu0 0
    %2878 = vmatprep.subr.bf16.mxu0 0
    %2879 = vmatpush2.bf16.msra.mxu0 0
    %2880 = vmatprep.subr.bf16.mxu0 0
    %2881 = vmatpush2.bf16.msra.mxu0 0
    %2882 = vmatprep.subr.bf16.mxu0 0
    %2883 = vmatpush2.bf16.msra.mxu0 0
    %2884 = vmatprep.subr.bf16.mxu0 0
    %2885 = vmatpush2.bf16.msra.mxu0 0
    %2886 = vmatprep.subr.bf16.mxu0 0
    %2887 = vmatpush2.bf16.msra.mxu0 0
    %2888 = vmatprep.subr.bf16.mxu0 0
    %2889 = vmatpush2.bf16.msra.mxu0 0
    %2890 = vmatprep.mubr.bf16.mxu0 0
    %2891 = vmatmul.mubr.bf16.gmra.mxu0 %v211
    %v2892 = vpop.f32.mrf.mxu0
    %v2893 = vpop.f32.mrf.mxu0
    %v2894 = vpop.f32.mrf.mxu0
    %v2895 = vpop.f32.mrf.mxu0
    %2896 = vmatprep.mubr.bf16.mxu0 0
    %2897 = vmatmul.mubr.bf16.gmra.mxu0 %v214
    %v2898 = vpop.f32.mrf.mxu0
    %v2899 = vadd.f32 0.0, %v2898
    %v2900 = vpop.f32.mrf.mxu0
    %v2901 = vadd.f32 0.0, %v2900
    %v2902 = vpop.f32.mrf.mxu0
    %v2903 = vadd.f32 0.0, %v2902
    %v2904 = vpop.f32.mrf.mxu0
    %v2905 = vadd.f32 0.0, %v2904
    %2906 = vmatprep.mubr.bf16.mxu0 0
    %2907 = vmatmul.mubr.bf16.gmra.mxu0 %v217
    %v2908 = vpop.f32.mrf.mxu0
    %v2909 = vadd.f32 0.0, %v2908
    %v2910 = vpop.f32.mrf.mxu0
    %v2911 = vadd.f32 0.0, %v2910
    %v2912 = vpop.f32.mrf.mxu0
    %v2913 = vadd.f32 0.0, %v2912
    %v2914 = vpop.f32.mrf.mxu0
    %v2915 = vadd.f32 0.0, %v2914
    %2916 = vmatprep.mubr.bf16.mxu0 0
    %2917 = vmatmul.mubr.bf16.gmra.mxu0 %v220
    %v2918 = vpop.f32.mrf.mxu0
    %v2919 = vadd.f32 0.0, %v2918
    %v2920 = vpop.f32.mrf.mxu0
    %v2921 = vadd.f32 0.0, %v2920
    %v2922 = vpop.f32.mrf.mxu0
    %v2923 = vadd.f32 0.0, %v2922
    %v2924 = vpop.f32.mrf.mxu0
    %v2925 = vadd.f32 0.0, %v2924
    %2926 = vmatprep.mubr.bf16.mxu0 0
    %2927 = vmatmul.mubr.bf16.gmra.mxu0 %v223
    %v2928 = vpop.f32.mrf.mxu0
    %v2929 = vadd.f32 0.0, %v2928
    %v2930 = vpop.f32.mrf.mxu0
    %v2931 = vadd.f32 0.0, %v2930
    %v2932 = vpop.f32.mrf.mxu0
    %v2933 = vadd.f32 0.0, %v2932
    %v2934 = vpop.f32.mrf.mxu0
    %v2935 = vadd.f32 0.0, %v2934
    %2936 = vmatprep.mubr.bf16.mxu0 0
    %2937 = vmatmul.mubr.bf16.gmra.mxu0 %v226
    %v2938 = vpop.f32.mrf.mxu0
    %v2939 = vadd.f32 0.0, %v2938
    %v2940 = vpop.f32.mrf.mxu0
    %v2941 = vadd.f32 0.0, %v2940
    %v2942 = vpop.f32.mrf.mxu0
    %v2943 = vadd.f32 0.0, %v2942
    %v2944 = vpop.f32.mrf.mxu0
    %v2945 = vadd.f32 0.0, %v2944
    %2946 = vmatprep.mubr.bf16.mxu0 0
    %2947 = vmatmul.mubr.bf16.gmra.mxu0 %v229
    %v2948 = vpop.f32.mrf.mxu0
    %v2949 = vadd.f32 0.0, %v2948
    %v2950 = vpop.f32.mrf.mxu0
    %v2951 = vadd.f32 0.0, %v2950
    %v2952 = vpop.f32.mrf.mxu0
    %v2953 = vadd.f32 0.0, %v2952
    %v2954 = vpop.f32.mrf.mxu0
    %v2955 = vadd.f32 0.0, %v2954
    %2956 = vmatprep.mubr.bf16.mxu0 0
    %2957 = vmatmul.mubr.bf16.gmra.mxu0 %v232
    %v2958 = vpop.f32.mrf.mxu0
    %v2959 = vadd.f32 0.0, %v2958
    %v2960 = vpop.f32.mrf.mxu0
    %v2961 = vadd.f32 0.0, %v2960
    %v2962 = vpop.f32.mrf.mxu0
    %v2963 = vadd.f32 0.0, %v2962
    %v2964 = vpop.f32.mrf.mxu0
    %v2965 = vadd.f32 0.0, %v2964
    %2966 = vmatprep.mubr.bf16.mxu0 0
    %2967 = vmatmul.mubr.bf16.gmra.mxu0 %v235
    %v2968 = vpop.f32.mrf.mxu0
    %v2969 = vadd.f32 0.0, %v2968
    %v2970 = vpop.f32.mrf.mxu0
    %v2971 = vadd.f32 0.0, %v2970
    %v2972 = vpop.f32.mrf.mxu0
    %v2973 = vadd.f32 0.0, %v2972
    %v2974 = vpop.f32.mrf.mxu0
    %v2975 = vadd.f32 0.0, %v2974
    %2976 = vmatprep.mubr.bf16.mxu0 0
    %2977 = vmatmul.mubr.bf16.gmra.mxu0 %v238
    %v2978 = vpop.f32.mrf.mxu0
    %v2979 = vadd.f32 0.0, %v2978
    %v2980 = vpop.f32.mrf.mxu0
    %v2981 = vadd.f32 0.0, %v2980
    %v2982 = vpop.f32.mrf.mxu0
    %v2983 = vadd.f32 0.0, %v2982
    %v2984 = vpop.f32.mrf.mxu0
    %v2985 = vadd.f32 0.0, %v2984
    %2986 = vmatprep.mubr.bf16.mxu0 0
    %2987 = vmatmul.mubr.bf16.gmra.mxu0 %v241
    %v2988 = vpop.f32.mrf.mxu0
    %v2989 = vadd.f32 0.0, %v2988
    %v2990 = vpop.f32.mrf.mxu0
    %v2991 = vadd.f32 0.0, %v2990
    %v2992 = vpop.f32.mrf.mxu0
    %v2993 = vadd.f32 0.0, %v2992
    %v2994 = vpop.f32.mrf.mxu0
    %v2995 = vadd.f32 0.0, %v2994
    %2996 = vmatprep.mubr.bf16.mxu0 0
    %2997 = vmatmul.mubr.bf16.gmra.mxu0 %v244
    %v2998 = vpop.f32.mrf.mxu0
    %v2999 = vadd.f32 0.0, %v2998
    %v3000 = vpop.f32.mrf.mxu0
    %v3001 = vadd.f32 0.0, %v3000
    %v3002 = vpop.f32.mrf.mxu0
    %v3003 = vadd.f32 0.0, %v3002
    %v3004 = vpop.f32.mrf.mxu0
    %v3005 = vadd.f32 0.0, %v3004
    %3006 = vmatprep.mubr.bf16.mxu0 0
    %3007 = vmatmul.mubr.bf16.gmra.mxu0 %v247
    %v3008 = vpop.f32.mrf.mxu0
    %v3009 = vadd.f32 0.0, %v3008
    %v3010 = vpop.f32.mrf.mxu0
    %v3011 = vadd.f32 0.0, %v3010
    %v3012 = vpop.f32.mrf.mxu0
    %v3013 = vadd.f32 0.0, %v3012
    %v3014 = vpop.f32.mrf.mxu0
    %v3015 = vadd.f32 0.0, %v3014
    %3016 = vmatprep.mubr.bf16.mxu0 0
    %3017 = vmatmul.mubr.bf16.gmra.mxu0 %v250
    %v3018 = vpop.f32.mrf.mxu0
    %v3019 = vadd.f32 0.0, %v3018
    %v3020 = vpop.f32.mrf.mxu0
    %v3021 = vadd.f32 0.0, %v3020
    %v3022 = vpop.f32.mrf.mxu0
    %v3023 = vadd.f32 0.0, %v3022
    %v3024 = vpop.f32.mrf.mxu0
    %v3025 = vadd.f32 0.0, %v3024
    %3026 = vmatprep.mubr.bf16.mxu0 0
    %3027 = vmatmul.mubr.bf16.gmra.mxu0 %v253
    %v3028 = vpop.f32.mrf.mxu0
    %v3029 = vadd.f32 0.0, %v3028
    %v3030 = vpop.f32.mrf.mxu0
    %v3031 = vadd.f32 0.0, %v3030
    %v3032 = vpop.f32.mrf.mxu0
    %v3033 = vadd.f32 0.0, %v3032
    %v3034 = vpop.f32.mrf.mxu0
    %v3035 = vadd.f32 0.0, %v3034
    %3036 = vdwg.mxu0
    %v3037 = vadd.f32 %v2510, %v2720
    %v3038 = vadd.f32 %v2511, %v2722
    %v3039 = vadd.f32 %v2512, %v2899
    %v3040 = vadd.f32 %v2513, %v2901
    %v3041 = vadd.f32 %v2514, %v2724
    %v3042 = vadd.f32 %v2515, %v2726
    %v3043 = vadd.f32 %v2516, %v2903
    %v3044 = vadd.f32 %v2517, %v2905
    %v3045 = vadd.f32 %v2518, %v2730
    %v3046 = vadd.f32 %v2519, %v2732
    %v3047 = vadd.f32 %v2520, %v2909
    %v3048 = vadd.f32 %v2521, %v2911
    %v3049 = vadd.f32 %v2522, %v2734
    %v3050 = vadd.f32 %v2523, %v2736
    %v3051 = vadd.f32 %v2524, %v2913
    %v3052 = vadd.f32 %v2525, %v2915
    %v3053 = vadd.f32 %v2526, %v2740
    %v3054 = vadd.f32 %v2527, %v2742
    %v3055 = vadd.f32 %v2528, %v2919
    %v3056 = vadd.f32 %v2529, %v2921
    %v3057 = vadd.f32 %v2530, %v2744
    %v3058 = vadd.f32 %v2531, %v2746
    %v3059 = vadd.f32 %v2532, %v2923
    %v3060 = vadd.f32 %v2533, %v2925
    %v3061 = vadd.f32 %v2534, %v2750
    %v3062 = vadd.f32 %v2535, %v2752
    %v3063 = vadd.f32 %v2536, %v2929
    %v3064 = vadd.f32 %v2537, %v2931
    %v3065 = vadd.f32 %v2538, %v2754
    %v3066 = vadd.f32 %v2539, %v2756
    %v3067 = vadd.f32 %v2540, %v2933
    %v3068 = vadd.f32 %v2541, %v2935
    %v3069 = vadd.f32 %v2542, %v2760
    %v3070 = vadd.f32 %v2543, %v2762
    %v3071 = vadd.f32 %v2544, %v2939
    %v3072 = vadd.f32 %v2545, %v2941
    %v3073 = vadd.f32 %v2546, %v2764
    %v3074 = vadd.f32 %v2547, %v2766
    %v3075 = vadd.f32 %v2548, %v2943
    %v3076 = vadd.f32 %v2549, %v2945
    %v3077 = vadd.f32 %v2550, %v2770
    %v3078 = vadd.f32 %v2551, %v2772
    %v3079 = vadd.f32 %v2552, %v2949
    %v3080 = vadd.f32 %v2553, %v2951
    %v3081 = vadd.f32 %v2554, %v2774
    %v3082 = vadd.f32 %v2555, %v2776
    %v3083 = vadd.f32 %v2556, %v2953
    %v3084 = vadd.f32 %v2557, %v2955
    %v3085 = vadd.f32 %v2558, %v2780
    %v3086 = vadd.f32 %v2559, %v2782
    %v3087 = vadd.f32 %v2560, %v2959
    %v3088 = vadd.f32 %v2561, %v2961
    %v3089 = vadd.f32 %v2562, %v2784
    %v3090 = vadd.f32 %v2563, %v2786
    %v3091 = vadd.f32 %v2564, %v2963
    %v3092 = vadd.f32 %v2565, %v2965
    %v3093 = vadd.f32 %v2566, %v2790
    %v3094 = vadd.f32 %v2567, %v2792
    %v3095 = vadd.f32 %v2568, %v2969
    %v3096 = vadd.f32 %v2569, %v2971
    %v3097 = vadd.f32 %v2570, %v2794
    %v3098 = vadd.f32 %v2571, %v2796
    %v3099 = vadd.f32 %v2572, %v2973
    %v3100 = vadd.f32 %v2573, %v2975
    %v3101 = vadd.f32 %v2574, %v2800
    %v3102 = vadd.f32 %v2575, %v2802
    %v3103 = vadd.f32 %v2576, %v2979
    %v3104 = vadd.f32 %v2577, %v2981
    %v3105 = vadd.f32 %v2578, %v2804
    %v3106 = vadd.f32 %v2579, %v2806
    %v3107 = vadd.f32 %v2580, %v2983
    %v3108 = vadd.f32 %v2581, %v2985
    %v3109 = vadd.f32 %v2582, %v2810
    %v3110 = vadd.f32 %v2583, %v2812
    %v3111 = vadd.f32 %v2584, %v2989
    %v3112 = vadd.f32 %v2585, %v2991
    %v3113 = vadd.f32 %v2586, %v2814
    %v3114 = vadd.f32 %v2587, %v2816
    %v3115 = vadd.f32 %v2588, %v2993
    %v3116 = vadd.f32 %v2589, %v2995
    %v3117 = vadd.f32 %v2590, %v2820
    %v3118 = vadd.f32 %v2591, %v2822
    %v3119 = vadd.f32 %v2592, %v2999
    %v3120 = vadd.f32 %v2593, %v3001
    %v3121 = vadd.f32 %v2594, %v2824
    %v3122 = vadd.f32 %v2595, %v2826
    %v3123 = vadd.f32 %v2596, %v3003
    %v3124 = vadd.f32 %v2597, %v3005
    %v3125 = vadd.f32 %v2598, %v2830
    %v3126 = vadd.f32 %v2599, %v2832
    %v3127 = vadd.f32 %v2600, %v3009
    %v3128 = vadd.f32 %v2601, %v3011
    %v3129 = vadd.f32 %v2602, %v2834
    %v3130 = vadd.f32 %v2603, %v2836
    %v3131 = vadd.f32 %v2604, %v3013
    %v3132 = vadd.f32 %v2605, %v3015
    %v3133 = vadd.f32 %v2606, %v2840
    %v3134 = vadd.f32 %v2607, %v2842
    %v3135 = vadd.f32 %v2608, %v3019
    %v3136 = vadd.f32 %v2609, %v3021
    %v3137 = vadd.f32 %v2610, %v2844
    %v3138 = vadd.f32 %v2611, %v2846
    %v3139 = vadd.f32 %v2612, %v3023
    %v3140 = vadd.f32 %v2613, %v3025
    %v3141 = vadd.f32 %v2614, %v2850
    %v3142 = vadd.f32 %v2615, %v2852
    %v3143 = vadd.f32 %v2616, %v3029
    %v3144 = vadd.f32 %v2617, %v3031
    %v3145 = vadd.f32 %v2618, %v2854
    %v3146 = vadd.f32 %v2619, %v2856
    %v3147 = vadd.f32 %v2620, %v3033
    %v3148 = vadd.f32 %v2621, %v3035
    %v3149 = vmax.f32 %v1568, %v3037
    %v3150 = vmax.f32 %v1569, %v3038
    %v3151 = vmax.f32 %v1570, %v3039
    %v3152 = vmax.f32 %v1571, %v3040
    %v3153 = vmax.f32 %v1572, %v3041
    %v3154 = vmax.f32 %v1573, %v3042
    %v3155 = vmax.f32 %v1574, %v3043
    %v3156 = vmax.f32 %v1575, %v3044
    %v3157 = vmax.f32 %v1576, %v3045
    %v3158 = vmax.f32 %v1577, %v3046
    %v3159 = vmax.f32 %v1578, %v3047
    %v3160 = vmax.f32 %v1579, %v3048
    %v3161 = vmax.f32 %v1580, %v3049
    %v3162 = vmax.f32 %v1581, %v3050
    %v3163 = vmax.f32 %v1582, %v3051
    %v3164 = vmax.f32 %v1583, %v3052
    %v3165 = vmax.f32 %v1584, %v3053
    %v3166 = vmax.f32 %v1585, %v3054
    %v3167 = vmax.f32 %v1586, %v3055
    %v3168 = vmax.f32 %v1587, %v3056
    %v3169 = vmax.f32 %v1588, %v3057
    %v3170 = vmax.f32 %v1589, %v3058
    %v3171 = vmax.f32 %v1590, %v3059
    %v3172 = vmax.f32 %v1591, %v3060
    %v3173 = vmax.f32 %v1592, %v3061
    %v3174 = vmax.f32 %v1593, %v3062
    %v3175 = vmax.f32 %v1594, %v3063
    %v3176 = vmax.f32 %v1595, %v3064
    %v3177 = vmax.f32 %v1596, %v3065
    %v3178 = vmax.f32 %v1597, %v3066
    %v3179 = vmax.f32 %v1598, %v3067
    %v3180 = vmax.f32 %v1599, %v3068
    %v3181 = vmax.f32 %v1600, %v3069
    %v3182 = vmax.f32 %v1601, %v3070
    %v3183 = vmax.f32 %v1602, %v3071
    %v3184 = vmax.f32 %v1603, %v3072
    %v3185 = vmax.f32 %v1604, %v3073
    %v3186 = vmax.f32 %v1605, %v3074
    %v3187 = vmax.f32 %v1606, %v3075
    %v3188 = vmax.f32 %v1607, %v3076
    %v3189 = vmax.f32 %v1608, %v3077
    %v3190 = vmax.f32 %v1609, %v3078
    %v3191 = vmax.f32 %v1610, %v3079
    %v3192 = vmax.f32 %v1611, %v3080
    %v3193 = vmax.f32 %v1612, %v3081
    %v3194 = vmax.f32 %v1613, %v3082
    %v3195 = vmax.f32 %v1614, %v3083
    %v3196 = vmax.f32 %v1615, %v3084
    %v3197 = vmax.f32 %v1616, %v3085
    %v3198 = vmax.f32 %v1617, %v3086
    %v3199 = vmax.f32 %v1618, %v3087
    %v3200 = vmax.f32 %v1619, %v3088
    %v3201 = vmax.f32 %v1620, %v3089
    %v3202 = vmax.f32 %v1621, %v3090
    %v3203 = vmax.f32 %v1622, %v3091
    %v3204 = vmax.f32 %v1623, %v3092
    %v3205 = vmax.f32 %v1624, %v3093
    %v3206 = vmax.f32 %v1625, %v3094
    %v3207 = vmax.f32 %v1626, %v3095
    %v3208 = vmax.f32 %v1627, %v3096
    %v3209 = vmax.f32 %v1628, %v3097
    %v3210 = vmax.f32 %v1629, %v3098
    %v3211 = vmax.f32 %v1630, %v3099
    %v3212 = vmax.f32 %v1631, %v3100
    %v3213 = vmax.f32 %v1632, %v3101
    %v3214 = vmax.f32 %v1633, %v3102
    %v3215 = vmax.f32 %v1634, %v3103
    %v3216 = vmax.f32 %v1635, %v3104
    %v3217 = vmax.f32 %v1636, %v3105
    %v3218 = vmax.f32 %v1637, %v3106
    %v3219 = vmax.f32 %v1638, %v3107
    %v3220 = vmax.f32 %v1639, %v3108
    %v3221 = vmax.f32 %v1640, %v3109
    %v3222 = vmax.f32 %v1641, %v3110
    %v3223 = vmax.f32 %v1642, %v3111
    %v3224 = vmax.f32 %v1643, %v3112
    %v3225 = vmax.f32 %v1644, %v3113
    %v3226 = vmax.f32 %v1645, %v3114
    %v3227 = vmax.f32 %v1646, %v3115
    %v3228 = vmax.f32 %v1647, %v3116
    %v3229 = vmax.f32 %v1648, %v3117
    %v3230 = vmax.f32 %v1649, %v3118
    %v3231 = vmax.f32 %v1650, %v3119
    %v3232 = vmax.f32 %v1651, %v3120
    %v3233 = vmax.f32 %v1652, %v3121
    %v3234 = vmax.f32 %v1653, %v3122
    %v3235 = vmax.f32 %v1654, %v3123
    %v3236 = vmax.f32 %v1655, %v3124
    %v3237 = vmax.f32 %v1656, %v3125
    %v3238 = vmax.f32 %v1657, %v3126
    %v3239 = vmax.f32 %v1658, %v3127
    %v3240 = vmax.f32 %v1659, %v3128
    %v3241 = vmax.f32 %v1660, %v3129
    %v3242 = vmax.f32 %v1661, %v3130
    %v3243 = vmax.f32 %v1662, %v3131
    %v3244 = vmax.f32 %v1663, %v3132
    %v3245 = vmax.f32 %v1664, %v3133
    %v3246 = vmax.f32 %v1665, %v3134
    %v3247 = vmax.f32 %v1666, %v3135
    %v3248 = vmax.f32 %v1667, %v3136
    %v3249 = vmax.f32 %v1668, %v3137
    %v3250 = vmax.f32 %v1669, %v3138
    %v3251 = vmax.f32 %v1670, %v3139
    %v3252 = vmax.f32 %v1671, %v3140
    %v3253 = vmax.f32 %v1672, %v3141
    %v3254 = vmax.f32 %v1673, %v3142
    %v3255 = vmax.f32 %v1674, %v3143
    %v3256 = vmax.f32 %v1675, %v3144
    %v3257 = vmax.f32 %v1676, %v3145
    %v3258 = vmax.f32 %v1677, %v3146
    %v3259 = vmax.f32 %v1678, %v3147
    %v3260 = vmax.f32 %v1679, %v3148
    %v3261 = vmax.f32 %v3149, %v3153
    %v3262 = vmax.f32 %v3150, %v3154
    %v3263 = vmax.f32 %v3151, %v3155
    %v3264 = vmax.f32 %v3152, %v3156
    %v3265 = vmax.f32 %v3157, %v3161
    %v3266 = vmax.f32 %v3158, %v3162
    %v3267 = vmax.f32 %v3159, %v3163
    %v3268 = vmax.f32 %v3160, %v3164
    %v3269 = vmax.f32 %v3165, %v3169
    %v3270 = vmax.f32 %v3166, %v3170
    %v3271 = vmax.f32 %v3167, %v3171
    %v3272 = vmax.f32 %v3168, %v3172
    %v3273 = vmax.f32 %v3173, %v3177
    %v3274 = vmax.f32 %v3174, %v3178
    %v3275 = vmax.f32 %v3175, %v3179
    %v3276 = vmax.f32 %v3176, %v3180
    %v3277 = vmax.f32 %v3181, %v3185
    %v3278 = vmax.f32 %v3182, %v3186
    %v3279 = vmax.f32 %v3183, %v3187
    %v3280 = vmax.f32 %v3184, %v3188
    %v3281 = vmax.f32 %v3189, %v3193
    %v3282 = vmax.f32 %v3190, %v3194
    %v3283 = vmax.f32 %v3191, %v3195
    %v3284 = vmax.f32 %v3192, %v3196
    %v3285 = vmax.f32 %v3197, %v3201
    %v3286 = vmax.f32 %v3198, %v3202
    %v3287 = vmax.f32 %v3199, %v3203
    %v3288 = vmax.f32 %v3200, %v3204
    %v3289 = vmax.f32 %v3205, %v3209
    %v3290 = vmax.f32 %v3206, %v3210
    %v3291 = vmax.f32 %v3207, %v3211
    %v3292 = vmax.f32 %v3208, %v3212
    %v3293 = vmax.f32 %v3213, %v3217
    %v3294 = vmax.f32 %v3214, %v3218
    %v3295 = vmax.f32 %v3215, %v3219
    %v3296 = vmax.f32 %v3216, %v3220
    %v3297 = vmax.f32 %v3221, %v3225
    %v3298 = vmax.f32 %v3222, %v3226
    %v3299 = vmax.f32 %v3223, %v3227
    %v3300 = vmax.f32 %v3224, %v3228
    %v3301 = vmax.f32 %v3229, %v3233
    %v3302 = vmax.f32 %v3230, %v3234
    %v3303 = vmax.f32 %v3231, %v3235
    %v3304 = vmax.f32 %v3232, %v3236
    %v3305 = vmax.f32 %v3237, %v3241
    %v3306 = vmax.f32 %v3238, %v3242
    %v3307 = vmax.f32 %v3239, %v3243
    %v3308 = vmax.f32 %v3240, %v3244
    %v3309 = vmax.f32 %v3245, %v3249
    %v3310 = vmax.f32 %v3246, %v3250
    %v3311 = vmax.f32 %v3247, %v3251
    %v3312 = vmax.f32 %v3248, %v3252
    %v3313 = vmax.f32 %v3253, %v3257
    %v3314 = vmax.f32 %v3254, %v3258
    %v3315 = vmax.f32 %v3255, %v3259
    %v3316 = vmax.f32 %v3256, %v3260
    %v3317 = vld [vmem:[#allocation5] sm:$0xf]
    %v3319 = vlaneseq
    %v3320 = vshrl.u32 %v3319, 7
    %v3321 = vsub.s32 0, %v3320
    %v3322 = vrot.slane %v3317, %v3321
    %v3323 = vlaneseq
    %v3324 = vshrl.u32 %v3323, 7
    %v3325 = vsub.s32 1, %v3324
    %v3326 = vrot.slane %v3317, %v3325
    %v3327 = vlaneseq
    %v3328 = vshrl.u32 %v3327, 7
    %v3329 = vsub.s32 2, %v3328
    %v3330 = vrot.slane %v3317, %v3329
    %v3331 = vlaneseq
    %v3332 = vshrl.u32 %v3331, 7
    %v3333 = vsub.s32 3, %v3332
    %v3334 = vrot.slane %v3317, %v3333
    %v3339 = vadd.f32 %v3261, %v3322
    %v3340 = vadd.f32 %v3262, %v3326
    %v3341 = vadd.f32 %v3263, %v3330
    %v3342 = vadd.f32 %v3264, %v3334
    %v3343 = vadd.f32 %v3265, %v3322
    %v3344 = vadd.f32 %v3266, %v3326
    %v3345 = vadd.f32 %v3267, %v3330
    %v3346 = vadd.f32 %v3268, %v3334
    %v3347 = vadd.f32 %v3269, %v3322
    %v3348 = vadd.f32 %v3270, %v3326
    %v3349 = vadd.f32 %v3271, %v3330
    %v3350 = vadd.f32 %v3272, %v3334
    %v3351 = vadd.f32 %v3273, %v3322
    %v3352 = vadd.f32 %v3274, %v3326
    %v3353 = vadd.f32 %v3275, %v3330
    %v3354 = vadd.f32 %v3276, %v3334
    %v3355 = vadd.f32 %v3277, %v3322
    %v3356 = vadd.f32 %v3278, %v3326
    %v3357 = vadd.f32 %v3279, %v3330
    %v3358 = vadd.f32 %v3280, %v3334
    %v3359 = vadd.f32 %v3281, %v3322
    %v3360 = vadd.f32 %v3282, %v3326
    %v3361 = vadd.f32 %v3283, %v3330
    %v3362 = vadd.f32 %v3284, %v3334
    %v3363 = vadd.f32 %v3285, %v3322
    %v3364 = vadd.f32 %v3286, %v3326
    %v3365 = vadd.f32 %v3287, %v3330
    %v3366 = vadd.f32 %v3288, %v3334
    %v3367 = vadd.f32 %v3289, %v3322
    %v3368 = vadd.f32 %v3290, %v3326
    %v3369 = vadd.f32 %v3291, %v3330
    %v3370 = vadd.f32 %v3292, %v3334
    %v3371 = vadd.f32 %v3293, %v3322
    %v3372 = vadd.f32 %v3294, %v3326
    %v3373 = vadd.f32 %v3295, %v3330
    %v3374 = vadd.f32 %v3296, %v3334
    %v3375 = vadd.f32 %v3297, %v3322
    %v3376 = vadd.f32 %v3298, %v3326
    %v3377 = vadd.f32 %v3299, %v3330
    %v3378 = vadd.f32 %v3300, %v3334
    %v3379 = vadd.f32 %v3301, %v3322
    %v3380 = vadd.f32 %v3302, %v3326
    %v3381 = vadd.f32 %v3303, %v3330
    %v3382 = vadd.f32 %v3304, %v3334
    %v3383 = vadd.f32 %v3305, %v3322
    %v3384 = vadd.f32 %v3306, %v3326
    %v3385 = vadd.f32 %v3307, %v3330
    %v3386 = vadd.f32 %v3308, %v3334
    %v3387 = vadd.f32 %v3309, %v3322
    %v3388 = vadd.f32 %v3310, %v3326
    %v3389 = vadd.f32 %v3311, %v3330
    %v3390 = vadd.f32 %v3312, %v3334
    %v3391 = vadd.f32 %v3313, %v3322
    %v3392 = vadd.f32 %v3314, %v3326
    %v3393 = vadd.f32 %v3315, %v3330
    %v3394 = vadd.f32 %v3316, %v3334
    %v3395 = vmax.f32 %v3339, 0.0
    %v3396 = vmax.f32 %v3340, 0.0
    %v3397 = vmax.f32 %v3341, 0.0
    %v3398 = vmax.f32 %v3342, 0.0
    %v3399 = vmax.f32 %v3343, 0.0
    %v3400 = vmax.f32 %v3344, 0.0
    %v3401 = vmax.f32 %v3345, 0.0
    %v3402 = vmax.f32 %v3346, 0.0
    %v3403 = vmax.f32 %v3347, 0.0
    %v3404 = vmax.f32 %v3348, 0.0
    %v3405 = vmax.f32 %v3349, 0.0
    %v3406 = vmax.f32 %v3350, 0.0
    %v3407 = vmax.f32 %v3351, 0.0
    %v3408 = vmax.f32 %v3352, 0.0
    %v3409 = vmax.f32 %v3353, 0.0
    %v3410 = vmax.f32 %v3354, 0.0
    %v3411 = vmax.f32 %v3355, 0.0
    %v3412 = vmax.f32 %v3356, 0.0
    %v3413 = vmax.f32 %v3357, 0.0
    %v3414 = vmax.f32 %v3358, 0.0
    %v3415 = vmax.f32 %v3359, 0.0
    %v3416 = vmax.f32 %v3360, 0.0
    %v3417 = vmax.f32 %v3361, 0.0
    %v3418 = vmax.f32 %v3362, 0.0
    %v3419 = vmax.f32 %v3363, 0.0
    %v3420 = vmax.f32 %v3364, 0.0
    %v3421 = vmax.f32 %v3365, 0.0
    %v3422 = vmax.f32 %v3366, 0.0
    %v3423 = vmax.f32 %v3367, 0.0
    %v3424 = vmax.f32 %v3368, 0.0
    %v3425 = vmax.f32 %v3369, 0.0
    %v3426 = vmax.f32 %v3370, 0.0
    %v3427 = vmax.f32 %v3371, 0.0
    %v3428 = vmax.f32 %v3372, 0.0
    %v3429 = vmax.f32 %v3373, 0.0
    %v3430 = vmax.f32 %v3374, 0.0
    %v3431 = vmax.f32 %v3375, 0.0
    %v3432 = vmax.f32 %v3376, 0.0
    %v3433 = vmax.f32 %v3377, 0.0
    %v3434 = vmax.f32 %v3378, 0.0
    %v3435 = vmax.f32 %v3379, 0.0
    %v3436 = vmax.f32 %v3380, 0.0
    %v3437 = vmax.f32 %v3381, 0.0
    %v3438 = vmax.f32 %v3382, 0.0
    %v3439 = vmax.f32 %v3383, 0.0
    %v3440 = vmax.f32 %v3384, 0.0
    %v3441 = vmax.f32 %v3385, 0.0
    %v3442 = vmax.f32 %v3386, 0.0
    %v3443 = vmax.f32 %v3387, 0.0
    %v3444 = vmax.f32 %v3388, 0.0
    %v3445 = vmax.f32 %v3389, 0.0
    %v3446 = vmax.f32 %v3390, 0.0
    %v3447 = vmax.f32 %v3391, 0.0
    %v3448 = vmax.f32 %v3392, 0.0
    %v3449 = vmax.f32 %v3393, 0.0
    %v3450 = vmax.f32 %v3394, 0.0
    %3451 = vst [vmem:[#allocation2] sm:$0xff] 0.0
    %3452 = vst [vmem:[#allocation2 + $0x8] sm:$0xff] 0.0
    %3453 = vst [vmem:[#allocation2 + $0x10] sm:$0xff] 0.0
    %vm3454 = vcmask 523264
    %3455 = vst.msk [vmem:[#allocation2 + $0x18] sm:$0xff] %vm3454, 0.0
    %3456 = vst [vmem:[#allocation2 + $0x1e0] sm:$0xff] 0.0
    %3457 = vst [vmem:[#allocation2 + $0x1e8] sm:$0xff] 0.0
    %3458 = vst [vmem:[#allocation2 + $0x1f0] sm:$0xff] 0.0
    %3459 = vst.msk [vmem:[#allocation2 + $0x1f8] sm:$0xff] %vm3454, 0.0
    %3460 = vst [vmem:[#allocation2 + $0x20] sm:$0xff] %v3395
    %3461 = vst [vmem:[#allocation2 + $0x28] sm:$0xff] %v3396
    %3462 = vst [vmem:[#allocation2 + $0x30] sm:$0xff] %v3397
    %3463 = vst.msk [vmem:[#allocation2 + $0x38] sm:$0xff] %vm3454, %v3398
    %3464 = vst [vmem:[#allocation2 + $0x40] sm:$0xff] %v3399
    %3465 = vst [vmem:[#allocation2 + $0x48] sm:$0xff] %v3400
    %3466 = vst [vmem:[#allocation2 + $0x50] sm:$0xff] %v3401
    %3467 = vst.msk [vmem:[#allocation2 + $0x58] sm:$0xff] %vm3454, %v3402
    %3468 = vst [vmem:[#allocation2 + $0x60] sm:$0xff] %v3403
    %3469 = vst [vmem:[#allocation2 + $0x68] sm:$0xff] %v3404
    %3470 = vst [vmem:[#allocation2 + $0x70] sm:$0xff] %v3405
    %3471 = vst.msk [vmem:[#allocation2 + $0x78] sm:$0xff] %vm3454, %v3406
    %3472 = vst [vmem:[#allocation2 + $0x80] sm:$0xff] %v3407
    %3473 = vst [vmem:[#allocation2 + $0x88] sm:$0xff] %v3408
    %3474 = vst [vmem:[#allocation2 + $0x90] sm:$0xff] %v3409
    %3475 = vst.msk [vmem:[#allocation2 + $0x98] sm:$0xff] %vm3454, %v3410
    %3476 = vst [vmem:[#allocation2 + $0xa0] sm:$0xff] %v3411
    %3477 = vst [vmem:[#allocation2 + $0xa8] sm:$0xff] %v3412
    %3478 = vst [vmem:[#allocation2 + $0xb0] sm:$0xff] %v3413
    %3479 = vst.msk [vmem:[#allocation2 + $0xb8] sm:$0xff] %vm3454, %v3414
    %3480 = vst [vmem:[#allocation2 + $0xc0] sm:$0xff] %v3415
    %3481 = vst [vmem:[#allocation2 + $0xc8] sm:$0xff] %v3416
    %3482 = vst [vmem:[#allocation2 + $0xd0] sm:$0xff] %v3417
    %3483 = vst.msk [vmem:[#allocation2 + $0xd8] sm:$0xff] %vm3454, %v3418
    %3484 = vst [vmem:[#allocation2 + $0xe0] sm:$0xff] %v3419
    %3485 = vst [vmem:[#allocation2 + $0xe8] sm:$0xff] %v3420
    %3486 = vst [vmem:[#allocation2 + $0xf0] sm:$0xff] %v3421
    %3487 = vst.msk [vmem:[#allocation2 + $0xf8] sm:$0xff] %vm3454, %v3422
    %3488 = vst [vmem:[#allocation2 + $0x100] sm:$0xff] %v3423
    %3489 = vst [vmem:[#allocation2 + $0x108] sm:$0xff] %v3424
    %3490 = vst [vmem:[#allocation2 + $0x110] sm:$0xff] %v3425
    %3491 = vst.msk [vmem:[#allocation2 + $0x118] sm:$0xff] %vm3454, %v3426
    %3492 = vst [vmem:[#allocation2 + $0x120] sm:$0xff] %v3427
    %3493 = vst [vmem:[#allocation2 + $0x128] sm:$0xff] %v3428
    %3494 = vst [vmem:[#allocation2 + $0x130] sm:$0xff] %v3429
    %3495 = vst.msk [vmem:[#allocation2 + $0x138] sm:$0xff] %vm3454, %v3430
    %3496 = vst [vmem:[#allocation2 + $0x140] sm:$0xff] %v3431
    %3497 = vst [vmem:[#allocation2 + $0x148] sm:$0xff] %v3432
    %3498 = vst [vmem:[#allocation2 + $0x150] sm:$0xff] %v3433
    %3499 = vst.msk [vmem:[#allocation2 + $0x158] sm:$0xff] %vm3454, %v3434
    %3500 = vst [vmem:[#allocation2 + $0x160] sm:$0xff] %v3435
    %3501 = vst [vmem:[#allocation2 + $0x168] sm:$0xff] %v3436
    %3502 = vst [vmem:[#allocation2 + $0x170] sm:$0xff] %v3437
    %3503 = vst.msk [vmem:[#allocation2 + $0x178] sm:$0xff] %vm3454, %v3438
    %3504 = vst [vmem:[#allocation2 + $0x180] sm:$0xff] %v3439
    %3505 = vst [vmem:[#allocation2 + $0x188] sm:$0xff] %v3440
    %3506 = vst [vmem:[#allocation2 + $0x190] sm:$0xff] %v3441
    %3507 = vst.msk [vmem:[#allocation2 + $0x198] sm:$0xff] %vm3454, %v3442
    %3508 = vst [vmem:[#allocation2 + $0x1a0] sm:$0xff] %v3443
    %3509 = vst [vmem:[#allocation2 + $0x1a8] sm:$0xff] %v3444
    %3510 = vst [vmem:[#allocation2 + $0x1b0] sm:$0xff] %v3445
    %3511 = vst.msk [vmem:[#allocation2 + $0x1b8] sm:$0xff] %vm3454, %v3446
    %3512 = vst [vmem:[#allocation2 + $0x1c0] sm:$0xff] %v3447
    %3513 = vst [vmem:[#allocation2 + $0x1c8] sm:$0xff] %v3448
    %3514 = vst [vmem:[#allocation2 + $0x1d0] sm:$0xff] %v3449
    %3515 = vst.msk [vmem:[#allocation2 + $0x1d8] sm:$0xff] %vm3454, %v3450
    %v3516 = vld [vmem:[#allocation2] sm:$0xff]
    %v3517 = vld [vmem:[#allocation2 + $0x8] sm:$0xff]
    %v3518 = vld [vmem:[#allocation2 + $0x10] sm:$0xff]
    %v3519 = vld [vmem:[#allocation2 + $0x18] sm:$0xff]
    %v3520 = vld [vmem:[#allocation2 + $0x20] sm:$0xff]
    %v3521 = vld [vmem:[#allocation2 + $0x28] sm:$0xff]
    %v3522 = vld [vmem:[#allocation2 + $0x30] sm:$0xff]
    %v3523 = vld [vmem:[#allocation2 + $0x38] sm:$0xff]
    %v3524 = vld [vmem:[#allocation2 + $0x40] sm:$0xff]
    %v3525 = vld [vmem:[#allocation2 + $0x48] sm:$0xff]
    %v3526 = vld [vmem:[#allocation2 + $0x50] sm:$0xff]
    %v3527 = vld [vmem:[#allocation2 + $0x58] sm:$0xff]
    %v3528 = vld [vmem:[#allocation2 + $0x60] sm:$0xff]
    %v3529 = vld [vmem:[#allocation2 + $0x68] sm:$0xff]
    %v3530 = vld [vmem:[#allocation2 + $0x70] sm:$0xff]
    %v3531 = vld [vmem:[#allocation2 + $0x78] sm:$0xff]
    %v3532 = vld [vmem:[#allocation2 + $0x80] sm:$0xff]
    %v3533 = vld [vmem:[#allocation2 + $0x88] sm:$0xff]
    %v3534 = vld [vmem:[#allocation2 + $0x90] sm:$0xff]
    %v3535 = vld [vmem:[#allocation2 + $0x98] sm:$0xff]
    %v3536 = vld [vmem:[#allocation2 + $0xa0] sm:$0xff]
    %v3537 = vld [vmem:[#allocation2 + $0xa8] sm:$0xff]
    %v3538 = vld [vmem:[#allocation2 + $0xb0] sm:$0xff]
    %v3539 = vld [vmem:[#allocation2 + $0xb8] sm:$0xff]
    %v3540 = vld [vmem:[#allocation2 + $0xc0] sm:$0xff]
    %v3541 = vld [vmem:[#allocation2 + $0xc8] sm:$0xff]
    %v3542 = vld [vmem:[#allocation2 + $0xd0] sm:$0xff]
    %v3543 = vld [vmem:[#allocation2 + $0xd8] sm:$0xff]
    %v3544 = vld [vmem:[#allocation2 + $0xe0] sm:$0xff]
    %v3545 = vld [vmem:[#allocation2 + $0xe8] sm:$0xff]
    %v3546 = vld [vmem:[#allocation2 + $0xf0] sm:$0xff]
    %v3547 = vld [vmem:[#allocation2 + $0xf8] sm:$0xff]
    %v3548 = vld [vmem:[#allocation2 + $0x100] sm:$0xff]
    %v3549 = vld [vmem:[#allocation2 + $0x108] sm:$0xff]
    %v3550 = vld [vmem:[#allocation2 + $0x110] sm:$0xff]
    %v3551 = vld [vmem:[#allocation2 + $0x118] sm:$0xff]
    %v3552 = vld [vmem:[#allocation2 + $0x120] sm:$0xff]
    %v3553 = vld [vmem:[#allocation2 + $0x128] sm:$0xff]
    %v3554 = vld [vmem:[#allocation2 + $0x130] sm:$0xff]
    %v3555 = vld [vmem:[#allocation2 + $0x138] sm:$0xff]
    %v3556 = vld [vmem:[#allocation2 + $0x140] sm:$0xff]
    %v3557 = vld [vmem:[#allocation2 + $0x148] sm:$0xff]
    %v3558 = vld [vmem:[#allocation2 + $0x150] sm:$0xff]
    %v3559 = vld [vmem:[#allocation2 + $0x158] sm:$0xff]
    %v3560 = vld [vmem:[#allocation2 + $0x160] sm:$0xff]
    %v3561 = vld [vmem:[#allocation2 + $0x168] sm:$0xff]
    %v3562 = vld [vmem:[#allocation2 + $0x170] sm:$0xff]
    %v3563 = vld [vmem:[#allocation2 + $0x178] sm:$0xff]
    %v3564 = vld [vmem:[#allocation2 + $0x180] sm:$0xff]
    %v3565 = vld [vmem:[#allocation2 + $0x188] sm:$0xff]
    %v3566 = vld [vmem:[#allocation2 + $0x190] sm:$0xff]
    %v3567 = vld [vmem:[#allocation2 + $0x198] sm:$0xff]
    %v3568 = vld [vmem:[#allocation2 + $0x1a0] sm:$0xff]
    %v3569 = vld [vmem:[#allocation2 + $0x1a8] sm:$0xff]
    %v3570 = vld [vmem:[#allocation2 + $0x1b0] sm:$0xff]
    %v3571 = vld [vmem:[#allocation2 + $0x1b8] sm:$0xff]
    %v3572 = vld [vmem:[#allocation2 + $0x1c0] sm:$0xff]
    %v3573 = vld [vmem:[#allocation2 + $0x1c8] sm:$0xff]
    %v3574 = vld [vmem:[#allocation2 + $0x1d0] sm:$0xff]
    %v3575 = vld [vmem:[#allocation2 + $0x1d8] sm:$0xff]
    %v3576 = vld [vmem:[#allocation2 + $0x1e0] sm:$0xff]
    %v3577 = vld [vmem:[#allocation2 + $0x1e8] sm:$0xff]
    %v3578 = vld [vmem:[#allocation2 + $0x1f0] sm:$0xff]
    %v3579 = vld [vmem:[#allocation2 + $0x1f8] sm:$0xff]
    %v3580 = vpack.c.bf16 %v3520, %v3516
    %v3581 = vpack.c.bf16 %v3521, %v3517
    %v3582 = vpack.c.bf16 %v3522, %v3518
    %v3583 = vpack.c.bf16 %v3523, %v3519
    %v3584 = vpack.c.bf16 %v3528, %v3524
    %v3585 = vpack.c.bf16 %v3529, %v3525
    %v3586 = vpack.c.bf16 %v3530, %v3526
    %v3587 = vpack.c.bf16 %v3531, %v3527
    %v3588 = vpack.c.bf16 %v3536, %v3532
    %v3589 = vpack.c.bf16 %v3537, %v3533
    %v3590 = vpack.c.bf16 %v3538, %v3534
    %v3591 = vpack.c.bf16 %v3539, %v3535
    %v3592 = vpack.c.bf16 %v3544, %v3540
    %v3593 = vpack.c.bf16 %v3545, %v3541
    %v3594 = vpack.c.bf16 %v3546, %v3542
    %v3595 = vpack.c.bf16 %v3547, %v3543
    %v3596 = vpack.c.bf16 %v3552, %v3548
    %v3597 = vpack.c.bf16 %v3553, %v3549
    %v3598 = vpack.c.bf16 %v3554, %v3550
    %v3599 = vpack.c.bf16 %v3555, %v3551
    %v3600 = vpack.c.bf16 %v3560, %v3556
    %v3601 = vpack.c.bf16 %v3561, %v3557
    %v3602 = vpack.c.bf16 %v3562, %v3558
    %v3603 = vpack.c.bf16 %v3563, %v3559
    %v3604 = vpack.c.bf16 %v3568, %v3564
    %v3605 = vpack.c.bf16 %v3569, %v3565
    %v3606 = vpack.c.bf16 %v3570, %v3566
    %v3607 = vpack.c.bf16 %v3571, %v3567
    %v3608 = vpack.c.bf16 %v3576, %v3572
    %v3609 = vpack.c.bf16 %v3577, %v3573
    %v3610 = vpack.c.bf16 %v3578, %v3574
    %v3611 = vpack.c.bf16 %v3579, %v3575
    %v3612 = vld [vmem:[#allocation7] sm:$0xff]
    %v3613 = vld [vmem:[#allocation7 + $0x8] sm:$0xff]
    %v3614 = vld [vmem:[#allocation7 + $0x10] sm:$0xff]
    %v3615 = vld [vmem:[#allocation7 + $0x18] sm:$0xff]
    %v3616 = vld [vmem:[#allocation7 + $0x20] sm:$0xff]
    %v3617 = vld [vmem:[#allocation7 + $0x28] sm:$0xff]
    %v3618 = vld [vmem:[#allocation7 + $0x30] sm:$0xff]
    %v3619 = vld [vmem:[#allocation7 + $0x38] sm:$0xff]
    %v3620 = vld [vmem:[#allocation7 + $0x40] sm:$0xff]
    %v3621 = vld [vmem:[#allocation7 + $0x48] sm:$0xff]
    %v3622 = vld [vmem:[#allocation7 + $0x50] sm:$0xff]
    %v3623 = vld [vmem:[#allocation7 + $0x58] sm:$0xff]
    %v3624 = vld [vmem:[#allocation7 + $0x60] sm:$0xff]
    %v3625 = vld [vmem:[#allocation7 + $0x68] sm:$0xff]
    %v3626 = vld [vmem:[#allocation7 + $0x70] sm:$0xff]
    %v3627 = vld [vmem:[#allocation7 + $0x78] sm:$0xff]
    %v3628 = vld [vmem:[#allocation7 + $0x80] sm:$0xff]
    %v3629 = vld [vmem:[#allocation7 + $0x88] sm:$0xff]
    %v3630 = vld [vmem:[#allocation7 + $0x90] sm:$0xff]
    %v3631 = vld [vmem:[#allocation7 + $0x98] sm:$0xff]
    %v3632 = vld [vmem:[#allocation7 + $0xa0] sm:$0xff]
    %v3633 = vld [vmem:[#allocation7 + $0xa8] sm:$0xff]
    %v3634 = vld [vmem:[#allocation7 + $0xb0] sm:$0xff]
    %v3635 = vld [vmem:[#allocation7 + $0xb8] sm:$0xff]
    %v3636 = vld [vmem:[#allocation7 + $0xc0] sm:$0xff]
    %v3637 = vld [vmem:[#allocation7 + $0xc8] sm:$0xff]
    %v3638 = vld [vmem:[#allocation7 + $0xd0] sm:$0xff]
    %v3639 = vld [vmem:[#allocation7 + $0xd8] sm:$0xff]
    %v3640 = vld [vmem:[#allocation7 + $0xe0] sm:$0xff]
    %v3641 = vld [vmem:[#allocation7 + $0xe8] sm:$0xff]
    %v3642 = vld [vmem:[#allocation7 + $0xf0] sm:$0xff]
    %v3643 = vld [vmem:[#allocation7 + $0xf8] sm:$0xff]
    %v3644 = vld [vmem:[#allocation7 + $0x100] sm:$0xff]
    %v3645 = vld [vmem:[#allocation7 + $0x108] sm:$0xff]
    %v3646 = vld [vmem:[#allocation7 + $0x110] sm:$0xff]
    %v3647 = vld [vmem:[#allocation7 + $0x118] sm:$0xff]
    %v3648 = vld [vmem:[#allocation7 + $0x120] sm:$0xff]
    %v3649 = vld [vmem:[#allocation7 + $0x128] sm:$0xff]
    %v3650 = vld [vmem:[#allocation7 + $0x130] sm:$0xff]
    %v3651 = vld [vmem:[#allocation7 + $0x138] sm:$0xff]
    %v3652 = vld [vmem:[#allocation7 + $0x140] sm:$0xff]
    %v3653 = vld [vmem:[#allocation7 + $0x148] sm:$0xff]
    %v3654 = vld [vmem:[#allocation7 + $0x150] sm:$0xff]
    %v3655 = vld [vmem:[#allocation7 + $0x158] sm:$0xff]
    %v3656 = vld [vmem:[#allocation7 + $0x160] sm:$0xff]
    %v3657 = vld [vmem:[#allocation7 + $0x168] sm:$0xff]
    %v3658 = vld [vmem:[#allocation7 + $0x170] sm:$0xff]
    %v3659 = vld [vmem:[#allocation7 + $0x178] sm:$0xff]
    %v3660 = vld [vmem:[#allocation7 + $0x180] sm:$0xff]
    %v3661 = vld [vmem:[#allocation7 + $0x188] sm:$0xff]
    %v3662 = vld [vmem:[#allocation7 + $0x190] sm:$0xff]
    %v3663 = vld [vmem:[#allocation7 + $0x198] sm:$0xff]
    %v3664 = vld [vmem:[#allocation7 + $0x1a0] sm:$0xff]
    %v3665 = vld [vmem:[#allocation7 + $0x1a8] sm:$0xff]
    %v3666 = vld [vmem:[#allocation7 + $0x1b0] sm:$0xff]
    %v3667 = vld [vmem:[#allocation7 + $0x1b8] sm:$0xff]
    %v3668 = vld [vmem:[#allocation7 + $0x1c0] sm:$0xff]
    %v3669 = vld [vmem:[#allocation7 + $0x1c8] sm:$0xff]
    %v3670 = vld [vmem:[#allocation7 + $0x1d0] sm:$0xff]
    %v3671 = vld [vmem:[#allocation7 + $0x1d8] sm:$0xff]
    %v3672 = vld [vmem:[#allocation7 + $0x1e0] sm:$0xff]
    %v3673 = vld [vmem:[#allocation7 + $0x1e8] sm:$0xff]
    %v3674 = vld [vmem:[#allocation7 + $0x1f0] sm:$0xff]
    %v3675 = vld [vmem:[#allocation7 + $0x1f8] sm:$0xff]
    %v3676 = vld [vmem:[#allocation7 + $0x200] sm:$0xff]
    %v3677 = vld [vmem:[#allocation7 + $0x208] sm:$0xff]
    %v3678 = vld [vmem:[#allocation7 + $0x210] sm:$0xff]
    %v3679 = vld [vmem:[#allocation7 + $0x218] sm:$0xff]
    %v3680 = vld [vmem:[#allocation7 + $0x220] sm:$0xff]
    %v3681 = vld [vmem:[#allocation7 + $0x228] sm:$0xff]
    %v3682 = vld [vmem:[#allocation7 + $0x230] sm:$0xff]
    %v3683 = vld [vmem:[#allocation7 + $0x238] sm:$0xff]
    %v3684 = vld [vmem:[#allocation7 + $0x240] sm:$0xff]
    %v3685 = vld [vmem:[#allocation7 + $0x248] sm:$0xff]
    %v3686 = vld [vmem:[#allocation7 + $0x250] sm:$0xff]
    %v3687 = vld [vmem:[#allocation7 + $0x258] sm:$0xff]
    %v3688 = vld [vmem:[#allocation7 + $0x260] sm:$0xff]
    %v3689 = vld [vmem:[#allocation7 + $0x268] sm:$0xff]
    %v3690 = vld [vmem:[#allocation7 + $0x270] sm:$0xff]
    %v3691 = vld [vmem:[#allocation7 + $0x278] sm:$0xff]
    %v3692 = vld [vmem:[#allocation7 + $0x280] sm:$0xff]
    %v3693 = vld [vmem:[#allocation7 + $0x288] sm:$0xff]
    %v3694 = vld [vmem:[#allocation7 + $0x290] sm:$0xff]
    %v3695 = vld [vmem:[#allocation7 + $0x298] sm:$0xff]
    %v3696 = vld [vmem:[#allocation7 + $0x2a0] sm:$0xff]
    %v3697 = vld [vmem:[#allocation7 + $0x2a8] sm:$0xff]
    %v3698 = vld [vmem:[#allocation7 + $0x2b0] sm:$0xff]
    %v3699 = vld [vmem:[#allocation7 + $0x2b8] sm:$0xff]
    %v3700 = vld [vmem:[#allocation7 + $0x2c0] sm:$0xff]
    %v3701 = vld [vmem:[#allocation7 + $0x2c8] sm:$0xff]
    %v3702 = vld [vmem:[#allocation7 + $0x2d0] sm:$0xff]
    %v3703 = vld [vmem:[#allocation7 + $0x2d8] sm:$0xff]
    %v3704 = vld [vmem:[#allocation7 + $0x2e0] sm:$0xff]
    %v3705 = vld [vmem:[#allocation7 + $0x2e8] sm:$0xff]
    %v3706 = vld [vmem:[#allocation7 + $0x2f0] sm:$0xff]
    %v3707 = vld [vmem:[#allocation7 + $0x2f8] sm:$0xff]
    %v3708 = vld [vmem:[#allocation7 + $0x300] sm:$0xff]
    %v3709 = vld [vmem:[#allocation7 + $0x308] sm:$0xff]
    %v3710 = vld [vmem:[#allocation7 + $0x310] sm:$0xff]
    %v3711 = vld [vmem:[#allocation7 + $0x318] sm:$0xff]
    %v3712 = vld [vmem:[#allocation7 + $0x320] sm:$0xff]
    %v3713 = vld [vmem:[#allocation7 + $0x328] sm:$0xff]
    %v3714 = vld [vmem:[#allocation7 + $0x330] sm:$0xff]
    %v3715 = vld [vmem:[#allocation7 + $0x338] sm:$0xff]
    %v3716 = vld [vmem:[#allocation7 + $0x340] sm:$0xff]
    %v3717 = vld [vmem:[#allocation7 + $0x348] sm:$0xff]
    %v3718 = vld [vmem:[#allocation7 + $0x350] sm:$0xff]
    %v3719 = vld [vmem:[#allocation7 + $0x358] sm:$0xff]
    %v3720 = vld [vmem:[#allocation7 + $0x360] sm:$0xff]
    %v3721 = vld [vmem:[#allocation7 + $0x368] sm:$0xff]
    %v3722 = vld [vmem:[#allocation7 + $0x370] sm:$0xff]
    %v3723 = vld [vmem:[#allocation7 + $0x378] sm:$0xff]
    %v3836 = vunpack.c.l.b16 %v3612
    %v3837 = vunpack.c.h.b16 %v3612
    %v3838 = vunpack.c.l.b16 %v3613
    %v3839 = vunpack.c.h.b16 %v3613
    %v3840 = vunpack.c.l.b16 %v3614
    %v3841 = vunpack.c.h.b16 %v3614
    %v3842 = vunpack.c.l.b16 %v3615
    %v3843 = vunpack.c.h.b16 %v3615
    %v3844 = vunpack.c.l.b16 %v3616
    %v3845 = vunpack.c.h.b16 %v3616
    %v3846 = vunpack.c.l.b16 %v3617
    %v3847 = vunpack.c.h.b16 %v3617
    %v3848 = vunpack.c.l.b16 %v3618
    %v3849 = vunpack.c.h.b16 %v3618
    %v3850 = vunpack.c.l.b16 %v3619
    %v3851 = vunpack.c.h.b16 %v3619
    %v3852 = vunpack.c.l.b16 %v3620
    %v3853 = vunpack.c.h.b16 %v3620
    %v3854 = vunpack.c.l.b16 %v3621
    %v3855 = vunpack.c.h.b16 %v3621
    %v3856 = vunpack.c.l.b16 %v3622
    %v3857 = vunpack.c.h.b16 %v3622
    %v3858 = vunpack.c.l.b16 %v3623
    %v3859 = vunpack.c.h.b16 %v3623
    %v3860 = vunpack.c.l.b16 %v3624
    %v3861 = vunpack.c.h.b16 %v3624
    %v3862 = vunpack.c.l.b16 %v3625
    %v3863 = vunpack.c.h.b16 %v3625
    %v3864 = vunpack.c.l.b16 %v3626
    %v3865 = vunpack.c.h.b16 %v3626
    %v3866 = vunpack.c.l.b16 %v3627
    %v3867 = vunpack.c.h.b16 %v3627
    %v3868 = vunpack.c.l.b16 %v3628
    %v3869 = vunpack.c.h.b16 %v3628
    %v3870 = vunpack.c.l.b16 %v3629
    %v3871 = vunpack.c.h.b16 %v3629
    %v3872 = vunpack.c.l.b16 %v3630
    %v3873 = vunpack.c.h.b16 %v3630
    %v3874 = vunpack.c.l.b16 %v3631
    %v3875 = vunpack.c.h.b16 %v3631
    %v3876 = vunpack.c.l.b16 %v3632
    %v3877 = vunpack.c.h.b16 %v3632
    %v3878 = vunpack.c.l.b16 %v3633
    %v3879 = vunpack.c.h.b16 %v3633
    %v3880 = vunpack.c.l.b16 %v3634
    %v3881 = vunpack.c.h.b16 %v3634
    %v3882 = vunpack.c.l.b16 %v3635
    %v3883 = vunpack.c.h.b16 %v3635
    %v3884 = vunpack.c.l.b16 %v3636
    %v3885 = vunpack.c.h.b16 %v3636
    %v3886 = vunpack.c.l.b16 %v3637
    %v3887 = vunpack.c.h.b16 %v3637
    %v3888 = vunpack.c.l.b16 %v3638
    %v3889 = vunpack.c.h.b16 %v3638
    %v3890 = vunpack.c.l.b16 %v3639
    %v3891 = vunpack.c.h.b16 %v3639
    %v3892 = vunpack.c.l.b16 %v3640
    %v3893 = vunpack.c.h.b16 %v3640
    %v3894 = vunpack.c.l.b16 %v3641
    %v3895 = vunpack.c.h.b16 %v3641
    %v3896 = vunpack.c.l.b16 %v3642
    %v3897 = vunpack.c.h.b16 %v3642
    %v3898 = vunpack.c.l.b16 %v3643
    %v3899 = vunpack.c.h.b16 %v3643
    %v3900 = vunpack.c.l.b16 %v3644
    %v3901 = vunpack.c.h.b16 %v3644
    %v3902 = vunpack.c.l.b16 %v3645
    %v3903 = vunpack.c.h.b16 %v3645
    %v3904 = vunpack.c.l.b16 %v3646
    %v3905 = vunpack.c.h.b16 %v3646
    %v3906 = vunpack.c.l.b16 %v3647
    %v3907 = vunpack.c.h.b16 %v3647
    %v3908 = vunpack.c.l.b16 %v3648
    %v3909 = vunpack.c.h.b16 %v3648
    %v3910 = vunpack.c.l.b16 %v3649
    %v3911 = vunpack.c.h.b16 %v3649
    %v3912 = vunpack.c.l.b16 %v3650
    %v3913 = vunpack.c.h.b16 %v3650
    %v3914 = vunpack.c.l.b16 %v3651
    %v3915 = vunpack.c.h.b16 %v3651
    %v3916 = vunpack.c.l.b16 %v3652
    %v3917 = vunpack.c.h.b16 %v3652
    %v3918 = vunpack.c.l.b16 %v3653
    %v3919 = vunpack.c.h.b16 %v3653
    %v3920 = vunpack.c.l.b16 %v3654
    %v3921 = vunpack.c.h.b16 %v3654
    %v3922 = vunpack.c.l.b16 %v3655
    %v3923 = vunpack.c.h.b16 %v3655
    %v3924 = vunpack.c.l.b16 %v3656
    %v3925 = vunpack.c.h.b16 %v3656
    %v3926 = vunpack.c.l.b16 %v3657
    %v3927 = vunpack.c.h.b16 %v3657
    %v3928 = vunpack.c.l.b16 %v3658
    %v3929 = vunpack.c.h.b16 %v3658
    %v3930 = vunpack.c.l.b16 %v3659
    %v3931 = vunpack.c.h.b16 %v3659
    %v3932 = vunpack.c.l.b16 %v3660
    %v3933 = vunpack.c.h.b16 %v3660
    %v3934 = vunpack.c.l.b16 %v3661
    %v3935 = vunpack.c.h.b16 %v3661
    %v3936 = vunpack.c.l.b16 %v3662
    %v3937 = vunpack.c.h.b16 %v3662
    %v3938 = vunpack.c.l.b16 %v3663
    %v3939 = vunpack.c.h.b16 %v3663
    %v3940 = vunpack.c.l.b16 %v3664
    %v3941 = vunpack.c.h.b16 %v3664
    %v3942 = vunpack.c.l.b16 %v3665
    %v3943 = vunpack.c.h.b16 %v3665
    %v3944 = vunpack.c.l.b16 %v3666
    %v3945 = vunpack.c.h.b16 %v3666
    %v3946 = vunpack.c.l.b16 %v3667
    %v3947 = vunpack.c.h.b16 %v3667
    %v3948 = vunpack.c.l.b16 %v3668
    %v3949 = vunpack.c.h.b16 %v3668
    %v3950 = vunpack.c.l.b16 %v3669
    %v3951 = vunpack.c.h.b16 %v3669
    %v3952 = vunpack.c.l.b16 %v3670
    %v3953 = vunpack.c.h.b16 %v3670
    %v3954 = vunpack.c.l.b16 %v3671
    %v3955 = vunpack.c.h.b16 %v3671
    %v3956 = vunpack.c.l.b16 %v3672
    %v3957 = vunpack.c.h.b16 %v3672
    %v3958 = vunpack.c.l.b16 %v3673
    %v3959 = vunpack.c.h.b16 %v3673
    %v3960 = vunpack.c.l.b16 %v3674
    %v3961 = vunpack.c.h.b16 %v3674
    %v3962 = vunpack.c.l.b16 %v3675
    %v3963 = vunpack.c.h.b16 %v3675
    %v3964 = vunpack.c.l.b16 %v3676
    %v3965 = vunpack.c.h.b16 %v3676
    %v3966 = vunpack.c.l.b16 %v3677
    %v3967 = vunpack.c.h.b16 %v3677
    %v3968 = vunpack.c.l.b16 %v3678
    %v3969 = vunpack.c.h.b16 %v3678
    %v3970 = vunpack.c.l.b16 %v3679
    %v3971 = vunpack.c.h.b16 %v3679
    %v3972 = vunpack.c.l.b16 %v3680
    %v3973 = vunpack.c.h.b16 %v3680
    %v3974 = vunpack.c.l.b16 %v3681
    %v3975 = vunpack.c.h.b16 %v3681
    %v3976 = vunpack.c.l.b16 %v3682
    %v3977 = vunpack.c.h.b16 %v3682
    %v3978 = vunpack.c.l.b16 %v3683
    %v3979 = vunpack.c.h.b16 %v3683
    %v3980 = vunpack.c.l.b16 %v3684
    %v3981 = vunpack.c.h.b16 %v3684
    %v3982 = vunpack.c.l.b16 %v3685
    %v3983 = vunpack.c.h.b16 %v3685
    %v3984 = vunpack.c.l.b16 %v3686
    %v3985 = vunpack.c.h.b16 %v3686
    %v3986 = vunpack.c.l.b16 %v3687
    %v3987 = vunpack.c.h.b16 %v3687
    %v3988 = vunpack.c.l.b16 %v3688
    %v3989 = vunpack.c.h.b16 %v3688
    %v3990 = vunpack.c.l.b16 %v3689
    %v3991 = vunpack.c.h.b16 %v3689
    %v3992 = vunpack.c.l.b16 %v3690
    %v3993 = vunpack.c.h.b16 %v3690
    %v3994 = vunpack.c.l.b16 %v3691
    %v3995 = vunpack.c.h.b16 %v3691
    %v3996 = vunpack.c.l.b16 %v3692
    %v3997 = vunpack.c.h.b16 %v3692
    %v3998 = vunpack.c.l.b16 %v3693
    %v3999 = vunpack.c.h.b16 %v3693
    %v4000 = vunpack.c.l.b16 %v3694
    %v4001 = vunpack.c.h.b16 %v3694
    %v4002 = vunpack.c.l.b16 %v3695
    %v4003 = vunpack.c.h.b16 %v3695
    %v4004 = vunpack.c.l.b16 %v3696
    %v4005 = vunpack.c.h.b16 %v3696
    %v4006 = vunpack.c.l.b16 %v3697
    %v4007 = vunpack.c.h.b16 %v3697
    %v4008 = vunpack.c.l.b16 %v3698
    %v4009 = vunpack.c.h.b16 %v3698
    %v4010 = vunpack.c.l.b16 %v3699
    %v4011 = vunpack.c.h.b16 %v3699
    %v4012 = vunpack.c.l.b16 %v3700
    %v4013 = vunpack.c.h.b16 %v3700
    %v4014 = vunpack.c.l.b16 %v3701
    %v4015 = vunpack.c.h.b16 %v3701
    %v4016 = vunpack.c.l.b16 %v3702
    %v4017 = vunpack.c.h.b16 %v3702
    %v4018 = vunpack.c.l.b16 %v3703
    %v4019 = vunpack.c.h.b16 %v3703
    %v4020 = vunpack.c.l.b16 %v3704
    %v4021 = vunpack.c.h.b16 %v3704
    %v4022 = vunpack.c.l.b16 %v3705
    %v4023 = vunpack.c.h.b16 %v3705
    %v4024 = vunpack.c.l.b16 %v3706
    %v4025 = vunpack.c.h.b16 %v3706
    %v4026 = vunpack.c.l.b16 %v3707
    %v4027 = vunpack.c.h.b16 %v3707
    %v4028 = vunpack.c.l.b16 %v3708
    %v4029 = vunpack.c.h.b16 %v3708
    %v4030 = vunpack.c.l.b16 %v3709
    %v4031 = vunpack.c.h.b16 %v3709
    %v4032 = vunpack.c.l.b16 %v3710
    %v4033 = vunpack.c.h.b16 %v3710
    %v4034 = vunpack.c.l.b16 %v3711
    %v4035 = vunpack.c.h.b16 %v3711
    %v4036 = vunpack.c.l.b16 %v3712
    %v4037 = vunpack.c.h.b16 %v3712
    %v4038 = vunpack.c.l.b16 %v3713
    %v4039 = vunpack.c.h.b16 %v3713
    %v4040 = vunpack.c.l.b16 %v3714
    %v4041 = vunpack.c.h.b16 %v3714
    %v4042 = vunpack.c.l.b16 %v3715
    %v4043 = vunpack.c.h.b16 %v3715
    %v4044 = vunpack.c.l.b16 %v3716
    %v4045 = vunpack.c.h.b16 %v3716
    %v4046 = vunpack.c.l.b16 %v3717
    %v4047 = vunpack.c.h.b16 %v3717
    %v4048 = vunpack.c.l.b16 %v3718
    %v4049 = vunpack.c.h.b16 %v3718
    %v4050 = vunpack.c.l.b16 %v3719
    %v4051 = vunpack.c.h.b16 %v3719
    %v4052 = vunpack.c.l.b16 %v3720
    %v4053 = vunpack.c.h.b16 %v3720
    %v4054 = vunpack.c.l.b16 %v3721
    %v4055 = vunpack.c.h.b16 %v3721
    %v4056 = vunpack.c.l.b16 %v3722
    %v4057 = vunpack.c.h.b16 %v3722
    %v4058 = vunpack.c.l.b16 %v3723
    %v4059 = vunpack.c.h.b16 %v3723
    %v4060 = vpack.c.b16 %v3840, %v3836
    %v4061 = vpack.c.b16 %v3841, %v3837
    %v4062 = vpack.c.b16 %v3842, %v3838
    %v4063 = vpack.c.b16 %v3843, %v3839
    %v4064 = vpack.c.b16 %v3848, %v3844
    %v4065 = vpack.c.b16 %v3849, %v3845
    %v4066 = vpack.c.b16 %v3850, %v3846
    %v4067 = vpack.c.b16 %v3851, %v3847
    %v4068 = vpack.c.b16 %v3856, %v3852
    %v4069 = vpack.c.b16 %v3857, %v3853
    %v4070 = vpack.c.b16 %v3858, %v3854
    %v4071 = vpack.c.b16 %v3859, %v3855
    %v4072 = vpack.c.b16 %v3864, %v3860
    %v4073 = vpack.c.b16 %v3865, %v3861
    %v4074 = vpack.c.b16 %v3866, %v3862
    %v4075 = vpack.c.b16 %v3867, %v3863
    %v4076 = vpack.c.b16 %v3872, %v3868
    %v4077 = vpack.c.b16 %v3873, %v3869
    %v4078 = vpack.c.b16 %v3874, %v3870
    %v4079 = vpack.c.b16 %v3875, %v3871
    %v4080 = vpack.c.b16 %v3880, %v3876
    %v4081 = vpack.c.b16 %v3881, %v3877
    %v4082 = vpack.c.b16 %v3882, %v3878
    %v4083 = vpack.c.b16 %v3883, %v3879
    %v4084 = vpack.c.b16 %v3888, %v3884
    %v4085 = vpack.c.b16 %v3889, %v3885
    %v4086 = vpack.c.b16 %v3890, %v3886
    %v4087 = vpack.c.b16 %v3891, %v3887
    %v4088 = vpack.c.b16 %v3896, %v3892
    %v4089 = vpack.c.b16 %v3897, %v3893
    %v4090 = vpack.c.b16 %v3898, %v3894
    %v4091 = vpack.c.b16 %v3899, %v3895
    %v4092 = vpack.c.b16 %v3904, %v3900
    %v4093 = vpack.c.b16 %v3905, %v3901
    %v4094 = vpack.c.b16 %v3906, %v3902
    %v4095 = vpack.c.b16 %v3907, %v3903
    %v4096 = vpack.c.b16 %v3912, %v3908
    %v4097 = vpack.c.b16 %v3913, %v3909
    %v4098 = vpack.c.b16 %v3914, %v3910
    %v4099 = vpack.c.b16 %v3915, %v3911
    %v4100 = vpack.c.b16 %v3920, %v3916
    %v4101 = vpack.c.b16 %v3921, %v3917
    %v4102 = vpack.c.b16 %v3922, %v3918
    %v4103 = vpack.c.b16 %v3923, %v3919
    %v4104 = vpack.c.b16 %v3928, %v3924
    %v4105 = vpack.c.b16 %v3929, %v3925
    %v4106 = vpack.c.b16 %v3930, %v3926
    %v4107 = vpack.c.b16 %v3931, %v3927
    %v4108 = vpack.c.b16 %v3936, %v3932
    %v4109 = vpack.c.b16 %v3937, %v3933
    %v4110 = vpack.c.b16 %v3938, %v3934
    %v4111 = vpack.c.b16 %v3939, %v3935
    %v4112 = vpack.c.b16 %v3944, %v3940
    %v4113 = vpack.c.b16 %v3945, %v3941
    %v4114 = vpack.c.b16 %v3946, %v3942
    %v4115 = vpack.c.b16 %v3947, %v3943
    %v4116 = vpack.c.b16 %v3952, %v3948
    %v4117 = vpack.c.b16 %v3953, %v3949
    %v4118 = vpack.c.b16 %v3954, %v3950
    %v4119 = vpack.c.b16 %v3955, %v3951
    %v4120 = vpack.c.b16 %v3960, %v3956
    %v4121 = vpack.c.b16 %v3961, %v3957
    %v4122 = vpack.c.b16 %v3962, %v3958
    %v4123 = vpack.c.b16 %v3963, %v3959
    %v4124 = vpack.c.b16 %v3968, %v3964
    %v4125 = vpack.c.b16 %v3969, %v3965
    %v4126 = vpack.c.b16 %v3970, %v3966
    %v4127 = vpack.c.b16 %v3971, %v3967
    %v4128 = vpack.c.b16 %v3976, %v3972
    %v4129 = vpack.c.b16 %v3977, %v3973
    %v4130 = vpack.c.b16 %v3978, %v3974
    %v4131 = vpack.c.b16 %v3979, %v3975
    %v4132 = vpack.c.b16 %v3984, %v3980
    %v4133 = vpack.c.b16 %v3985, %v3981
    %v4134 = vpack.c.b16 %v3986, %v3982
    %v4135 = vpack.c.b16 %v3987, %v3983
    %v4136 = vpack.c.b16 %v3992, %v3988
    %v4137 = vpack.c.b16 %v3993, %v3989
    %v4138 = vpack.c.b16 %v3994, %v3990
    %v4139 = vpack.c.b16 %v3995, %v3991
    %v4140 = vpack.c.b16 %v4000, %v3996
    %v4141 = vpack.c.b16 %v4001, %v3997
    %v4142 = vpack.c.b16 %v4002, %v3998
    %v4143 = vpack.c.b16 %v4003, %v3999
    %v4144 = vpack.c.b16 %v4008, %v4004
    %v4145 = vpack.c.b16 %v4009, %v4005
    %v4146 = vpack.c.b16 %v4010, %v4006
    %v4147 = vpack.c.b16 %v4011, %v4007
    %v4148 = vpack.c.b16 %v4016, %v4012
    %v4149 = vpack.c.b16 %v4017, %v4013
    %v4150 = vpack.c.b16 %v4018, %v4014
    %v4151 = vpack.c.b16 %v4019, %v4015
    %v4152 = vpack.c.b16 %v4024, %v4020
    %v4153 = vpack.c.b16 %v4025, %v4021
    %v4154 = vpack.c.b16 %v4026, %v4022
    %v4155 = vpack.c.b16 %v4027, %v4023
    %v4156 = vpack.c.b16 %v4032, %v4028
    %v4157 = vpack.c.b16 %v4033, %v4029
    %v4158 = vpack.c.b16 %v4034, %v4030
    %v4159 = vpack.c.b16 %v4035, %v4031
    %v4160 = vpack.c.b16 %v4040, %v4036
    %v4161 = vpack.c.b16 %v4041, %v4037
    %v4162 = vpack.c.b16 %v4042, %v4038
    %v4163 = vpack.c.b16 %v4043, %v4039
    %v4164 = vpack.c.b16 %v4048, %v4044
    %v4165 = vpack.c.b16 %v4049, %v4045
    %v4166 = vpack.c.b16 %v4050, %v4046
    %v4167 = vpack.c.b16 %v4051, %v4047
    %v4168 = vpack.c.b16 %v4056, %v4052
    %v4169 = vpack.c.b16 %v4057, %v4053
    %v4170 = vpack.c.b16 %v4058, %v4054
    %v4171 = vpack.c.b16 %v4059, %v4055
    %v4285 = vsel %vm3454, %v3583, 0
    %v4288 = vsel %vm3454, %v3587, 0
    %v4291 = vsel %vm3454, %v3591, 0
    %v4294 = vsel %vm3454, %v3595, 0
    %v4297 = vsel %vm3454, %v3599, 0
    %v4300 = vsel %vm3454, %v3603, 0
    %v4303 = vsel %vm3454, %v3607, 0
    %v4306 = vsel %vm3454, %v3611, 0
    %4308 = vmatprep.subr.bf16.mxu0 %v4089
    %4309 = vmatpush1.bf16.msra.mxu0 %v4088
    %4310 = vmatprep.subr.bf16.mxu0 %v4085
    %4311 = vmatpush1.bf16.msra.mxu0 %v4084
    %4312 = vmatprep.subr.bf16.mxu0 %v4081
    %4313 = vmatpush1.bf16.msra.mxu0 %v4080
    %4314 = vmatprep.subr.bf16.mxu0 %v4077
    %4315 = vmatpush1.bf16.msra.mxu0 %v4076
    %4316 = vmatprep.subr.bf16.mxu0 %v4073
    %4317 = vmatpush1.bf16.msra.mxu0 %v4072
    %4318 = vmatprep.subr.bf16.mxu0 %v4069
    %4319 = vmatpush1.bf16.msra.mxu0 %v4068
    %4320 = vmatprep.subr.bf16.mxu0 %v4065
    %4321 = vmatpush1.bf16.msra.mxu0 %v4064
    %4322 = vmatprep.subr.bf16.mxu0 %v4061
    %4323 = vmatpush1.bf16.msra.mxu0 %v4060
    %4324 = vmatprep.subr.bf16.mxu0 %v4121
    %4325 = vmatpush2.bf16.msra.mxu0 %v4120
    %4326 = vmatprep.subr.bf16.mxu0 %v4117
    %4327 = vmatpush2.bf16.msra.mxu0 %v4116
    %4328 = vmatprep.subr.bf16.mxu0 %v4113
    %4329 = vmatpush2.bf16.msra.mxu0 %v4112
    %4330 = vmatprep.subr.bf16.mxu0 %v4109
    %4331 = vmatpush2.bf16.msra.mxu0 %v4108
    %4332 = vmatprep.subr.bf16.mxu0 %v4105
    %4333 = vmatpush2.bf16.msra.mxu0 %v4104
    %4334 = vmatprep.subr.bf16.mxu0 %v4101
    %4335 = vmatpush2.bf16.msra.mxu0 %v4100
    %4336 = vmatprep.subr.bf16.mxu0 %v4097
    %4337 = vmatpush2.bf16.msra.mxu0 %v4096
    %4338 = vmatprep.subr.bf16.mxu0 %v4093
    %4339 = vmatpush2.bf16.msra.mxu0 %v4092
    %4340 = vmatprep.mubr.bf16.mxu0 %v3581
    %4341 = vmatmul.mubr.bf16.gmra.mxu0 %v3580
    %v4342 = vpop.f32.mrf.mxu0
    %v4343 = vadd.f32 0.0, %v4342
    %v4344 = vpop.f32.mrf.mxu0
    %v4345 = vadd.f32 0.0, %v4344
    %v4346 = vpop.f32.mrf.mxu0
    %v4347 = vadd.f32 0.0, %v4346
    %v4348 = vpop.f32.mrf.mxu0
    %v4349 = vadd.f32 0.0, %v4348
    %4350 = vmatprep.mubr.bf16.mxu0 %v3585
    %4351 = vmatmul.mubr.bf16.gmra.mxu0 %v3584
    %v4352 = vpop.f32.mrf.mxu0
    %v4353 = vadd.f32 0.0, %v4352
    %v4354 = vpop.f32.mrf.mxu0
    %v4355 = vadd.f32 0.0, %v4354
    %v4356 = vpop.f32.mrf.mxu0
    %v4357 = vadd.f32 0.0, %v4356
    %v4358 = vpop.f32.mrf.mxu0
    %v4359 = vadd.f32 0.0, %v4358
    %4360 = vmatprep.mubr.bf16.mxu0 %v3589
    %4361 = vmatmul.mubr.bf16.gmra.mxu0 %v3588
    %v4362 = vpop.f32.mrf.mxu0
    %v4363 = vadd.f32 0.0, %v4362
    %v4364 = vpop.f32.mrf.mxu0
    %v4365 = vadd.f32 0.0, %v4364
    %v4366 = vpop.f32.mrf.mxu0
    %v4367 = vadd.f32 0.0, %v4366
    %v4368 = vpop.f32.mrf.mxu0
    %v4369 = vadd.f32 0.0, %v4368
    %4370 = vmatprep.mubr.bf16.mxu0 %v3593
    %4371 = vmatmul.mubr.bf16.gmra.mxu0 %v3592
    %v4372 = vpop.f32.mrf.mxu0
    %v4373 = vadd.f32 0.0, %v4372
    %v4374 = vpop.f32.mrf.mxu0
    %v4375 = vadd.f32 0.0, %v4374
    %v4376 = vpop.f32.mrf.mxu0
    %v4377 = vadd.f32 0.0, %v4376
    %v4378 = vpop.f32.mrf.mxu0
    %v4379 = vadd.f32 0.0, %v4378
    %4380 = vmatprep.mubr.bf16.mxu0 %v3597
    %4381 = vmatmul.mubr.bf16.gmra.mxu0 %v3596
    %v4382 = vpop.f32.mrf.mxu0
    %v4383 = vadd.f32 0.0, %v4382
    %v4384 = vpop.f32.mrf.mxu0
    %v4385 = vadd.f32 0.0, %v4384
    %v4386 = vpop.f32.mrf.mxu0
    %v4387 = vadd.f32 0.0, %v4386
    %v4388 = vpop.f32.mrf.mxu0
    %v4389 = vadd.f32 0.0, %v4388
    %4390 = vmatprep.mubr.bf16.mxu0 %v3601
    %4391 = vmatmul.mubr.bf16.gmra.mxu0 %v3600
    %v4392 = vpop.f32.mrf.mxu0
    %v4393 = vadd.f32 0.0, %v4392
    %v4394 = vpop.f32.mrf.mxu0
    %v4395 = vadd.f32 0.0, %v4394
    %v4396 = vpop.f32.mrf.mxu0
    %v4397 = vadd.f32 0.0, %v4396
    %v4398 = vpop.f32.mrf.mxu0
    %v4399 = vadd.f32 0.0, %v4398
    %4400 = vmatprep.mubr.bf16.mxu0 %v3605
    %4401 = vmatmul.mubr.bf16.gmra.mxu0 %v3604
    %v4402 = vpop.f32.mrf.mxu0
    %v4403 = vadd.f32 0.0, %v4402
    %v4404 = vpop.f32.mrf.mxu0
    %v4405 = vadd.f32 0.0, %v4404
    %v4406 = vpop.f32.mrf.mxu0
    %v4407 = vadd.f32 0.0, %v4406
    %v4408 = vpop.f32.mrf.mxu0
    %v4409 = vadd.f32 0.0, %v4408
    %4410 = vmatprep.mubr.bf16.mxu0 %v3609
    %4411 = vmatmul.mubr.bf16.gmra.mxu0 %v3608
    %v4412 = vpop.f32.mrf.mxu0
    %v4413 = vpop.f32.mrf.mxu0
    %v4414 = vpop.f32.mrf.mxu0
    %v4415 = vpop.f32.mrf.mxu0
    %4416 = vdwg.mxu0
    %4417 = vmatprep.subr.bf16.mxu0 %v4153
    %4418 = vmatpush1.bf16.msra.mxu0 %v4152
    %4419 = vmatprep.subr.bf16.mxu0 %v4149
    %4420 = vmatpush1.bf16.msra.mxu0 %v4148
    %4421 = vmatprep.subr.bf16.mxu0 %v4145
    %4422 = vmatpush1.bf16.msra.mxu0 %v4144
    %4423 = vmatprep.subr.bf16.mxu0 %v4141
    %4424 = vmatpush1.bf16.msra.mxu0 %v4140
    %4425 = vmatprep.subr.bf16.mxu0 %v4137
    %4426 = vmatpush1.bf16.msra.mxu0 %v4136
    %4427 = vmatprep.subr.bf16.mxu0 %v4133
    %4428 = vmatpush1.bf16.msra.mxu0 %v4132
    %4429 = vmatprep.subr.bf16.mxu0 %v4129
    %4430 = vmatpush1.bf16.msra.mxu0 %v4128
    %4431 = vmatprep.subr.bf16.mxu0 %v4125
    %4432 = vmatpush1.bf16.msra.mxu0 %v4124
    %4433 = vmatprep.subr.bf16.mxu0 0
    %4434 = vmatpush2.bf16.msra.mxu0 0
    %4435 = vmatprep.subr.bf16.mxu0 0
    %4436 = vmatpush2.bf16.msra.mxu0 0
    %4437 = vmatprep.subr.bf16.mxu0 0
    %4438 = vmatpush2.bf16.msra.mxu0 0
    %4439 = vmatprep.subr.bf16.mxu0 0
    %4440 = vmatpush2.bf16.msra.mxu0 0
    %4441 = vmatprep.subr.bf16.mxu0 %v4169
    %4442 = vmatpush2.bf16.msra.mxu0 %v4168
    %4443 = vmatprep.subr.bf16.mxu0 %v4165
    %4444 = vmatpush2.bf16.msra.mxu0 %v4164
    %4445 = vmatprep.subr.bf16.mxu0 %v4161
    %4446 = vmatpush2.bf16.msra.mxu0 %v4160
    %4447 = vmatprep.subr.bf16.mxu0 %v4157
    %4448 = vmatpush2.bf16.msra.mxu0 %v4156
    %4449 = vmatprep.mubr.bf16.mxu0 %v4285
    %4450 = vmatmul.mubr.bf16.gmra.mxu0 %v3582
    %v4451 = vpop.f32.mrf.mxu0
    %v4452 = vadd.f32 %v4343, %v4451
    %v4453 = vpop.f32.mrf.mxu0
    %v4454 = vadd.f32 %v4345, %v4453
    %v4455 = vpop.f32.mrf.mxu0
    %v4456 = vadd.f32 %v4347, %v4455
    %v4457 = vpop.f32.mrf.mxu0
    %v4458 = vadd.f32 %v4349, %v4457
    %4459 = vmatprep.mubr.bf16.mxu0 %v4288
    %4460 = vmatmul.mubr.bf16.gmra.mxu0 %v3586
    %v4461 = vpop.f32.mrf.mxu0
    %v4462 = vadd.f32 %v4353, %v4461
    %v4463 = vpop.f32.mrf.mxu0
    %v4464 = vadd.f32 %v4355, %v4463
    %v4465 = vpop.f32.mrf.mxu0
    %v4466 = vadd.f32 %v4357, %v4465
    %v4467 = vpop.f32.mrf.mxu0
    %v4468 = vadd.f32 %v4359, %v4467
    %4469 = vmatprep.mubr.bf16.mxu0 %v4291
    %4470 = vmatmul.mubr.bf16.gmra.mxu0 %v3590
    %v4471 = vpop.f32.mrf.mxu0
    %v4472 = vadd.f32 %v4363, %v4471
    %v4473 = vpop.f32.mrf.mxu0
    %v4474 = vadd.f32 %v4365, %v4473
    %v4475 = vpop.f32.mrf.mxu0
    %v4476 = vadd.f32 %v4367, %v4475
    %v4477 = vpop.f32.mrf.mxu0
    %v4478 = vadd.f32 %v4369, %v4477
    %4479 = vmatprep.mubr.bf16.mxu0 %v4294
    %4480 = vmatmul.mubr.bf16.gmra.mxu0 %v3594
    %v4481 = vpop.f32.mrf.mxu0
    %v4482 = vadd.f32 %v4373, %v4481
    %v4483 = vpop.f32.mrf.mxu0
    %v4484 = vadd.f32 %v4375, %v4483
    %v4485 = vpop.f32.mrf.mxu0
    %v4486 = vadd.f32 %v4377, %v4485
    %v4487 = vpop.f32.mrf.mxu0
    %v4488 = vadd.f32 %v4379, %v4487
    %4489 = vmatprep.mubr.bf16.mxu0 %v4297
    %4490 = vmatmul.mubr.bf16.gmra.mxu0 %v3598
    %v4491 = vpop.f32.mrf.mxu0
    %v4492 = vadd.f32 %v4383, %v4491
    %v4493 = vpop.f32.mrf.mxu0
    %v4494 = vadd.f32 %v4385, %v4493
    %v4495 = vpop.f32.mrf.mxu0
    %v4496 = vadd.f32 %v4387, %v4495
    %v4497 = vpop.f32.mrf.mxu0
    %v4498 = vadd.f32 %v4389, %v4497
    %4499 = vmatprep.mubr.bf16.mxu0 %v4300
    %4500 = vmatmul.mubr.bf16.gmra.mxu0 %v3602
    %v4501 = vpop.f32.mrf.mxu0
    %v4502 = vadd.f32 %v4393, %v4501
    %v4503 = vpop.f32.mrf.mxu0
    %v4504 = vadd.f32 %v4395, %v4503
    %v4505 = vpop.f32.mrf.mxu0
    %v4506 = vadd.f32 %v4397, %v4505
    %v4507 = vpop.f32.mrf.mxu0
    %v4508 = vadd.f32 %v4399, %v4507
    %4509 = vmatprep.mubr.bf16.mxu0 %v4303
    %4510 = vmatmul.mubr.bf16.gmra.mxu0 %v3606
    %v4511 = vpop.f32.mrf.mxu0
    %v4512 = vadd.f32 %v4403, %v4511
    %v4513 = vpop.f32.mrf.mxu0
    %v4514 = vadd.f32 %v4405, %v4513
    %v4515 = vpop.f32.mrf.mxu0
    %v4516 = vadd.f32 %v4407, %v4515
    %v4517 = vpop.f32.mrf.mxu0
    %v4518 = vadd.f32 %v4409, %v4517
    %4519 = vmatprep.mubr.bf16.mxu0 %v4306
    %4520 = vmatmul.mubr.bf16.gmra.mxu0 %v3610
    %v4521 = vpop.f32.mrf.mxu0
    %v4522 = vpop.f32.mrf.mxu0
    %v4523 = vpop.f32.mrf.mxu0
    %v4524 = vpop.f32.mrf.mxu0
    %4525 = vdwg.mxu0
    %4526 = vmatprep.subr.bf16.mxu0 %v4091
    %4527 = vmatpush1.bf16.msra.mxu0 %v4090
    %4528 = vmatprep.subr.bf16.mxu0 %v4087
    %4529 = vmatpush1.bf16.msra.mxu0 %v4086
    %4530 = vmatprep.subr.bf16.mxu0 %v4083
    %4531 = vmatpush1.bf16.msra.mxu0 %v4082
    %4532 = vmatprep.subr.bf16.mxu0 %v4079
    %4533 = vmatpush1.bf16.msra.mxu0 %v4078
    %4534 = vmatprep.subr.bf16.mxu0 %v4075
    %4535 = vmatpush1.bf16.msra.mxu0 %v4074
    %4536 = vmatprep.subr.bf16.mxu0 %v4071
    %4537 = vmatpush1.bf16.msra.mxu0 %v4070
    %4538 = vmatprep.subr.bf16.mxu0 %v4067
    %4539 = vmatpush1.bf16.msra.mxu0 %v4066
    %4540 = vmatprep.subr.bf16.mxu0 %v4063
    %4541 = vmatpush1.bf16.msra.mxu0 %v4062
    %4542 = vmatprep.subr.bf16.mxu0 %v4123
    %4543 = vmatpush2.bf16.msra.mxu0 %v4122
    %4544 = vmatprep.subr.bf16.mxu0 %v4119
    %4545 = vmatpush2.bf16.msra.mxu0 %v4118
    %4546 = vmatprep.subr.bf16.mxu0 %v4115
    %4547 = vmatpush2.bf16.msra.mxu0 %v4114
    %4548 = vmatprep.subr.bf16.mxu0 %v4111
    %4549 = vmatpush2.bf16.msra.mxu0 %v4110
    %4550 = vmatprep.subr.bf16.mxu0 %v4107
    %4551 = vmatpush2.bf16.msra.mxu0 %v4106
    %4552 = vmatprep.subr.bf16.mxu0 %v4103
    %4553 = vmatpush2.bf16.msra.mxu0 %v4102
    %4554 = vmatprep.subr.bf16.mxu0 %v4099
    %4555 = vmatpush2.bf16.msra.mxu0 %v4098
    %4556 = vmatprep.subr.bf16.mxu0 %v4095
    %4557 = vmatpush2.bf16.msra.mxu0 %v4094
    %4558 = vmatprep.mubr.bf16.mxu0 %v3581
    %4559 = vmatmul.mubr.bf16.gmra.mxu0 %v3580
    %v4560 = vpop.f32.mrf.mxu0
    %v4561 = vadd.f32 0.0, %v4560
    %v4562 = vpop.f32.mrf.mxu0
    %v4563 = vadd.f32 0.0, %v4562
    %v4564 = vpop.f32.mrf.mxu0
    %v4565 = vadd.f32 0.0, %v4564
    %v4566 = vpop.f32.mrf.mxu0
    %v4567 = vadd.f32 0.0, %v4566
    %4568 = vmatprep.mubr.bf16.mxu0 %v3585
    %4569 = vmatmul.mubr.bf16.gmra.mxu0 %v3584
    %v4570 = vpop.f32.mrf.mxu0
    %v4571 = vadd.f32 0.0, %v4570
    %v4572 = vpop.f32.mrf.mxu0
    %v4573 = vadd.f32 0.0, %v4572
    %v4574 = vpop.f32.mrf.mxu0
    %v4575 = vadd.f32 0.0, %v4574
    %v4576 = vpop.f32.mrf.mxu0
    %v4577 = vadd.f32 0.0, %v4576
    %4578 = vmatprep.mubr.bf16.mxu0 %v3589
    %4579 = vmatmul.mubr.bf16.gmra.mxu0 %v3588
    %v4580 = vpop.f32.mrf.mxu0
    %v4581 = vadd.f32 0.0, %v4580
    %v4582 = vpop.f32.mrf.mxu0
    %v4583 = vadd.f32 0.0, %v4582
    %v4584 = vpop.f32.mrf.mxu0
    %v4585 = vadd.f32 0.0, %v4584
    %v4586 = vpop.f32.mrf.mxu0
    %v4587 = vadd.f32 0.0, %v4586
    %4588 = vmatprep.mubr.bf16.mxu0 %v3593
    %4589 = vmatmul.mubr.bf16.gmra.mxu0 %v3592
    %v4590 = vpop.f32.mrf.mxu0
    %v4591 = vadd.f32 0.0, %v4590
    %v4592 = vpop.f32.mrf.mxu0
    %v4593 = vadd.f32 0.0, %v4592
    %v4594 = vpop.f32.mrf.mxu0
    %v4595 = vadd.f32 0.0, %v4594
    %v4596 = vpop.f32.mrf.mxu0
    %v4597 = vadd.f32 0.0, %v4596
    %4598 = vmatprep.mubr.bf16.mxu0 %v3597
    %4599 = vmatmul.mubr.bf16.gmra.mxu0 %v3596
    %v4600 = vpop.f32.mrf.mxu0
    %v4601 = vadd.f32 0.0, %v4600
    %v4602 = vpop.f32.mrf.mxu0
    %v4603 = vadd.f32 0.0, %v4602
    %v4604 = vpop.f32.mrf.mxu0
    %v4605 = vadd.f32 0.0, %v4604
    %v4606 = vpop.f32.mrf.mxu0
    %v4607 = vadd.f32 0.0, %v4606
    %4608 = vmatprep.mubr.bf16.mxu0 %v3601
    %4609 = vmatmul.mubr.bf16.gmra.mxu0 %v3600
    %v4610 = vpop.f32.mrf.mxu0
    %v4611 = vadd.f32 0.0, %v4610
    %v4612 = vpop.f32.mrf.mxu0
    %v4613 = vadd.f32 0.0, %v4612
    %v4614 = vpop.f32.mrf.mxu0
    %v4615 = vadd.f32 0.0, %v4614
    %v4616 = vpop.f32.mrf.mxu0
    %v4617 = vadd.f32 0.0, %v4616
    %4618 = vmatprep.mubr.bf16.mxu0 %v3605
    %4619 = vmatmul.mubr.bf16.gmra.mxu0 %v3604
    %v4620 = vpop.f32.mrf.mxu0
    %v4621 = vadd.f32 0.0, %v4620
    %v4622 = vpop.f32.mrf.mxu0
    %v4623 = vadd.f32 0.0, %v4622
    %v4624 = vpop.f32.mrf.mxu0
    %v4625 = vadd.f32 0.0, %v4624
    %v4626 = vpop.f32.mrf.mxu0
    %v4627 = vadd.f32 0.0, %v4626
    %4628 = vmatprep.mubr.bf16.mxu0 %v3609
    %4629 = vmatmul.mubr.bf16.gmra.mxu0 %v3608
    %v4630 = vpop.f32.mrf.mxu0
    %v4631 = vpop.f32.mrf.mxu0
    %v4632 = vpop.f32.mrf.mxu0
    %v4633 = vpop.f32.mrf.mxu0
    %4634 = vdwg.mxu0
    %4635 = vmatprep.subr.bf16.mxu0 %v4155
    %4636 = vmatpush1.bf16.msra.mxu0 %v4154
    %4637 = vmatprep.subr.bf16.mxu0 %v4151
    %4638 = vmatpush1.bf16.msra.mxu0 %v4150
    %4639 = vmatprep.subr.bf16.mxu0 %v4147
    %4640 = vmatpush1.bf16.msra.mxu0 %v4146
    %4641 = vmatprep.subr.bf16.mxu0 %v4143
    %4642 = vmatpush1.bf16.msra.mxu0 %v4142
    %4643 = vmatprep.subr.bf16.mxu0 %v4139
    %4644 = vmatpush1.bf16.msra.mxu0 %v4138
    %4645 = vmatprep.subr.bf16.mxu0 %v4135
    %4646 = vmatpush1.bf16.msra.mxu0 %v4134
    %4647 = vmatprep.subr.bf16.mxu0 %v4131
    %4648 = vmatpush1.bf16.msra.mxu0 %v4130
    %4649 = vmatprep.subr.bf16.mxu0 %v4127
    %4650 = vmatpush1.bf16.msra.mxu0 %v4126
    %4651 = vmatprep.subr.bf16.mxu0 0
    %4652 = vmatpush2.bf16.msra.mxu0 0
    %4653 = vmatprep.subr.bf16.mxu0 0
    %4654 = vmatpush2.bf16.msra.mxu0 0
    %4655 = vmatprep.subr.bf16.mxu0 0
    %4656 = vmatpush2.bf16.msra.mxu0 0
    %4657 = vmatprep.subr.bf16.mxu0 0
    %4658 = vmatpush2.bf16.msra.mxu0 0
    %4659 = vmatprep.subr.bf16.mxu0 %v4171
    %4660 = vmatpush2.bf16.msra.mxu0 %v4170
    %4661 = vmatprep.subr.bf16.mxu0 %v4167
    %4662 = vmatpush2.bf16.msra.mxu0 %v4166
    %4663 = vmatprep.subr.bf16.mxu0 %v4163
    %4664 = vmatpush2.bf16.msra.mxu0 %v4162
    %4665 = vmatprep.subr.bf16.mxu0 %v4159
    %4666 = vmatpush2.bf16.msra.mxu0 %v4158
    %4667 = vmatprep.mubr.bf16.mxu0 %v4285
    %4668 = vmatmul.mubr.bf16.gmra.mxu0 %v3582
    %v4669 = vpop.f32.mrf.mxu0
    %v4670 = vadd.f32 %v4561, %v4669
    %v4671 = vpop.f32.mrf.mxu0
    %v4672 = vadd.f32 %v4563, %v4671
    %v4673 = vpop.f32.mrf.mxu0
    %v4674 = vadd.f32 %v4565, %v4673
    %v4675 = vpop.f32.mrf.mxu0
    %v4676 = vadd.f32 %v4567, %v4675
    %4677 = vmatprep.mubr.bf16.mxu0 %v4288
    %4678 = vmatmul.mubr.bf16.gmra.mxu0 %v3586
    %v4679 = vpop.f32.mrf.mxu0
    %v4680 = vadd.f32 %v4571, %v4679
    %v4681 = vpop.f32.mrf.mxu0
    %v4682 = vadd.f32 %v4573, %v4681
    %v4683 = vpop.f32.mrf.mxu0
    %v4684 = vadd.f32 %v4575, %v4683
    %v4685 = vpop.f32.mrf.mxu0
    %v4686 = vadd.f32 %v4577, %v4685
    %4687 = vmatprep.mubr.bf16.mxu0 %v4291
    %4688 = vmatmul.mubr.bf16.gmra.mxu0 %v3590
    %v4689 = vpop.f32.mrf.mxu0
    %v4690 = vadd.f32 %v4581, %v4689
    %v4691 = vpop.f32.mrf.mxu0
    %v4692 = vadd.f32 %v4583, %v4691
    %v4693 = vpop.f32.mrf.mxu0
    %v4694 = vadd.f32 %v4585, %v4693
    %v4695 = vpop.f32.mrf.mxu0
    %v4696 = vadd.f32 %v4587, %v4695
    %4697 = vmatprep.mubr.bf16.mxu0 %v4294
    %4698 = vmatmul.mubr.bf16.gmra.mxu0 %v3594
    %v4699 = vpop.f32.mrf.mxu0
    %v4700 = vadd.f32 %v4591, %v4699
    %v4701 = vpop.f32.mrf.mxu0
    %v4702 = vadd.f32 %v4593, %v4701
    %v4703 = vpop.f32.mrf.mxu0
    %v4704 = vadd.f32 %v4595, %v4703
    %v4705 = vpop.f32.mrf.mxu0
    %v4706 = vadd.f32 %v4597, %v4705
    %4707 = vmatprep.mubr.bf16.mxu0 %v4297
    %4708 = vmatmul.mubr.bf16.gmra.mxu0 %v3598
    %v4709 = vpop.f32.mrf.mxu0
    %v4710 = vadd.f32 %v4601, %v4709
    %v4711 = vpop.f32.mrf.mxu0
    %v4712 = vadd.f32 %v4603, %v4711
    %v4713 = vpop.f32.mrf.mxu0
    %v4714 = vadd.f32 %v4605, %v4713
    %v4715 = vpop.f32.mrf.mxu0
    %v4716 = vadd.f32 %v4607, %v4715
    %4717 = vmatprep.mubr.bf16.mxu0 %v4300
    %4718 = vmatmul.mubr.bf16.gmra.mxu0 %v3602
    %v4719 = vpop.f32.mrf.mxu0
    %v4720 = vadd.f32 %v4611, %v4719
    %v4721 = vpop.f32.mrf.mxu0
    %v4722 = vadd.f32 %v4613, %v4721
    %v4723 = vpop.f32.mrf.mxu0
    %v4724 = vadd.f32 %v4615, %v4723
    %v4725 = vpop.f32.mrf.mxu0
    %v4726 = vadd.f32 %v4617, %v4725
    %4727 = vmatprep.mubr.bf16.mxu0 %v4303
    %4728 = vmatmul.mubr.bf16.gmra.mxu0 %v3606
    %v4729 = vpop.f32.mrf.mxu0
    %v4730 = vadd.f32 %v4621, %v4729
    %v4731 = vpop.f32.mrf.mxu0
    %v4732 = vadd.f32 %v4623, %v4731
    %v4733 = vpop.f32.mrf.mxu0
    %v4734 = vadd.f32 %v4625, %v4733
    %v4735 = vpop.f32.mrf.mxu0
    %v4736 = vadd.f32 %v4627, %v4735
    %4737 = vmatprep.mubr.bf16.mxu0 %v4306
    %4738 = vmatmul.mubr.bf16.gmra.mxu0 %v3610
    %v4739 = vpop.f32.mrf.mxu0
    %v4740 = vpop.f32.mrf.mxu0
    %v4741 = vpop.f32.mrf.mxu0
    %v4742 = vpop.f32.mrf.mxu0
    %4743 = vdwg.mxu0
    %s4744 = scalar_lea.vmem [#allocation7], 1792
    %v4745 = vld [vmem:[%s4744] sm:$0xff]
    %v4746 = vld [vmem:[%s4744 + $0x8] sm:$0xff]
    %v4747 = vld [vmem:[%s4744 + $0x10] sm:$0xff]
    %v4748 = vld [vmem:[%s4744 + $0x18] sm:$0xff]
    %v4749 = vld [vmem:[%s4744 + $0x20] sm:$0xff]
    %v4750 = vld [vmem:[%s4744 + $0x28] sm:$0xff]
    %v4751 = vld [vmem:[%s4744 + $0x30] sm:$0xff]
    %v4752 = vld [vmem:[%s4744 + $0x38] sm:$0xff]
    %v4753 = vld [vmem:[%s4744 + $0x40] sm:$0xff]
    %v4754 = vld [vmem:[%s4744 + $0x48] sm:$0xff]
    %v4755 = vld [vmem:[%s4744 + $0x50] sm:$0xff]
    %v4756 = vld [vmem:[%s4744 + $0x58] sm:$0xff]
    %v4757 = vld [vmem:[%s4744 + $0x60] sm:$0xff]
    %v4758 = vld [vmem:[%s4744 + $0x68] sm:$0xff]
    %v4759 = vld [vmem:[%s4744 + $0x70] sm:$0xff]
    %v4760 = vld [vmem:[%s4744 + $0x78] sm:$0xff]
    %v4761 = vld [vmem:[%s4744 + $0x80] sm:$0xff]
    %v4762 = vld [vmem:[%s4744 + $0x88] sm:$0xff]
    %v4763 = vld [vmem:[%s4744 + $0x90] sm:$0xff]
    %v4764 = vld [vmem:[%s4744 + $0x98] sm:$0xff]
    %v4765 = vld [vmem:[%s4744 + $0xa0] sm:$0xff]
    %v4766 = vld [vmem:[%s4744 + $0xa8] sm:$0xff]
    %v4767 = vld [vmem:[%s4744 + $0xb0] sm:$0xff]
    %v4768 = vld [vmem:[%s4744 + $0xb8] sm:$0xff]
    %v4769 = vld [vmem:[%s4744 + $0xc0] sm:$0xff]
    %v4770 = vld [vmem:[%s4744 + $0xc8] sm:$0xff]
    %v4771 = vld [vmem:[%s4744 + $0xd0] sm:$0xff]
    %v4772 = vld [vmem:[%s4744 + $0xd8] sm:$0xff]
    %v4773 = vld [vmem:[%s4744 + $0xe0] sm:$0xff]
    %v4774 = vld [vmem:[%s4744 + $0xe8] sm:$0xff]
    %v4775 = vld [vmem:[%s4744 + $0xf0] sm:$0xff]
    %v4776 = vld [vmem:[%s4744 + $0xf8] sm:$0xff]
    %v4777 = vld [vmem:[%s4744 + $0x100] sm:$0xff]
    %v4778 = vld [vmem:[%s4744 + $0x108] sm:$0xff]
    %v4779 = vld [vmem:[%s4744 + $0x110] sm:$0xff]
    %v4780 = vld [vmem:[%s4744 + $0x118] sm:$0xff]
    %v4781 = vld [vmem:[%s4744 + $0x120] sm:$0xff]
    %v4782 = vld [vmem:[%s4744 + $0x128] sm:$0xff]
    %v4783 = vld [vmem:[%s4744 + $0x130] sm:$0xff]
    %v4784 = vld [vmem:[%s4744 + $0x138] sm:$0xff]
    %v4785 = vld [vmem:[%s4744 + $0x140] sm:$0xff]
    %v4786 = vld [vmem:[%s4744 + $0x148] sm:$0xff]
    %v4787 = vld [vmem:[%s4744 + $0x150] sm:$0xff]
    %v4788 = vld [vmem:[%s4744 + $0x158] sm:$0xff]
    %v4789 = vld [vmem:[%s4744 + $0x160] sm:$0xff]
    %v4790 = vld [vmem:[%s4744 + $0x168] sm:$0xff]
    %v4791 = vld [vmem:[%s4744 + $0x170] sm:$0xff]
    %v4792 = vld [vmem:[%s4744 + $0x178] sm:$0xff]
    %v4793 = vld [vmem:[%s4744 + $0x180] sm:$0xff]
    %v4794 = vld [vmem:[%s4744 + $0x188] sm:$0xff]
    %v4795 = vld [vmem:[%s4744 + $0x190] sm:$0xff]
    %v4796 = vld [vmem:[%s4744 + $0x198] sm:$0xff]
    %v4797 = vld [vmem:[%s4744 + $0x1a0] sm:$0xff]
    %v4798 = vld [vmem:[%s4744 + $0x1a8] sm:$0xff]
    %v4799 = vld [vmem:[%s4744 + $0x1b0] sm:$0xff]
    %v4800 = vld [vmem:[%s4744 + $0x1b8] sm:$0xff]
    %v4801 = vld [vmem:[%s4744 + $0x1c0] sm:$0xff]
    %v4802 = vld [vmem:[%s4744 + $0x1c8] sm:$0xff]
    %v4803 = vld [vmem:[%s4744 + $0x1d0] sm:$0xff]
    %v4804 = vld [vmem:[%s4744 + $0x1d8] sm:$0xff]
    %v4805 = vld [vmem:[%s4744 + $0x1e0] sm:$0xff]
    %v4806 = vld [vmem:[%s4744 + $0x1e8] sm:$0xff]
    %v4807 = vld [vmem:[%s4744 + $0x1f0] sm:$0xff]
    %v4808 = vld [vmem:[%s4744 + $0x1f8] sm:$0xff]
    %v4809 = vld [vmem:[%s4744 + $0x200] sm:$0xff]
    %v4810 = vld [vmem:[%s4744 + $0x208] sm:$0xff]
    %v4811 = vld [vmem:[%s4744 + $0x210] sm:$0xff]
    %v4812 = vld [vmem:[%s4744 + $0x218] sm:$0xff]
    %v4813 = vld [vmem:[%s4744 + $0x220] sm:$0xff]
    %v4814 = vld [vmem:[%s4744 + $0x228] sm:$0xff]
    %v4815 = vld [vmem:[%s4744 + $0x230] sm:$0xff]
    %v4816 = vld [vmem:[%s4744 + $0x238] sm:$0xff]
    %v4817 = vld [vmem:[%s4744 + $0x240] sm:$0xff]
    %v4818 = vld [vmem:[%s4744 + $0x248] sm:$0xff]
    %v4819 = vld [vmem:[%s4744 + $0x250] sm:$0xff]
    %v4820 = vld [vmem:[%s4744 + $0x258] sm:$0xff]
    %v4821 = vld [vmem:[%s4744 + $0x260] sm:$0xff]
    %v4822 = vld [vmem:[%s4744 + $0x268] sm:$0xff]
    %v4823 = vld [vmem:[%s4744 + $0x270] sm:$0xff]
    %v4824 = vld [vmem:[%s4744 + $0x278] sm:$0xff]
    %v4825 = vld [vmem:[%s4744 + $0x280] sm:$0xff]
    %v4826 = vld [vmem:[%s4744 + $0x288] sm:$0xff]
    %v4827 = vld [vmem:[%s4744 + $0x290] sm:$0xff]
    %v4828 = vld [vmem:[%s4744 + $0x298] sm:$0xff]
    %v4829 = vld [vmem:[%s4744 + $0x2a0] sm:$0xff]
    %v4830 = vld [vmem:[%s4744 + $0x2a8] sm:$0xff]
    %v4831 = vld [vmem:[%s4744 + $0x2b0] sm:$0xff]
    %v4832 = vld [vmem:[%s4744 + $0x2b8] sm:$0xff]
    %v4833 = vld [vmem:[%s4744 + $0x2c0] sm:$0xff]
    %v4834 = vld [vmem:[%s4744 + $0x2c8] sm:$0xff]
    %v4835 = vld [vmem:[%s4744 + $0x2d0] sm:$0xff]
    %v4836 = vld [vmem:[%s4744 + $0x2d8] sm:$0xff]
    %v4837 = vld [vmem:[%s4744 + $0x2e0] sm:$0xff]
    %v4838 = vld [vmem:[%s4744 + $0x2e8] sm:$0xff]
    %v4839 = vld [vmem:[%s4744 + $0x2f0] sm:$0xff]
    %v4840 = vld [vmem:[%s4744 + $0x2f8] sm:$0xff]
    %v4841 = vld [vmem:[%s4744 + $0x300] sm:$0xff]
    %v4842 = vld [vmem:[%s4744 + $0x308] sm:$0xff]
    %v4843 = vld [vmem:[%s4744 + $0x310] sm:$0xff]
    %v4844 = vld [vmem:[%s4744 + $0x318] sm:$0xff]
    %v4845 = vld [vmem:[%s4744 + $0x320] sm:$0xff]
    %v4846 = vld [vmem:[%s4744 + $0x328] sm:$0xff]
    %v4847 = vld [vmem:[%s4744 + $0x330] sm:$0xff]
    %v4848 = vld [vmem:[%s4744 + $0x338] sm:$0xff]
    %v4849 = vld [vmem:[%s4744 + $0x340] sm:$0xff]
    %v4850 = vld [vmem:[%s4744 + $0x348] sm:$0xff]
    %v4851 = vld [vmem:[%s4744 + $0x350] sm:$0xff]
    %v4852 = vld [vmem:[%s4744 + $0x358] sm:$0xff]
    %v4853 = vld [vmem:[%s4744 + $0x360] sm:$0xff]
    %v4854 = vld [vmem:[%s4744 + $0x368] sm:$0xff]
    %v4855 = vld [vmem:[%s4744 + $0x370] sm:$0xff]
    %v4856 = vld [vmem:[%s4744 + $0x378] sm:$0xff]
    %v4969 = vunpack.c.l.b16 %v4745
    %v4970 = vunpack.c.h.b16 %v4745
    %v4971 = vunpack.c.l.b16 %v4746
    %v4972 = vunpack.c.h.b16 %v4746
    %v4973 = vunpack.c.l.b16 %v4747
    %v4974 = vunpack.c.h.b16 %v4747
    %v4975 = vunpack.c.l.b16 %v4748
    %v4976 = vunpack.c.h.b16 %v4748
    %v4977 = vunpack.c.l.b16 %v4749
    %v4978 = vunpack.c.h.b16 %v4749
    %v4979 = vunpack.c.l.b16 %v4750
    %v4980 = vunpack.c.h.b16 %v4750
    %v4981 = vunpack.c.l.b16 %v4751
    %v4982 = vunpack.c.h.b16 %v4751
    %v4983 = vunpack.c.l.b16 %v4752
    %v4984 = vunpack.c.h.b16 %v4752
    %v4985 = vunpack.c.l.b16 %v4753
    %v4986 = vunpack.c.h.b16 %v4753
    %v4987 = vunpack.c.l.b16 %v4754
    %v4988 = vunpack.c.h.b16 %v4754
    %v4989 = vunpack.c.l.b16 %v4755
    %v4990 = vunpack.c.h.b16 %v4755
    %v4991 = vunpack.c.l.b16 %v4756
    %v4992 = vunpack.c.h.b16 %v4756
    %v4993 = vunpack.c.l.b16 %v4757
    %v4994 = vunpack.c.h.b16 %v4757
    %v4995 = vunpack.c.l.b16 %v4758
    %v4996 = vunpack.c.h.b16 %v4758
    %v4997 = vunpack.c.l.b16 %v4759
    %v4998 = vunpack.c.h.b16 %v4759
    %v4999 = vunpack.c.l.b16 %v4760
    %v5000 = vunpack.c.h.b16 %v4760
    %v5001 = vunpack.c.l.b16 %v4761
    %v5002 = vunpack.c.h.b16 %v4761
    %v5003 = vunpack.c.l.b16 %v4762
    %v5004 = vunpack.c.h.b16 %v4762
    %v5005 = vunpack.c.l.b16 %v4763
    %v5006 = vunpack.c.h.b16 %v4763
    %v5007 = vunpack.c.l.b16 %v4764
    %v5008 = vunpack.c.h.b16 %v4764
    %v5009 = vunpack.c.l.b16 %v4765
    %v5010 = vunpack.c.h.b16 %v4765
    %v5011 = vunpack.c.l.b16 %v4766
    %v5012 = vunpack.c.h.b16 %v4766
    %v5013 = vunpack.c.l.b16 %v4767
    %v5014 = vunpack.c.h.b16 %v4767
    %v5015 = vunpack.c.l.b16 %v4768
    %v5016 = vunpack.c.h.b16 %v4768
    %v5017 = vunpack.c.l.b16 %v4769
    %v5018 = vunpack.c.h.b16 %v4769
    %v5019 = vunpack.c.l.b16 %v4770
    %v5020 = vunpack.c.h.b16 %v4770
    %v5021 = vunpack.c.l.b16 %v4771
    %v5022 = vunpack.c.h.b16 %v4771
    %v5023 = vunpack.c.l.b16 %v4772
    %v5024 = vunpack.c.h.b16 %v4772
    %v5025 = vunpack.c.l.b16 %v4773
    %v5026 = vunpack.c.h.b16 %v4773
    %v5027 = vunpack.c.l.b16 %v4774
    %v5028 = vunpack.c.h.b16 %v4774
    %v5029 = vunpack.c.l.b16 %v4775
    %v5030 = vunpack.c.h.b16 %v4775
    %v5031 = vunpack.c.l.b16 %v4776
    %v5032 = vunpack.c.h.b16 %v4776
    %v5033 = vunpack.c.l.b16 %v4777
    %v5034 = vunpack.c.h.b16 %v4777
    %v5035 = vunpack.c.l.b16 %v4778
    %v5036 = vunpack.c.h.b16 %v4778
    %v5037 = vunpack.c.l.b16 %v4779
    %v5038 = vunpack.c.h.b16 %v4779
    %v5039 = vunpack.c.l.b16 %v4780
    %v5040 = vunpack.c.h.b16 %v4780
    %v5041 = vunpack.c.l.b16 %v4781
    %v5042 = vunpack.c.h.b16 %v4781
    %v5043 = vunpack.c.l.b16 %v4782
    %v5044 = vunpack.c.h.b16 %v4782
    %v5045 = vunpack.c.l.b16 %v4783
    %v5046 = vunpack.c.h.b16 %v4783
    %v5047 = vunpack.c.l.b16 %v4784
    %v5048 = vunpack.c.h.b16 %v4784
    %v5049 = vunpack.c.l.b16 %v4785
    %v5050 = vunpack.c.h.b16 %v4785
    %v5051 = vunpack.c.l.b16 %v4786
    %v5052 = vunpack.c.h.b16 %v4786
    %v5053 = vunpack.c.l.b16 %v4787
    %v5054 = vunpack.c.h.b16 %v4787
    %v5055 = vunpack.c.l.b16 %v4788
    %v5056 = vunpack.c.h.b16 %v4788
    %v5057 = vunpack.c.l.b16 %v4789
    %v5058 = vunpack.c.h.b16 %v4789
    %v5059 = vunpack.c.l.b16 %v4790
    %v5060 = vunpack.c.h.b16 %v4790
    %v5061 = vunpack.c.l.b16 %v4791
    %v5062 = vunpack.c.h.b16 %v4791
    %v5063 = vunpack.c.l.b16 %v4792
    %v5064 = vunpack.c.h.b16 %v4792
    %v5065 = vunpack.c.l.b16 %v4793
    %v5066 = vunpack.c.h.b16 %v4793
    %v5067 = vunpack.c.l.b16 %v4794
    %v5068 = vunpack.c.h.b16 %v4794
    %v5069 = vunpack.c.l.b16 %v4795
    %v5070 = vunpack.c.h.b16 %v4795
    %v5071 = vunpack.c.l.b16 %v4796
    %v5072 = vunpack.c.h.b16 %v4796
    %v5073 = vunpack.c.l.b16 %v4797
    %v5074 = vunpack.c.h.b16 %v4797
    %v5075 = vunpack.c.l.b16 %v4798
    %v5076 = vunpack.c.h.b16 %v4798
    %v5077 = vunpack.c.l.b16 %v4799
    %v5078 = vunpack.c.h.b16 %v4799
    %v5079 = vunpack.c.l.b16 %v4800
    %v5080 = vunpack.c.h.b16 %v4800
    %v5081 = vunpack.c.l.b16 %v4801
    %v5082 = vunpack.c.h.b16 %v4801
    %v5083 = vunpack.c.l.b16 %v4802
    %v5084 = vunpack.c.h.b16 %v4802
    %v5085 = vunpack.c.l.b16 %v4803
    %v5086 = vunpack.c.h.b16 %v4803
    %v5087 = vunpack.c.l.b16 %v4804
    %v5088 = vunpack.c.h.b16 %v4804
    %v5089 = vunpack.c.l.b16 %v4805
    %v5090 = vunpack.c.h.b16 %v4805
    %v5091 = vunpack.c.l.b16 %v4806
    %v5092 = vunpack.c.h.b16 %v4806
    %v5093 = vunpack.c.l.b16 %v4807
    %v5094 = vunpack.c.h.b16 %v4807
    %v5095 = vunpack.c.l.b16 %v4808
    %v5096 = vunpack.c.h.b16 %v4808
    %v5097 = vunpack.c.l.b16 %v4809
    %v5098 = vunpack.c.h.b16 %v4809
    %v5099 = vunpack.c.l.b16 %v4810
    %v5100 = vunpack.c.h.b16 %v4810
    %v5101 = vunpack.c.l.b16 %v4811
    %v5102 = vunpack.c.h.b16 %v4811
    %v5103 = vunpack.c.l.b16 %v4812
    %v5104 = vunpack.c.h.b16 %v4812
    %v5105 = vunpack.c.l.b16 %v4813
    %v5106 = vunpack.c.h.b16 %v4813
    %v5107 = vunpack.c.l.b16 %v4814
    %v5108 = vunpack.c.h.b16 %v4814
    %v5109 = vunpack.c.l.b16 %v4815
    %v5110 = vunpack.c.h.b16 %v4815
    %v5111 = vunpack.c.l.b16 %v4816
    %v5112 = vunpack.c.h.b16 %v4816
    %v5113 = vunpack.c.l.b16 %v4817
    %v5114 = vunpack.c.h.b16 %v4817
    %v5115 = vunpack.c.l.b16 %v4818
    %v5116 = vunpack.c.h.b16 %v4818
    %v5117 = vunpack.c.l.b16 %v4819
    %v5118 = vunpack.c.h.b16 %v4819
    %v5119 = vunpack.c.l.b16 %v4820
    %v5120 = vunpack.c.h.b16 %v4820
    %v5121 = vunpack.c.l.b16 %v4821
    %v5122 = vunpack.c.h.b16 %v4821
    %v5123 = vunpack.c.l.b16 %v4822
    %v5124 = vunpack.c.h.b16 %v4822
    %v5125 = vunpack.c.l.b16 %v4823
    %v5126 = vunpack.c.h.b16 %v4823
    %v5127 = vunpack.c.l.b16 %v4824
    %v5128 = vunpack.c.h.b16 %v4824
    %v5129 = vunpack.c.l.b16 %v4825
    %v5130 = vunpack.c.h.b16 %v4825
    %v5131 = vunpack.c.l.b16 %v4826
    %v5132 = vunpack.c.h.b16 %v4826
    %v5133 = vunpack.c.l.b16 %v4827
    %v5134 = vunpack.c.h.b16 %v4827
    %v5135 = vunpack.c.l.b16 %v4828
    %v5136 = vunpack.c.h.b16 %v4828
    %v5137 = vunpack.c.l.b16 %v4829
    %v5138 = vunpack.c.h.b16 %v4829
    %v5139 = vunpack.c.l.b16 %v4830
    %v5140 = vunpack.c.h.b16 %v4830
    %v5141 = vunpack.c.l.b16 %v4831
    %v5142 = vunpack.c.h.b16 %v4831
    %v5143 = vunpack.c.l.b16 %v4832
    %v5144 = vunpack.c.h.b16 %v4832
    %v5145 = vunpack.c.l.b16 %v4833
    %v5146 = vunpack.c.h.b16 %v4833
    %v5147 = vunpack.c.l.b16 %v4834
    %v5148 = vunpack.c.h.b16 %v4834
    %v5149 = vunpack.c.l.b16 %v4835
    %v5150 = vunpack.c.h.b16 %v4835
    %v5151 = vunpack.c.l.b16 %v4836
    %v5152 = vunpack.c.h.b16 %v4836
    %v5153 = vunpack.c.l.b16 %v4837
    %v5154 = vunpack.c.h.b16 %v4837
    %v5155 = vunpack.c.l.b16 %v4838
    %v5156 = vunpack.c.h.b16 %v4838
    %v5157 = vunpack.c.l.b16 %v4839
    %v5158 = vunpack.c.h.b16 %v4839
    %v5159 = vunpack.c.l.b16 %v4840
    %v5160 = vunpack.c.h.b16 %v4840
    %v5161 = vunpack.c.l.b16 %v4841
    %v5162 = vunpack.c.h.b16 %v4841
    %v5163 = vunpack.c.l.b16 %v4842
    %v5164 = vunpack.c.h.b16 %v4842
    %v5165 = vunpack.c.l.b16 %v4843
    %v5166 = vunpack.c.h.b16 %v4843
    %v5167 = vunpack.c.l.b16 %v4844
    %v5168 = vunpack.c.h.b16 %v4844
    %v5169 = vunpack.c.l.b16 %v4845
    %v5170 = vunpack.c.h.b16 %v4845
    %v5171 = vunpack.c.l.b16 %v4846
    %v5172 = vunpack.c.h.b16 %v4846
    %v5173 = vunpack.c.l.b16 %v4847
    %v5174 = vunpack.c.h.b16 %v4847
    %v5175 = vunpack.c.l.b16 %v4848
    %v5176 = vunpack.c.h.b16 %v4848
    %v5177 = vunpack.c.l.b16 %v4849
    %v5178 = vunpack.c.h.b16 %v4849
    %v5179 = vunpack.c.l.b16 %v4850
    %v5180 = vunpack.c.h.b16 %v4850
    %v5181 = vunpack.c.l.b16 %v4851
    %v5182 = vunpack.c.h.b16 %v4851
    %v5183 = vunpack.c.l.b16 %v4852
    %v5184 = vunpack.c.h.b16 %v4852
    %v5185 = vunpack.c.l.b16 %v4853
    %v5186 = vunpack.c.h.b16 %v4853
    %v5187 = vunpack.c.l.b16 %v4854
    %v5188 = vunpack.c.h.b16 %v4854
    %v5189 = vunpack.c.l.b16 %v4855
    %v5190 = vunpack.c.h.b16 %v4855
    %v5191 = vunpack.c.l.b16 %v4856
    %v5192 = vunpack.c.h.b16 %v4856
    %v5193 = vpack.c.b16 %v4973, %v4969
    %v5194 = vpack.c.b16 %v4974, %v4970
    %v5195 = vpack.c.b16 %v4975, %v4971
    %v5196 = vpack.c.b16 %v4976, %v4972
    %v5197 = vpack.c.b16 %v4981, %v4977
    %v5198 = vpack.c.b16 %v4982, %v4978
    %v5199 = vpack.c.b16 %v4983, %v4979
    %v5200 = vpack.c.b16 %v4984, %v4980
    %v5201 = vpack.c.b16 %v4989, %v4985
    %v5202 = vpack.c.b16 %v4990, %v4986
    %v5203 = vpack.c.b16 %v4991, %v4987
    %v5204 = vpack.c.b16 %v4992, %v4988
    %v5205 = vpack.c.b16 %v4997, %v4993
    %v5206 = vpack.c.b16 %v4998, %v4994
    %v5207 = vpack.c.b16 %v4999, %v4995
    %v5208 = vpack.c.b16 %v5000, %v4996
    %v5209 = vpack.c.b16 %v5005, %v5001
    %v5210 = vpack.c.b16 %v5006, %v5002
    %v5211 = vpack.c.b16 %v5007, %v5003
    %v5212 = vpack.c.b16 %v5008, %v5004
    %v5213 = vpack.c.b16 %v5013, %v5009
    %v5214 = vpack.c.b16 %v5014, %v5010
    %v5215 = vpack.c.b16 %v5015, %v5011
    %v5216 = vpack.c.b16 %v5016, %v5012
    %v5217 = vpack.c.b16 %v5021, %v5017
    %v5218 = vpack.c.b16 %v5022, %v5018
    %v5219 = vpack.c.b16 %v5023, %v5019
    %v5220 = vpack.c.b16 %v5024, %v5020
    %v5221 = vpack.c.b16 %v5029, %v5025
    %v5222 = vpack.c.b16 %v5030, %v5026
    %v5223 = vpack.c.b16 %v5031, %v5027
    %v5224 = vpack.c.b16 %v5032, %v5028
    %v5225 = vpack.c.b16 %v5037, %v5033
    %v5226 = vpack.c.b16 %v5038, %v5034
    %v5227 = vpack.c.b16 %v5039, %v5035
    %v5228 = vpack.c.b16 %v5040, %v5036
    %v5229 = vpack.c.b16 %v5045, %v5041
    %v5230 = vpack.c.b16 %v5046, %v5042
    %v5231 = vpack.c.b16 %v5047, %v5043
    %v5232 = vpack.c.b16 %v5048, %v5044
    %v5233 = vpack.c.b16 %v5053, %v5049
    %v5234 = vpack.c.b16 %v5054, %v5050
    %v5235 = vpack.c.b16 %v5055, %v5051
    %v5236 = vpack.c.b16 %v5056, %v5052
    %v5237 = vpack.c.b16 %v5061, %v5057
    %v5238 = vpack.c.b16 %v5062, %v5058
    %v5239 = vpack.c.b16 %v5063, %v5059
    %v5240 = vpack.c.b16 %v5064, %v5060
    %v5241 = vpack.c.b16 %v5069, %v5065
    %v5242 = vpack.c.b16 %v5070, %v5066
    %v5243 = vpack.c.b16 %v5071, %v5067
    %v5244 = vpack.c.b16 %v5072, %v5068
    %v5245 = vpack.c.b16 %v5077, %v5073
    %v5246 = vpack.c.b16 %v5078, %v5074
    %v5247 = vpack.c.b16 %v5079, %v5075
    %v5248 = vpack.c.b16 %v5080, %v5076
    %v5249 = vpack.c.b16 %v5085, %v5081
    %v5250 = vpack.c.b16 %v5086, %v5082
    %v5251 = vpack.c.b16 %v5087, %v5083
    %v5252 = vpack.c.b16 %v5088, %v5084
    %v5253 = vpack.c.b16 %v5093, %v5089
    %v5254 = vpack.c.b16 %v5094, %v5090
    %v5255 = vpack.c.b16 %v5095, %v5091
    %v5256 = vpack.c.b16 %v5096, %v5092
    %v5257 = vpack.c.b16 %v5101, %v5097
    %v5258 = vpack.c.b16 %v5102, %v5098
    %v5259 = vpack.c.b16 %v5103, %v5099
    %v5260 = vpack.c.b16 %v5104, %v5100
    %v5261 = vpack.c.b16 %v5109, %v5105
    %v5262 = vpack.c.b16 %v5110, %v5106
    %v5263 = vpack.c.b16 %v5111, %v5107
    %v5264 = vpack.c.b16 %v5112, %v5108
    %v5265 = vpack.c.b16 %v5117, %v5113
    %v5266 = vpack.c.b16 %v5118, %v5114
    %v5267 = vpack.c.b16 %v5119, %v5115
    %v5268 = vpack.c.b16 %v5120, %v5116
    %v5269 = vpack.c.b16 %v5125, %v5121
    %v5270 = vpack.c.b16 %v5126, %v5122
    %v5271 = vpack.c.b16 %v5127, %v5123
    %v5272 = vpack.c.b16 %v5128, %v5124
    %v5273 = vpack.c.b16 %v5133, %v5129
    %v5274 = vpack.c.b16 %v5134, %v5130
    %v5275 = vpack.c.b16 %v5135, %v5131
    %v5276 = vpack.c.b16 %v5136, %v5132
    %v5277 = vpack.c.b16 %v5141, %v5137
    %v5278 = vpack.c.b16 %v5142, %v5138
    %v5279 = vpack.c.b16 %v5143, %v5139
    %v5280 = vpack.c.b16 %v5144, %v5140
    %v5281 = vpack.c.b16 %v5149, %v5145
    %v5282 = vpack.c.b16 %v5150, %v5146
    %v5283 = vpack.c.b16 %v5151, %v5147
    %v5284 = vpack.c.b16 %v5152, %v5148
    %v5285 = vpack.c.b16 %v5157, %v5153
    %v5286 = vpack.c.b16 %v5158, %v5154
    %v5287 = vpack.c.b16 %v5159, %v5155
    %v5288 = vpack.c.b16 %v5160, %v5156
    %v5289 = vpack.c.b16 %v5165, %v5161
    %v5290 = vpack.c.b16 %v5166, %v5162
    %v5291 = vpack.c.b16 %v5167, %v5163
    %v5292 = vpack.c.b16 %v5168, %v5164
    %v5293 = vpack.c.b16 %v5173, %v5169
    %v5294 = vpack.c.b16 %v5174, %v5170
    %v5295 = vpack.c.b16 %v5175, %v5171
    %v5296 = vpack.c.b16 %v5176, %v5172
    %v5297 = vpack.c.b16 %v5181, %v5177
    %v5298 = vpack.c.b16 %v5182, %v5178
    %v5299 = vpack.c.b16 %v5183, %v5179
    %v5300 = vpack.c.b16 %v5184, %v5180
    %v5301 = vpack.c.b16 %v5189, %v5185
    %v5302 = vpack.c.b16 %v5190, %v5186
    %v5303 = vpack.c.b16 %v5191, %v5187
    %v5304 = vpack.c.b16 %v5192, %v5188
    %5417 = vmatprep.subr.bf16.mxu0 %v5222
    %5418 = vmatpush1.bf16.msra.mxu0 %v5221
    %5419 = vmatprep.subr.bf16.mxu0 %v5218
    %5420 = vmatpush1.bf16.msra.mxu0 %v5217
    %5421 = vmatprep.subr.bf16.mxu0 %v5214
    %5422 = vmatpush1.bf16.msra.mxu0 %v5213
    %5423 = vmatprep.subr.bf16.mxu0 %v5210
    %5424 = vmatpush1.bf16.msra.mxu0 %v5209
    %5425 = vmatprep.subr.bf16.mxu0 %v5206
    %5426 = vmatpush1.bf16.msra.mxu0 %v5205
    %5427 = vmatprep.subr.bf16.mxu0 %v5202
    %5428 = vmatpush1.bf16.msra.mxu0 %v5201
    %5429 = vmatprep.subr.bf16.mxu0 %v5198
    %5430 = vmatpush1.bf16.msra.mxu0 %v5197
    %5431 = vmatprep.subr.bf16.mxu0 %v5194
    %5432 = vmatpush1.bf16.msra.mxu0 %v5193
    %5433 = vmatprep.subr.bf16.mxu0 %v5254
    %5434 = vmatpush2.bf16.msra.mxu0 %v5253
    %5435 = vmatprep.subr.bf16.mxu0 %v5250
    %5436 = vmatpush2.bf16.msra.mxu0 %v5249
    %5437 = vmatprep.subr.bf16.mxu0 %v5246
    %5438 = vmatpush2.bf16.msra.mxu0 %v5245
    %5439 = vmatprep.subr.bf16.mxu0 %v5242
    %5440 = vmatpush2.bf16.msra.mxu0 %v5241
    %5441 = vmatprep.subr.bf16.mxu0 %v5238
    %5442 = vmatpush2.bf16.msra.mxu0 %v5237
    %5443 = vmatprep.subr.bf16.mxu0 %v5234
    %5444 = vmatpush2.bf16.msra.mxu0 %v5233
    %5445 = vmatprep.subr.bf16.mxu0 %v5230
    %5446 = vmatpush2.bf16.msra.mxu0 %v5229
    %5447 = vmatprep.subr.bf16.mxu0 %v5226
    %5448 = vmatpush2.bf16.msra.mxu0 %v5225
    %5449 = vmatprep.mubr.bf16.mxu0 %v3581
    %5450 = vmatmul.mubr.bf16.gmra.mxu0 %v3580
    %v5451 = vpop.f32.mrf.mxu0
    %v5452 = vpop.f32.mrf.mxu0
    %v5453 = vpop.f32.mrf.mxu0
    %v5454 = vadd.f32 0.0, %v5453
    %v5455 = vpop.f32.mrf.mxu0
    %v5456 = vadd.f32 0.0, %v5455
    %5457 = vmatprep.mubr.bf16.mxu0 %v3585
    %5458 = vmatmul.mubr.bf16.gmra.mxu0 %v3584
    %v5459 = vpop.f32.mrf.mxu0
    %v5460 = vadd.f32 0.0, %v5459
    %v5461 = vpop.f32.mrf.mxu0
    %v5462 = vadd.f32 0.0, %v5461
    %v5463 = vpop.f32.mrf.mxu0
    %v5464 = vadd.f32 0.0, %v5463
    %v5465 = vpop.f32.mrf.mxu0
    %v5466 = vadd.f32 0.0, %v5465
    %5467 = vmatprep.mubr.bf16.mxu0 %v3589
    %5468 = vmatmul.mubr.bf16.gmra.mxu0 %v3588
    %v5469 = vpop.f32.mrf.mxu0
    %v5470 = vadd.f32 0.0, %v5469
    %v5471 = vpop.f32.mrf.mxu0
    %v5472 = vadd.f32 0.0, %v5471
    %v5473 = vpop.f32.mrf.mxu0
    %v5474 = vadd.f32 0.0, %v5473
    %v5475 = vpop.f32.mrf.mxu0
    %v5476 = vadd.f32 0.0, %v5475
    %5477 = vmatprep.mubr.bf16.mxu0 %v3593
    %5478 = vmatmul.mubr.bf16.gmra.mxu0 %v3592
    %v5479 = vpop.f32.mrf.mxu0
    %v5480 = vadd.f32 0.0, %v5479
    %v5481 = vpop.f32.mrf.mxu0
    %v5482 = vadd.f32 0.0, %v5481
    %v5483 = vpop.f32.mrf.mxu0
    %v5484 = vadd.f32 0.0, %v5483
    %v5485 = vpop.f32.mrf.mxu0
    %v5486 = vadd.f32 0.0, %v5485
    %5487 = vmatprep.mubr.bf16.mxu0 %v3597
    %5488 = vmatmul.mubr.bf16.gmra.mxu0 %v3596
    %v5489 = vpop.f32.mrf.mxu0
    %v5490 = vadd.f32 0.0, %v5489
    %v5491 = vpop.f32.mrf.mxu0
    %v5492 = vadd.f32 0.0, %v5491
    %v5493 = vpop.f32.mrf.mxu0
    %v5494 = vadd.f32 0.0, %v5493
    %v5495 = vpop.f32.mrf.mxu0
    %v5496 = vadd.f32 0.0, %v5495
    %5497 = vmatprep.mubr.bf16.mxu0 %v3601
    %5498 = vmatmul.mubr.bf16.gmra.mxu0 %v3600
    %v5499 = vpop.f32.mrf.mxu0
    %v5500 = vadd.f32 0.0, %v5499
    %v5501 = vpop.f32.mrf.mxu0
    %v5502 = vadd.f32 0.0, %v5501
    %v5503 = vpop.f32.mrf.mxu0
    %v5504 = vadd.f32 0.0, %v5503
    %v5505 = vpop.f32.mrf.mxu0
    %v5506 = vadd.f32 0.0, %v5505
    %5507 = vmatprep.mubr.bf16.mxu0 %v3605
    %5508 = vmatmul.mubr.bf16.gmra.mxu0 %v3604
    %v5509 = vpop.f32.mrf.mxu0
    %v5510 = vadd.f32 0.0, %v5509
    %v5511 = vpop.f32.mrf.mxu0
    %v5512 = vadd.f32 0.0, %v5511
    %v5513 = vpop.f32.mrf.mxu0
    %v5514 = vadd.f32 0.0, %v5513
    %v5515 = vpop.f32.mrf.mxu0
    %v5516 = vadd.f32 0.0, %v5515
    %5517 = vmatprep.mubr.bf16.mxu0 %v3609
    %5518 = vmatmul.mubr.bf16.gmra.mxu0 %v3608
    %v5519 = vpop.f32.mrf.mxu0
    %v5520 = vadd.f32 0.0, %v5519
    %v5521 = vpop.f32.mrf.mxu0
    %v5522 = vadd.f32 0.0, %v5521
    %v5523 = vpop.f32.mrf.mxu0
    %v5524 = vpop.f32.mrf.mxu0
    %5525 = vdwg.mxu0
    %5526 = vmatprep.subr.bf16.mxu0 %v5286
    %5527 = vmatpush1.bf16.msra.mxu0 %v5285
    %5528 = vmatprep.subr.bf16.mxu0 %v5282
    %5529 = vmatpush1.bf16.msra.mxu0 %v5281
    %5530 = vmatprep.subr.bf16.mxu0 %v5278
    %5531 = vmatpush1.bf16.msra.mxu0 %v5277
    %5532 = vmatprep.subr.bf16.mxu0 %v5274
    %5533 = vmatpush1.bf16.msra.mxu0 %v5273
    %5534 = vmatprep.subr.bf16.mxu0 %v5270
    %5535 = vmatpush1.bf16.msra.mxu0 %v5269
    %5536 = vmatprep.subr.bf16.mxu0 %v5266
    %5537 = vmatpush1.bf16.msra.mxu0 %v5265
    %5538 = vmatprep.subr.bf16.mxu0 %v5262
    %5539 = vmatpush1.bf16.msra.mxu0 %v5261
    %5540 = vmatprep.subr.bf16.mxu0 %v5258
    %5541 = vmatpush1.bf16.msra.mxu0 %v5257
    %5542 = vmatprep.subr.bf16.mxu0 0
    %5543 = vmatpush2.bf16.msra.mxu0 0
    %5544 = vmatprep.subr.bf16.mxu0 0
    %5545 = vmatpush2.bf16.msra.mxu0 0
    %5546 = vmatprep.subr.bf16.mxu0 0
    %5547 = vmatpush2.bf16.msra.mxu0 0
    %5548 = vmatprep.subr.bf16.mxu0 0
    %5549 = vmatpush2.bf16.msra.mxu0 0
    %5550 = vmatprep.subr.bf16.mxu0 %v5302
    %5551 = vmatpush2.bf16.msra.mxu0 %v5301
    %5552 = vmatprep.subr.bf16.mxu0 %v5298
    %5553 = vmatpush2.bf16.msra.mxu0 %v5297
    %5554 = vmatprep.subr.bf16.mxu0 %v5294
    %5555 = vmatpush2.bf16.msra.mxu0 %v5293
    %5556 = vmatprep.subr.bf16.mxu0 %v5290
    %5557 = vmatpush2.bf16.msra.mxu0 %v5289
    %5558 = vmatprep.mubr.bf16.mxu0 %v4285
    %5559 = vmatmul.mubr.bf16.gmra.mxu0 %v3582
    %v5560 = vpop.f32.mrf.mxu0
    %v5561 = vpop.f32.mrf.mxu0
    %v5562 = vpop.f32.mrf.mxu0
    %v5563 = vadd.f32 %v5454, %v5562
    %v5564 = vpop.f32.mrf.mxu0
    %v5565 = vadd.f32 %v5456, %v5564
    %5566 = vmatprep.mubr.bf16.mxu0 %v4288
    %5567 = vmatmul.mubr.bf16.gmra.mxu0 %v3586
    %v5568 = vpop.f32.mrf.mxu0
    %v5569 = vadd.f32 %v5460, %v5568
    %v5570 = vpop.f32.mrf.mxu0
    %v5571 = vadd.f32 %v5462, %v5570
    %v5572 = vpop.f32.mrf.mxu0
    %v5573 = vadd.f32 %v5464, %v5572
    %v5574 = vpop.f32.mrf.mxu0
    %v5575 = vadd.f32 %v5466, %v5574
    %5576 = vmatprep.mubr.bf16.mxu0 %v4291
    %5577 = vmatmul.mubr.bf16.gmra.mxu0 %v3590
    %v5578 = vpop.f32.mrf.mxu0
    %v5579 = vadd.f32 %v5470, %v5578
    %v5580 = vpop.f32.mrf.mxu0
    %v5581 = vadd.f32 %v5472, %v5580
    %v5582 = vpop.f32.mrf.mxu0
    %v5583 = vadd.f32 %v5474, %v5582
    %v5584 = vpop.f32.mrf.mxu0
    %v5585 = vadd.f32 %v5476, %v5584
    %5586 = vmatprep.mubr.bf16.mxu0 %v4294
    %5587 = vmatmul.mubr.bf16.gmra.mxu0 %v3594
    %v5588 = vpop.f32.mrf.mxu0
    %v5589 = vadd.f32 %v5480, %v5588
    %v5590 = vpop.f32.mrf.mxu0
    %v5591 = vadd.f32 %v5482, %v5590
    %v5592 = vpop.f32.mrf.mxu0
    %v5593 = vadd.f32 %v5484, %v5592
    %v5594 = vpop.f32.mrf.mxu0
    %v5595 = vadd.f32 %v5486, %v5594
    %5596 = vmatprep.mubr.bf16.mxu0 %v4297
    %5597 = vmatmul.mubr.bf16.gmra.mxu0 %v3598
    %v5598 = vpop.f32.mrf.mxu0
    %v5599 = vadd.f32 %v5490, %v5598
    %v5600 = vpop.f32.mrf.mxu0
    %v5601 = vadd.f32 %v5492, %v5600
    %v5602 = vpop.f32.mrf.mxu0
    %v5603 = vadd.f32 %v5494, %v5602
    %v5604 = vpop.f32.mrf.mxu0
    %v5605 = vadd.f32 %v5496, %v5604
    %5606 = vmatprep.mubr.bf16.mxu0 %v4300
    %5607 = vmatmul.mubr.bf16.gmra.mxu0 %v3602
    %v5608 = vpop.f32.mrf.mxu0
    %v5609 = vadd.f32 %v5500, %v5608
    %v5610 = vpop.f32.mrf.mxu0
    %v5611 = vadd.f32 %v5502, %v5610
    %v5612 = vpop.f32.mrf.mxu0
    %v5613 = vadd.f32 %v5504, %v5612
    %v5614 = vpop.f32.mrf.mxu0
    %v5615 = vadd.f32 %v5506, %v5614
    %5616 = vmatprep.mubr.bf16.mxu0 %v4303
    %5617 = vmatmul.mubr.bf16.gmra.mxu0 %v3606
    %v5618 = vpop.f32.mrf.mxu0
    %v5619 = vadd.f32 %v5510, %v5618
    %v5620 = vpop.f32.mrf.mxu0
    %v5621 = vadd.f32 %v5512, %v5620
    %v5622 = vpop.f32.mrf.mxu0
    %v5623 = vadd.f32 %v5514, %v5622
    %v5624 = vpop.f32.mrf.mxu0
    %v5625 = vadd.f32 %v5516, %v5624
    %5626 = vmatprep.mubr.bf16.mxu0 %v4306
    %5627 = vmatmul.mubr.bf16.gmra.mxu0 %v3610
    %v5628 = vpop.f32.mrf.mxu0
    %v5629 = vadd.f32 %v5520, %v5628
    %v5630 = vpop.f32.mrf.mxu0
    %v5631 = vadd.f32 %v5522, %v5630
    %v5632 = vpop.f32.mrf.mxu0
    %v5633 = vpop.f32.mrf.mxu0
    %5634 = vdwg.mxu0
    %5635 = vmatprep.subr.bf16.mxu0 %v5224
    %5636 = vmatpush1.bf16.msra.mxu0 %v5223
    %5637 = vmatprep.subr.bf16.mxu0 %v5220
    %5638 = vmatpush1.bf16.msra.mxu0 %v5219
    %5639 = vmatprep.subr.bf16.mxu0 %v5216
    %5640 = vmatpush1.bf16.msra.mxu0 %v5215
    %5641 = vmatprep.subr.bf16.mxu0 %v5212
    %5642 = vmatpush1.bf16.msra.mxu0 %v5211
    %5643 = vmatprep.subr.bf16.mxu0 %v5208
    %5644 = vmatpush1.bf16.msra.mxu0 %v5207
    %5645 = vmatprep.subr.bf16.mxu0 %v5204
    %5646 = vmatpush1.bf16.msra.mxu0 %v5203
    %5647 = vmatprep.subr.bf16.mxu0 %v5200
    %5648 = vmatpush1.bf16.msra.mxu0 %v5199
    %5649 = vmatprep.subr.bf16.mxu0 %v5196
    %5650 = vmatpush1.bf16.msra.mxu0 %v5195
    %5651 = vmatprep.subr.bf16.mxu0 %v5256
    %5652 = vmatpush2.bf16.msra.mxu0 %v5255
    %5653 = vmatprep.subr.bf16.mxu0 %v5252
    %5654 = vmatpush2.bf16.msra.mxu0 %v5251
    %5655 = vmatprep.subr.bf16.mxu0 %v5248
    %5656 = vmatpush2.bf16.msra.mxu0 %v5247
    %5657 = vmatprep.subr.bf16.mxu0 %v5244
    %5658 = vmatpush2.bf16.msra.mxu0 %v5243
    %5659 = vmatprep.subr.bf16.mxu0 %v5240
    %5660 = vmatpush2.bf16.msra.mxu0 %v5239
    %5661 = vmatprep.subr.bf16.mxu0 %v5236
    %5662 = vmatpush2.bf16.msra.mxu0 %v5235
    %5663 = vmatprep.subr.bf16.mxu0 %v5232
    %5664 = vmatpush2.bf16.msra.mxu0 %v5231
    %5665 = vmatprep.subr.bf16.mxu0 %v5228
    %5666 = vmatpush2.bf16.msra.mxu0 %v5227
    %5667 = vmatprep.mubr.bf16.mxu0 %v3581
    %5668 = vmatmul.mubr.bf16.gmra.mxu0 %v3580
    %v5669 = vpop.f32.mrf.mxu0
    %v5670 = vpop.f32.mrf.mxu0
    %v5671 = vpop.f32.mrf.mxu0
    %v5672 = vadd.f32 0.0, %v5671
    %v5673 = vpop.f32.mrf.mxu0
    %v5674 = vadd.f32 0.0, %v5673
    %5675 = vmatprep.mubr.bf16.mxu0 %v3585
    %5676 = vmatmul.mubr.bf16.gmra.mxu0 %v3584
    %v5677 = vpop.f32.mrf.mxu0
    %v5678 = vadd.f32 0.0, %v5677
    %v5679 = vpop.f32.mrf.mxu0
    %v5680 = vadd.f32 0.0, %v5679
    %v5681 = vpop.f32.mrf.mxu0
    %v5682 = vadd.f32 0.0, %v5681
    %v5683 = vpop.f32.mrf.mxu0
    %v5684 = vadd.f32 0.0, %v5683
    %5685 = vmatprep.mubr.bf16.mxu0 %v3589
    %5686 = vmatmul.mubr.bf16.gmra.mxu0 %v3588
    %v5687 = vpop.f32.mrf.mxu0
    %v5688 = vadd.f32 0.0, %v5687
    %v5689 = vpop.f32.mrf.mxu0
    %v5690 = vadd.f32 0.0, %v5689
    %v5691 = vpop.f32.mrf.mxu0
    %v5692 = vadd.f32 0.0, %v5691
    %v5693 = vpop.f32.mrf.mxu0
    %v5694 = vadd.f32 0.0, %v5693
    %5695 = vmatprep.mubr.bf16.mxu0 %v3593
    %5696 = vmatmul.mubr.bf16.gmra.mxu0 %v3592
    %v5697 = vpop.f32.mrf.mxu0
    %v5698 = vadd.f32 0.0, %v5697
    %v5699 = vpop.f32.mrf.mxu0
    %v5700 = vadd.f32 0.0, %v5699
    %v5701 = vpop.f32.mrf.mxu0
    %v5702 = vadd.f32 0.0, %v5701
    %v5703 = vpop.f32.mrf.mxu0
    %v5704 = vadd.f32 0.0, %v5703
    %5705 = vmatprep.mubr.bf16.mxu0 %v3597
    %5706 = vmatmul.mubr.bf16.gmra.mxu0 %v3596
    %v5707 = vpop.f32.mrf.mxu0
    %v5708 = vadd.f32 0.0, %v5707
    %v5709 = vpop.f32.mrf.mxu0
    %v5710 = vadd.f32 0.0, %v5709
    %v5711 = vpop.f32.mrf.mxu0
    %v5712 = vadd.f32 0.0, %v5711
    %v5713 = vpop.f32.mrf.mxu0
    %v5714 = vadd.f32 0.0, %v5713
    %5715 = vmatprep.mubr.bf16.mxu0 %v3601
    %5716 = vmatmul.mubr.bf16.gmra.mxu0 %v3600
    %v5717 = vpop.f32.mrf.mxu0
    %v5718 = vadd.f32 0.0, %v5717
    %v5719 = vpop.f32.mrf.mxu0
    %v5720 = vadd.f32 0.0, %v5719
    %v5721 = vpop.f32.mrf.mxu0
    %v5722 = vadd.f32 0.0, %v5721
    %v5723 = vpop.f32.mrf.mxu0
    %v5724 = vadd.f32 0.0, %v5723
    %5725 = vmatprep.mubr.bf16.mxu0 %v3605
    %5726 = vmatmul.mubr.bf16.gmra.mxu0 %v3604
    %v5727 = vpop.f32.mrf.mxu0
    %v5728 = vadd.f32 0.0, %v5727
    %v5729 = vpop.f32.mrf.mxu0
    %v5730 = vadd.f32 0.0, %v5729
    %v5731 = vpop.f32.mrf.mxu0
    %v5732 = vadd.f32 0.0, %v5731
    %v5733 = vpop.f32.mrf.mxu0
    %v5734 = vadd.f32 0.0, %v5733
    %5735 = vmatprep.mubr.bf16.mxu0 %v3609
    %5736 = vmatmul.mubr.bf16.gmra.mxu0 %v3608
    %v5737 = vpop.f32.mrf.mxu0
    %v5738 = vadd.f32 0.0, %v5737
    %v5739 = vpop.f32.mrf.mxu0
    %v5740 = vadd.f32 0.0, %v5739
    %v5741 = vpop.f32.mrf.mxu0
    %v5742 = vpop.f32.mrf.mxu0
    %5743 = vdwg.mxu0
    %5744 = vmatprep.subr.bf16.mxu0 %v5288
    %5745 = vmatpush1.bf16.msra.mxu0 %v5287
    %5746 = vmatprep.subr.bf16.mxu0 %v5284
    %5747 = vmatpush1.bf16.msra.mxu0 %v5283
    %5748 = vmatprep.subr.bf16.mxu0 %v5280
    %5749 = vmatpush1.bf16.msra.mxu0 %v5279
    %5750 = vmatprep.subr.bf16.mxu0 %v5276
    %5751 = vmatpush1.bf16.msra.mxu0 %v5275
    %5752 = vmatprep.subr.bf16.mxu0 %v5272
    %5753 = vmatpush1.bf16.msra.mxu0 %v5271
    %5754 = vmatprep.subr.bf16.mxu0 %v5268
    %5755 = vmatpush1.bf16.msra.mxu0 %v5267
    %5756 = vmatprep.subr.bf16.mxu0 %v5264
    %5757 = vmatpush1.bf16.msra.mxu0 %v5263
    %5758 = vmatprep.subr.bf16.mxu0 %v5260
    %5759 = vmatpush1.bf16.msra.mxu0 %v5259
    %5760 = vmatprep.subr.bf16.mxu0 0
    %5761 = vmatpush2.bf16.msra.mxu0 0
    %5762 = vmatprep.subr.bf16.mxu0 0
    %5763 = vmatpush2.bf16.msra.mxu0 0
    %5764 = vmatprep.subr.bf16.mxu0 0
    %5765 = vmatpush2.bf16.msra.mxu0 0
    %5766 = vmatprep.subr.bf16.mxu0 0
    %5767 = vmatpush2.bf16.msra.mxu0 0
    %5768 = vmatprep.subr.bf16.mxu0 %v5304
    %5769 = vmatpush2.bf16.msra.mxu0 %v5303
    %5770 = vmatprep.subr.bf16.mxu0 %v5300
    %5771 = vmatpush2.bf16.msra.mxu0 %v5299
    %5772 = vmatprep.subr.bf16.mxu0 %v5296
    %5773 = vmatpush2.bf16.msra.mxu0 %v5295
    %5774 = vmatprep.subr.bf16.mxu0 %v5292
    %5775 = vmatpush2.bf16.msra.mxu0 %v5291
    %5776 = vmatprep.mubr.bf16.mxu0 %v4285
    %5777 = vmatmul.mubr.bf16.gmra.mxu0 %v3582
    %v5778 = vpop.f32.mrf.mxu0
    %v5779 = vpop.f32.mrf.mxu0
    %v5780 = vpop.f32.mrf.mxu0
    %v5781 = vadd.f32 %v5672, %v5780
    %v5782 = vpop.f32.mrf.mxu0
    %v5783 = vadd.f32 %v5674, %v5782
    %5784 = vmatprep.mubr.bf16.mxu0 %v4288
    %5785 = vmatmul.mubr.bf16.gmra.mxu0 %v3586
    %v5786 = vpop.f32.mrf.mxu0
    %v5787 = vadd.f32 %v5678, %v5786
    %v5788 = vpop.f32.mrf.mxu0
    %v5789 = vadd.f32 %v5680, %v5788
    %v5790 = vpop.f32.mrf.mxu0
    %v5791 = vadd.f32 %v5682, %v5790
    %v5792 = vpop.f32.mrf.mxu0
    %v5793 = vadd.f32 %v5684, %v5792
    %5794 = vmatprep.mubr.bf16.mxu0 %v4291
    %5795 = vmatmul.mubr.bf16.gmra.mxu0 %v3590
    %v5796 = vpop.f32.mrf.mxu0
    %v5797 = vadd.f32 %v5688, %v5796
    %v5798 = vpop.f32.mrf.mxu0
    %v5799 = vadd.f32 %v5690, %v5798
    %v5800 = vpop.f32.mrf.mxu0
    %v5801 = vadd.f32 %v5692, %v5800
    %v5802 = vpop.f32.mrf.mxu0
    %v5803 = vadd.f32 %v5694, %v5802
    %5804 = vmatprep.mubr.bf16.mxu0 %v4294
    %5805 = vmatmul.mubr.bf16.gmra.mxu0 %v3594
    %v5806 = vpop.f32.mrf.mxu0
    %v5807 = vadd.f32 %v5698, %v5806
    %v5808 = vpop.f32.mrf.mxu0
    %v5809 = vadd.f32 %v5700, %v5808
    %v5810 = vpop.f32.mrf.mxu0
    %v5811 = vadd.f32 %v5702, %v5810
    %v5812 = vpop.f32.mrf.mxu0
    %v5813 = vadd.f32 %v5704, %v5812
    %5814 = vmatprep.mubr.bf16.mxu0 %v4297
    %5815 = vmatmul.mubr.bf16.gmra.mxu0 %v3598
    %v5816 = vpop.f32.mrf.mxu0
    %v5817 = vadd.f32 %v5708, %v5816
    %v5818 = vpop.f32.mrf.mxu0
    %v5819 = vadd.f32 %v5710, %v5818
    %v5820 = vpop.f32.mrf.mxu0
    %v5821 = vadd.f32 %v5712, %v5820
    %v5822 = vpop.f32.mrf.mxu0
    %v5823 = vadd.f32 %v5714, %v5822
    %5824 = vmatprep.mubr.bf16.mxu0 %v4300
    %5825 = vmatmul.mubr.bf16.gmra.mxu0 %v3602
    %v5826 = vpop.f32.mrf.mxu0
    %v5827 = vadd.f32 %v5718, %v5826
    %v5828 = vpop.f32.mrf.mxu0
    %v5829 = vadd.f32 %v5720, %v5828
    %v5830 = vpop.f32.mrf.mxu0
    %v5831 = vadd.f32 %v5722, %v5830
    %v5832 = vpop.f32.mrf.mxu0
    %v5833 = vadd.f32 %v5724, %v5832
    %5834 = vmatprep.mubr.bf16.mxu0 %v4303
    %5835 = vmatmul.mubr.bf16.gmra.mxu0 %v3606
    %v5836 = vpop.f32.mrf.mxu0
    %v5837 = vadd.f32 %v5728, %v5836
    %v5838 = vpop.f32.mrf.mxu0
    %v5839 = vadd.f32 %v5730, %v5838
    %v5840 = vpop.f32.mrf.mxu0
    %v5841 = vadd.f32 %v5732, %v5840
    %v5842 = vpop.f32.mrf.mxu0
    %v5843 = vadd.f32 %v5734, %v5842
    %5844 = vmatprep.mubr.bf16.mxu0 %v4306
    %5845 = vmatmul.mubr.bf16.gmra.mxu0 %v3610
    %v5846 = vpop.f32.mrf.mxu0
    %v5847 = vadd.f32 %v5738, %v5846
    %v5848 = vpop.f32.mrf.mxu0
    %v5849 = vadd.f32 %v5740, %v5848
    %v5850 = vpop.f32.mrf.mxu0
    %v5851 = vpop.f32.mrf.mxu0
    %5852 = vdwg.mxu0
    %v5853 = vadd.f32 %v4452, %v5563
    %v5854 = vadd.f32 %v4454, %v5565
    %v5855 = vadd.f32 %v4670, %v5781
    %v5856 = vadd.f32 %v4672, %v5783
    %v5857 = vadd.f32 %v4456, %v5569
    %v5858 = vadd.f32 %v4458, %v5571
    %v5859 = vadd.f32 %v4674, %v5787
    %v5860 = vadd.f32 %v4676, %v5789
    %v5861 = vadd.f32 %v4462, %v5573
    %v5862 = vadd.f32 %v4464, %v5575
    %v5863 = vadd.f32 %v4680, %v5791
    %v5864 = vadd.f32 %v4682, %v5793
    %v5865 = vadd.f32 %v4466, %v5579
    %v5866 = vadd.f32 %v4468, %v5581
    %v5867 = vadd.f32 %v4684, %v5797
    %v5868 = vadd.f32 %v4686, %v5799
    %v5869 = vadd.f32 %v4472, %v5583
    %v5870 = vadd.f32 %v4474, %v5585
    %v5871 = vadd.f32 %v4690, %v5801
    %v5872 = vadd.f32 %v4692, %v5803
    %v5873 = vadd.f32 %v4476, %v5589
    %v5874 = vadd.f32 %v4478, %v5591
    %v5875 = vadd.f32 %v4694, %v5807
    %v5876 = vadd.f32 %v4696, %v5809
    %v5877 = vadd.f32 %v4482, %v5593
    %v5878 = vadd.f32 %v4484, %v5595
    %v5879 = vadd.f32 %v4700, %v5811
    %v5880 = vadd.f32 %v4702, %v5813
    %v5881 = vadd.f32 %v4486, %v5599
    %v5882 = vadd.f32 %v4488, %v5601
    %v5883 = vadd.f32 %v4704, %v5817
    %v5884 = vadd.f32 %v4706, %v5819
    %v5885 = vadd.f32 %v4492, %v5603
    %v5886 = vadd.f32 %v4494, %v5605
    %v5887 = vadd.f32 %v4710, %v5821
    %v5888 = vadd.f32 %v4712, %v5823
    %v5889 = vadd.f32 %v4496, %v5609
    %v5890 = vadd.f32 %v4498, %v5611
    %v5891 = vadd.f32 %v4714, %v5827
    %v5892 = vadd.f32 %v4716, %v5829
    %v5893 = vadd.f32 %v4502, %v5613
    %v5894 = vadd.f32 %v4504, %v5615
    %v5895 = vadd.f32 %v4720, %v5831
    %v5896 = vadd.f32 %v4722, %v5833
    %v5897 = vadd.f32 %v4506, %v5619
    %v5898 = vadd.f32 %v4508, %v5621
    %v5899 = vadd.f32 %v4724, %v5837
    %v5900 = vadd.f32 %v4726, %v5839
    %v5901 = vadd.f32 %v4512, %v5623
    %v5902 = vadd.f32 %v4514, %v5625
    %v5903 = vadd.f32 %v4730, %v5841
    %v5904 = vadd.f32 %v4732, %v5843
    %v5905 = vadd.f32 %v4516, %v5629
    %v5906 = vadd.f32 %v4518, %v5631
    %v5907 = vadd.f32 %v4734, %v5847
    %v5908 = vadd.f32 %v4736, %v5849
    %s5909 = scalar_lea.vmem [#allocation7], 3584
    %v5910 = vld [vmem:[%s5909] sm:$0xff]
    %v5911 = vld [vmem:[%s5909 + $0x8] sm:$0xff]
    %v5912 = vld [vmem:[%s5909 + $0x10] sm:$0xff]
    %v5913 = vld [vmem:[%s5909 + $0x18] sm:$0xff]
    %v5914 = vld [vmem:[%s5909 + $0x20] sm:$0xff]
    %v5915 = vld [vmem:[%s5909 + $0x28] sm:$0xff]
    %v5916 = vld [vmem:[%s5909 + $0x30] sm:$0xff]
    %v5917 = vld [vmem:[%s5909 + $0x38] sm:$0xff]
    %v5918 = vld [vmem:[%s5909 + $0x40] sm:$0xff]
    %v5919 = vld [vmem:[%s5909 + $0x48] sm:$0xff]
    %v5920 = vld [vmem:[%s5909 + $0x50] sm:$0xff]
    %v5921 = vld [vmem:[%s5909 + $0x58] sm:$0xff]
    %v5922 = vld [vmem:[%s5909 + $0x60] sm:$0xff]
    %v5923 = vld [vmem:[%s5909 + $0x68] sm:$0xff]
    %v5924 = vld [vmem:[%s5909 + $0x70] sm:$0xff]
    %v5925 = vld [vmem:[%s5909 + $0x78] sm:$0xff]
    %v5926 = vld [vmem:[%s5909 + $0x80] sm:$0xff]
    %v5927 = vld [vmem:[%s5909 + $0x88] sm:$0xff]
    %v5928 = vld [vmem:[%s5909 + $0x90] sm:$0xff]
    %v5929 = vld [vmem:[%s5909 + $0x98] sm:$0xff]
    %v5930 = vld [vmem:[%s5909 + $0xa0] sm:$0xff]
    %v5931 = vld [vmem:[%s5909 + $0xa8] sm:$0xff]
    %v5932 = vld [vmem:[%s5909 + $0xb0] sm:$0xff]
    %v5933 = vld [vmem:[%s5909 + $0xb8] sm:$0xff]
    %v5934 = vld [vmem:[%s5909 + $0xc0] sm:$0xff]
    %v5935 = vld [vmem:[%s5909 + $0xc8] sm:$0xff]
    %v5936 = vld [vmem:[%s5909 + $0xd0] sm:$0xff]
    %v5937 = vld [vmem:[%s5909 + $0xd8] sm:$0xff]
    %v5938 = vld [vmem:[%s5909 + $0xe0] sm:$0xff]
    %v5939 = vld [vmem:[%s5909 + $0xe8] sm:$0xff]
    %v5940 = vld [vmem:[%s5909 + $0xf0] sm:$0xff]
    %v5941 = vld [vmem:[%s5909 + $0xf8] sm:$0xff]
    %v5942 = vld [vmem:[%s5909 + $0x100] sm:$0xff]
    %v5943 = vld [vmem:[%s5909 + $0x108] sm:$0xff]
    %v5944 = vld [vmem:[%s5909 + $0x110] sm:$0xff]
    %v5945 = vld [vmem:[%s5909 + $0x118] sm:$0xff]
    %v5946 = vld [vmem:[%s5909 + $0x120] sm:$0xff]
    %v5947 = vld [vmem:[%s5909 + $0x128] sm:$0xff]
    %v5948 = vld [vmem:[%s5909 + $0x130] sm:$0xff]
    %v5949 = vld [vmem:[%s5909 + $0x138] sm:$0xff]
    %v5950 = vld [vmem:[%s5909 + $0x140] sm:$0xff]
    %v5951 = vld [vmem:[%s5909 + $0x148] sm:$0xff]
    %v5952 = vld [vmem:[%s5909 + $0x150] sm:$0xff]
    %v5953 = vld [vmem:[%s5909 + $0x158] sm:$0xff]
    %v5954 = vld [vmem:[%s5909 + $0x160] sm:$0xff]
    %v5955 = vld [vmem:[%s5909 + $0x168] sm:$0xff]
    %v5956 = vld [vmem:[%s5909 + $0x170] sm:$0xff]
    %v5957 = vld [vmem:[%s5909 + $0x178] sm:$0xff]
    %v5958 = vld [vmem:[%s5909 + $0x180] sm:$0xff]
    %v5959 = vld [vmem:[%s5909 + $0x188] sm:$0xff]
    %v5960 = vld [vmem:[%s5909 + $0x190] sm:$0xff]
    %v5961 = vld [vmem:[%s5909 + $0x198] sm:$0xff]
    %v5962 = vld [vmem:[%s5909 + $0x1a0] sm:$0xff]
    %v5963 = vld [vmem:[%s5909 + $0x1a8] sm:$0xff]
    %v5964 = vld [vmem:[%s5909 + $0x1b0] sm:$0xff]
    %v5965 = vld [vmem:[%s5909 + $0x1b8] sm:$0xff]
    %v5966 = vld [vmem:[%s5909 + $0x1c0] sm:$0xff]
    %v5967 = vld [vmem:[%s5909 + $0x1c8] sm:$0xff]
    %v5968 = vld [vmem:[%s5909 + $0x1d0] sm:$0xff]
    %v5969 = vld [vmem:[%s5909 + $0x1d8] sm:$0xff]
    %v5970 = vld [vmem:[%s5909 + $0x1e0] sm:$0xff]
    %v5971 = vld [vmem:[%s5909 + $0x1e8] sm:$0xff]
    %v5972 = vld [vmem:[%s5909 + $0x1f0] sm:$0xff]
    %v5973 = vld [vmem:[%s5909 + $0x1f8] sm:$0xff]
    %v5974 = vld [vmem:[%s5909 + $0x200] sm:$0xff]
    %v5975 = vld [vmem:[%s5909 + $0x208] sm:$0xff]
    %v5976 = vld [vmem:[%s5909 + $0x210] sm:$0xff]
    %v5977 = vld [vmem:[%s5909 + $0x218] sm:$0xff]
    %v5978 = vld [vmem:[%s5909 + $0x220] sm:$0xff]
    %v5979 = vld [vmem:[%s5909 + $0x228] sm:$0xff]
    %v5980 = vld [vmem:[%s5909 + $0x230] sm:$0xff]
    %v5981 = vld [vmem:[%s5909 + $0x238] sm:$0xff]
    %v5982 = vld [vmem:[%s5909 + $0x240] sm:$0xff]
    %v5983 = vld [vmem:[%s5909 + $0x248] sm:$0xff]
    %v5984 = vld [vmem:[%s5909 + $0x250] sm:$0xff]
    %v5985 = vld [vmem:[%s5909 + $0x258] sm:$0xff]
    %v5986 = vld [vmem:[%s5909 + $0x260] sm:$0xff]
    %v5987 = vld [vmem:[%s5909 + $0x268] sm:$0xff]
    %v5988 = vld [vmem:[%s5909 + $0x270] sm:$0xff]
    %v5989 = vld [vmem:[%s5909 + $0x278] sm:$0xff]
    %v5990 = vld [vmem:[%s5909 + $0x280] sm:$0xff]
    %v5991 = vld [vmem:[%s5909 + $0x288] sm:$0xff]
    %v5992 = vld [vmem:[%s5909 + $0x290] sm:$0xff]
    %v5993 = vld [vmem:[%s5909 + $0x298] sm:$0xff]
    %v5994 = vld [vmem:[%s5909 + $0x2a0] sm:$0xff]
    %v5995 = vld [vmem:[%s5909 + $0x2a8] sm:$0xff]
    %v5996 = vld [vmem:[%s5909 + $0x2b0] sm:$0xff]
    %v5997 = vld [vmem:[%s5909 + $0x2b8] sm:$0xff]
    %v5998 = vld [vmem:[%s5909 + $0x2c0] sm:$0xff]
    %v5999 = vld [vmem:[%s5909 + $0x2c8] sm:$0xff]
    %v6000 = vld [vmem:[%s5909 + $0x2d0] sm:$0xff]
    %v6001 = vld [vmem:[%s5909 + $0x2d8] sm:$0xff]
    %v6002 = vld [vmem:[%s5909 + $0x2e0] sm:$0xff]
    %v6003 = vld [vmem:[%s5909 + $0x2e8] sm:$0xff]
    %v6004 = vld [vmem:[%s5909 + $0x2f0] sm:$0xff]
    %v6005 = vld [vmem:[%s5909 + $0x2f8] sm:$0xff]
    %v6006 = vld [vmem:[%s5909 + $0x300] sm:$0xff]
    %v6007 = vld [vmem:[%s5909 + $0x308] sm:$0xff]
    %v6008 = vld [vmem:[%s5909 + $0x310] sm:$0xff]
    %v6009 = vld [vmem:[%s5909 + $0x318] sm:$0xff]
    %v6010 = vld [vmem:[%s5909 + $0x320] sm:$0xff]
    %v6011 = vld [vmem:[%s5909 + $0x328] sm:$0xff]
    %v6012 = vld [vmem:[%s5909 + $0x330] sm:$0xff]
    %v6013 = vld [vmem:[%s5909 + $0x338] sm:$0xff]
    %v6014 = vld [vmem:[%s5909 + $0x340] sm:$0xff]
    %v6015 = vld [vmem:[%s5909 + $0x348] sm:$0xff]
    %v6016 = vld [vmem:[%s5909 + $0x350] sm:$0xff]
    %v6017 = vld [vmem:[%s5909 + $0x358] sm:$0xff]
    %v6018 = vld [vmem:[%s5909 + $0x360] sm:$0xff]
    %v6019 = vld [vmem:[%s5909 + $0x368] sm:$0xff]
    %v6020 = vld [vmem:[%s5909 + $0x370] sm:$0xff]
    %v6021 = vld [vmem:[%s5909 + $0x378] sm:$0xff]
    %v6134 = vunpack.c.l.b16 %v5910
    %v6135 = vunpack.c.h.b16 %v5910
    %v6136 = vunpack.c.l.b16 %v5911
    %v6137 = vunpack.c.h.b16 %v5911
    %v6138 = vunpack.c.l.b16 %v5912
    %v6139 = vunpack.c.h.b16 %v5912
    %v6140 = vunpack.c.l.b16 %v5913
    %v6141 = vunpack.c.h.b16 %v5913
    %v6142 = vunpack.c.l.b16 %v5914
    %v6143 = vunpack.c.h.b16 %v5914
    %v6144 = vunpack.c.l.b16 %v5915
    %v6145 = vunpack.c.h.b16 %v5915
    %v6146 = vunpack.c.l.b16 %v5916
    %v6147 = vunpack.c.h.b16 %v5916
    %v6148 = vunpack.c.l.b16 %v5917
    %v6149 = vunpack.c.h.b16 %v5917
    %v6150 = vunpack.c.l.b16 %v5918
    %v6151 = vunpack.c.h.b16 %v5918
    %v6152 = vunpack.c.l.b16 %v5919
    %v6153 = vunpack.c.h.b16 %v5919
    %v6154 = vunpack.c.l.b16 %v5920
    %v6155 = vunpack.c.h.b16 %v5920
    %v6156 = vunpack.c.l.b16 %v5921
    %v6157 = vunpack.c.h.b16 %v5921
    %v6158 = vunpack.c.l.b16 %v5922
    %v6159 = vunpack.c.h.b16 %v5922
    %v6160 = vunpack.c.l.b16 %v5923
    %v6161 = vunpack.c.h.b16 %v5923
    %v6162 = vunpack.c.l.b16 %v5924
    %v6163 = vunpack.c.h.b16 %v5924
    %v6164 = vunpack.c.l.b16 %v5925
    %v6165 = vunpack.c.h.b16 %v5925
    %v6166 = vunpack.c.l.b16 %v5926
    %v6167 = vunpack.c.h.b16 %v5926
    %v6168 = vunpack.c.l.b16 %v5927
    %v6169 = vunpack.c.h.b16 %v5927
    %v6170 = vunpack.c.l.b16 %v5928
    %v6171 = vunpack.c.h.b16 %v5928
    %v6172 = vunpack.c.l.b16 %v5929
    %v6173 = vunpack.c.h.b16 %v5929
    %v6174 = vunpack.c.l.b16 %v5930
    %v6175 = vunpack.c.h.b16 %v5930
    %v6176 = vunpack.c.l.b16 %v5931
    %v6177 = vunpack.c.h.b16 %v5931
    %v6178 = vunpack.c.l.b16 %v5932
    %v6179 = vunpack.c.h.b16 %v5932
    %v6180 = vunpack.c.l.b16 %v5933
    %v6181 = vunpack.c.h.b16 %v5933
    %v6182 = vunpack.c.l.b16 %v5934
    %v6183 = vunpack.c.h.b16 %v5934
    %v6184 = vunpack.c.l.b16 %v5935
    %v6185 = vunpack.c.h.b16 %v5935
    %v6186 = vunpack.c.l.b16 %v5936
    %v6187 = vunpack.c.h.b16 %v5936
    %v6188 = vunpack.c.l.b16 %v5937
    %v6189 = vunpack.c.h.b16 %v5937
    %v6190 = vunpack.c.l.b16 %v5938
    %v6191 = vunpack.c.h.b16 %v5938
    %v6192 = vunpack.c.l.b16 %v5939
    %v6193 = vunpack.c.h.b16 %v5939
    %v6194 = vunpack.c.l.b16 %v5940
    %v6195 = vunpack.c.h.b16 %v5940
    %v6196 = vunpack.c.l.b16 %v5941
    %v6197 = vunpack.c.h.b16 %v5941
    %v6198 = vunpack.c.l.b16 %v5942
    %v6199 = vunpack.c.h.b16 %v5942
    %v6200 = vunpack.c.l.b16 %v5943
    %v6201 = vunpack.c.h.b16 %v5943
    %v6202 = vunpack.c.l.b16 %v5944
    %v6203 = vunpack.c.h.b16 %v5944
    %v6204 = vunpack.c.l.b16 %v5945
    %v6205 = vunpack.c.h.b16 %v5945
    %v6206 = vunpack.c.l.b16 %v5946
    %v6207 = vunpack.c.h.b16 %v5946
    %v6208 = vunpack.c.l.b16 %v5947
    %v6209 = vunpack.c.h.b16 %v5947
    %v6210 = vunpack.c.l.b16 %v5948
    %v6211 = vunpack.c.h.b16 %v5948
    %v6212 = vunpack.c.l.b16 %v5949
    %v6213 = vunpack.c.h.b16 %v5949
    %v6214 = vunpack.c.l.b16 %v5950
    %v6215 = vunpack.c.h.b16 %v5950
    %v6216 = vunpack.c.l.b16 %v5951
    %v6217 = vunpack.c.h.b16 %v5951
    %v6218 = vunpack.c.l.b16 %v5952
    %v6219 = vunpack.c.h.b16 %v5952
    %v6220 = vunpack.c.l.b16 %v5953
    %v6221 = vunpack.c.h.b16 %v5953
    %v6222 = vunpack.c.l.b16 %v5954
    %v6223 = vunpack.c.h.b16 %v5954
    %v6224 = vunpack.c.l.b16 %v5955
    %v6225 = vunpack.c.h.b16 %v5955
    %v6226 = vunpack.c.l.b16 %v5956
    %v6227 = vunpack.c.h.b16 %v5956
    %v6228 = vunpack.c.l.b16 %v5957
    %v6229 = vunpack.c.h.b16 %v5957
    %v6230 = vunpack.c.l.b16 %v5958
    %v6231 = vunpack.c.h.b16 %v5958
    %v6232 = vunpack.c.l.b16 %v5959
    %v6233 = vunpack.c.h.b16 %v5959
    %v6234 = vunpack.c.l.b16 %v5960
    %v6235 = vunpack.c.h.b16 %v5960
    %v6236 = vunpack.c.l.b16 %v5961
    %v6237 = vunpack.c.h.b16 %v5961
    %v6238 = vunpack.c.l.b16 %v5962
    %v6239 = vunpack.c.h.b16 %v5962
    %v6240 = vunpack.c.l.b16 %v5963
    %v6241 = vunpack.c.h.b16 %v5963
    %v6242 = vunpack.c.l.b16 %v5964
    %v6243 = vunpack.c.h.b16 %v5964
    %v6244 = vunpack.c.l.b16 %v5965
    %v6245 = vunpack.c.h.b16 %v5965
    %v6246 = vunpack.c.l.b16 %v5966
    %v6247 = vunpack.c.h.b16 %v5966
    %v6248 = vunpack.c.l.b16 %v5967
    %v6249 = vunpack.c.h.b16 %v5967
    %v6250 = vunpack.c.l.b16 %v5968
    %v6251 = vunpack.c.h.b16 %v5968
    %v6252 = vunpack.c.l.b16 %v5969
    %v6253 = vunpack.c.h.b16 %v5969
    %v6254 = vunpack.c.l.b16 %v5970
    %v6255 = vunpack.c.h.b16 %v5970
    %v6256 = vunpack.c.l.b16 %v5971
    %v6257 = vunpack.c.h.b16 %v5971
    %v6258 = vunpack.c.l.b16 %v5972
    %v6259 = vunpack.c.h.b16 %v5972
    %v6260 = vunpack.c.l.b16 %v5973
    %v6261 = vunpack.c.h.b16 %v5973
    %v6262 = vunpack.c.l.b16 %v5974
    %v6263 = vunpack.c.h.b16 %v5974
    %v6264 = vunpack.c.l.b16 %v5975
    %v6265 = vunpack.c.h.b16 %v5975
    %v6266 = vunpack.c.l.b16 %v5976
    %v6267 = vunpack.c.h.b16 %v5976
    %v6268 = vunpack.c.l.b16 %v5977
    %v6269 = vunpack.c.h.b16 %v5977
    %v6270 = vunpack.c.l.b16 %v5978
    %v6271 = vunpack.c.h.b16 %v5978
    %v6272 = vunpack.c.l.b16 %v5979
    %v6273 = vunpack.c.h.b16 %v5979
    %v6274 = vunpack.c.l.b16 %v5980
    %v6275 = vunpack.c.h.b16 %v5980
    %v6276 = vunpack.c.l.b16 %v5981
    %v6277 = vunpack.c.h.b16 %v5981
    %v6278 = vunpack.c.l.b16 %v5982
    %v6279 = vunpack.c.h.b16 %v5982
    %v6280 = vunpack.c.l.b16 %v5983
    %v6281 = vunpack.c.h.b16 %v5983
    %v6282 = vunpack.c.l.b16 %v5984
    %v6283 = vunpack.c.h.b16 %v5984
    %v6284 = vunpack.c.l.b16 %v5985
    %v6285 = vunpack.c.h.b16 %v5985
    %v6286 = vunpack.c.l.b16 %v5986
    %v6287 = vunpack.c.h.b16 %v5986
    %v6288 = vunpack.c.l.b16 %v5987
    %v6289 = vunpack.c.h.b16 %v5987
    %v6290 = vunpack.c.l.b16 %v5988
    %v6291 = vunpack.c.h.b16 %v5988
    %v6292 = vunpack.c.l.b16 %v5989
    %v6293 = vunpack.c.h.b16 %v5989
    %v6294 = vunpack.c.l.b16 %v5990
    %v6295 = vunpack.c.h.b16 %v5990
    %v6296 = vunpack.c.l.b16 %v5991
    %v6297 = vunpack.c.h.b16 %v5991
    %v6298 = vunpack.c.l.b16 %v5992
    %v6299 = vunpack.c.h.b16 %v5992
    %v6300 = vunpack.c.l.b16 %v5993
    %v6301 = vunpack.c.h.b16 %v5993
    %v6302 = vunpack.c.l.b16 %v5994
    %v6303 = vunpack.c.h.b16 %v5994
    %v6304 = vunpack.c.l.b16 %v5995
    %v6305 = vunpack.c.h.b16 %v5995
    %v6306 = vunpack.c.l.b16 %v5996
    %v6307 = vunpack.c.h.b16 %v5996
    %v6308 = vunpack.c.l.b16 %v5997
    %v6309 = vunpack.c.h.b16 %v5997
    %v6310 = vunpack.c.l.b16 %v5998
    %v6311 = vunpack.c.h.b16 %v5998
    %v6312 = vunpack.c.l.b16 %v5999
    %v6313 = vunpack.c.h.b16 %v5999
    %v6314 = vunpack.c.l.b16 %v6000
    %v6315 = vunpack.c.h.b16 %v6000
    %v6316 = vunpack.c.l.b16 %v6001
    %v6317 = vunpack.c.h.b16 %v6001
    %v6318 = vunpack.c.l.b16 %v6002
    %v6319 = vunpack.c.h.b16 %v6002
    %v6320 = vunpack.c.l.b16 %v6003
    %v6321 = vunpack.c.h.b16 %v6003
    %v6322 = vunpack.c.l.b16 %v6004
    %v6323 = vunpack.c.h.b16 %v6004
    %v6324 = vunpack.c.l.b16 %v6005
    %v6325 = vunpack.c.h.b16 %v6005
    %v6326 = vunpack.c.l.b16 %v6006
    %v6327 = vunpack.c.h.b16 %v6006
    %v6328 = vunpack.c.l.b16 %v6007
    %v6329 = vunpack.c.h.b16 %v6007
    %v6330 = vunpack.c.l.b16 %v6008
    %v6331 = vunpack.c.h.b16 %v6008
    %v6332 = vunpack.c.l.b16 %v6009
    %v6333 = vunpack.c.h.b16 %v6009
    %v6334 = vunpack.c.l.b16 %v6010
    %v6335 = vunpack.c.h.b16 %v6010
    %v6336 = vunpack.c.l.b16 %v6011
    %v6337 = vunpack.c.h.b16 %v6011
    %v6338 = vunpack.c.l.b16 %v6012
    %v6339 = vunpack.c.h.b16 %v6012
    %v6340 = vunpack.c.l.b16 %v6013
    %v6341 = vunpack.c.h.b16 %v6013
    %v6342 = vunpack.c.l.b16 %v6014
    %v6343 = vunpack.c.h.b16 %v6014
    %v6344 = vunpack.c.l.b16 %v6015
    %v6345 = vunpack.c.h.b16 %v6015
    %v6346 = vunpack.c.l.b16 %v6016
    %v6347 = vunpack.c.h.b16 %v6016
    %v6348 = vunpack.c.l.b16 %v6017
    %v6349 = vunpack.c.h.b16 %v6017
    %v6350 = vunpack.c.l.b16 %v6018
    %v6351 = vunpack.c.h.b16 %v6018
    %v6352 = vunpack.c.l.b16 %v6019
    %v6353 = vunpack.c.h.b16 %v6019
    %v6354 = vunpack.c.l.b16 %v6020
    %v6355 = vunpack.c.h.b16 %v6020
    %v6356 = vunpack.c.l.b16 %v6021
    %v6357 = vunpack.c.h.b16 %v6021
    %v6358 = vpack.c.b16 %v6138, %v6134
    %v6359 = vpack.c.b16 %v6139, %v6135
    %v6360 = vpack.c.b16 %v6140, %v6136
    %v6361 = vpack.c.b16 %v6141, %v6137
    %v6362 = vpack.c.b16 %v6146, %v6142
    %v6363 = vpack.c.b16 %v6147, %v6143
    %v6364 = vpack.c.b16 %v6148, %v6144
    %v6365 = vpack.c.b16 %v6149, %v6145
    %v6366 = vpack.c.b16 %v6154, %v6150
    %v6367 = vpack.c.b16 %v6155, %v6151
    %v6368 = vpack.c.b16 %v6156, %v6152
    %v6369 = vpack.c.b16 %v6157, %v6153
    %v6370 = vpack.c.b16 %v6162, %v6158
    %v6371 = vpack.c.b16 %v6163, %v6159
    %v6372 = vpack.c.b16 %v6164, %v6160
    %v6373 = vpack.c.b16 %v6165, %v6161
    %v6374 = vpack.c.b16 %v6170, %v6166
    %v6375 = vpack.c.b16 %v6171, %v6167
    %v6376 = vpack.c.b16 %v6172, %v6168
    %v6377 = vpack.c.b16 %v6173, %v6169
    %v6378 = vpack.c.b16 %v6178, %v6174
    %v6379 = vpack.c.b16 %v6179, %v6175
    %v6380 = vpack.c.b16 %v6180, %v6176
    %v6381 = vpack.c.b16 %v6181, %v6177
    %v6382 = vpack.c.b16 %v6186, %v6182
    %v6383 = vpack.c.b16 %v6187, %v6183
    %v6384 = vpack.c.b16 %v6188, %v6184
    %v6385 = vpack.c.b16 %v6189, %v6185
    %v6386 = vpack.c.b16 %v6194, %v6190
    %v6387 = vpack.c.b16 %v6195, %v6191
    %v6388 = vpack.c.b16 %v6196, %v6192
    %v6389 = vpack.c.b16 %v6197, %v6193
    %v6390 = vpack.c.b16 %v6202, %v6198
    %v6391 = vpack.c.b16 %v6203, %v6199
    %v6392 = vpack.c.b16 %v6204, %v6200
    %v6393 = vpack.c.b16 %v6205, %v6201
    %v6394 = vpack.c.b16 %v6210, %v6206
    %v6395 = vpack.c.b16 %v6211, %v6207
    %v6396 = vpack.c.b16 %v6212, %v6208
    %v6397 = vpack.c.b16 %v6213, %v6209
    %v6398 = vpack.c.b16 %v6218, %v6214
    %v6399 = vpack.c.b16 %v6219, %v6215
    %v6400 = vpack.c.b16 %v6220, %v6216
    %v6401 = vpack.c.b16 %v6221, %v6217
    %v6402 = vpack.c.b16 %v6226, %v6222
    %v6403 = vpack.c.b16 %v6227, %v6223
    %v6404 = vpack.c.b16 %v6228, %v6224
    %v6405 = vpack.c.b16 %v6229, %v6225
    %v6406 = vpack.c.b16 %v6234, %v6230
    %v6407 = vpack.c.b16 %v6235, %v6231
    %v6408 = vpack.c.b16 %v6236, %v6232
    %v6409 = vpack.c.b16 %v6237, %v6233
    %v6410 = vpack.c.b16 %v6242, %v6238
    %v6411 = vpack.c.b16 %v6243, %v6239
    %v6412 = vpack.c.b16 %v6244, %v6240
    %v6413 = vpack.c.b16 %v6245, %v6241
    %v6414 = vpack.c.b16 %v6250, %v6246
    %v6415 = vpack.c.b16 %v6251, %v6247
    %v6416 = vpack.c.b16 %v6252, %v6248
    %v6417 = vpack.c.b16 %v6253, %v6249
    %v6418 = vpack.c.b16 %v6258, %v6254
    %v6419 = vpack.c.b16 %v6259, %v6255
    %v6420 = vpack.c.b16 %v6260, %v6256
    %v6421 = vpack.c.b16 %v6261, %v6257
    %v6422 = vpack.c.b16 %v6266, %v6262
    %v6423 = vpack.c.b16 %v6267, %v6263
    %v6424 = vpack.c.b16 %v6268, %v6264
    %v6425 = vpack.c.b16 %v6269, %v6265
    %v6426 = vpack.c.b16 %v6274, %v6270
    %v6427 = vpack.c.b16 %v6275, %v6271
    %v6428 = vpack.c.b16 %v6276, %v6272
    %v6429 = vpack.c.b16 %v6277, %v6273
    %v6430 = vpack.c.b16 %v6282, %v6278
    %v6431 = vpack.c.b16 %v6283, %v6279
    %v6432 = vpack.c.b16 %v6284, %v6280
    %v6433 = vpack.c.b16 %v6285, %v6281
    %v6434 = vpack.c.b16 %v6290, %v6286
    %v6435 = vpack.c.b16 %v6291, %v6287
    %v6436 = vpack.c.b16 %v6292, %v6288
    %v6437 = vpack.c.b16 %v6293, %v6289
    %v6438 = vpack.c.b16 %v6298, %v6294
    %v6439 = vpack.c.b16 %v6299, %v6295
    %v6440 = vpack.c.b16 %v6300, %v6296
    %v6441 = vpack.c.b16 %v6301, %v6297
    %v6442 = vpack.c.b16 %v6306, %v6302
    %v6443 = vpack.c.b16 %v6307, %v6303
    %v6444 = vpack.c.b16 %v6308, %v6304
    %v6445 = vpack.c.b16 %v6309, %v6305
    %v6446 = vpack.c.b16 %v6314, %v6310
    %v6447 = vpack.c.b16 %v6315, %v6311
    %v6448 = vpack.c.b16 %v6316, %v6312
    %v6449 = vpack.c.b16 %v6317, %v6313
    %v6450 = vpack.c.b16 %v6322, %v6318
    %v6451 = vpack.c.b16 %v6323, %v6319
    %v6452 = vpack.c.b16 %v6324, %v6320
    %v6453 = vpack.c.b16 %v6325, %v6321
    %v6454 = vpack.c.b16 %v6330, %v6326
    %v6455 = vpack.c.b16 %v6331, %v6327
    %v6456 = vpack.c.b16 %v6332, %v6328
    %v6457 = vpack.c.b16 %v6333, %v6329
    %v6458 = vpack.c.b16 %v6338, %v6334
    %v6459 = vpack.c.b16 %v6339, %v6335
    %v6460 = vpack.c.b16 %v6340, %v6336
    %v6461 = vpack.c.b16 %v6341, %v6337
    %v6462 = vpack.c.b16 %v6346, %v6342
    %v6463 = vpack.c.b16 %v6347, %v6343
    %v6464 = vpack.c.b16 %v6348, %v6344
    %v6465 = vpack.c.b16 %v6349, %v6345
    %v6466 = vpack.c.b16 %v6354, %v6350
    %v6467 = vpack.c.b16 %v6355, %v6351
    %v6468 = vpack.c.b16 %v6356, %v6352
    %v6469 = vpack.c.b16 %v6357, %v6353
    %6582 = vmatprep.subr.bf16.mxu0 %v6387
    %6583 = vmatpush1.bf16.msra.mxu0 %v6386
    %6584 = vmatprep.subr.bf16.mxu0 %v6383
    %6585 = vmatpush1.bf16.msra.mxu0 %v6382
    %6586 = vmatprep.subr.bf16.mxu0 %v6379
    %6587 = vmatpush1.bf16.msra.mxu0 %v6378
    %6588 = vmatprep.subr.bf16.mxu0 %v6375
    %6589 = vmatpush1.bf16.msra.mxu0 %v6374
    %6590 = vmatprep.subr.bf16.mxu0 %v6371
    %6591 = vmatpush1.bf16.msra.mxu0 %v6370
    %6592 = vmatprep.subr.bf16.mxu0 %v6367
    %6593 = vmatpush1.bf16.msra.mxu0 %v6366
    %6594 = vmatprep.subr.bf16.mxu0 %v6363
    %6595 = vmatpush1.bf16.msra.mxu0 %v6362
    %6596 = vmatprep.subr.bf16.mxu0 %v6359
    %6597 = vmatpush1.bf16.msra.mxu0 %v6358
    %6598 = vmatprep.subr.bf16.mxu0 %v6419
    %6599 = vmatpush2.bf16.msra.mxu0 %v6418
    %6600 = vmatprep.subr.bf16.mxu0 %v6415
    %6601 = vmatpush2.bf16.msra.mxu0 %v6414
    %6602 = vmatprep.subr.bf16.mxu0 %v6411
    %6603 = vmatpush2.bf16.msra.mxu0 %v6410
    %6604 = vmatprep.subr.bf16.mxu0 %v6407
    %6605 = vmatpush2.bf16.msra.mxu0 %v6406
    %6606 = vmatprep.subr.bf16.mxu0 %v6403
    %6607 = vmatpush2.bf16.msra.mxu0 %v6402
    %6608 = vmatprep.subr.bf16.mxu0 %v6399
    %6609 = vmatpush2.bf16.msra.mxu0 %v6398
    %6610 = vmatprep.subr.bf16.mxu0 %v6395
    %6611 = vmatpush2.bf16.msra.mxu0 %v6394
    %6612 = vmatprep.subr.bf16.mxu0 %v6391
    %6613 = vmatpush2.bf16.msra.mxu0 %v6390
    %6614 = vmatprep.mubr.bf16.mxu0 %v3581
    %6615 = vmatmul.mubr.bf16.gmra.mxu0 %v3580
    %v6616 = vpop.f32.mrf.mxu0
    %v6617 = vpop.f32.mrf.mxu0
    %v6618 = vpop.f32.mrf.mxu0
    %v6619 = vpop.f32.mrf.mxu0
    %6620 = vmatprep.mubr.bf16.mxu0 %v3585
    %6621 = vmatmul.mubr.bf16.gmra.mxu0 %v3584
    %v6622 = vpop.f32.mrf.mxu0
    %v6623 = vadd.f32 0.0, %v6622
    %v6624 = vpop.f32.mrf.mxu0
    %v6625 = vadd.f32 0.0, %v6624
    %v6626 = vpop.f32.mrf.mxu0
    %v6627 = vadd.f32 0.0, %v6626
    %v6628 = vpop.f32.mrf.mxu0
    %v6629 = vadd.f32 0.0, %v6628
    %6630 = vmatprep.mubr.bf16.mxu0 %v3589
    %6631 = vmatmul.mubr.bf16.gmra.mxu0 %v3588
    %v6632 = vpop.f32.mrf.mxu0
    %v6633 = vadd.f32 0.0, %v6632
    %v6634 = vpop.f32.mrf.mxu0
    %v6635 = vadd.f32 0.0, %v6634
    %v6636 = vpop.f32.mrf.mxu0
    %v6637 = vadd.f32 0.0, %v6636
    %v6638 = vpop.f32.mrf.mxu0
    %v6639 = vadd.f32 0.0, %v6638
    %6640 = vmatprep.mubr.bf16.mxu0 %v3593
    %6641 = vmatmul.mubr.bf16.gmra.mxu0 %v3592
    %v6642 = vpop.f32.mrf.mxu0
    %v6643 = vadd.f32 0.0, %v6642
    %v6644 = vpop.f32.mrf.mxu0
    %v6645 = vadd.f32 0.0, %v6644
    %v6646 = vpop.f32.mrf.mxu0
    %v6647 = vadd.f32 0.0, %v6646
    %v6648 = vpop.f32.mrf.mxu0
    %v6649 = vadd.f32 0.0, %v6648
    %6650 = vmatprep.mubr.bf16.mxu0 %v3597
    %6651 = vmatmul.mubr.bf16.gmra.mxu0 %v3596
    %v6652 = vpop.f32.mrf.mxu0
    %v6653 = vadd.f32 0.0, %v6652
    %v6654 = vpop.f32.mrf.mxu0
    %v6655 = vadd.f32 0.0, %v6654
    %v6656 = vpop.f32.mrf.mxu0
    %v6657 = vadd.f32 0.0, %v6656
    %v6658 = vpop.f32.mrf.mxu0
    %v6659 = vadd.f32 0.0, %v6658
    %6660 = vmatprep.mubr.bf16.mxu0 %v3601
    %6661 = vmatmul.mubr.bf16.gmra.mxu0 %v3600
    %v6662 = vpop.f32.mrf.mxu0
    %v6663 = vadd.f32 0.0, %v6662
    %v6664 = vpop.f32.mrf.mxu0
    %v6665 = vadd.f32 0.0, %v6664
    %v6666 = vpop.f32.mrf.mxu0
    %v6667 = vadd.f32 0.0, %v6666
    %v6668 = vpop.f32.mrf.mxu0
    %v6669 = vadd.f32 0.0, %v6668
    %6670 = vmatprep.mubr.bf16.mxu0 %v3605
    %6671 = vmatmul.mubr.bf16.gmra.mxu0 %v3604
    %v6672 = vpop.f32.mrf.mxu0
    %v6673 = vadd.f32 0.0, %v6672
    %v6674 = vpop.f32.mrf.mxu0
    %v6675 = vadd.f32 0.0, %v6674
    %v6676 = vpop.f32.mrf.mxu0
    %v6677 = vadd.f32 0.0, %v6676
    %v6678 = vpop.f32.mrf.mxu0
    %v6679 = vadd.f32 0.0, %v6678
    %6680 = vmatprep.mubr.bf16.mxu0 %v3609
    %6681 = vmatmul.mubr.bf16.gmra.mxu0 %v3608
    %v6682 = vpop.f32.mrf.mxu0
    %v6683 = vadd.f32 0.0, %v6682
    %v6684 = vpop.f32.mrf.mxu0
    %v6685 = vadd.f32 0.0, %v6684
    %v6686 = vpop.f32.mrf.mxu0
    %v6687 = vadd.f32 0.0, %v6686
    %v6688 = vpop.f32.mrf.mxu0
    %v6689 = vadd.f32 0.0, %v6688
    %6690 = vdwg.mxu0
    %6691 = vmatprep.subr.bf16.mxu0 %v6451
    %6692 = vmatpush1.bf16.msra.mxu0 %v6450
    %6693 = vmatprep.subr.bf16.mxu0 %v6447
    %6694 = vmatpush1.bf16.msra.mxu0 %v6446
    %6695 = vmatprep.subr.bf16.mxu0 %v6443
    %6696 = vmatpush1.bf16.msra.mxu0 %v6442
    %6697 = vmatprep.subr.bf16.mxu0 %v6439
    %6698 = vmatpush1.bf16.msra.mxu0 %v6438
    %6699 = vmatprep.subr.bf16.mxu0 %v6435
    %6700 = vmatpush1.bf16.msra.mxu0 %v6434
    %6701 = vmatprep.subr.bf16.mxu0 %v6431
    %6702 = vmatpush1.bf16.msra.mxu0 %v6430
    %6703 = vmatprep.subr.bf16.mxu0 %v6427
    %6704 = vmatpush1.bf16.msra.mxu0 %v6426
    %6705 = vmatprep.subr.bf16.mxu0 %v6423
    %6706 = vmatpush1.bf16.msra.mxu0 %v6422
    %6707 = vmatprep.subr.bf16.mxu0 0
    %6708 = vmatpush2.bf16.msra.mxu0 0
    %6709 = vmatprep.subr.bf16.mxu0 0
    %6710 = vmatpush2.bf16.msra.mxu0 0
    %6711 = vmatprep.subr.bf16.mxu0 0
    %6712 = vmatpush2.bf16.msra.mxu0 0
    %6713 = vmatprep.subr.bf16.mxu0 0
    %6714 = vmatpush2.bf16.msra.mxu0 0
    %6715 = vmatprep.subr.bf16.mxu0 %v6467
    %6716 = vmatpush2.bf16.msra.mxu0 %v6466
    %6717 = vmatprep.subr.bf16.mxu0 %v6463
    %6718 = vmatpush2.bf16.msra.mxu0 %v6462
    %6719 = vmatprep.subr.bf16.mxu0 %v6459
    %6720 = vmatpush2.bf16.msra.mxu0 %v6458
    %6721 = vmatprep.subr.bf16.mxu0 %v6455
    %6722 = vmatpush2.bf16.msra.mxu0 %v6454
    %6723 = vmatprep.mubr.bf16.mxu0 %v4285
    %6724 = vmatmul.mubr.bf16.gmra.mxu0 %v3582
    %v6725 = vpop.f32.mrf.mxu0
    %v6726 = vpop.f32.mrf.mxu0
    %v6727 = vpop.f32.mrf.mxu0
    %v6728 = vpop.f32.mrf.mxu0
    %6729 = vmatprep.mubr.bf16.mxu0 %v4288
    %6730 = vmatmul.mubr.bf16.gmra.mxu0 %v3586
    %v6731 = vpop.f32.mrf.mxu0
    %v6732 = vadd.f32 %v6623, %v6731
    %v6733 = vpop.f32.mrf.mxu0
    %v6734 = vadd.f32 %v6625, %v6733
    %v6735 = vpop.f32.mrf.mxu0
    %v6736 = vadd.f32 %v6627, %v6735
    %v6737 = vpop.f32.mrf.mxu0
    %v6738 = vadd.f32 %v6629, %v6737
    %6739 = vmatprep.mubr.bf16.mxu0 %v4291
    %6740 = vmatmul.mubr.bf16.gmra.mxu0 %v3590
    %v6741 = vpop.f32.mrf.mxu0
    %v6742 = vadd.f32 %v6633, %v6741
    %v6743 = vpop.f32.mrf.mxu0
    %v6744 = vadd.f32 %v6635, %v6743
    %v6745 = vpop.f32.mrf.mxu0
    %v6746 = vadd.f32 %v6637, %v6745
    %v6747 = vpop.f32.mrf.mxu0
    %v6748 = vadd.f32 %v6639, %v6747
    %6749 = vmatprep.mubr.bf16.mxu0 %v4294
    %6750 = vmatmul.mubr.bf16.gmra.mxu0 %v3594
    %v6751 = vpop.f32.mrf.mxu0
    %v6752 = vadd.f32 %v6643, %v6751
    %v6753 = vpop.f32.mrf.mxu0
    %v6754 = vadd.f32 %v6645, %v6753
    %v6755 = vpop.f32.mrf.mxu0
    %v6756 = vadd.f32 %v6647, %v6755
    %v6757 = vpop.f32.mrf.mxu0
    %v6758 = vadd.f32 %v6649, %v6757
    %6759 = vmatprep.mubr.bf16.mxu0 %v4297
    %6760 = vmatmul.mubr.bf16.gmra.mxu0 %v3598
    %v6761 = vpop.f32.mrf.mxu0
    %v6762 = vadd.f32 %v6653, %v6761
    %v6763 = vpop.f32.mrf.mxu0
    %v6764 = vadd.f32 %v6655, %v6763
    %v6765 = vpop.f32.mrf.mxu0
    %v6766 = vadd.f32 %v6657, %v6765
    %v6767 = vpop.f32.mrf.mxu0
    %v6768 = vadd.f32 %v6659, %v6767
    %6769 = vmatprep.mubr.bf16.mxu0 %v4300
    %6770 = vmatmul.mubr.bf16.gmra.mxu0 %v3602
    %v6771 = vpop.f32.mrf.mxu0
    %v6772 = vadd.f32 %v6663, %v6771
    %v6773 = vpop.f32.mrf.mxu0
    %v6774 = vadd.f32 %v6665, %v6773
    %v6775 = vpop.f32.mrf.mxu0
    %v6776 = vadd.f32 %v6667, %v6775
    %v6777 = vpop.f32.mrf.mxu0
    %v6778 = vadd.f32 %v6669, %v6777
    %6779 = vmatprep.mubr.bf16.mxu0 %v4303
    %6780 = vmatmul.mubr.bf16.gmra.mxu0 %v3606
    %v6781 = vpop.f32.mrf.mxu0
    %v6782 = vadd.f32 %v6673, %v6781
    %v6783 = vpop.f32.mrf.mxu0
    %v6784 = vadd.f32 %v6675, %v6783
    %v6785 = vpop.f32.mrf.mxu0
    %v6786 = vadd.f32 %v6677, %v6785
    %v6787 = vpop.f32.mrf.mxu0
    %v6788 = vadd.f32 %v6679, %v6787
    %6789 = vmatprep.mubr.bf16.mxu0 %v4306
    %6790 = vmatmul.mubr.bf16.gmra.mxu0 %v3610
    %v6791 = vpop.f32.mrf.mxu0
    %v6792 = vadd.f32 %v6683, %v6791
    %v6793 = vpop.f32.mrf.mxu0
    %v6794 = vadd.f32 %v6685, %v6793
    %v6795 = vpop.f32.mrf.mxu0
    %v6796 = vadd.f32 %v6687, %v6795
    %v6797 = vpop.f32.mrf.mxu0
    %v6798 = vadd.f32 %v6689, %v6797
    %6799 = vdwg.mxu0
    %6800 = vmatprep.subr.bf16.mxu0 %v6389
    %6801 = vmatpush1.bf16.msra.mxu0 %v6388
    %6802 = vmatprep.subr.bf16.mxu0 %v6385
    %6803 = vmatpush1.bf16.msra.mxu0 %v6384
    %6804 = vmatprep.subr.bf16.mxu0 %v6381
    %6805 = vmatpush1.bf16.msra.mxu0 %v6380
    %6806 = vmatprep.subr.bf16.mxu0 %v6377
    %6807 = vmatpush1.bf16.msra.mxu0 %v6376
    %6808 = vmatprep.subr.bf16.mxu0 %v6373
    %6809 = vmatpush1.bf16.msra.mxu0 %v6372
    %6810 = vmatprep.subr.bf16.mxu0 %v6369
    %6811 = vmatpush1.bf16.msra.mxu0 %v6368
    %6812 = vmatprep.subr.bf16.mxu0 %v6365
    %6813 = vmatpush1.bf16.msra.mxu0 %v6364
    %6814 = vmatprep.subr.bf16.mxu0 %v6361
    %6815 = vmatpush1.bf16.msra.mxu0 %v6360
    %6816 = vmatprep.subr.bf16.mxu0 %v6421
    %6817 = vmatpush2.bf16.msra.mxu0 %v6420
    %6818 = vmatprep.subr.bf16.mxu0 %v6417
    %6819 = vmatpush2.bf16.msra.mxu0 %v6416
    %6820 = vmatprep.subr.bf16.mxu0 %v6413
    %6821 = vmatpush2.bf16.msra.mxu0 %v6412
    %6822 = vmatprep.subr.bf16.mxu0 %v6409
    %6823 = vmatpush2.bf16.msra.mxu0 %v6408
    %6824 = vmatprep.subr.bf16.mxu0 %v6405
    %6825 = vmatpush2.bf16.msra.mxu0 %v6404
    %6826 = vmatprep.subr.bf16.mxu0 %v6401
    %6827 = vmatpush2.bf16.msra.mxu0 %v6400
    %6828 = vmatprep.subr.bf16.mxu0 %v6397
    %6829 = vmatpush2.bf16.msra.mxu0 %v6396
    %6830 = vmatprep.subr.bf16.mxu0 %v6393
    %6831 = vmatpush2.bf16.msra.mxu0 %v6392
    %6832 = vmatprep.mubr.bf16.mxu0 %v3581
    %6833 = vmatmul.mubr.bf16.gmra.mxu0 %v3580
    %v6834 = vpop.f32.mrf.mxu0
    %v6835 = vpop.f32.mrf.mxu0
    %v6836 = vpop.f32.mrf.mxu0
    %v6837 = vpop.f32.mrf.mxu0
    %6838 = vmatprep.mubr.bf16.mxu0 %v3585
    %6839 = vmatmul.mubr.bf16.gmra.mxu0 %v3584
    %v6840 = vpop.f32.mrf.mxu0
    %v6841 = vadd.f32 0.0, %v6840
    %v6842 = vpop.f32.mrf.mxu0
    %v6843 = vadd.f32 0.0, %v6842
    %v6844 = vpop.f32.mrf.mxu0
    %v6845 = vadd.f32 0.0, %v6844
    %v6846 = vpop.f32.mrf.mxu0
    %v6847 = vadd.f32 0.0, %v6846
    %6848 = vmatprep.mubr.bf16.mxu0 %v3589
    %6849 = vmatmul.mubr.bf16.gmra.mxu0 %v3588
    %v6850 = vpop.f32.mrf.mxu0
    %v6851 = vadd.f32 0.0, %v6850
    %v6852 = vpop.f32.mrf.mxu0
    %v6853 = vadd.f32 0.0, %v6852
    %v6854 = vpop.f32.mrf.mxu0
    %v6855 = vadd.f32 0.0, %v6854
    %v6856 = vpop.f32.mrf.mxu0
    %v6857 = vadd.f32 0.0, %v6856
    %6858 = vmatprep.mubr.bf16.mxu0 %v3593
    %6859 = vmatmul.mubr.bf16.gmra.mxu0 %v3592
    %v6860 = vpop.f32.mrf.mxu0
    %v6861 = vadd.f32 0.0, %v6860
    %v6862 = vpop.f32.mrf.mxu0
    %v6863 = vadd.f32 0.0, %v6862
    %v6864 = vpop.f32.mrf.mxu0
    %v6865 = vadd.f32 0.0, %v6864
    %v6866 = vpop.f32.mrf.mxu0
    %v6867 = vadd.f32 0.0, %v6866
    %6868 = vmatprep.mubr.bf16.mxu0 %v3597
    %6869 = vmatmul.mubr.bf16.gmra.mxu0 %v3596
    %v6870 = vpop.f32.mrf.mxu0
    %v6871 = vadd.f32 0.0, %v6870
    %v6872 = vpop.f32.mrf.mxu0
    %v6873 = vadd.f32 0.0, %v6872
    %v6874 = vpop.f32.mrf.mxu0
    %v6875 = vadd.f32 0.0, %v6874
    %v6876 = vpop.f32.mrf.mxu0
    %v6877 = vadd.f32 0.0, %v6876
    %6878 = vmatprep.mubr.bf16.mxu0 %v3601
    %6879 = vmatmul.mubr.bf16.gmra.mxu0 %v3600
    %v6880 = vpop.f32.mrf.mxu0
    %v6881 = vadd.f32 0.0, %v6880
    %v6882 = vpop.f32.mrf.mxu0
    %v6883 = vadd.f32 0.0, %v6882
    %v6884 = vpop.f32.mrf.mxu0
    %v6885 = vadd.f32 0.0, %v6884
    %v6886 = vpop.f32.mrf.mxu0
    %v6887 = vadd.f32 0.0, %v6886
    %6888 = vmatprep.mubr.bf16.mxu0 %v3605
    %6889 = vmatmul.mubr.bf16.gmra.mxu0 %v3604
    %v6890 = vpop.f32.mrf.mxu0
    %v6891 = vadd.f32 0.0, %v6890
    %v6892 = vpop.f32.mrf.mxu0
    %v6893 = vadd.f32 0.0, %v6892
    %v6894 = vpop.f32.mrf.mxu0
    %v6895 = vadd.f32 0.0, %v6894
    %v6896 = vpop.f32.mrf.mxu0
    %v6897 = vadd.f32 0.0, %v6896
    %6898 = vmatprep.mubr.bf16.mxu0 %v3609
    %6899 = vmatmul.mubr.bf16.gmra.mxu0 %v3608
    %v6900 = vpop.f32.mrf.mxu0
    %v6901 = vadd.f32 0.0, %v6900
    %v6902 = vpop.f32.mrf.mxu0
    %v6903 = vadd.f32 0.0, %v6902
    %v6904 = vpop.f32.mrf.mxu0
    %v6905 = vadd.f32 0.0, %v6904
    %v6906 = vpop.f32.mrf.mxu0
    %v6907 = vadd.f32 0.0, %v6906
    %6908 = vdwg.mxu0
    %6909 = vmatprep.subr.bf16.mxu0 %v6453
    %6910 = vmatpush1.bf16.msra.mxu0 %v6452
    %6911 = vmatprep.subr.bf16.mxu0 %v6449
    %6912 = vmatpush1.bf16.msra.mxu0 %v6448
    %6913 = vmatprep.subr.bf16.mxu0 %v6445
    %6914 = vmatpush1.bf16.msra.mxu0 %v6444
    %6915 = vmatprep.subr.bf16.mxu0 %v6441
    %6916 = vmatpush1.bf16.msra.mxu0 %v6440
    %6917 = vmatprep.subr.bf16.mxu0 %v6437
    %6918 = vmatpush1.bf16.msra.mxu0 %v6436
    %6919 = vmatprep.subr.bf16.mxu0 %v6433
    %6920 = vmatpush1.bf16.msra.mxu0 %v6432
    %6921 = vmatprep.subr.bf16.mxu0 %v6429
    %6922 = vmatpush1.bf16.msra.mxu0 %v6428
    %6923 = vmatprep.subr.bf16.mxu0 %v6425
    %6924 = vmatpush1.bf16.msra.mxu0 %v6424
    %6925 = vmatprep.subr.bf16.mxu0 0
    %6926 = vmatpush2.bf16.msra.mxu0 0
    %6927 = vmatprep.subr.bf16.mxu0 0
    %6928 = vmatpush2.bf16.msra.mxu0 0
    %6929 = vmatprep.subr.bf16.mxu0 0
    %6930 = vmatpush2.bf16.msra.mxu0 0
    %6931 = vmatprep.subr.bf16.mxu0 0
    %6932 = vmatpush2.bf16.msra.mxu0 0
    %6933 = vmatprep.subr.bf16.mxu0 %v6469
    %6934 = vmatpush2.bf16.msra.mxu0 %v6468
    %6935 = vmatprep.subr.bf16.mxu0 %v6465
    %6936 = vmatpush2.bf16.msra.mxu0 %v6464
    %6937 = vmatprep.subr.bf16.mxu0 %v6461
    %6938 = vmatpush2.bf16.msra.mxu0 %v6460
    %6939 = vmatprep.subr.bf16.mxu0 %v6457
    %6940 = vmatpush2.bf16.msra.mxu0 %v6456
    %6941 = vmatprep.mubr.bf16.mxu0 %v4285
    %6942 = vmatmul.mubr.bf16.gmra.mxu0 %v3582
    %v6943 = vpop.f32.mrf.mxu0
    %v6944 = vpop.f32.mrf.mxu0
    %v6945 = vpop.f32.mrf.mxu0
    %v6946 = vpop.f32.mrf.mxu0
    %6947 = vmatprep.mubr.bf16.mxu0 %v4288
    %6948 = vmatmul.mubr.bf16.gmra.mxu0 %v3586
    %v6949 = vpop.f32.mrf.mxu0
    %v6950 = vadd.f32 %v6841, %v6949
    %v6951 = vpop.f32.mrf.mxu0
    %v6952 = vadd.f32 %v6843, %v6951
    %v6953 = vpop.f32.mrf.mxu0
    %v6954 = vadd.f32 %v6845, %v6953
    %v6955 = vpop.f32.mrf.mxu0
    %v6956 = vadd.f32 %v6847, %v6955
    %6957 = vmatprep.mubr.bf16.mxu0 %v4291
    %6958 = vmatmul.mubr.bf16.gmra.mxu0 %v3590
    %v6959 = vpop.f32.mrf.mxu0
    %v6960 = vadd.f32 %v6851, %v6959
    %v6961 = vpop.f32.mrf.mxu0
    %v6962 = vadd.f32 %v6853, %v6961
    %v6963 = vpop.f32.mrf.mxu0
    %v6964 = vadd.f32 %v6855, %v6963
    %v6965 = vpop.f32.mrf.mxu0
    %v6966 = vadd.f32 %v6857, %v6965
    %6967 = vmatprep.mubr.bf16.mxu0 %v4294
    %6968 = vmatmul.mubr.bf16.gmra.mxu0 %v3594
    %v6969 = vpop.f32.mrf.mxu0
    %v6970 = vadd.f32 %v6861, %v6969
    %v6971 = vpop.f32.mrf.mxu0
    %v6972 = vadd.f32 %v6863, %v6971
    %v6973 = vpop.f32.mrf.mxu0
    %v6974 = vadd.f32 %v6865, %v6973
    %v6975 = vpop.f32.mrf.mxu0
    %v6976 = vadd.f32 %v6867, %v6975
    %6977 = vmatprep.mubr.bf16.mxu0 %v4297
    %6978 = vmatmul.mubr.bf16.gmra.mxu0 %v3598
    %v6979 = vpop.f32.mrf.mxu0
    %v6980 = vadd.f32 %v6871, %v6979
    %v6981 = vpop.f32.mrf.mxu0
    %v6982 = vadd.f32 %v6873, %v6981
    %v6983 = vpop.f32.mrf.mxu0
    %v6984 = vadd.f32 %v6875, %v6983
    %v6985 = vpop.f32.mrf.mxu0
    %v6986 = vadd.f32 %v6877, %v6985
    %6987 = vmatprep.mubr.bf16.mxu0 %v4300
    %6988 = vmatmul.mubr.bf16.gmra.mxu0 %v3602
    %v6989 = vpop.f32.mrf.mxu0
    %v6990 = vadd.f32 %v6881, %v6989
    %v6991 = vpop.f32.mrf.mxu0
    %v6992 = vadd.f32 %v6883, %v6991
    %v6993 = vpop.f32.mrf.mxu0
    %v6994 = vadd.f32 %v6885, %v6993
    %v6995 = vpop.f32.mrf.mxu0
    %v6996 = vadd.f32 %v6887, %v6995
    %6997 = vmatprep.mubr.bf16.mxu0 %v4303
    %6998 = vmatmul.mubr.bf16.gmra.mxu0 %v3606
    %v6999 = vpop.f32.mrf.mxu0
    %v7000 = vadd.f32 %v6891, %v6999
    %v7001 = vpop.f32.mrf.mxu0
    %v7002 = vadd.f32 %v6893, %v7001
    %v7003 = vpop.f32.mrf.mxu0
    %v7004 = vadd.f32 %v6895, %v7003
    %v7005 = vpop.f32.mrf.mxu0
    %v7006 = vadd.f32 %v6897, %v7005
    %7007 = vmatprep.mubr.bf16.mxu0 %v4306
    %7008 = vmatmul.mubr.bf16.gmra.mxu0 %v3610
    %v7009 = vpop.f32.mrf.mxu0
    %v7010 = vadd.f32 %v6901, %v7009
    %v7011 = vpop.f32.mrf.mxu0
    %v7012 = vadd.f32 %v6903, %v7011
    %v7013 = vpop.f32.mrf.mxu0
    %v7014 = vadd.f32 %v6905, %v7013
    %v7015 = vpop.f32.mrf.mxu0
    %v7016 = vadd.f32 %v6907, %v7015
    %7017 = vdwg.mxu0
    %v7018 = vadd.f32 %v5853, %v6732
    %v7019 = vadd.f32 %v5854, %v6734
    %v7020 = vadd.f32 %v5855, %v6950
    %v7021 = vadd.f32 %v5856, %v6952
    %v7022 = vadd.f32 %v5857, %v6736
    %v7023 = vadd.f32 %v5858, %v6738
    %v7024 = vadd.f32 %v5859, %v6954
    %v7025 = vadd.f32 %v5860, %v6956
    %v7026 = vadd.f32 %v5861, %v6742
    %v7027 = vadd.f32 %v5862, %v6744
    %v7028 = vadd.f32 %v5863, %v6960
    %v7029 = vadd.f32 %v5864, %v6962
    %v7030 = vadd.f32 %v5865, %v6746
    %v7031 = vadd.f32 %v5866, %v6748
    %v7032 = vadd.f32 %v5867, %v6964
    %v7033 = vadd.f32 %v5868, %v6966
    %v7034 = vadd.f32 %v5869, %v6752
    %v7035 = vadd.f32 %v5870, %v6754
    %v7036 = vadd.f32 %v5871, %v6970
    %v7037 = vadd.f32 %v5872, %v6972
    %v7038 = vadd.f32 %v5873, %v6756
    %v7039 = vadd.f32 %v5874, %v6758
    %v7040 = vadd.f32 %v5875, %v6974
    %v7041 = vadd.f32 %v5876, %v6976
    %v7042 = vadd.f32 %v5877, %v6762
    %v7043 = vadd.f32 %v5878, %v6764
    %v7044 = vadd.f32 %v5879, %v6980
    %v7045 = vadd.f32 %v5880, %v6982
    %v7046 = vadd.f32 %v5881, %v6766
    %v7047 = vadd.f32 %v5882, %v6768
    %v7048 = vadd.f32 %v5883, %v6984
    %v7049 = vadd.f32 %v5884, %v6986
    %v7050 = vadd.f32 %v5885, %v6772
    %v7051 = vadd.f32 %v5886, %v6774
    %v7052 = vadd.f32 %v5887, %v6990
    %v7053 = vadd.f32 %v5888, %v6992
    %v7054 = vadd.f32 %v5889, %v6776
    %v7055 = vadd.f32 %v5890, %v6778
    %v7056 = vadd.f32 %v5891, %v6994
    %v7057 = vadd.f32 %v5892, %v6996
    %v7058 = vadd.f32 %v5893, %v6782
    %v7059 = vadd.f32 %v5894, %v6784
    %v7060 = vadd.f32 %v5895, %v7000
    %v7061 = vadd.f32 %v5896, %v7002
    %v7062 = vadd.f32 %v5897, %v6786
    %v7063 = vadd.f32 %v5898, %v6788
    %v7064 = vadd.f32 %v5899, %v7004
    %v7065 = vadd.f32 %v5900, %v7006
    %v7066 = vadd.f32 %v5901, %v6792
    %v7067 = vadd.f32 %v5902, %v6794
    %v7068 = vadd.f32 %v5903, %v7010
    %v7069 = vadd.f32 %v5904, %v7012
    %v7070 = vadd.f32 %v5905, %v6796
    %v7071 = vadd.f32 %v5906, %v6798
    %v7072 = vadd.f32 %v5907, %v7014
    %v7073 = vadd.f32 %v5908, %v7016
    %s7074 = scalar_lea.vmem [#allocation7], 896
    %v7075 = vld [vmem:[%s7074] sm:$0xff]
    %v7076 = vld [vmem:[%s7074 + $0x8] sm:$0xff]
    %v7077 = vld [vmem:[%s7074 + $0x10] sm:$0xff]
    %v7078 = vld [vmem:[%s7074 + $0x18] sm:$0xff]
    %v7079 = vld [vmem:[%s7074 + $0x20] sm:$0xff]
    %v7080 = vld [vmem:[%s7074 + $0x28] sm:$0xff]
    %v7081 = vld [vmem:[%s7074 + $0x30] sm:$0xff]
    %v7082 = vld [vmem:[%s7074 + $0x38] sm:$0xff]
    %v7083 = vld [vmem:[%s7074 + $0x40] sm:$0xff]
    %v7084 = vld [vmem:[%s7074 + $0x48] sm:$0xff]
    %v7085 = vld [vmem:[%s7074 + $0x50] sm:$0xff]
    %v7086 = vld [vmem:[%s7074 + $0x58] sm:$0xff]
    %v7087 = vld [vmem:[%s7074 + $0x60] sm:$0xff]
    %v7088 = vld [vmem:[%s7074 + $0x68] sm:$0xff]
    %v7089 = vld [vmem:[%s7074 + $0x70] sm:$0xff]
    %v7090 = vld [vmem:[%s7074 + $0x78] sm:$0xff]
    %v7091 = vld [vmem:[%s7074 + $0x80] sm:$0xff]
    %v7092 = vld [vmem:[%s7074 + $0x88] sm:$0xff]
    %v7093 = vld [vmem:[%s7074 + $0x90] sm:$0xff]
    %v7094 = vld [vmem:[%s7074 + $0x98] sm:$0xff]
    %v7095 = vld [vmem:[%s7074 + $0xa0] sm:$0xff]
    %v7096 = vld [vmem:[%s7074 + $0xa8] sm:$0xff]
    %v7097 = vld [vmem:[%s7074 + $0xb0] sm:$0xff]
    %v7098 = vld [vmem:[%s7074 + $0xb8] sm:$0xff]
    %v7099 = vld [vmem:[%s7074 + $0xc0] sm:$0xff]
    %v7100 = vld [vmem:[%s7074 + $0xc8] sm:$0xff]
    %v7101 = vld [vmem:[%s7074 + $0xd0] sm:$0xff]
    %v7102 = vld [vmem:[%s7074 + $0xd8] sm:$0xff]
    %v7103 = vld [vmem:[%s7074 + $0xe0] sm:$0xff]
    %v7104 = vld [vmem:[%s7074 + $0xe8] sm:$0xff]
    %v7105 = vld [vmem:[%s7074 + $0xf0] sm:$0xff]
    %v7106 = vld [vmem:[%s7074 + $0xf8] sm:$0xff]
    %v7107 = vld [vmem:[%s7074 + $0x100] sm:$0xff]
    %v7108 = vld [vmem:[%s7074 + $0x108] sm:$0xff]
    %v7109 = vld [vmem:[%s7074 + $0x110] sm:$0xff]
    %v7110 = vld [vmem:[%s7074 + $0x118] sm:$0xff]
    %v7111 = vld [vmem:[%s7074 + $0x120] sm:$0xff]
    %v7112 = vld [vmem:[%s7074 + $0x128] sm:$0xff]
    %v7113 = vld [vmem:[%s7074 + $0x130] sm:$0xff]
    %v7114 = vld [vmem:[%s7074 + $0x138] sm:$0xff]
    %v7115 = vld [vmem:[%s7074 + $0x140] sm:$0xff]
    %v7116 = vld [vmem:[%s7074 + $0x148] sm:$0xff]
    %v7117 = vld [vmem:[%s7074 + $0x150] sm:$0xff]
    %v7118 = vld [vmem:[%s7074 + $0x158] sm:$0xff]
    %v7119 = vld [vmem:[%s7074 + $0x160] sm:$0xff]
    %v7120 = vld [vmem:[%s7074 + $0x168] sm:$0xff]
    %v7121 = vld [vmem:[%s7074 + $0x170] sm:$0xff]
    %v7122 = vld [vmem:[%s7074 + $0x178] sm:$0xff]
    %v7123 = vld [vmem:[%s7074 + $0x180] sm:$0xff]
    %v7124 = vld [vmem:[%s7074 + $0x188] sm:$0xff]
    %v7125 = vld [vmem:[%s7074 + $0x190] sm:$0xff]
    %v7126 = vld [vmem:[%s7074 + $0x198] sm:$0xff]
    %v7127 = vld [vmem:[%s7074 + $0x1a0] sm:$0xff]
    %v7128 = vld [vmem:[%s7074 + $0x1a8] sm:$0xff]
    %v7129 = vld [vmem:[%s7074 + $0x1b0] sm:$0xff]
    %v7130 = vld [vmem:[%s7074 + $0x1b8] sm:$0xff]
    %v7131 = vld [vmem:[%s7074 + $0x1c0] sm:$0xff]
    %v7132 = vld [vmem:[%s7074 + $0x1c8] sm:$0xff]
    %v7133 = vld [vmem:[%s7074 + $0x1d0] sm:$0xff]
    %v7134 = vld [vmem:[%s7074 + $0x1d8] sm:$0xff]
    %v7135 = vld [vmem:[%s7074 + $0x1e0] sm:$0xff]
    %v7136 = vld [vmem:[%s7074 + $0x1e8] sm:$0xff]
    %v7137 = vld [vmem:[%s7074 + $0x1f0] sm:$0xff]
    %v7138 = vld [vmem:[%s7074 + $0x1f8] sm:$0xff]
    %v7139 = vld [vmem:[%s7074 + $0x200] sm:$0xff]
    %v7140 = vld [vmem:[%s7074 + $0x208] sm:$0xff]
    %v7141 = vld [vmem:[%s7074 + $0x210] sm:$0xff]
    %v7142 = vld [vmem:[%s7074 + $0x218] sm:$0xff]
    %v7143 = vld [vmem:[%s7074 + $0x220] sm:$0xff]
    %v7144 = vld [vmem:[%s7074 + $0x228] sm:$0xff]
    %v7145 = vld [vmem:[%s7074 + $0x230] sm:$0xff]
    %v7146 = vld [vmem:[%s7074 + $0x238] sm:$0xff]
    %v7147 = vld [vmem:[%s7074 + $0x240] sm:$0xff]
    %v7148 = vld [vmem:[%s7074 + $0x248] sm:$0xff]
    %v7149 = vld [vmem:[%s7074 + $0x250] sm:$0xff]
    %v7150 = vld [vmem:[%s7074 + $0x258] sm:$0xff]
    %v7151 = vld [vmem:[%s7074 + $0x260] sm:$0xff]
    %v7152 = vld [vmem:[%s7074 + $0x268] sm:$0xff]
    %v7153 = vld [vmem:[%s7074 + $0x270] sm:$0xff]
    %v7154 = vld [vmem:[%s7074 + $0x278] sm:$0xff]
    %v7155 = vld [vmem:[%s7074 + $0x280] sm:$0xff]
    %v7156 = vld [vmem:[%s7074 + $0x288] sm:$0xff]
    %v7157 = vld [vmem:[%s7074 + $0x290] sm:$0xff]
    %v7158 = vld [vmem:[%s7074 + $0x298] sm:$0xff]
    %v7159 = vld [vmem:[%s7074 + $0x2a0] sm:$0xff]
    %v7160 = vld [vmem:[%s7074 + $0x2a8] sm:$0xff]
    %v7161 = vld [vmem:[%s7074 + $0x2b0] sm:$0xff]
    %v7162 = vld [vmem:[%s7074 + $0x2b8] sm:$0xff]
    %v7163 = vld [vmem:[%s7074 + $0x2c0] sm:$0xff]
    %v7164 = vld [vmem:[%s7074 + $0x2c8] sm:$0xff]
    %v7165 = vld [vmem:[%s7074 + $0x2d0] sm:$0xff]
    %v7166 = vld [vmem:[%s7074 + $0x2d8] sm:$0xff]
    %v7167 = vld [vmem:[%s7074 + $0x2e0] sm:$0xff]
    %v7168 = vld [vmem:[%s7074 + $0x2e8] sm:$0xff]
    %v7169 = vld [vmem:[%s7074 + $0x2f0] sm:$0xff]
    %v7170 = vld [vmem:[%s7074 + $0x2f8] sm:$0xff]
    %v7171 = vld [vmem:[%s7074 + $0x300] sm:$0xff]
    %v7172 = vld [vmem:[%s7074 + $0x308] sm:$0xff]
    %v7173 = vld [vmem:[%s7074 + $0x310] sm:$0xff]
    %v7174 = vld [vmem:[%s7074 + $0x318] sm:$0xff]
    %v7175 = vld [vmem:[%s7074 + $0x320] sm:$0xff]
    %v7176 = vld [vmem:[%s7074 + $0x328] sm:$0xff]
    %v7177 = vld [vmem:[%s7074 + $0x330] sm:$0xff]
    %v7178 = vld [vmem:[%s7074 + $0x338] sm:$0xff]
    %v7179 = vld [vmem:[%s7074 + $0x340] sm:$0xff]
    %v7180 = vld [vmem:[%s7074 + $0x348] sm:$0xff]
    %v7181 = vld [vmem:[%s7074 + $0x350] sm:$0xff]
    %v7182 = vld [vmem:[%s7074 + $0x358] sm:$0xff]
    %v7183 = vld [vmem:[%s7074 + $0x360] sm:$0xff]
    %v7184 = vld [vmem:[%s7074 + $0x368] sm:$0xff]
    %v7185 = vld [vmem:[%s7074 + $0x370] sm:$0xff]
    %v7186 = vld [vmem:[%s7074 + $0x378] sm:$0xff]
    %v7299 = vunpack.c.l.b16 %v7075
    %v7300 = vunpack.c.h.b16 %v7075
    %v7301 = vunpack.c.l.b16 %v7076
    %v7302 = vunpack.c.h.b16 %v7076
    %v7303 = vunpack.c.l.b16 %v7077
    %v7304 = vunpack.c.h.b16 %v7077
    %v7305 = vunpack.c.l.b16 %v7078
    %v7306 = vunpack.c.h.b16 %v7078
    %v7307 = vunpack.c.l.b16 %v7079
    %v7308 = vunpack.c.h.b16 %v7079
    %v7309 = vunpack.c.l.b16 %v7080
    %v7310 = vunpack.c.h.b16 %v7080
    %v7311 = vunpack.c.l.b16 %v7081
    %v7312 = vunpack.c.h.b16 %v7081
    %v7313 = vunpack.c.l.b16 %v7082
    %v7314 = vunpack.c.h.b16 %v7082
    %v7315 = vunpack.c.l.b16 %v7083
    %v7316 = vunpack.c.h.b16 %v7083
    %v7317 = vunpack.c.l.b16 %v7084
    %v7318 = vunpack.c.h.b16 %v7084
    %v7319 = vunpack.c.l.b16 %v7085
    %v7320 = vunpack.c.h.b16 %v7085
    %v7321 = vunpack.c.l.b16 %v7086
    %v7322 = vunpack.c.h.b16 %v7086
    %v7323 = vunpack.c.l.b16 %v7087
    %v7324 = vunpack.c.h.b16 %v7087
    %v7325 = vunpack.c.l.b16 %v7088
    %v7326 = vunpack.c.h.b16 %v7088
    %v7327 = vunpack.c.l.b16 %v7089
    %v7328 = vunpack.c.h.b16 %v7089
    %v7329 = vunpack.c.l.b16 %v7090
    %v7330 = vunpack.c.h.b16 %v7090
    %v7331 = vunpack.c.l.b16 %v7091
    %v7332 = vunpack.c.h.b16 %v7091
    %v7333 = vunpack.c.l.b16 %v7092
    %v7334 = vunpack.c.h.b16 %v7092
    %v7335 = vunpack.c.l.b16 %v7093
    %v7336 = vunpack.c.h.b16 %v7093
    %v7337 = vunpack.c.l.b16 %v7094
    %v7338 = vunpack.c.h.b16 %v7094
    %v7339 = vunpack.c.l.b16 %v7095
    %v7340 = vunpack.c.h.b16 %v7095
    %v7341 = vunpack.c.l.b16 %v7096
    %v7342 = vunpack.c.h.b16 %v7096
    %v7343 = vunpack.c.l.b16 %v7097
    %v7344 = vunpack.c.h.b16 %v7097
    %v7345 = vunpack.c.l.b16 %v7098
    %v7346 = vunpack.c.h.b16 %v7098
    %v7347 = vunpack.c.l.b16 %v7099
    %v7348 = vunpack.c.h.b16 %v7099
    %v7349 = vunpack.c.l.b16 %v7100
    %v7350 = vunpack.c.h.b16 %v7100
    %v7351 = vunpack.c.l.b16 %v7101
    %v7352 = vunpack.c.h.b16 %v7101
    %v7353 = vunpack.c.l.b16 %v7102
    %v7354 = vunpack.c.h.b16 %v7102
    %v7355 = vunpack.c.l.b16 %v7103
    %v7356 = vunpack.c.h.b16 %v7103
    %v7357 = vunpack.c.l.b16 %v7104
    %v7358 = vunpack.c.h.b16 %v7104
    %v7359 = vunpack.c.l.b16 %v7105
    %v7360 = vunpack.c.h.b16 %v7105
    %v7361 = vunpack.c.l.b16 %v7106
    %v7362 = vunpack.c.h.b16 %v7106
    %v7363 = vunpack.c.l.b16 %v7107
    %v7364 = vunpack.c.h.b16 %v7107
    %v7365 = vunpack.c.l.b16 %v7108
    %v7366 = vunpack.c.h.b16 %v7108
    %v7367 = vunpack.c.l.b16 %v7109
    %v7368 = vunpack.c.h.b16 %v7109
    %v7369 = vunpack.c.l.b16 %v7110
    %v7370 = vunpack.c.h.b16 %v7110
    %v7371 = vunpack.c.l.b16 %v7111
    %v7372 = vunpack.c.h.b16 %v7111
    %v7373 = vunpack.c.l.b16 %v7112
    %v7374 = vunpack.c.h.b16 %v7112
    %v7375 = vunpack.c.l.b16 %v7113
    %v7376 = vunpack.c.h.b16 %v7113
    %v7377 = vunpack.c.l.b16 %v7114
    %v7378 = vunpack.c.h.b16 %v7114
    %v7379 = vunpack.c.l.b16 %v7115
    %v7380 = vunpack.c.h.b16 %v7115
    %v7381 = vunpack.c.l.b16 %v7116
    %v7382 = vunpack.c.h.b16 %v7116
    %v7383 = vunpack.c.l.b16 %v7117
    %v7384 = vunpack.c.h.b16 %v7117
    %v7385 = vunpack.c.l.b16 %v7118
    %v7386 = vunpack.c.h.b16 %v7118
    %v7387 = vunpack.c.l.b16 %v7119
    %v7388 = vunpack.c.h.b16 %v7119
    %v7389 = vunpack.c.l.b16 %v7120
    %v7390 = vunpack.c.h.b16 %v7120
    %v7391 = vunpack.c.l.b16 %v7121
    %v7392 = vunpack.c.h.b16 %v7121
    %v7393 = vunpack.c.l.b16 %v7122
    %v7394 = vunpack.c.h.b16 %v7122
    %v7395 = vunpack.c.l.b16 %v7123
    %v7396 = vunpack.c.h.b16 %v7123
    %v7397 = vunpack.c.l.b16 %v7124
    %v7398 = vunpack.c.h.b16 %v7124
    %v7399 = vunpack.c.l.b16 %v7125
    %v7400 = vunpack.c.h.b16 %v7125
    %v7401 = vunpack.c.l.b16 %v7126
    %v7402 = vunpack.c.h.b16 %v7126
    %v7403 = vunpack.c.l.b16 %v7127
    %v7404 = vunpack.c.h.b16 %v7127
    %v7405 = vunpack.c.l.b16 %v7128
    %v7406 = vunpack.c.h.b16 %v7128
    %v7407 = vunpack.c.l.b16 %v7129
    %v7408 = vunpack.c.h.b16 %v7129
    %v7409 = vunpack.c.l.b16 %v7130
    %v7410 = vunpack.c.h.b16 %v7130
    %v7411 = vunpack.c.l.b16 %v7131
    %v7412 = vunpack.c.h.b16 %v7131
    %v7413 = vunpack.c.l.b16 %v7132
    %v7414 = vunpack.c.h.b16 %v7132
    %v7415 = vunpack.c.l.b16 %v7133
    %v7416 = vunpack.c.h.b16 %v7133
    %v7417 = vunpack.c.l.b16 %v7134
    %v7418 = vunpack.c.h.b16 %v7134
    %v7419 = vunpack.c.l.b16 %v7135
    %v7420 = vunpack.c.h.b16 %v7135
    %v7421 = vunpack.c.l.b16 %v7136
    %v7422 = vunpack.c.h.b16 %v7136
    %v7423 = vunpack.c.l.b16 %v7137
    %v7424 = vunpack.c.h.b16 %v7137
    %v7425 = vunpack.c.l.b16 %v7138
    %v7426 = vunpack.c.h.b16 %v7138
    %v7427 = vunpack.c.l.b16 %v7139
    %v7428 = vunpack.c.h.b16 %v7139
    %v7429 = vunpack.c.l.b16 %v7140
    %v7430 = vunpack.c.h.b16 %v7140
    %v7431 = vunpack.c.l.b16 %v7141
    %v7432 = vunpack.c.h.b16 %v7141
    %v7433 = vunpack.c.l.b16 %v7142
    %v7434 = vunpack.c.h.b16 %v7142
    %v7435 = vunpack.c.l.b16 %v7143
    %v7436 = vunpack.c.h.b16 %v7143
    %v7437 = vunpack.c.l.b16 %v7144
    %v7438 = vunpack.c.h.b16 %v7144
    %v7439 = vunpack.c.l.b16 %v7145
    %v7440 = vunpack.c.h.b16 %v7145
    %v7441 = vunpack.c.l.b16 %v7146
    %v7442 = vunpack.c.h.b16 %v7146
    %v7443 = vunpack.c.l.b16 %v7147
    %v7444 = vunpack.c.h.b16 %v7147
    %v7445 = vunpack.c.l.b16 %v7148
    %v7446 = vunpack.c.h.b16 %v7148
    %v7447 = vunpack.c.l.b16 %v7149
    %v7448 = vunpack.c.h.b16 %v7149
    %v7449 = vunpack.c.l.b16 %v7150
    %v7450 = vunpack.c.h.b16 %v7150
    %v7451 = vunpack.c.l.b16 %v7151
    %v7452 = vunpack.c.h.b16 %v7151
    %v7453 = vunpack.c.l.b16 %v7152
    %v7454 = vunpack.c.h.b16 %v7152
    %v7455 = vunpack.c.l.b16 %v7153
    %v7456 = vunpack.c.h.b16 %v7153
    %v7457 = vunpack.c.l.b16 %v7154
    %v7458 = vunpack.c.h.b16 %v7154
    %v7459 = vunpack.c.l.b16 %v7155
    %v7460 = vunpack.c.h.b16 %v7155
    %v7461 = vunpack.c.l.b16 %v7156
    %v7462 = vunpack.c.h.b16 %v7156
    %v7463 = vunpack.c.l.b16 %v7157
    %v7464 = vunpack.c.h.b16 %v7157
    %v7465 = vunpack.c.l.b16 %v7158
    %v7466 = vunpack.c.h.b16 %v7158
    %v7467 = vunpack.c.l.b16 %v7159
    %v7468 = vunpack.c.h.b16 %v7159
    %v7469 = vunpack.c.l.b16 %v7160
    %v7470 = vunpack.c.h.b16 %v7160
    %v7471 = vunpack.c.l.b16 %v7161
    %v7472 = vunpack.c.h.b16 %v7161
    %v7473 = vunpack.c.l.b16 %v7162
    %v7474 = vunpack.c.h.b16 %v7162
    %v7475 = vunpack.c.l.b16 %v7163
    %v7476 = vunpack.c.h.b16 %v7163
    %v7477 = vunpack.c.l.b16 %v7164
    %v7478 = vunpack.c.h.b16 %v7164
    %v7479 = vunpack.c.l.b16 %v7165
    %v7480 = vunpack.c.h.b16 %v7165
    %v7481 = vunpack.c.l.b16 %v7166
    %v7482 = vunpack.c.h.b16 %v7166
    %v7483 = vunpack.c.l.b16 %v7167
    %v7484 = vunpack.c.h.b16 %v7167
    %v7485 = vunpack.c.l.b16 %v7168
    %v7486 = vunpack.c.h.b16 %v7168
    %v7487 = vunpack.c.l.b16 %v7169
    %v7488 = vunpack.c.h.b16 %v7169
    %v7489 = vunpack.c.l.b16 %v7170
    %v7490 = vunpack.c.h.b16 %v7170
    %v7491 = vunpack.c.l.b16 %v7171
    %v7492 = vunpack.c.h.b16 %v7171
    %v7493 = vunpack.c.l.b16 %v7172
    %v7494 = vunpack.c.h.b16 %v7172
    %v7495 = vunpack.c.l.b16 %v7173
    %v7496 = vunpack.c.h.b16 %v7173
    %v7497 = vunpack.c.l.b16 %v7174
    %v7498 = vunpack.c.h.b16 %v7174
    %v7499 = vunpack.c.l.b16 %v7175
    %v7500 = vunpack.c.h.b16 %v7175
    %v7501 = vunpack.c.l.b16 %v7176
    %v7502 = vunpack.c.h.b16 %v7176
    %v7503 = vunpack.c.l.b16 %v7177
    %v7504 = vunpack.c.h.b16 %v7177
    %v7505 = vunpack.c.l.b16 %v7178
    %v7506 = vunpack.c.h.b16 %v7178
    %v7507 = vunpack.c.l.b16 %v7179
    %v7508 = vunpack.c.h.b16 %v7179
    %v7509 = vunpack.c.l.b16 %v7180
    %v7510 = vunpack.c.h.b16 %v7180
    %v7511 = vunpack.c.l.b16 %v7181
    %v7512 = vunpack.c.h.b16 %v7181
    %v7513 = vunpack.c.l.b16 %v7182
    %v7514 = vunpack.c.h.b16 %v7182
    %v7515 = vunpack.c.l.b16 %v7183
    %v7516 = vunpack.c.h.b16 %v7183
    %v7517 = vunpack.c.l.b16 %v7184
    %v7518 = vunpack.c.h.b16 %v7184
    %v7519 = vunpack.c.l.b16 %v7185
    %v7520 = vunpack.c.h.b16 %v7185
    %v7521 = vunpack.c.l.b16 %v7186
    %v7522 = vunpack.c.h.b16 %v7186
    %v7523 = vpack.c.b16 %v7303, %v7299
    %v7524 = vpack.c.b16 %v7304, %v7300
    %v7525 = vpack.c.b16 %v7305, %v7301
    %v7526 = vpack.c.b16 %v7306, %v7302
    %v7527 = vpack.c.b16 %v7311, %v7307
    %v7528 = vpack.c.b16 %v7312, %v7308
    %v7529 = vpack.c.b16 %v7313, %v7309
    %v7530 = vpack.c.b16 %v7314, %v7310
    %v7531 = vpack.c.b16 %v7319, %v7315
    %v7532 = vpack.c.b16 %v7320, %v7316
    %v7533 = vpack.c.b16 %v7321, %v7317
    %v7534 = vpack.c.b16 %v7322, %v7318
    %v7535 = vpack.c.b16 %v7327, %v7323
    %v7536 = vpack.c.b16 %v7328, %v7324
    %v7537 = vpack.c.b16 %v7329, %v7325
    %v7538 = vpack.c.b16 %v7330, %v7326
    %v7539 = vpack.c.b16 %v7335, %v7331
    %v7540 = vpack.c.b16 %v7336, %v7332
    %v7541 = vpack.c.b16 %v7337, %v7333
    %v7542 = vpack.c.b16 %v7338, %v7334
    %v7543 = vpack.c.b16 %v7343, %v7339
    %v7544 = vpack.c.b16 %v7344, %v7340
    %v7545 = vpack.c.b16 %v7345, %v7341
    %v7546 = vpack.c.b16 %v7346, %v7342
    %v7547 = vpack.c.b16 %v7351, %v7347
    %v7548 = vpack.c.b16 %v7352, %v7348
    %v7549 = vpack.c.b16 %v7353, %v7349
    %v7550 = vpack.c.b16 %v7354, %v7350
    %v7551 = vpack.c.b16 %v7359, %v7355
    %v7552 = vpack.c.b16 %v7360, %v7356
    %v7553 = vpack.c.b16 %v7361, %v7357
    %v7554 = vpack.c.b16 %v7362, %v7358
    %v7555 = vpack.c.b16 %v7367, %v7363
    %v7556 = vpack.c.b16 %v7368, %v7364
    %v7557 = vpack.c.b16 %v7369, %v7365
    %v7558 = vpack.c.b16 %v7370, %v7366
    %v7559 = vpack.c.b16 %v7375, %v7371
    %v7560 = vpack.c.b16 %v7376, %v7372
    %v7561 = vpack.c.b16 %v7377, %v7373
    %v7562 = vpack.c.b16 %v7378, %v7374
    %v7563 = vpack.c.b16 %v7383, %v7379
    %v7564 = vpack.c.b16 %v7384, %v7380
    %v7565 = vpack.c.b16 %v7385, %v7381
    %v7566 = vpack.c.b16 %v7386, %v7382
    %v7567 = vpack.c.b16 %v7391, %v7387
    %v7568 = vpack.c.b16 %v7392, %v7388
    %v7569 = vpack.c.b16 %v7393, %v7389
    %v7570 = vpack.c.b16 %v7394, %v7390
    %v7571 = vpack.c.b16 %v7399, %v7395
    %v7572 = vpack.c.b16 %v7400, %v7396
    %v7573 = vpack.c.b16 %v7401, %v7397
    %v7574 = vpack.c.b16 %v7402, %v7398
    %v7575 = vpack.c.b16 %v7407, %v7403
    %v7576 = vpack.c.b16 %v7408, %v7404
    %v7577 = vpack.c.b16 %v7409, %v7405
    %v7578 = vpack.c.b16 %v7410, %v7406
    %v7579 = vpack.c.b16 %v7415, %v7411
    %v7580 = vpack.c.b16 %v7416, %v7412
    %v7581 = vpack.c.b16 %v7417, %v7413
    %v7582 = vpack.c.b16 %v7418, %v7414
    %v7583 = vpack.c.b16 %v7423, %v7419
    %v7584 = vpack.c.b16 %v7424, %v7420
    %v7585 = vpack.c.b16 %v7425, %v7421
    %v7586 = vpack.c.b16 %v7426, %v7422
    %v7587 = vpack.c.b16 %v7431, %v7427
    %v7588 = vpack.c.b16 %v7432, %v7428
    %v7589 = vpack.c.b16 %v7433, %v7429
    %v7590 = vpack.c.b16 %v7434, %v7430
    %v7591 = vpack.c.b16 %v7439, %v7435
    %v7592 = vpack.c.b16 %v7440, %v7436
    %v7593 = vpack.c.b16 %v7441, %v7437
    %v7594 = vpack.c.b16 %v7442, %v7438
    %v7595 = vpack.c.b16 %v7447, %v7443
    %v7596 = vpack.c.b16 %v7448, %v7444
    %v7597 = vpack.c.b16 %v7449, %v7445
    %v7598 = vpack.c.b16 %v7450, %v7446
    %v7599 = vpack.c.b16 %v7455, %v7451
    %v7600 = vpack.c.b16 %v7456, %v7452
    %v7601 = vpack.c.b16 %v7457, %v7453
    %v7602 = vpack.c.b16 %v7458, %v7454
    %v7603 = vpack.c.b16 %v7463, %v7459
    %v7604 = vpack.c.b16 %v7464, %v7460
    %v7605 = vpack.c.b16 %v7465, %v7461
    %v7606 = vpack.c.b16 %v7466, %v7462
    %v7607 = vpack.c.b16 %v7471, %v7467
    %v7608 = vpack.c.b16 %v7472, %v7468
    %v7609 = vpack.c.b16 %v7473, %v7469
    %v7610 = vpack.c.b16 %v7474, %v7470
    %v7611 = vpack.c.b16 %v7479, %v7475
    %v7612 = vpack.c.b16 %v7480, %v7476
    %v7613 = vpack.c.b16 %v7481, %v7477
    %v7614 = vpack.c.b16 %v7482, %v7478
    %v7615 = vpack.c.b16 %v7487, %v7483
    %v7616 = vpack.c.b16 %v7488, %v7484
    %v7617 = vpack.c.b16 %v7489, %v7485
    %v7618 = vpack.c.b16 %v7490, %v7486
    %v7619 = vpack.c.b16 %v7495, %v7491
    %v7620 = vpack.c.b16 %v7496, %v7492
    %v7621 = vpack.c.b16 %v7497, %v7493
    %v7622 = vpack.c.b16 %v7498, %v7494
    %v7623 = vpack.c.b16 %v7503, %v7499
    %v7624 = vpack.c.b16 %v7504, %v7500
    %v7625 = vpack.c.b16 %v7505, %v7501
    %v7626 = vpack.c.b16 %v7506, %v7502
    %v7627 = vpack.c.b16 %v7511, %v7507
    %v7628 = vpack.c.b16 %v7512, %v7508
    %v7629 = vpack.c.b16 %v7513, %v7509
    %v7630 = vpack.c.b16 %v7514, %v7510
    %v7631 = vpack.c.b16 %v7519, %v7515
    %v7632 = vpack.c.b16 %v7520, %v7516
    %v7633 = vpack.c.b16 %v7521, %v7517
    %v7634 = vpack.c.b16 %v7522, %v7518
    %7747 = vmatprep.subr.bf16.mxu0 %v7552
    %7748 = vmatpush1.bf16.msra.mxu0 %v7551
    %7749 = vmatprep.subr.bf16.mxu0 %v7548
    %7750 = vmatpush1.bf16.msra.mxu0 %v7547
    %7751 = vmatprep.subr.bf16.mxu0 %v7544
    %7752 = vmatpush1.bf16.msra.mxu0 %v7543
    %7753 = vmatprep.subr.bf16.mxu0 %v7540
    %7754 = vmatpush1.bf16.msra.mxu0 %v7539
    %7755 = vmatprep.subr.bf16.mxu0 %v7536
    %7756 = vmatpush1.bf16.msra.mxu0 %v7535
    %7757 = vmatprep.subr.bf16.mxu0 %v7532
    %7758 = vmatpush1.bf16.msra.mxu0 %v7531
    %7759 = vmatprep.subr.bf16.mxu0 %v7528
    %7760 = vmatpush1.bf16.msra.mxu0 %v7527
    %7761 = vmatprep.subr.bf16.mxu0 %v7524
    %7762 = vmatpush1.bf16.msra.mxu0 %v7523
    %7763 = vmatprep.subr.bf16.mxu0 %v7584
    %7764 = vmatpush2.bf16.msra.mxu0 %v7583
    %7765 = vmatprep.subr.bf16.mxu0 %v7580
    %7766 = vmatpush2.bf16.msra.mxu0 %v7579
    %7767 = vmatprep.subr.bf16.mxu0 %v7576
    %7768 = vmatpush2.bf16.msra.mxu0 %v7575
    %7769 = vmatprep.subr.bf16.mxu0 %v7572
    %7770 = vmatpush2.bf16.msra.mxu0 %v7571
    %7771 = vmatprep.subr.bf16.mxu0 %v7568
    %7772 = vmatpush2.bf16.msra.mxu0 %v7567
    %7773 = vmatprep.subr.bf16.mxu0 %v7564
    %7774 = vmatpush2.bf16.msra.mxu0 %v7563
    %7775 = vmatprep.subr.bf16.mxu0 %v7560
    %7776 = vmatpush2.bf16.msra.mxu0 %v7559
    %7777 = vmatprep.subr.bf16.mxu0 %v7556
    %7778 = vmatpush2.bf16.msra.mxu0 %v7555
    %7779 = vmatprep.mubr.bf16.mxu0 %v3581
    %7780 = vmatmul.mubr.bf16.gmra.mxu0 %v3580
    %v7781 = vpop.f32.mrf.mxu0
    %v7782 = vadd.f32 0.0, %v7781
    %v7783 = vpop.f32.mrf.mxu0
    %v7784 = vadd.f32 0.0, %v7783
    %v7785 = vpop.f32.mrf.mxu0
    %v7786 = vadd.f32 0.0, %v7785
    %v7787 = vpop.f32.mrf.mxu0
    %v7788 = vadd.f32 0.0, %v7787
    %7789 = vmatprep.mubr.bf16.mxu0 %v3585
    %7790 = vmatmul.mubr.bf16.gmra.mxu0 %v3584
    %v7791 = vpop.f32.mrf.mxu0
    %v7792 = vadd.f32 0.0, %v7791
    %v7793 = vpop.f32.mrf.mxu0
    %v7794 = vadd.f32 0.0, %v7793
    %v7795 = vpop.f32.mrf.mxu0
    %v7796 = vadd.f32 0.0, %v7795
    %v7797 = vpop.f32.mrf.mxu0
    %v7798 = vadd.f32 0.0, %v7797
    %7799 = vmatprep.mubr.bf16.mxu0 %v3589
    %7800 = vmatmul.mubr.bf16.gmra.mxu0 %v3588
    %v7801 = vpop.f32.mrf.mxu0
    %v7802 = vadd.f32 0.0, %v7801
    %v7803 = vpop.f32.mrf.mxu0
    %v7804 = vadd.f32 0.0, %v7803
    %v7805 = vpop.f32.mrf.mxu0
    %v7806 = vadd.f32 0.0, %v7805
    %v7807 = vpop.f32.mrf.mxu0
    %v7808 = vadd.f32 0.0, %v7807
    %7809 = vmatprep.mubr.bf16.mxu0 %v3593
    %7810 = vmatmul.mubr.bf16.gmra.mxu0 %v3592
    %v7811 = vpop.f32.mrf.mxu0
    %v7812 = vadd.f32 0.0, %v7811
    %v7813 = vpop.f32.mrf.mxu0
    %v7814 = vadd.f32 0.0, %v7813
    %v7815 = vpop.f32.mrf.mxu0
    %v7816 = vadd.f32 0.0, %v7815
    %v7817 = vpop.f32.mrf.mxu0
    %v7818 = vadd.f32 0.0, %v7817
    %7819 = vmatprep.mubr.bf16.mxu0 %v3597
    %7820 = vmatmul.mubr.bf16.gmra.mxu0 %v3596
    %v7821 = vpop.f32.mrf.mxu0
    %v7822 = vadd.f32 0.0, %v7821
    %v7823 = vpop.f32.mrf.mxu0
    %v7824 = vadd.f32 0.0, %v7823
    %v7825 = vpop.f32.mrf.mxu0
    %v7826 = vadd.f32 0.0, %v7825
    %v7827 = vpop.f32.mrf.mxu0
    %v7828 = vadd.f32 0.0, %v7827
    %7829 = vmatprep.mubr.bf16.mxu0 %v3601
    %7830 = vmatmul.mubr.bf16.gmra.mxu0 %v3600
    %v7831 = vpop.f32.mrf.mxu0
    %v7832 = vadd.f32 0.0, %v7831
    %v7833 = vpop.f32.mrf.mxu0
    %v7834 = vadd.f32 0.0, %v7833
    %v7835 = vpop.f32.mrf.mxu0
    %v7836 = vadd.f32 0.0, %v7835
    %v7837 = vpop.f32.mrf.mxu0
    %v7838 = vadd.f32 0.0, %v7837
    %7839 = vmatprep.mubr.bf16.mxu0 %v3605
    %7840 = vmatmul.mubr.bf16.gmra.mxu0 %v3604
    %v7841 = vpop.f32.mrf.mxu0
    %v7842 = vadd.f32 0.0, %v7841
    %v7843 = vpop.f32.mrf.mxu0
    %v7844 = vadd.f32 0.0, %v7843
    %v7845 = vpop.f32.mrf.mxu0
    %v7846 = vadd.f32 0.0, %v7845
    %v7847 = vpop.f32.mrf.mxu0
    %v7848 = vadd.f32 0.0, %v7847
    %7849 = vmatprep.mubr.bf16.mxu0 %v3609
    %7850 = vmatmul.mubr.bf16.gmra.mxu0 %v3608
    %v7851 = vpop.f32.mrf.mxu0
    %v7852 = vpop.f32.mrf.mxu0
    %v7853 = vpop.f32.mrf.mxu0
    %v7854 = vpop.f32.mrf.mxu0
    %7855 = vdwg.mxu0
    %7856 = vmatprep.subr.bf16.mxu0 %v7616
    %7857 = vmatpush1.bf16.msra.mxu0 %v7615
    %7858 = vmatprep.subr.bf16.mxu0 %v7612
    %7859 = vmatpush1.bf16.msra.mxu0 %v7611
    %7860 = vmatprep.subr.bf16.mxu0 %v7608
    %7861 = vmatpush1.bf16.msra.mxu0 %v7607
    %7862 = vmatprep.subr.bf16.mxu0 %v7604
    %7863 = vmatpush1.bf16.msra.mxu0 %v7603
    %7864 = vmatprep.subr.bf16.mxu0 %v7600
    %7865 = vmatpush1.bf16.msra.mxu0 %v7599
    %7866 = vmatprep.subr.bf16.mxu0 %v7596
    %7867 = vmatpush1.bf16.msra.mxu0 %v7595
    %7868 = vmatprep.subr.bf16.mxu0 %v7592
    %7869 = vmatpush1.bf16.msra.mxu0 %v7591
    %7870 = vmatprep.subr.bf16.mxu0 %v7588
    %7871 = vmatpush1.bf16.msra.mxu0 %v7587
    %7872 = vmatprep.subr.bf16.mxu0 0
    %7873 = vmatpush2.bf16.msra.mxu0 0
    %7874 = vmatprep.subr.bf16.mxu0 0
    %7875 = vmatpush2.bf16.msra.mxu0 0
    %7876 = vmatprep.subr.bf16.mxu0 0
    %7877 = vmatpush2.bf16.msra.mxu0 0
    %7878 = vmatprep.subr.bf16.mxu0 0
    %7879 = vmatpush2.bf16.msra.mxu0 0
    %7880 = vmatprep.subr.bf16.mxu0 %v7632
    %7881 = vmatpush2.bf16.msra.mxu0 %v7631
    %7882 = vmatprep.subr.bf16.mxu0 %v7628
    %7883 = vmatpush2.bf16.msra.mxu0 %v7627
    %7884 = vmatprep.subr.bf16.mxu0 %v7624
    %7885 = vmatpush2.bf16.msra.mxu0 %v7623
    %7886 = vmatprep.subr.bf16.mxu0 %v7620
    %7887 = vmatpush2.bf16.msra.mxu0 %v7619
    %7888 = vmatprep.mubr.bf16.mxu0 %v4285
    %7889 = vmatmul.mubr.bf16.gmra.mxu0 %v3582
    %v7890 = vpop.f32.mrf.mxu0
    %v7891 = vadd.f32 %v7782, %v7890
    %v7892 = vpop.f32.mrf.mxu0
    %v7893 = vadd.f32 %v7784, %v7892
    %v7894 = vpop.f32.mrf.mxu0
    %v7895 = vadd.f32 %v7786, %v7894
    %v7896 = vpop.f32.mrf.mxu0
    %v7897 = vadd.f32 %v7788, %v7896
    %7898 = vmatprep.mubr.bf16.mxu0 %v4288
    %7899 = vmatmul.mubr.bf16.gmra.mxu0 %v3586
    %v7900 = vpop.f32.mrf.mxu0
    %v7901 = vadd.f32 %v7792, %v7900
    %v7902 = vpop.f32.mrf.mxu0
    %v7903 = vadd.f32 %v7794, %v7902
    %v7904 = vpop.f32.mrf.mxu0
    %v7905 = vadd.f32 %v7796, %v7904
    %v7906 = vpop.f32.mrf.mxu0
    %v7907 = vadd.f32 %v7798, %v7906
    %7908 = vmatprep.mubr.bf16.mxu0 %v4291
    %7909 = vmatmul.mubr.bf16.gmra.mxu0 %v3590
    %v7910 = vpop.f32.mrf.mxu0
    %v7911 = vadd.f32 %v7802, %v7910
    %v7912 = vpop.f32.mrf.mxu0
    %v7913 = vadd.f32 %v7804, %v7912
    %v7914 = vpop.f32.mrf.mxu0
    %v7915 = vadd.f32 %v7806, %v7914
    %v7916 = vpop.f32.mrf.mxu0
    %v7917 = vadd.f32 %v7808, %v7916
    %7918 = vmatprep.mubr.bf16.mxu0 %v4294
    %7919 = vmatmul.mubr.bf16.gmra.mxu0 %v3594
    %v7920 = vpop.f32.mrf.mxu0
    %v7921 = vadd.f32 %v7812, %v7920
    %v7922 = vpop.f32.mrf.mxu0
    %v7923 = vadd.f32 %v7814, %v7922
    %v7924 = vpop.f32.mrf.mxu0
    %v7925 = vadd.f32 %v7816, %v7924
    %v7926 = vpop.f32.mrf.mxu0
    %v7927 = vadd.f32 %v7818, %v7926
    %7928 = vmatprep.mubr.bf16.mxu0 %v4297
    %7929 = vmatmul.mubr.bf16.gmra.mxu0 %v3598
    %v7930 = vpop.f32.mrf.mxu0
    %v7931 = vadd.f32 %v7822, %v7930
    %v7932 = vpop.f32.mrf.mxu0
    %v7933 = vadd.f32 %v7824, %v7932
    %v7934 = vpop.f32.mrf.mxu0
    %v7935 = vadd.f32 %v7826, %v7934
    %v7936 = vpop.f32.mrf.mxu0
    %v7937 = vadd.f32 %v7828, %v7936
    %7938 = vmatprep.mubr.bf16.mxu0 %v4300
    %7939 = vmatmul.mubr.bf16.gmra.mxu0 %v3602
    %v7940 = vpop.f32.mrf.mxu0
    %v7941 = vadd.f32 %v7832, %v7940
    %v7942 = vpop.f32.mrf.mxu0
    %v7943 = vadd.f32 %v7834, %v7942
    %v7944 = vpop.f32.mrf.mxu0
    %v7945 = vadd.f32 %v7836, %v7944
    %v7946 = vpop.f32.mrf.mxu0
    %v7947 = vadd.f32 %v7838, %v7946
    %7948 = vmatprep.mubr.bf16.mxu0 %v4303
    %7949 = vmatmul.mubr.bf16.gmra.mxu0 %v3606
    %v7950 = vpop.f32.mrf.mxu0
    %v7951 = vadd.f32 %v7842, %v7950
    %v7952 = vpop.f32.mrf.mxu0
    %v7953 = vadd.f32 %v7844, %v7952
    %v7954 = vpop.f32.mrf.mxu0
    %v7955 = vadd.f32 %v7846, %v7954
    %v7956 = vpop.f32.mrf.mxu0
    %v7957 = vadd.f32 %v7848, %v7956
    %7958 = vmatprep.mubr.bf16.mxu0 %v4306
    %7959 = vmatmul.mubr.bf16.gmra.mxu0 %v3610
    %v7960 = vpop.f32.mrf.mxu0
    %v7961 = vpop.f32.mrf.mxu0
    %v7962 = vpop.f32.mrf.mxu0
    %v7963 = vpop.f32.mrf.mxu0
    %7964 = vdwg.mxu0
    %7965 = vmatprep.subr.bf16.mxu0 %v7554
    %7966 = vmatpush1.bf16.msra.mxu0 %v7553
    %7967 = vmatprep.subr.bf16.mxu0 %v7550
    %7968 = vmatpush1.bf16.msra.mxu0 %v7549
    %7969 = vmatprep.subr.bf16.mxu0 %v7546
    %7970 = vmatpush1.bf16.msra.mxu0 %v7545
    %7971 = vmatprep.subr.bf16.mxu0 %v7542
    %7972 = vmatpush1.bf16.msra.mxu0 %v7541
    %7973 = vmatprep.subr.bf16.mxu0 %v7538
    %7974 = vmatpush1.bf16.msra.mxu0 %v7537
    %7975 = vmatprep.subr.bf16.mxu0 %v7534
    %7976 = vmatpush1.bf16.msra.mxu0 %v7533
    %7977 = vmatprep.subr.bf16.mxu0 %v7530
    %7978 = vmatpush1.bf16.msra.mxu0 %v7529
    %7979 = vmatprep.subr.bf16.mxu0 %v7526
    %7980 = vmatpush1.bf16.msra.mxu0 %v7525
    %7981 = vmatprep.subr.bf16.mxu0 %v7586
    %7982 = vmatpush2.bf16.msra.mxu0 %v7585
    %7983 = vmatprep.subr.bf16.mxu0 %v7582
    %7984 = vmatpush2.bf16.msra.mxu0 %v7581
    %7985 = vmatprep.subr.bf16.mxu0 %v7578
    %7986 = vmatpush2.bf16.msra.mxu0 %v7577
    %7987 = vmatprep.subr.bf16.mxu0 %v7574
    %7988 = vmatpush2.bf16.msra.mxu0 %v7573
    %7989 = vmatprep.subr.bf16.mxu0 %v7570
    %7990 = vmatpush2.bf16.msra.mxu0 %v7569
    %7991 = vmatprep.subr.bf16.mxu0 %v7566
    %7992 = vmatpush2.bf16.msra.mxu0 %v7565
    %7993 = vmatprep.subr.bf16.mxu0 %v7562
    %7994 = vmatpush2.bf16.msra.mxu0 %v7561
    %7995 = vmatprep.subr.bf16.mxu0 %v7558
    %7996 = vmatpush2.bf16.msra.mxu0 %v7557
    %7997 = vmatprep.mubr.bf16.mxu0 %v3581
    %7998 = vmatmul.mubr.bf16.gmra.mxu0 %v3580
    %v7999 = vpop.f32.mrf.mxu0
    %v8000 = vadd.f32 0.0, %v7999
    %v8001 = vpop.f32.mrf.mxu0
    %v8002 = vadd.f32 0.0, %v8001
    %v8003 = vpop.f32.mrf.mxu0
    %v8004 = vadd.f32 0.0, %v8003
    %v8005 = vpop.f32.mrf.mxu0
    %v8006 = vadd.f32 0.0, %v8005
    %8007 = vmatprep.mubr.bf16.mxu0 %v3585
    %8008 = vmatmul.mubr.bf16.gmra.mxu0 %v3584
    %v8009 = vpop.f32.mrf.mxu0
    %v8010 = vadd.f32 0.0, %v8009
    %v8011 = vpop.f32.mrf.mxu0
    %v8012 = vadd.f32 0.0, %v8011
    %v8013 = vpop.f32.mrf.mxu0
    %v8014 = vadd.f32 0.0, %v8013
    %v8015 = vpop.f32.mrf.mxu0
    %v8016 = vadd.f32 0.0, %v8015
    %8017 = vmatprep.mubr.bf16.mxu0 %v3589
    %8018 = vmatmul.mubr.bf16.gmra.mxu0 %v3588
    %v8019 = vpop.f32.mrf.mxu0
    %v8020 = vadd.f32 0.0, %v8019
    %v8021 = vpop.f32.mrf.mxu0
    %v8022 = vadd.f32 0.0, %v8021
    %v8023 = vpop.f32.mrf.mxu0
    %v8024 = vadd.f32 0.0, %v8023
    %v8025 = vpop.f32.mrf.mxu0
    %v8026 = vadd.f32 0.0, %v8025
    %8027 = vmatprep.mubr.bf16.mxu0 %v3593
    %8028 = vmatmul.mubr.bf16.gmra.mxu0 %v3592
    %v8029 = vpop.f32.mrf.mxu0
    %v8030 = vadd.f32 0.0, %v8029
    %v8031 = vpop.f32.mrf.mxu0
    %v8032 = vadd.f32 0.0, %v8031
    %v8033 = vpop.f32.mrf.mxu0
    %v8034 = vadd.f32 0.0, %v8033
    %v8035 = vpop.f32.mrf.mxu0
    %v8036 = vadd.f32 0.0, %v8035
    %8037 = vmatprep.mubr.bf16.mxu0 %v3597
    %8038 = vmatmul.mubr.bf16.gmra.mxu0 %v3596
    %v8039 = vpop.f32.mrf.mxu0
    %v8040 = vadd.f32 0.0, %v8039
    %v8041 = vpop.f32.mrf.mxu0
    %v8042 = vadd.f32 0.0, %v8041
    %v8043 = vpop.f32.mrf.mxu0
    %v8044 = vadd.f32 0.0, %v8043
    %v8045 = vpop.f32.mrf.mxu0
    %v8046 = vadd.f32 0.0, %v8045
    %8047 = vmatprep.mubr.bf16.mxu0 %v3601
    %8048 = vmatmul.mubr.bf16.gmra.mxu0 %v3600
    %v8049 = vpop.f32.mrf.mxu0
    %v8050 = vadd.f32 0.0, %v8049
    %v8051 = vpop.f32.mrf.mxu0
    %v8052 = vadd.f32 0.0, %v8051
    %v8053 = vpop.f32.mrf.mxu0
    %v8054 = vadd.f32 0.0, %v8053
    %v8055 = vpop.f32.mrf.mxu0
    %v8056 = vadd.f32 0.0, %v8055
    %8057 = vmatprep.mubr.bf16.mxu0 %v3605
    %8058 = vmatmul.mubr.bf16.gmra.mxu0 %v3604
    %v8059 = vpop.f32.mrf.mxu0
    %v8060 = vadd.f32 0.0, %v8059
    %v8061 = vpop.f32.mrf.mxu0
    %v8062 = vadd.f32 0.0, %v8061
    %v8063 = vpop.f32.mrf.mxu0
    %v8064 = vadd.f32 0.0, %v8063
    %v8065 = vpop.f32.mrf.mxu0
    %v8066 = vadd.f32 0.0, %v8065
    %8067 = vmatprep.mubr.bf16.mxu0 %v3609
    %8068 = vmatmul.mubr.bf16.gmra.mxu0 %v3608
    %v8069 = vpop.f32.mrf.mxu0
    %v8070 = vpop.f32.mrf.mxu0
    %v8071 = vpop.f32.mrf.mxu0
    %v8072 = vpop.f32.mrf.mxu0
    %8073 = vdwg.mxu0
    %8074 = vmatprep.subr.bf16.mxu0 %v7618
    %8075 = vmatpush1.bf16.msra.mxu0 %v7617
    %8076 = vmatprep.subr.bf16.mxu0 %v7614
    %8077 = vmatpush1.bf16.msra.mxu0 %v7613
    %8078 = vmatprep.subr.bf16.mxu0 %v7610
    %8079 = vmatpush1.bf16.msra.mxu0 %v7609
    %8080 = vmatprep.subr.bf16.mxu0 %v7606
    %8081 = vmatpush1.bf16.msra.mxu0 %v7605
    %8082 = vmatprep.subr.bf16.mxu0 %v7602
    %8083 = vmatpush1.bf16.msra.mxu0 %v7601
    %8084 = vmatprep.subr.bf16.mxu0 %v7598
    %8085 = vmatpush1.bf16.msra.mxu0 %v7597
    %8086 = vmatprep.subr.bf16.mxu0 %v7594
    %8087 = vmatpush1.bf16.msra.mxu0 %v7593
    %8088 = vmatprep.subr.bf16.mxu0 %v7590
    %8089 = vmatpush1.bf16.msra.mxu0 %v7589
    %8090 = vmatprep.subr.bf16.mxu0 0
    %8091 = vmatpush2.bf16.msra.mxu0 0
    %8092 = vmatprep.subr.bf16.mxu0 0
    %8093 = vmatpush2.bf16.msra.mxu0 0
    %8094 = vmatprep.subr.bf16.mxu0 0
    %8095 = vmatpush2.bf16.msra.mxu0 0
    %8096 = vmatprep.subr.bf16.mxu0 0
    %8097 = vmatpush2.bf16.msra.mxu0 0
    %8098 = vmatprep.subr.bf16.mxu0 %v7634
    %8099 = vmatpush2.bf16.msra.mxu0 %v7633
    %8100 = vmatprep.subr.bf16.mxu0 %v7630
    %8101 = vmatpush2.bf16.msra.mxu0 %v7629
    %8102 = vmatprep.subr.bf16.mxu0 %v7626
    %8103 = vmatpush2.bf16.msra.mxu0 %v7625
    %8104 = vmatprep.subr.bf16.mxu0 %v7622
    %8105 = vmatpush2.bf16.msra.mxu0 %v7621
    %8106 = vmatprep.mubr.bf16.mxu0 %v4285
    %8107 = vmatmul.mubr.bf16.gmra.mxu0 %v3582
    %v8108 = vpop.f32.mrf.mxu0
    %v8109 = vadd.f32 %v8000, %v8108
    %v8110 = vpop.f32.mrf.mxu0
    %v8111 = vadd.f32 %v8002, %v8110
    %v8112 = vpop.f32.mrf.mxu0
    %v8113 = vadd.f32 %v8004, %v8112
    %v8114 = vpop.f32.mrf.mxu0
    %v8115 = vadd.f32 %v8006, %v8114
    %8116 = vmatprep.mubr.bf16.mxu0 %v4288
    %8117 = vmatmul.mubr.bf16.gmra.mxu0 %v3586
    %v8118 = vpop.f32.mrf.mxu0
    %v8119 = vadd.f32 %v8010, %v8118
    %v8120 = vpop.f32.mrf.mxu0
    %v8121 = vadd.f32 %v8012, %v8120
    %v8122 = vpop.f32.mrf.mxu0
    %v8123 = vadd.f32 %v8014, %v8122
    %v8124 = vpop.f32.mrf.mxu0
    %v8125 = vadd.f32 %v8016, %v8124
    %8126 = vmatprep.mubr.bf16.mxu0 %v4291
    %8127 = vmatmul.mubr.bf16.gmra.mxu0 %v3590
    %v8128 = vpop.f32.mrf.mxu0
    %v8129 = vadd.f32 %v8020, %v8128
    %v8130 = vpop.f32.mrf.mxu0
    %v8131 = vadd.f32 %v8022, %v8130
    %v8132 = vpop.f32.mrf.mxu0
    %v8133 = vadd.f32 %v8024, %v8132
    %v8134 = vpop.f32.mrf.mxu0
    %v8135 = vadd.f32 %v8026, %v8134
    %8136 = vmatprep.mubr.bf16.mxu0 %v4294
    %8137 = vmatmul.mubr.bf16.gmra.mxu0 %v3594
    %v8138 = vpop.f32.mrf.mxu0
    %v8139 = vadd.f32 %v8030, %v8138
    %v8140 = vpop.f32.mrf.mxu0
    %v8141 = vadd.f32 %v8032, %v8140
    %v8142 = vpop.f32.mrf.mxu0
    %v8143 = vadd.f32 %v8034, %v8142
    %v8144 = vpop.f32.mrf.mxu0
    %v8145 = vadd.f32 %v8036, %v8144
    %8146 = vmatprep.mubr.bf16.mxu0 %v4297
    %8147 = vmatmul.mubr.bf16.gmra.mxu0 %v3598
    %v8148 = vpop.f32.mrf.mxu0
    %v8149 = vadd.f32 %v8040, %v8148
    %v8150 = vpop.f32.mrf.mxu0
    %v8151 = vadd.f32 %v8042, %v8150
    %v8152 = vpop.f32.mrf.mxu0
    %v8153 = vadd.f32 %v8044, %v8152
    %v8154 = vpop.f32.mrf.mxu0
    %v8155 = vadd.f32 %v8046, %v8154
    %8156 = vmatprep.mubr.bf16.mxu0 %v4300
    %8157 = vmatmul.mubr.bf16.gmra.mxu0 %v3602
    %v8158 = vpop.f32.mrf.mxu0
    %v8159 = vadd.f32 %v8050, %v8158
    %v8160 = vpop.f32.mrf.mxu0
    %v8161 = vadd.f32 %v8052, %v8160
    %v8162 = vpop.f32.mrf.mxu0
    %v8163 = vadd.f32 %v8054, %v8162
    %v8164 = vpop.f32.mrf.mxu0
    %v8165 = vadd.f32 %v8056, %v8164
    %8166 = vmatprep.mubr.bf16.mxu0 %v4303
    %8167 = vmatmul.mubr.bf16.gmra.mxu0 %v3606
    %v8168 = vpop.f32.mrf.mxu0
    %v8169 = vadd.f32 %v8060, %v8168
    %v8170 = vpop.f32.mrf.mxu0
    %v8171 = vadd.f32 %v8062, %v8170
    %v8172 = vpop.f32.mrf.mxu0
    %v8173 = vadd.f32 %v8064, %v8172
    %v8174 = vpop.f32.mrf.mxu0
    %v8175 = vadd.f32 %v8066, %v8174
    %8176 = vmatprep.mubr.bf16.mxu0 %v4306
    %8177 = vmatmul.mubr.bf16.gmra.mxu0 %v3610
    %v8178 = vpop.f32.mrf.mxu0
    %v8179 = vpop.f32.mrf.mxu0
    %v8180 = vpop.f32.mrf.mxu0
    %v8181 = vpop.f32.mrf.mxu0
    %8182 = vdwg.mxu0
    %s8183 = scalar_lea.vmem [#allocation7], 2688
    %v8184 = vld [vmem:[%s8183] sm:$0xff]
    %v8185 = vld [vmem:[%s8183 + $0x8] sm:$0xff]
    %v8186 = vld [vmem:[%s8183 + $0x10] sm:$0xff]
    %v8187 = vld [vmem:[%s8183 + $0x18] sm:$0xff]
    %v8188 = vld [vmem:[%s8183 + $0x20] sm:$0xff]
    %v8189 = vld [vmem:[%s8183 + $0x28] sm:$0xff]
    %v8190 = vld [vmem:[%s8183 + $0x30] sm:$0xff]
    %v8191 = vld [vmem:[%s8183 + $0x38] sm:$0xff]
    %v8192 = vld [vmem:[%s8183 + $0x40] sm:$0xff]
    %v8193 = vld [vmem:[%s8183 + $0x48] sm:$0xff]
    %v8194 = vld [vmem:[%s8183 + $0x50] sm:$0xff]
    %v8195 = vld [vmem:[%s8183 + $0x58] sm:$0xff]
    %v8196 = vld [vmem:[%s8183 + $0x60] sm:$0xff]
    %v8197 = vld [vmem:[%s8183 + $0x68] sm:$0xff]
    %v8198 = vld [vmem:[%s8183 + $0x70] sm:$0xff]
    %v8199 = vld [vmem:[%s8183 + $0x78] sm:$0xff]
    %v8200 = vld [vmem:[%s8183 + $0x80] sm:$0xff]
    %v8201 = vld [vmem:[%s8183 + $0x88] sm:$0xff]
    %v8202 = vld [vmem:[%s8183 + $0x90] sm:$0xff]
    %v8203 = vld [vmem:[%s8183 + $0x98] sm:$0xff]
    %v8204 = vld [vmem:[%s8183 + $0xa0] sm:$0xff]
    %v8205 = vld [vmem:[%s8183 + $0xa8] sm:$0xff]
    %v8206 = vld [vmem:[%s8183 + $0xb0] sm:$0xff]
    %v8207 = vld [vmem:[%s8183 + $0xb8] sm:$0xff]
    %v8208 = vld [vmem:[%s8183 + $0xc0] sm:$0xff]
    %v8209 = vld [vmem:[%s8183 + $0xc8] sm:$0xff]
    %v8210 = vld [vmem:[%s8183 + $0xd0] sm:$0xff]
    %v8211 = vld [vmem:[%s8183 + $0xd8] sm:$0xff]
    %v8212 = vld [vmem:[%s8183 + $0xe0] sm:$0xff]
    %v8213 = vld [vmem:[%s8183 + $0xe8] sm:$0xff]
    %v8214 = vld [vmem:[%s8183 + $0xf0] sm:$0xff]
    %v8215 = vld [vmem:[%s8183 + $0xf8] sm:$0xff]
    %v8216 = vld [vmem:[%s8183 + $0x100] sm:$0xff]
    %v8217 = vld [vmem:[%s8183 + $0x108] sm:$0xff]
    %v8218 = vld [vmem:[%s8183 + $0x110] sm:$0xff]
    %v8219 = vld [vmem:[%s8183 + $0x118] sm:$0xff]
    %v8220 = vld [vmem:[%s8183 + $0x120] sm:$0xff]
    %v8221 = vld [vmem:[%s8183 + $0x128] sm:$0xff]
    %v8222 = vld [vmem:[%s8183 + $0x130] sm:$0xff]
    %v8223 = vld [vmem:[%s8183 + $0x138] sm:$0xff]
    %v8224 = vld [vmem:[%s8183 + $0x140] sm:$0xff]
    %v8225 = vld [vmem:[%s8183 + $0x148] sm:$0xff]
    %v8226 = vld [vmem:[%s8183 + $0x150] sm:$0xff]
    %v8227 = vld [vmem:[%s8183 + $0x158] sm:$0xff]
    %v8228 = vld [vmem:[%s8183 + $0x160] sm:$0xff]
    %v8229 = vld [vmem:[%s8183 + $0x168] sm:$0xff]
    %v8230 = vld [vmem:[%s8183 + $0x170] sm:$0xff]
    %v8231 = vld [vmem:[%s8183 + $0x178] sm:$0xff]
    %v8232 = vld [vmem:[%s8183 + $0x180] sm:$0xff]
    %v8233 = vld [vmem:[%s8183 + $0x188] sm:$0xff]
    %v8234 = vld [vmem:[%s8183 + $0x190] sm:$0xff]
    %v8235 = vld [vmem:[%s8183 + $0x198] sm:$0xff]
    %v8236 = vld [vmem:[%s8183 + $0x1a0] sm:$0xff]
    %v8237 = vld [vmem:[%s8183 + $0x1a8] sm:$0xff]
    %v8238 = vld [vmem:[%s8183 + $0x1b0] sm:$0xff]
    %v8239 = vld [vmem:[%s8183 + $0x1b8] sm:$0xff]
    %v8240 = vld [vmem:[%s8183 + $0x1c0] sm:$0xff]
    %v8241 = vld [vmem:[%s8183 + $0x1c8] sm:$0xff]
    %v8242 = vld [vmem:[%s8183 + $0x1d0] sm:$0xff]
    %v8243 = vld [vmem:[%s8183 + $0x1d8] sm:$0xff]
    %v8244 = vld [vmem:[%s8183 + $0x1e0] sm:$0xff]
    %v8245 = vld [vmem:[%s8183 + $0x1e8] sm:$0xff]
    %v8246 = vld [vmem:[%s8183 + $0x1f0] sm:$0xff]
    %v8247 = vld [vmem:[%s8183 + $0x1f8] sm:$0xff]
    %v8248 = vld [vmem:[%s8183 + $0x200] sm:$0xff]
    %v8249 = vld [vmem:[%s8183 + $0x208] sm:$0xff]
    %v8250 = vld [vmem:[%s8183 + $0x210] sm:$0xff]
    %v8251 = vld [vmem:[%s8183 + $0x218] sm:$0xff]
    %v8252 = vld [vmem:[%s8183 + $0x220] sm:$0xff]
    %v8253 = vld [vmem:[%s8183 + $0x228] sm:$0xff]
    %v8254 = vld [vmem:[%s8183 + $0x230] sm:$0xff]
    %v8255 = vld [vmem:[%s8183 + $0x238] sm:$0xff]
    %v8256 = vld [vmem:[%s8183 + $0x240] sm:$0xff]
    %v8257 = vld [vmem:[%s8183 + $0x248] sm:$0xff]
    %v8258 = vld [vmem:[%s8183 + $0x250] sm:$0xff]
    %v8259 = vld [vmem:[%s8183 + $0x258] sm:$0xff]
    %v8260 = vld [vmem:[%s8183 + $0x260] sm:$0xff]
    %v8261 = vld [vmem:[%s8183 + $0x268] sm:$0xff]
    %v8262 = vld [vmem:[%s8183 + $0x270] sm:$0xff]
    %v8263 = vld [vmem:[%s8183 + $0x278] sm:$0xff]
    %v8264 = vld [vmem:[%s8183 + $0x280] sm:$0xff]
    %v8265 = vld [vmem:[%s8183 + $0x288] sm:$0xff]
    %v8266 = vld [vmem:[%s8183 + $0x290] sm:$0xff]
    %v8267 = vld [vmem:[%s8183 + $0x298] sm:$0xff]
    %v8268 = vld [vmem:[%s8183 + $0x2a0] sm:$0xff]
    %v8269 = vld [vmem:[%s8183 + $0x2a8] sm:$0xff]
    %v8270 = vld [vmem:[%s8183 + $0x2b0] sm:$0xff]
    %v8271 = vld [vmem:[%s8183 + $0x2b8] sm:$0xff]
    %v8272 = vld [vmem:[%s8183 + $0x2c0] sm:$0xff]
    %v8273 = vld [vmem:[%s8183 + $0x2c8] sm:$0xff]
    %v8274 = vld [vmem:[%s8183 + $0x2d0] sm:$0xff]
    %v8275 = vld [vmem:[%s8183 + $0x2d8] sm:$0xff]
    %v8276 = vld [vmem:[%s8183 + $0x2e0] sm:$0xff]
    %v8277 = vld [vmem:[%s8183 + $0x2e8] sm:$0xff]
    %v8278 = vld [vmem:[%s8183 + $0x2f0] sm:$0xff]
    %v8279 = vld [vmem:[%s8183 + $0x2f8] sm:$0xff]
    %v8280 = vld [vmem:[%s8183 + $0x300] sm:$0xff]
    %v8281 = vld [vmem:[%s8183 + $0x308] sm:$0xff]
    %v8282 = vld [vmem:[%s8183 + $0x310] sm:$0xff]
    %v8283 = vld [vmem:[%s8183 + $0x318] sm:$0xff]
    %v8284 = vld [vmem:[%s8183 + $0x320] sm:$0xff]
    %v8285 = vld [vmem:[%s8183 + $0x328] sm:$0xff]
    %v8286 = vld [vmem:[%s8183 + $0x330] sm:$0xff]
    %v8287 = vld [vmem:[%s8183 + $0x338] sm:$0xff]
    %v8288 = vld [vmem:[%s8183 + $0x340] sm:$0xff]
    %v8289 = vld [vmem:[%s8183 + $0x348] sm:$0xff]
    %v8290 = vld [vmem:[%s8183 + $0x350] sm:$0xff]
    %v8291 = vld [vmem:[%s8183 + $0x358] sm:$0xff]
    %v8292 = vld [vmem:[%s8183 + $0x360] sm:$0xff]
    %v8293 = vld [vmem:[%s8183 + $0x368] sm:$0xff]
    %v8294 = vld [vmem:[%s8183 + $0x370] sm:$0xff]
    %v8295 = vld [vmem:[%s8183 + $0x378] sm:$0xff]
    %v8408 = vunpack.c.l.b16 %v8184
    %v8409 = vunpack.c.h.b16 %v8184
    %v8410 = vunpack.c.l.b16 %v8185
    %v8411 = vunpack.c.h.b16 %v8185
    %v8412 = vunpack.c.l.b16 %v8186
    %v8413 = vunpack.c.h.b16 %v8186
    %v8414 = vunpack.c.l.b16 %v8187
    %v8415 = vunpack.c.h.b16 %v8187
    %v8416 = vunpack.c.l.b16 %v8188
    %v8417 = vunpack.c.h.b16 %v8188
    %v8418 = vunpack.c.l.b16 %v8189
    %v8419 = vunpack.c.h.b16 %v8189
    %v8420 = vunpack.c.l.b16 %v8190
    %v8421 = vunpack.c.h.b16 %v8190
    %v8422 = vunpack.c.l.b16 %v8191
    %v8423 = vunpack.c.h.b16 %v8191
    %v8424 = vunpack.c.l.b16 %v8192
    %v8425 = vunpack.c.h.b16 %v8192
    %v8426 = vunpack.c.l.b16 %v8193
    %v8427 = vunpack.c.h.b16 %v8193
    %v8428 = vunpack.c.l.b16 %v8194
    %v8429 = vunpack.c.h.b16 %v8194
    %v8430 = vunpack.c.l.b16 %v8195
    %v8431 = vunpack.c.h.b16 %v8195
    %v8432 = vunpack.c.l.b16 %v8196
    %v8433 = vunpack.c.h.b16 %v8196
    %v8434 = vunpack.c.l.b16 %v8197
    %v8435 = vunpack.c.h.b16 %v8197
    %v8436 = vunpack.c.l.b16 %v8198
    %v8437 = vunpack.c.h.b16 %v8198
    %v8438 = vunpack.c.l.b16 %v8199
    %v8439 = vunpack.c.h.b16 %v8199
    %v8440 = vunpack.c.l.b16 %v8200
    %v8441 = vunpack.c.h.b16 %v8200
    %v8442 = vunpack.c.l.b16 %v8201
    %v8443 = vunpack.c.h.b16 %v8201
    %v8444 = vunpack.c.l.b16 %v8202
    %v8445 = vunpack.c.h.b16 %v8202
    %v8446 = vunpack.c.l.b16 %v8203
    %v8447 = vunpack.c.h.b16 %v8203
    %v8448 = vunpack.c.l.b16 %v8204
    %v8449 = vunpack.c.h.b16 %v8204
    %v8450 = vunpack.c.l.b16 %v8205
    %v8451 = vunpack.c.h.b16 %v8205
    %v8452 = vunpack.c.l.b16 %v8206
    %v8453 = vunpack.c.h.b16 %v8206
    %v8454 = vunpack.c.l.b16 %v8207
    %v8455 = vunpack.c.h.b16 %v8207
    %v8456 = vunpack.c.l.b16 %v8208
    %v8457 = vunpack.c.h.b16 %v8208
    %v8458 = vunpack.c.l.b16 %v8209
    %v8459 = vunpack.c.h.b16 %v8209
    %v8460 = vunpack.c.l.b16 %v8210
    %v8461 = vunpack.c.h.b16 %v8210
    %v8462 = vunpack.c.l.b16 %v8211
    %v8463 = vunpack.c.h.b16 %v8211
    %v8464 = vunpack.c.l.b16 %v8212
    %v8465 = vunpack.c.h.b16 %v8212
    %v8466 = vunpack.c.l.b16 %v8213
    %v8467 = vunpack.c.h.b16 %v8213
    %v8468 = vunpack.c.l.b16 %v8214
    %v8469 = vunpack.c.h.b16 %v8214
    %v8470 = vunpack.c.l.b16 %v8215
    %v8471 = vunpack.c.h.b16 %v8215
    %v8472 = vunpack.c.l.b16 %v8216
    %v8473 = vunpack.c.h.b16 %v8216
    %v8474 = vunpack.c.l.b16 %v8217
    %v8475 = vunpack.c.h.b16 %v8217
    %v8476 = vunpack.c.l.b16 %v8218
    %v8477 = vunpack.c.h.b16 %v8218
    %v8478 = vunpack.c.l.b16 %v8219
    %v8479 = vunpack.c.h.b16 %v8219
    %v8480 = vunpack.c.l.b16 %v8220
    %v8481 = vunpack.c.h.b16 %v8220
    %v8482 = vunpack.c.l.b16 %v8221
    %v8483 = vunpack.c.h.b16 %v8221
    %v8484 = vunpack.c.l.b16 %v8222
    %v8485 = vunpack.c.h.b16 %v8222
    %v8486 = vunpack.c.l.b16 %v8223
    %v8487 = vunpack.c.h.b16 %v8223
    %v8488 = vunpack.c.l.b16 %v8224
    %v8489 = vunpack.c.h.b16 %v8224
    %v8490 = vunpack.c.l.b16 %v8225
    %v8491 = vunpack.c.h.b16 %v8225
    %v8492 = vunpack.c.l.b16 %v8226
    %v8493 = vunpack.c.h.b16 %v8226
    %v8494 = vunpack.c.l.b16 %v8227
    %v8495 = vunpack.c.h.b16 %v8227
    %v8496 = vunpack.c.l.b16 %v8228
    %v8497 = vunpack.c.h.b16 %v8228
    %v8498 = vunpack.c.l.b16 %v8229
    %v8499 = vunpack.c.h.b16 %v8229
    %v8500 = vunpack.c.l.b16 %v8230
    %v8501 = vunpack.c.h.b16 %v8230
    %v8502 = vunpack.c.l.b16 %v8231
    %v8503 = vunpack.c.h.b16 %v8231
    %v8504 = vunpack.c.l.b16 %v8232
    %v8505 = vunpack.c.h.b16 %v8232
    %v8506 = vunpack.c.l.b16 %v8233
    %v8507 = vunpack.c.h.b16 %v8233
    %v8508 = vunpack.c.l.b16 %v8234
    %v8509 = vunpack.c.h.b16 %v8234
    %v8510 = vunpack.c.l.b16 %v8235
    %v8511 = vunpack.c.h.b16 %v8235
    %v8512 = vunpack.c.l.b16 %v8236
    %v8513 = vunpack.c.h.b16 %v8236
    %v8514 = vunpack.c.l.b16 %v8237
    %v8515 = vunpack.c.h.b16 %v8237
    %v8516 = vunpack.c.l.b16 %v8238
    %v8517 = vunpack.c.h.b16 %v8238
    %v8518 = vunpack.c.l.b16 %v8239
    %v8519 = vunpack.c.h.b16 %v8239
    %v8520 = vunpack.c.l.b16 %v8240
    %v8521 = vunpack.c.h.b16 %v8240
    %v8522 = vunpack.c.l.b16 %v8241
    %v8523 = vunpack.c.h.b16 %v8241
    %v8524 = vunpack.c.l.b16 %v8242
    %v8525 = vunpack.c.h.b16 %v8242
    %v8526 = vunpack.c.l.b16 %v8243
    %v8527 = vunpack.c.h.b16 %v8243
    %v8528 = vunpack.c.l.b16 %v8244
    %v8529 = vunpack.c.h.b16 %v8244
    %v8530 = vunpack.c.l.b16 %v8245
    %v8531 = vunpack.c.h.b16 %v8245
    %v8532 = vunpack.c.l.b16 %v8246
    %v8533 = vunpack.c.h.b16 %v8246
    %v8534 = vunpack.c.l.b16 %v8247
    %v8535 = vunpack.c.h.b16 %v8247
    %v8536 = vunpack.c.l.b16 %v8248
    %v8537 = vunpack.c.h.b16 %v8248
    %v8538 = vunpack.c.l.b16 %v8249
    %v8539 = vunpack.c.h.b16 %v8249
    %v8540 = vunpack.c.l.b16 %v8250
    %v8541 = vunpack.c.h.b16 %v8250
    %v8542 = vunpack.c.l.b16 %v8251
    %v8543 = vunpack.c.h.b16 %v8251
    %v8544 = vunpack.c.l.b16 %v8252
    %v8545 = vunpack.c.h.b16 %v8252
    %v8546 = vunpack.c.l.b16 %v8253
    %v8547 = vunpack.c.h.b16 %v8253
    %v8548 = vunpack.c.l.b16 %v8254
    %v8549 = vunpack.c.h.b16 %v8254
    %v8550 = vunpack.c.l.b16 %v8255
    %v8551 = vunpack.c.h.b16 %v8255
    %v8552 = vunpack.c.l.b16 %v8256
    %v8553 = vunpack.c.h.b16 %v8256
    %v8554 = vunpack.c.l.b16 %v8257
    %v8555 = vunpack.c.h.b16 %v8257
    %v8556 = vunpack.c.l.b16 %v8258
    %v8557 = vunpack.c.h.b16 %v8258
    %v8558 = vunpack.c.l.b16 %v8259
    %v8559 = vunpack.c.h.b16 %v8259
    %v8560 = vunpack.c.l.b16 %v8260
    %v8561 = vunpack.c.h.b16 %v8260
    %v8562 = vunpack.c.l.b16 %v8261
    %v8563 = vunpack.c.h.b16 %v8261
    %v8564 = vunpack.c.l.b16 %v8262
    %v8565 = vunpack.c.h.b16 %v8262
    %v8566 = vunpack.c.l.b16 %v8263
    %v8567 = vunpack.c.h.b16 %v8263
    %v8568 = vunpack.c.l.b16 %v8264
    %v8569 = vunpack.c.h.b16 %v8264
    %v8570 = vunpack.c.l.b16 %v8265
    %v8571 = vunpack.c.h.b16 %v8265
    %v8572 = vunpack.c.l.b16 %v8266
    %v8573 = vunpack.c.h.b16 %v8266
    %v8574 = vunpack.c.l.b16 %v8267
    %v8575 = vunpack.c.h.b16 %v8267
    %v8576 = vunpack.c.l.b16 %v8268
    %v8577 = vunpack.c.h.b16 %v8268
    %v8578 = vunpack.c.l.b16 %v8269
    %v8579 = vunpack.c.h.b16 %v8269
    %v8580 = vunpack.c.l.b16 %v8270
    %v8581 = vunpack.c.h.b16 %v8270
    %v8582 = vunpack.c.l.b16 %v8271
    %v8583 = vunpack.c.h.b16 %v8271
    %v8584 = vunpack.c.l.b16 %v8272
    %v8585 = vunpack.c.h.b16 %v8272
    %v8586 = vunpack.c.l.b16 %v8273
    %v8587 = vunpack.c.h.b16 %v8273
    %v8588 = vunpack.c.l.b16 %v8274
    %v8589 = vunpack.c.h.b16 %v8274
    %v8590 = vunpack.c.l.b16 %v8275
    %v8591 = vunpack.c.h.b16 %v8275
    %v8592 = vunpack.c.l.b16 %v8276
    %v8593 = vunpack.c.h.b16 %v8276
    %v8594 = vunpack.c.l.b16 %v8277
    %v8595 = vunpack.c.h.b16 %v8277
    %v8596 = vunpack.c.l.b16 %v8278
    %v8597 = vunpack.c.h.b16 %v8278
    %v8598 = vunpack.c.l.b16 %v8279
    %v8599 = vunpack.c.h.b16 %v8279
    %v8600 = vunpack.c.l.b16 %v8280
    %v8601 = vunpack.c.h.b16 %v8280
    %v8602 = vunpack.c.l.b16 %v8281
    %v8603 = vunpack.c.h.b16 %v8281
    %v8604 = vunpack.c.l.b16 %v8282
    %v8605 = vunpack.c.h.b16 %v8282
    %v8606 = vunpack.c.l.b16 %v8283
    %v8607 = vunpack.c.h.b16 %v8283
    %v8608 = vunpack.c.l.b16 %v8284
    %v8609 = vunpack.c.h.b16 %v8284
    %v8610 = vunpack.c.l.b16 %v8285
    %v8611 = vunpack.c.h.b16 %v8285
    %v8612 = vunpack.c.l.b16 %v8286
    %v8613 = vunpack.c.h.b16 %v8286
    %v8614 = vunpack.c.l.b16 %v8287
    %v8615 = vunpack.c.h.b16 %v8287
    %v8616 = vunpack.c.l.b16 %v8288
    %v8617 = vunpack.c.h.b16 %v8288
    %v8618 = vunpack.c.l.b16 %v8289
    %v8619 = vunpack.c.h.b16 %v8289
    %v8620 = vunpack.c.l.b16 %v8290
    %v8621 = vunpack.c.h.b16 %v8290
    %v8622 = vunpack.c.l.b16 %v8291
    %v8623 = vunpack.c.h.b16 %v8291
    %v8624 = vunpack.c.l.b16 %v8292
    %v8625 = vunpack.c.h.b16 %v8292
    %v8626 = vunpack.c.l.b16 %v8293
    %v8627 = vunpack.c.h.b16 %v8293
    %v8628 = vunpack.c.l.b16 %v8294
    %v8629 = vunpack.c.h.b16 %v8294
    %v8630 = vunpack.c.l.b16 %v8295
    %v8631 = vunpack.c.h.b16 %v8295
    %v8632 = vpack.c.b16 %v8412, %v8408
    %v8633 = vpack.c.b16 %v8413, %v8409
    %v8634 = vpack.c.b16 %v8414, %v8410
    %v8635 = vpack.c.b16 %v8415, %v8411
    %v8636 = vpack.c.b16 %v8420, %v8416
    %v8637 = vpack.c.b16 %v8421, %v8417
    %v8638 = vpack.c.b16 %v8422, %v8418
    %v8639 = vpack.c.b16 %v8423, %v8419
    %v8640 = vpack.c.b16 %v8428, %v8424
    %v8641 = vpack.c.b16 %v8429, %v8425
    %v8642 = vpack.c.b16 %v8430, %v8426
    %v8643 = vpack.c.b16 %v8431, %v8427
    %v8644 = vpack.c.b16 %v8436, %v8432
    %v8645 = vpack.c.b16 %v8437, %v8433
    %v8646 = vpack.c.b16 %v8438, %v8434
    %v8647 = vpack.c.b16 %v8439, %v8435
    %v8648 = vpack.c.b16 %v8444, %v8440
    %v8649 = vpack.c.b16 %v8445, %v8441
    %v8650 = vpack.c.b16 %v8446, %v8442
    %v8651 = vpack.c.b16 %v8447, %v8443
    %v8652 = vpack.c.b16 %v8452, %v8448
    %v8653 = vpack.c.b16 %v8453, %v8449
    %v8654 = vpack.c.b16 %v8454, %v8450
    %v8655 = vpack.c.b16 %v8455, %v8451
    %v8656 = vpack.c.b16 %v8460, %v8456
    %v8657 = vpack.c.b16 %v8461, %v8457
    %v8658 = vpack.c.b16 %v8462, %v8458
    %v8659 = vpack.c.b16 %v8463, %v8459
    %v8660 = vpack.c.b16 %v8468, %v8464
    %v8661 = vpack.c.b16 %v8469, %v8465
    %v8662 = vpack.c.b16 %v8470, %v8466
    %v8663 = vpack.c.b16 %v8471, %v8467
    %v8664 = vpack.c.b16 %v8476, %v8472
    %v8665 = vpack.c.b16 %v8477, %v8473
    %v8666 = vpack.c.b16 %v8478, %v8474
    %v8667 = vpack.c.b16 %v8479, %v8475
    %v8668 = vpack.c.b16 %v8484, %v8480
    %v8669 = vpack.c.b16 %v8485, %v8481
    %v8670 = vpack.c.b16 %v8486, %v8482
    %v8671 = vpack.c.b16 %v8487, %v8483
    %v8672 = vpack.c.b16 %v8492, %v8488
    %v8673 = vpack.c.b16 %v8493, %v8489
    %v8674 = vpack.c.b16 %v8494, %v8490
    %v8675 = vpack.c.b16 %v8495, %v8491
    %v8676 = vpack.c.b16 %v8500, %v8496
    %v8677 = vpack.c.b16 %v8501, %v8497
    %v8678 = vpack.c.b16 %v8502, %v8498
    %v8679 = vpack.c.b16 %v8503, %v8499
    %v8680 = vpack.c.b16 %v8508, %v8504
    %v8681 = vpack.c.b16 %v8509, %v8505
    %v8682 = vpack.c.b16 %v8510, %v8506
    %v8683 = vpack.c.b16 %v8511, %v8507
    %v8684 = vpack.c.b16 %v8516, %v8512
    %v8685 = vpack.c.b16 %v8517, %v8513
    %v8686 = vpack.c.b16 %v8518, %v8514
    %v8687 = vpack.c.b16 %v8519, %v8515
    %v8688 = vpack.c.b16 %v8524, %v8520
    %v8689 = vpack.c.b16 %v8525, %v8521
    %v8690 = vpack.c.b16 %v8526, %v8522
    %v8691 = vpack.c.b16 %v8527, %v8523
    %v8692 = vpack.c.b16 %v8532, %v8528
    %v8693 = vpack.c.b16 %v8533, %v8529
    %v8694 = vpack.c.b16 %v8534, %v8530
    %v8695 = vpack.c.b16 %v8535, %v8531
    %v8696 = vpack.c.b16 %v8540, %v8536
    %v8697 = vpack.c.b16 %v8541, %v8537
    %v8698 = vpack.c.b16 %v8542, %v8538
    %v8699 = vpack.c.b16 %v8543, %v8539
    %v8700 = vpack.c.b16 %v8548, %v8544
    %v8701 = vpack.c.b16 %v8549, %v8545
    %v8702 = vpack.c.b16 %v8550, %v8546
    %v8703 = vpack.c.b16 %v8551, %v8547
    %v8704 = vpack.c.b16 %v8556, %v8552
    %v8705 = vpack.c.b16 %v8557, %v8553
    %v8706 = vpack.c.b16 %v8558, %v8554
    %v8707 = vpack.c.b16 %v8559, %v8555
    %v8708 = vpack.c.b16 %v8564, %v8560
    %v8709 = vpack.c.b16 %v8565, %v8561
    %v8710 = vpack.c.b16 %v8566, %v8562
    %v8711 = vpack.c.b16 %v8567, %v8563
    %v8712 = vpack.c.b16 %v8572, %v8568
    %v8713 = vpack.c.b16 %v8573, %v8569
    %v8714 = vpack.c.b16 %v8574, %v8570
    %v8715 = vpack.c.b16 %v8575, %v8571
    %v8716 = vpack.c.b16 %v8580, %v8576
    %v8717 = vpack.c.b16 %v8581, %v8577
    %v8718 = vpack.c.b16 %v8582, %v8578
    %v8719 = vpack.c.b16 %v8583, %v8579
    %v8720 = vpack.c.b16 %v8588, %v8584
    %v8721 = vpack.c.b16 %v8589, %v8585
    %v8722 = vpack.c.b16 %v8590, %v8586
    %v8723 = vpack.c.b16 %v8591, %v8587
    %v8724 = vpack.c.b16 %v8596, %v8592
    %v8725 = vpack.c.b16 %v8597, %v8593
    %v8726 = vpack.c.b16 %v8598, %v8594
    %v8727 = vpack.c.b16 %v8599, %v8595
    %v8728 = vpack.c.b16 %v8604, %v8600
    %v8729 = vpack.c.b16 %v8605, %v8601
    %v8730 = vpack.c.b16 %v8606, %v8602
    %v8731 = vpack.c.b16 %v8607, %v8603
    %v8732 = vpack.c.b16 %v8612, %v8608
    %v8733 = vpack.c.b16 %v8613, %v8609
    %v8734 = vpack.c.b16 %v8614, %v8610
    %v8735 = vpack.c.b16 %v8615, %v8611
    %v8736 = vpack.c.b16 %v8620, %v8616
    %v8737 = vpack.c.b16 %v8621, %v8617
    %v8738 = vpack.c.b16 %v8622, %v8618
    %v8739 = vpack.c.b16 %v8623, %v8619
    %v8740 = vpack.c.b16 %v8628, %v8624
    %v8741 = vpack.c.b16 %v8629, %v8625
    %v8742 = vpack.c.b16 %v8630, %v8626
    %v8743 = vpack.c.b16 %v8631, %v8627
    %8856 = vmatprep.subr.bf16.mxu0 %v8661
    %8857 = vmatpush1.bf16.msra.mxu0 %v8660
    %8858 = vmatprep.subr.bf16.mxu0 %v8657
    %8859 = vmatpush1.bf16.msra.mxu0 %v8656
    %8860 = vmatprep.subr.bf16.mxu0 %v8653
    %8861 = vmatpush1.bf16.msra.mxu0 %v8652
    %8862 = vmatprep.subr.bf16.mxu0 %v8649
    %8863 = vmatpush1.bf16.msra.mxu0 %v8648
    %8864 = vmatprep.subr.bf16.mxu0 %v8645
    %8865 = vmatpush1.bf16.msra.mxu0 %v8644
    %8866 = vmatprep.subr.bf16.mxu0 %v8641
    %8867 = vmatpush1.bf16.msra.mxu0 %v8640
    %8868 = vmatprep.subr.bf16.mxu0 %v8637
    %8869 = vmatpush1.bf16.msra.mxu0 %v8636
    %8870 = vmatprep.subr.bf16.mxu0 %v8633
    %8871 = vmatpush1.bf16.msra.mxu0 %v8632
    %8872 = vmatprep.subr.bf16.mxu0 %v8693
    %8873 = vmatpush2.bf16.msra.mxu0 %v8692
    %8874 = vmatprep.subr.bf16.mxu0 %v8689
    %8875 = vmatpush2.bf16.msra.mxu0 %v8688
    %8876 = vmatprep.subr.bf16.mxu0 %v8685
    %8877 = vmatpush2.bf16.msra.mxu0 %v8684
    %8878 = vmatprep.subr.bf16.mxu0 %v8681
    %8879 = vmatpush2.bf16.msra.mxu0 %v8680
    %8880 = vmatprep.subr.bf16.mxu0 %v8677
    %8881 = vmatpush2.bf16.msra.mxu0 %v8676
    %8882 = vmatprep.subr.bf16.mxu0 %v8673
    %8883 = vmatpush2.bf16.msra.mxu0 %v8672
    %8884 = vmatprep.subr.bf16.mxu0 %v8669
    %8885 = vmatpush2.bf16.msra.mxu0 %v8668
    %8886 = vmatprep.subr.bf16.mxu0 %v8665
    %8887 = vmatpush2.bf16.msra.mxu0 %v8664
    %8888 = vmatprep.mubr.bf16.mxu0 %v3581
    %8889 = vmatmul.mubr.bf16.gmra.mxu0 %v3580
    %v8890 = vpop.f32.mrf.mxu0
    %v8891 = vpop.f32.mrf.mxu0
    %v8892 = vpop.f32.mrf.mxu0
    %v8893 = vadd.f32 0.0, %v8892
    %v8894 = vpop.f32.mrf.mxu0
    %v8895 = vadd.f32 0.0, %v8894
    %8896 = vmatprep.mubr.bf16.mxu0 %v3585
    %8897 = vmatmul.mubr.bf16.gmra.mxu0 %v3584
    %v8898 = vpop.f32.mrf.mxu0
    %v8899 = vadd.f32 0.0, %v8898
    %v8900 = vpop.f32.mrf.mxu0
    %v8901 = vadd.f32 0.0, %v8900
    %v8902 = vpop.f32.mrf.mxu0
    %v8903 = vadd.f32 0.0, %v8902
    %v8904 = vpop.f32.mrf.mxu0
    %v8905 = vadd.f32 0.0, %v8904
    %8906 = vmatprep.mubr.bf16.mxu0 %v3589
    %8907 = vmatmul.mubr.bf16.gmra.mxu0 %v3588
    %v8908 = vpop.f32.mrf.mxu0
    %v8909 = vadd.f32 0.0, %v8908
    %v8910 = vpop.f32.mrf.mxu0
    %v8911 = vadd.f32 0.0, %v8910
    %v8912 = vpop.f32.mrf.mxu0
    %v8913 = vadd.f32 0.0, %v8912
    %v8914 = vpop.f32.mrf.mxu0
    %v8915 = vadd.f32 0.0, %v8914
    %8916 = vmatprep.mubr.bf16.mxu0 %v3593
    %8917 = vmatmul.mubr.bf16.gmra.mxu0 %v3592
    %v8918 = vpop.f32.mrf.mxu0
    %v8919 = vadd.f32 0.0, %v8918
    %v8920 = vpop.f32.mrf.mxu0
    %v8921 = vadd.f32 0.0, %v8920
    %v8922 = vpop.f32.mrf.mxu0
    %v8923 = vadd.f32 0.0, %v8922
    %v8924 = vpop.f32.mrf.mxu0
    %v8925 = vadd.f32 0.0, %v8924
    %8926 = vmatprep.mubr.bf16.mxu0 %v3597
    %8927 = vmatmul.mubr.bf16.gmra.mxu0 %v3596
    %v8928 = vpop.f32.mrf.mxu0
    %v8929 = vadd.f32 0.0, %v8928
    %v8930 = vpop.f32.mrf.mxu0
    %v8931 = vadd.f32 0.0, %v8930
    %v8932 = vpop.f32.mrf.mxu0
    %v8933 = vadd.f32 0.0, %v8932
    %v8934 = vpop.f32.mrf.mxu0
    %v8935 = vadd.f32 0.0, %v8934
    %8936 = vmatprep.mubr.bf16.mxu0 %v3601
    %8937 = vmatmul.mubr.bf16.gmra.mxu0 %v3600
    %v8938 = vpop.f32.mrf.mxu0
    %v8939 = vadd.f32 0.0, %v8938
    %v8940 = vpop.f32.mrf.mxu0
    %v8941 = vadd.f32 0.0, %v8940
    %v8942 = vpop.f32.mrf.mxu0
    %v8943 = vadd.f32 0.0, %v8942
    %v8944 = vpop.f32.mrf.mxu0
    %v8945 = vadd.f32 0.0, %v8944
    %8946 = vmatprep.mubr.bf16.mxu0 %v3605
    %8947 = vmatmul.mubr.bf16.gmra.mxu0 %v3604
    %v8948 = vpop.f32.mrf.mxu0
    %v8949 = vadd.f32 0.0, %v8948
    %v8950 = vpop.f32.mrf.mxu0
    %v8951 = vadd.f32 0.0, %v8950
    %v8952 = vpop.f32.mrf.mxu0
    %v8953 = vadd.f32 0.0, %v8952
    %v8954 = vpop.f32.mrf.mxu0
    %v8955 = vadd.f32 0.0, %v8954
    %8956 = vmatprep.mubr.bf16.mxu0 %v3609
    %8957 = vmatmul.mubr.bf16.gmra.mxu0 %v3608
    %v8958 = vpop.f32.mrf.mxu0
    %v8959 = vadd.f32 0.0, %v8958
    %v8960 = vpop.f32.mrf.mxu0
    %v8961 = vadd.f32 0.0, %v8960
    %v8962 = vpop.f32.mrf.mxu0
    %v8963 = vpop.f32.mrf.mxu0
    %8964 = vdwg.mxu0
    %8965 = vmatprep.subr.bf16.mxu0 %v8725
    %8966 = vmatpush1.bf16.msra.mxu0 %v8724
    %8967 = vmatprep.subr.bf16.mxu0 %v8721
    %8968 = vmatpush1.bf16.msra.mxu0 %v8720
    %8969 = vmatprep.subr.bf16.mxu0 %v8717
    %8970 = vmatpush1.bf16.msra.mxu0 %v8716
    %8971 = vmatprep.subr.bf16.mxu0 %v8713
    %8972 = vmatpush1.bf16.msra.mxu0 %v8712
    %8973 = vmatprep.subr.bf16.mxu0 %v8709
    %8974 = vmatpush1.bf16.msra.mxu0 %v8708
    %8975 = vmatprep.subr.bf16.mxu0 %v8705
    %8976 = vmatpush1.bf16.msra.mxu0 %v8704
    %8977 = vmatprep.subr.bf16.mxu0 %v8701
    %8978 = vmatpush1.bf16.msra.mxu0 %v8700
    %8979 = vmatprep.subr.bf16.mxu0 %v8697
    %8980 = vmatpush1.bf16.msra.mxu0 %v8696
    %8981 = vmatprep.subr.bf16.mxu0 0
    %8982 = vmatpush2.bf16.msra.mxu0 0
    %8983 = vmatprep.subr.bf16.mxu0 0
    %8984 = vmatpush2.bf16.msra.mxu0 0
    %8985 = vmatprep.subr.bf16.mxu0 0
    %8986 = vmatpush2.bf16.msra.mxu0 0
    %8987 = vmatprep.subr.bf16.mxu0 0
    %8988 = vmatpush2.bf16.msra.mxu0 0
    %8989 = vmatprep.subr.bf16.mxu0 %v8741
    %8990 = vmatpush2.bf16.msra.mxu0 %v8740
    %8991 = vmatprep.subr.bf16.mxu0 %v8737
    %8992 = vmatpush2.bf16.msra.mxu0 %v8736
    %8993 = vmatprep.subr.bf16.mxu0 %v8733
    %8994 = vmatpush2.bf16.msra.mxu0 %v8732
    %8995 = vmatprep.subr.bf16.mxu0 %v8729
    %8996 = vmatpush2.bf16.msra.mxu0 %v8728
    %8997 = vmatprep.mubr.bf16.mxu0 %v4285
    %8998 = vmatmul.mubr.bf16.gmra.mxu0 %v3582
    %v8999 = vpop.f32.mrf.mxu0
    %v9000 = vpop.f32.mrf.mxu0
    %v9001 = vpop.f32.mrf.mxu0
    %v9002 = vadd.f32 %v8893, %v9001
    %v9003 = vpop.f32.mrf.mxu0
    %v9004 = vadd.f32 %v8895, %v9003
    %9005 = vmatprep.mubr.bf16.mxu0 %v4288
    %9006 = vmatmul.mubr.bf16.gmra.mxu0 %v3586
    %v9007 = vpop.f32.mrf.mxu0
    %v9008 = vadd.f32 %v8899, %v9007
    %v9009 = vpop.f32.mrf.mxu0
    %v9010 = vadd.f32 %v8901, %v9009
    %v9011 = vpop.f32.mrf.mxu0
    %v9012 = vadd.f32 %v8903, %v9011
    %v9013 = vpop.f32.mrf.mxu0
    %v9014 = vadd.f32 %v8905, %v9013
    %9015 = vmatprep.mubr.bf16.mxu0 %v4291
    %9016 = vmatmul.mubr.bf16.gmra.mxu0 %v3590
    %v9017 = vpop.f32.mrf.mxu0
    %v9018 = vadd.f32 %v8909, %v9017
    %v9019 = vpop.f32.mrf.mxu0
    %v9020 = vadd.f32 %v8911, %v9019
    %v9021 = vpop.f32.mrf.mxu0
    %v9022 = vadd.f32 %v8913, %v9021
    %v9023 = vpop.f32.mrf.mxu0
    %v9024 = vadd.f32 %v8915, %v9023
    %9025 = vmatprep.mubr.bf16.mxu0 %v4294
    %9026 = vmatmul.mubr.bf16.gmra.mxu0 %v3594
    %v9027 = vpop.f32.mrf.mxu0
    %v9028 = vadd.f32 %v8919, %v9027
    %v9029 = vpop.f32.mrf.mxu0
    %v9030 = vadd.f32 %v8921, %v9029
    %v9031 = vpop.f32.mrf.mxu0
    %v9032 = vadd.f32 %v8923, %v9031
    %v9033 = vpop.f32.mrf.mxu0
    %v9034 = vadd.f32 %v8925, %v9033
    %9035 = vmatprep.mubr.bf16.mxu0 %v4297
    %9036 = vmatmul.mubr.bf16.gmra.mxu0 %v3598
    %v9037 = vpop.f32.mrf.mxu0
    %v9038 = vadd.f32 %v8929, %v9037
    %v9039 = vpop.f32.mrf.mxu0
    %v9040 = vadd.f32 %v8931, %v9039
    %v9041 = vpop.f32.mrf.mxu0
    %v9042 = vadd.f32 %v8933, %v9041
    %v9043 = vpop.f32.mrf.mxu0
    %v9044 = vadd.f32 %v8935, %v9043
    %9045 = vmatprep.mubr.bf16.mxu0 %v4300
    %9046 = vmatmul.mubr.bf16.gmra.mxu0 %v3602
    %v9047 = vpop.f32.mrf.mxu0
    %v9048 = vadd.f32 %v8939, %v9047
    %v9049 = vpop.f32.mrf.mxu0
    %v9050 = vadd.f32 %v8941, %v9049
    %v9051 = vpop.f32.mrf.mxu0
    %v9052 = vadd.f32 %v8943, %v9051
    %v9053 = vpop.f32.mrf.mxu0
    %v9054 = vadd.f32 %v8945, %v9053
    %9055 = vmatprep.mubr.bf16.mxu0 %v4303
    %9056 = vmatmul.mubr.bf16.gmra.mxu0 %v3606
    %v9057 = vpop.f32.mrf.mxu0
    %v9058 = vadd.f32 %v8949, %v9057
    %v9059 = vpop.f32.mrf.mxu0
    %v9060 = vadd.f32 %v8951, %v9059
    %v9061 = vpop.f32.mrf.mxu0
    %v9062 = vadd.f32 %v8953, %v9061
    %v9063 = vpop.f32.mrf.mxu0
    %v9064 = vadd.f32 %v8955, %v9063
    %9065 = vmatprep.mubr.bf16.mxu0 %v4306
    %9066 = vmatmul.mubr.bf16.gmra.mxu0 %v3610
    %v9067 = vpop.f32.mrf.mxu0
    %v9068 = vadd.f32 %v8959, %v9067
    %v9069 = vpop.f32.mrf.mxu0
    %v9070 = vadd.f32 %v8961, %v9069
    %v9071 = vpop.f32.mrf.mxu0
    %v9072 = vpop.f32.mrf.mxu0
    %9073 = vdwg.mxu0
    %9074 = vmatprep.subr.bf16.mxu0 %v8663
    %9075 = vmatpush1.bf16.msra.mxu0 %v8662
    %9076 = vmatprep.subr.bf16.mxu0 %v8659
    %9077 = vmatpush1.bf16.msra.mxu0 %v8658
    %9078 = vmatprep.subr.bf16.mxu0 %v8655
    %9079 = vmatpush1.bf16.msra.mxu0 %v8654
    %9080 = vmatprep.subr.bf16.mxu0 %v8651
    %9081 = vmatpush1.bf16.msra.mxu0 %v8650
    %9082 = vmatprep.subr.bf16.mxu0 %v8647
    %9083 = vmatpush1.bf16.msra.mxu0 %v8646
    %9084 = vmatprep.subr.bf16.mxu0 %v8643
    %9085 = vmatpush1.bf16.msra.mxu0 %v8642
    %9086 = vmatprep.subr.bf16.mxu0 %v8639
    %9087 = vmatpush1.bf16.msra.mxu0 %v8638
    %9088 = vmatprep.subr.bf16.mxu0 %v8635
    %9089 = vmatpush1.bf16.msra.mxu0 %v8634
    %9090 = vmatprep.subr.bf16.mxu0 %v8695
    %9091 = vmatpush2.bf16.msra.mxu0 %v8694
    %9092 = vmatprep.subr.bf16.mxu0 %v8691
    %9093 = vmatpush2.bf16.msra.mxu0 %v8690
    %9094 = vmatprep.subr.bf16.mxu0 %v8687
    %9095 = vmatpush2.bf16.msra.mxu0 %v8686
    %9096 = vmatprep.subr.bf16.mxu0 %v8683
    %9097 = vmatpush2.bf16.msra.mxu0 %v8682
    %9098 = vmatprep.subr.bf16.mxu0 %v8679
    %9099 = vmatpush2.bf16.msra.mxu0 %v8678
    %9100 = vmatprep.subr.bf16.mxu0 %v8675
    %9101 = vmatpush2.bf16.msra.mxu0 %v8674
    %9102 = vmatprep.subr.bf16.mxu0 %v8671
    %9103 = vmatpush2.bf16.msra.mxu0 %v8670
    %9104 = vmatprep.subr.bf16.mxu0 %v8667
    %9105 = vmatpush2.bf16.msra.mxu0 %v8666
    %9106 = vmatprep.mubr.bf16.mxu0 %v3581
    %9107 = vmatmul.mubr.bf16.gmra.mxu0 %v3580
    %v9108 = vpop.f32.mrf.mxu0
    %v9109 = vpop.f32.mrf.mxu0
    %v9110 = vpop.f32.mrf.mxu0
    %v9111 = vadd.f32 0.0, %v9110
    %v9112 = vpop.f32.mrf.mxu0
    %v9113 = vadd.f32 0.0, %v9112
    %9114 = vmatprep.mubr.bf16.mxu0 %v3585
    %9115 = vmatmul.mubr.bf16.gmra.mxu0 %v3584
    %v9116 = vpop.f32.mrf.mxu0
    %v9117 = vadd.f32 0.0, %v9116
    %v9118 = vpop.f32.mrf.mxu0
    %v9119 = vadd.f32 0.0, %v9118
    %v9120 = vpop.f32.mrf.mxu0
    %v9121 = vadd.f32 0.0, %v9120
    %v9122 = vpop.f32.mrf.mxu0
    %v9123 = vadd.f32 0.0, %v9122
    %9124 = vmatprep.mubr.bf16.mxu0 %v3589
    %9125 = vmatmul.mubr.bf16.gmra.mxu0 %v3588
    %v9126 = vpop.f32.mrf.mxu0
    %v9127 = vadd.f32 0.0, %v9126
    %v9128 = vpop.f32.mrf.mxu0
    %v9129 = vadd.f32 0.0, %v9128
    %v9130 = vpop.f32.mrf.mxu0
    %v9131 = vadd.f32 0.0, %v9130
    %v9132 = vpop.f32.mrf.mxu0
    %v9133 = vadd.f32 0.0, %v9132
    %9134 = vmatprep.mubr.bf16.mxu0 %v3593
    %9135 = vmatmul.mubr.bf16.gmra.mxu0 %v3592
    %v9136 = vpop.f32.mrf.mxu0
    %v9137 = vadd.f32 0.0, %v9136
    %v9138 = vpop.f32.mrf.mxu0
    %v9139 = vadd.f32 0.0, %v9138
    %v9140 = vpop.f32.mrf.mxu0
    %v9141 = vadd.f32 0.0, %v9140
    %v9142 = vpop.f32.mrf.mxu0
    %v9143 = vadd.f32 0.0, %v9142
    %9144 = vmatprep.mubr.bf16.mxu0 %v3597
    %9145 = vmatmul.mubr.bf16.gmra.mxu0 %v3596
    %v9146 = vpop.f32.mrf.mxu0
    %v9147 = vadd.f32 0.0, %v9146
    %v9148 = vpop.f32.mrf.mxu0
    %v9149 = vadd.f32 0.0, %v9148
    %v9150 = vpop.f32.mrf.mxu0
    %v9151 = vadd.f32 0.0, %v9150
    %v9152 = vpop.f32.mrf.mxu0
    %v9153 = vadd.f32 0.0, %v9152
    %9154 = vmatprep.mubr.bf16.mxu0 %v3601
    %9155 = vmatmul.mubr.bf16.gmra.mxu0 %v3600
    %v9156 = vpop.f32.mrf.mxu0
    %v9157 = vadd.f32 0.0, %v9156
    %v9158 = vpop.f32.mrf.mxu0
    %v9159 = vadd.f32 0.0, %v9158
    %v9160 = vpop.f32.mrf.mxu0
    %v9161 = vadd.f32 0.0, %v9160
    %v9162 = vpop.f32.mrf.mxu0
    %v9163 = vadd.f32 0.0, %v9162
    %9164 = vmatprep.mubr.bf16.mxu0 %v3605
    %9165 = vmatmul.mubr.bf16.gmra.mxu0 %v3604
    %v9166 = vpop.f32.mrf.mxu0
    %v9167 = vadd.f32 0.0, %v9166
    %v9168 = vpop.f32.mrf.mxu0
    %v9169 = vadd.f32 0.0, %v9168
    %v9170 = vpop.f32.mrf.mxu0
    %v9171 = vadd.f32 0.0, %v9170
    %v9172 = vpop.f32.mrf.mxu0
    %v9173 = vadd.f32 0.0, %v9172
    %9174 = vmatprep.mubr.bf16.mxu0 %v3609
    %9175 = vmatmul.mubr.bf16.gmra.mxu0 %v3608
    %v9176 = vpop.f32.mrf.mxu0
    %v9177 = vadd.f32 0.0, %v9176
    %v9178 = vpop.f32.mrf.mxu0
    %v9179 = vadd.f32 0.0, %v9178
    %v9180 = vpop.f32.mrf.mxu0
    %v9181 = vpop.f32.mrf.mxu0
    %9182 = vdwg.mxu0
    %9183 = vmatprep.subr.bf16.mxu0 %v8727
    %9184 = vmatpush1.bf16.msra.mxu0 %v8726
    %9185 = vmatprep.subr.bf16.mxu0 %v8723
    %9186 = vmatpush1.bf16.msra.mxu0 %v8722
    %9187 = vmatprep.subr.bf16.mxu0 %v8719
    %9188 = vmatpush1.bf16.msra.mxu0 %v8718
    %9189 = vmatprep.subr.bf16.mxu0 %v8715
    %9190 = vmatpush1.bf16.msra.mxu0 %v8714
    %9191 = vmatprep.subr.bf16.mxu0 %v8711
    %9192 = vmatpush1.bf16.msra.mxu0 %v8710
    %9193 = vmatprep.subr.bf16.mxu0 %v8707
    %9194 = vmatpush1.bf16.msra.mxu0 %v8706
    %9195 = vmatprep.subr.bf16.mxu0 %v8703
    %9196 = vmatpush1.bf16.msra.mxu0 %v8702
    %9197 = vmatprep.subr.bf16.mxu0 %v8699
    %9198 = vmatpush1.bf16.msra.mxu0 %v8698
    %9199 = vmatprep.subr.bf16.mxu0 0
    %9200 = vmatpush2.bf16.msra.mxu0 0
    %9201 = vmatprep.subr.bf16.mxu0 0
    %9202 = vmatpush2.bf16.msra.mxu0 0
    %9203 = vmatprep.subr.bf16.mxu0 0
    %9204 = vmatpush2.bf16.msra.mxu0 0
    %9205 = vmatprep.subr.bf16.mxu0 0
    %9206 = vmatpush2.bf16.msra.mxu0 0
    %9207 = vmatprep.subr.bf16.mxu0 %v8743
    %9208 = vmatpush2.bf16.msra.mxu0 %v8742
    %9209 = vmatprep.subr.bf16.mxu0 %v8739
    %9210 = vmatpush2.bf16.msra.mxu0 %v8738
    %9211 = vmatprep.subr.bf16.mxu0 %v8735
    %9212 = vmatpush2.bf16.msra.mxu0 %v8734
    %9213 = vmatprep.subr.bf16.mxu0 %v8731
    %9214 = vmatpush2.bf16.msra.mxu0 %v8730
    %9215 = vmatprep.mubr.bf16.mxu0 %v4285
    %9216 = vmatmul.mubr.bf16.gmra.mxu0 %v3582
    %v9217 = vpop.f32.mrf.mxu0
    %v9218 = vpop.f32.mrf.mxu0
    %v9219 = vpop.f32.mrf.mxu0
    %v9220 = vadd.f32 %v9111, %v9219
    %v9221 = vpop.f32.mrf.mxu0
    %v9222 = vadd.f32 %v9113, %v9221
    %9223 = vmatprep.mubr.bf16.mxu0 %v4288
    %9224 = vmatmul.mubr.bf16.gmra.mxu0 %v3586
    %v9225 = vpop.f32.mrf.mxu0
    %v9226 = vadd.f32 %v9117, %v9225
    %v9227 = vpop.f32.mrf.mxu0
    %v9228 = vadd.f32 %v9119, %v9227
    %v9229 = vpop.f32.mrf.mxu0
    %v9230 = vadd.f32 %v9121, %v9229
    %v9231 = vpop.f32.mrf.mxu0
    %v9232 = vadd.f32 %v9123, %v9231
    %9233 = vmatprep.mubr.bf16.mxu0 %v4291
    %9234 = vmatmul.mubr.bf16.gmra.mxu0 %v3590
    %v9235 = vpop.f32.mrf.mxu0
    %v9236 = vadd.f32 %v9127, %v9235
    %v9237 = vpop.f32.mrf.mxu0
    %v9238 = vadd.f32 %v9129, %v9237
    %v9239 = vpop.f32.mrf.mxu0
    %v9240 = vadd.f32 %v9131, %v9239
    %v9241 = vpop.f32.mrf.mxu0
    %v9242 = vadd.f32 %v9133, %v9241
    %9243 = vmatprep.mubr.bf16.mxu0 %v4294
    %9244 = vmatmul.mubr.bf16.gmra.mxu0 %v3594
    %v9245 = vpop.f32.mrf.mxu0
    %v9246 = vadd.f32 %v9137, %v9245
    %v9247 = vpop.f32.mrf.mxu0
    %v9248 = vadd.f32 %v9139, %v9247
    %v9249 = vpop.f32.mrf.mxu0
    %v9250 = vadd.f32 %v9141, %v9249
    %v9251 = vpop.f32.mrf.mxu0
    %v9252 = vadd.f32 %v9143, %v9251
    %9253 = vmatprep.mubr.bf16.mxu0 %v4297
    %9254 = vmatmul.mubr.bf16.gmra.mxu0 %v3598
    %v9255 = vpop.f32.mrf.mxu0
    %v9256 = vadd.f32 %v9147, %v9255
    %v9257 = vpop.f32.mrf.mxu0
    %v9258 = vadd.f32 %v9149, %v9257
    %v9259 = vpop.f32.mrf.mxu0
    %v9260 = vadd.f32 %v9151, %v9259
    %v9261 = vpop.f32.mrf.mxu0
    %v9262 = vadd.f32 %v9153, %v9261
    %9263 = vmatprep.mubr.bf16.mxu0 %v4300
    %9264 = vmatmul.mubr.bf16.gmra.mxu0 %v3602
    %v9265 = vpop.f32.mrf.mxu0
    %v9266 = vadd.f32 %v9157, %v9265
    %v9267 = vpop.f32.mrf.mxu0
    %v9268 = vadd.f32 %v9159, %v9267
    %v9269 = vpop.f32.mrf.mxu0
    %v9270 = vadd.f32 %v9161, %v9269
    %v9271 = vpop.f32.mrf.mxu0
    %v9272 = vadd.f32 %v9163, %v9271
    %9273 = vmatprep.mubr.bf16.mxu0 %v4303
    %9274 = vmatmul.mubr.bf16.gmra.mxu0 %v3606
    %v9275 = vpop.f32.mrf.mxu0
    %v9276 = vadd.f32 %v9167, %v9275
    %v9277 = vpop.f32.mrf.mxu0
    %v9278 = vadd.f32 %v9169, %v9277
    %v9279 = vpop.f32.mrf.mxu0
    %v9280 = vadd.f32 %v9171, %v9279
    %v9281 = vpop.f32.mrf.mxu0
    %v9282 = vadd.f32 %v9173, %v9281
    %9283 = vmatprep.mubr.bf16.mxu0 %v4306
    %9284 = vmatmul.mubr.bf16.gmra.mxu0 %v3610
    %v9285 = vpop.f32.mrf.mxu0
    %v9286 = vadd.f32 %v9177, %v9285
    %v9287 = vpop.f32.mrf.mxu0
    %v9288 = vadd.f32 %v9179, %v9287
    %v9289 = vpop.f32.mrf.mxu0
    %v9290 = vpop.f32.mrf.mxu0
    %9291 = vdwg.mxu0
    %v9292 = vadd.f32 %v7891, %v9002
    %v9293 = vadd.f32 %v7893, %v9004
    %v9294 = vadd.f32 %v8109, %v9220
    %v9295 = vadd.f32 %v8111, %v9222
    %v9296 = vadd.f32 %v7895, %v9008
    %v9297 = vadd.f32 %v7897, %v9010
    %v9298 = vadd.f32 %v8113, %v9226
    %v9299 = vadd.f32 %v8115, %v9228
    %v9300 = vadd.f32 %v7901, %v9012
    %v9301 = vadd.f32 %v7903, %v9014
    %v9302 = vadd.f32 %v8119, %v9230
    %v9303 = vadd.f32 %v8121, %v9232
    %v9304 = vadd.f32 %v7905, %v9018
    %v9305 = vadd.f32 %v7907, %v9020
    %v9306 = vadd.f32 %v8123, %v9236
    %v9307 = vadd.f32 %v8125, %v9238
    %v9308 = vadd.f32 %v7911, %v9022
    %v9309 = vadd.f32 %v7913, %v9024
    %v9310 = vadd.f32 %v8129, %v9240
    %v9311 = vadd.f32 %v8131, %v9242
    %v9312 = vadd.f32 %v7915, %v9028
    %v9313 = vadd.f32 %v7917, %v9030
    %v9314 = vadd.f32 %v8133, %v9246
    %v9315 = vadd.f32 %v8135, %v9248
    %v9316 = vadd.f32 %v7921, %v9032
    %v9317 = vadd.f32 %v7923, %v9034
    %v9318 = vadd.f32 %v8139, %v9250
    %v9319 = vadd.f32 %v8141, %v9252
    %v9320 = vadd.f32 %v7925, %v9038
    %v9321 = vadd.f32 %v7927, %v9040
    %v9322 = vadd.f32 %v8143, %v9256
    %v9323 = vadd.f32 %v8145, %v9258
    %v9324 = vadd.f32 %v7931, %v9042
    %v9325 = vadd.f32 %v7933, %v9044
    %v9326 = vadd.f32 %v8149, %v9260
    %v9327 = vadd.f32 %v8151, %v9262
    %v9328 = vadd.f32 %v7935, %v9048
    %v9329 = vadd.f32 %v7937, %v9050
    %v9330 = vadd.f32 %v8153, %v9266
    %v9331 = vadd.f32 %v8155, %v9268
    %v9332 = vadd.f32 %v7941, %v9052
    %v9333 = vadd.f32 %v7943, %v9054
    %v9334 = vadd.f32 %v8159, %v9270
    %v9335 = vadd.f32 %v8161, %v9272
    %v9336 = vadd.f32 %v7945, %v9058
    %v9337 = vadd.f32 %v7947, %v9060
    %v9338 = vadd.f32 %v8163, %v9276
    %v9339 = vadd.f32 %v8165, %v9278
    %v9340 = vadd.f32 %v7951, %v9062
    %v9341 = vadd.f32 %v7953, %v9064
    %v9342 = vadd.f32 %v8169, %v9280
    %v9343 = vadd.f32 %v8171, %v9282
    %v9344 = vadd.f32 %v7955, %v9068
    %v9345 = vadd.f32 %v7957, %v9070
    %v9346 = vadd.f32 %v8173, %v9286
    %v9347 = vadd.f32 %v8175, %v9288
    %s9348 = scalar_lea.vmem [#allocation7], 4480
    %v9349 = vld [vmem:[%s9348] sm:$0xff]
    %v9350 = vld [vmem:[%s9348 + $0x8] sm:$0xff]
    %v9351 = vld [vmem:[%s9348 + $0x10] sm:$0xff]
    %v9352 = vld [vmem:[%s9348 + $0x18] sm:$0xff]
    %v9353 = vld [vmem:[%s9348 + $0x20] sm:$0xff]
    %v9354 = vld [vmem:[%s9348 + $0x28] sm:$0xff]
    %v9355 = vld [vmem:[%s9348 + $0x30] sm:$0xff]
    %v9356 = vld [vmem:[%s9348 + $0x38] sm:$0xff]
    %v9357 = vld [vmem:[%s9348 + $0x40] sm:$0xff]
    %v9358 = vld [vmem:[%s9348 + $0x48] sm:$0xff]
    %v9359 = vld [vmem:[%s9348 + $0x50] sm:$0xff]
    %v9360 = vld [vmem:[%s9348 + $0x58] sm:$0xff]
    %v9361 = vld [vmem:[%s9348 + $0x60] sm:$0xff]
    %v9362 = vld [vmem:[%s9348 + $0x68] sm:$0xff]
    %v9363 = vld [vmem:[%s9348 + $0x70] sm:$0xff]
    %v9364 = vld [vmem:[%s9348 + $0x78] sm:$0xff]
    %v9365 = vld [vmem:[%s9348 + $0x80] sm:$0xff]
    %v9366 = vld [vmem:[%s9348 + $0x88] sm:$0xff]
    %v9367 = vld [vmem:[%s9348 + $0x90] sm:$0xff]
    %v9368 = vld [vmem:[%s9348 + $0x98] sm:$0xff]
    %v9369 = vld [vmem:[%s9348 + $0xa0] sm:$0xff]
    %v9370 = vld [vmem:[%s9348 + $0xa8] sm:$0xff]
    %v9371 = vld [vmem:[%s9348 + $0xb0] sm:$0xff]
    %v9372 = vld [vmem:[%s9348 + $0xb8] sm:$0xff]
    %v9373 = vld [vmem:[%s9348 + $0xc0] sm:$0xff]
    %v9374 = vld [vmem:[%s9348 + $0xc8] sm:$0xff]
    %v9375 = vld [vmem:[%s9348 + $0xd0] sm:$0xff]
    %v9376 = vld [vmem:[%s9348 + $0xd8] sm:$0xff]
    %v9377 = vld [vmem:[%s9348 + $0xe0] sm:$0xff]
    %v9378 = vld [vmem:[%s9348 + $0xe8] sm:$0xff]
    %v9379 = vld [vmem:[%s9348 + $0xf0] sm:$0xff]
    %v9380 = vld [vmem:[%s9348 + $0xf8] sm:$0xff]
    %v9381 = vld [vmem:[%s9348 + $0x100] sm:$0xff]
    %v9382 = vld [vmem:[%s9348 + $0x108] sm:$0xff]
    %v9383 = vld [vmem:[%s9348 + $0x110] sm:$0xff]
    %v9384 = vld [vmem:[%s9348 + $0x118] sm:$0xff]
    %v9385 = vld [vmem:[%s9348 + $0x120] sm:$0xff]
    %v9386 = vld [vmem:[%s9348 + $0x128] sm:$0xff]
    %v9387 = vld [vmem:[%s9348 + $0x130] sm:$0xff]
    %v9388 = vld [vmem:[%s9348 + $0x138] sm:$0xff]
    %v9389 = vld [vmem:[%s9348 + $0x140] sm:$0xff]
    %v9390 = vld [vmem:[%s9348 + $0x148] sm:$0xff]
    %v9391 = vld [vmem:[%s9348 + $0x150] sm:$0xff]
    %v9392 = vld [vmem:[%s9348 + $0x158] sm:$0xff]
    %v9393 = vld [vmem:[%s9348 + $0x160] sm:$0xff]
    %v9394 = vld [vmem:[%s9348 + $0x168] sm:$0xff]
    %v9395 = vld [vmem:[%s9348 + $0x170] sm:$0xff]
    %v9396 = vld [vmem:[%s9348 + $0x178] sm:$0xff]
    %v9397 = vld [vmem:[%s9348 + $0x180] sm:$0xff]
    %v9398 = vld [vmem:[%s9348 + $0x188] sm:$0xff]
    %v9399 = vld [vmem:[%s9348 + $0x190] sm:$0xff]
    %v9400 = vld [vmem:[%s9348 + $0x198] sm:$0xff]
    %v9401 = vld [vmem:[%s9348 + $0x1a0] sm:$0xff]
    %v9402 = vld [vmem:[%s9348 + $0x1a8] sm:$0xff]
    %v9403 = vld [vmem:[%s9348 + $0x1b0] sm:$0xff]
    %v9404 = vld [vmem:[%s9348 + $0x1b8] sm:$0xff]
    %v9405 = vld [vmem:[%s9348 + $0x1c0] sm:$0xff]
    %v9406 = vld [vmem:[%s9348 + $0x1c8] sm:$0xff]
    %v9407 = vld [vmem:[%s9348 + $0x1d0] sm:$0xff]
    %v9408 = vld [vmem:[%s9348 + $0x1d8] sm:$0xff]
    %v9409 = vld [vmem:[%s9348 + $0x1e0] sm:$0xff]
    %v9410 = vld [vmem:[%s9348 + $0x1e8] sm:$0xff]
    %v9411 = vld [vmem:[%s9348 + $0x1f0] sm:$0xff]
    %v9412 = vld [vmem:[%s9348 + $0x1f8] sm:$0xff]
    %v9413 = vld [vmem:[%s9348 + $0x200] sm:$0xff]
    %v9414 = vld [vmem:[%s9348 + $0x208] sm:$0xff]
    %v9415 = vld [vmem:[%s9348 + $0x210] sm:$0xff]
    %v9416 = vld [vmem:[%s9348 + $0x218] sm:$0xff]
    %v9417 = vld [vmem:[%s9348 + $0x220] sm:$0xff]
    %v9418 = vld [vmem:[%s9348 + $0x228] sm:$0xff]
    %v9419 = vld [vmem:[%s9348 + $0x230] sm:$0xff]
    %v9420 = vld [vmem:[%s9348 + $0x238] sm:$0xff]
    %v9421 = vld [vmem:[%s9348 + $0x240] sm:$0xff]
    %v9422 = vld [vmem:[%s9348 + $0x248] sm:$0xff]
    %v9423 = vld [vmem:[%s9348 + $0x250] sm:$0xff]
    %v9424 = vld [vmem:[%s9348 + $0x258] sm:$0xff]
    %v9425 = vld [vmem:[%s9348 + $0x260] sm:$0xff]
    %v9426 = vld [vmem:[%s9348 + $0x268] sm:$0xff]
    %v9427 = vld [vmem:[%s9348 + $0x270] sm:$0xff]
    %v9428 = vld [vmem:[%s9348 + $0x278] sm:$0xff]
    %v9429 = vld [vmem:[%s9348 + $0x280] sm:$0xff]
    %v9430 = vld [vmem:[%s9348 + $0x288] sm:$0xff]
    %v9431 = vld [vmem:[%s9348 + $0x290] sm:$0xff]
    %v9432 = vld [vmem:[%s9348 + $0x298] sm:$0xff]
    %v9433 = vld [vmem:[%s9348 + $0x2a0] sm:$0xff]
    %v9434 = vld [vmem:[%s9348 + $0x2a8] sm:$0xff]
    %v9435 = vld [vmem:[%s9348 + $0x2b0] sm:$0xff]
    %v9436 = vld [vmem:[%s9348 + $0x2b8] sm:$0xff]
    %v9437 = vld [vmem:[%s9348 + $0x2c0] sm:$0xff]
    %v9438 = vld [vmem:[%s9348 + $0x2c8] sm:$0xff]
    %v9439 = vld [vmem:[%s9348 + $0x2d0] sm:$0xff]
    %v9440 = vld [vmem:[%s9348 + $0x2d8] sm:$0xff]
    %v9441 = vld [vmem:[%s9348 + $0x2e0] sm:$0xff]
    %v9442 = vld [vmem:[%s9348 + $0x2e8] sm:$0xff]
    %v9443 = vld [vmem:[%s9348 + $0x2f0] sm:$0xff]
    %v9444 = vld [vmem:[%s9348 + $0x2f8] sm:$0xff]
    %v9445 = vld [vmem:[%s9348 + $0x300] sm:$0xff]
    %v9446 = vld [vmem:[%s9348 + $0x308] sm:$0xff]
    %v9447 = vld [vmem:[%s9348 + $0x310] sm:$0xff]
    %v9448 = vld [vmem:[%s9348 + $0x318] sm:$0xff]
    %v9449 = vld [vmem:[%s9348 + $0x320] sm:$0xff]
    %v9450 = vld [vmem:[%s9348 + $0x328] sm:$0xff]
    %v9451 = vld [vmem:[%s9348 + $0x330] sm:$0xff]
    %v9452 = vld [vmem:[%s9348 + $0x338] sm:$0xff]
    %v9453 = vld [vmem:[%s9348 + $0x340] sm:$0xff]
    %v9454 = vld [vmem:[%s9348 + $0x348] sm:$0xff]
    %v9455 = vld [vmem:[%s9348 + $0x350] sm:$0xff]
    %v9456 = vld [vmem:[%s9348 + $0x358] sm:$0xff]
    %v9457 = vld [vmem:[%s9348 + $0x360] sm:$0xff]
    %v9458 = vld [vmem:[%s9348 + $0x368] sm:$0xff]
    %v9459 = vld [vmem:[%s9348 + $0x370] sm:$0xff]
    %v9460 = vld [vmem:[%s9348 + $0x378] sm:$0xff]
    %v9573 = vunpack.c.l.b16 %v9349
    %v9574 = vunpack.c.h.b16 %v9349
    %v9575 = vunpack.c.l.b16 %v9350
    %v9576 = vunpack.c.h.b16 %v9350
    %v9577 = vunpack.c.l.b16 %v9351
    %v9578 = vunpack.c.h.b16 %v9351
    %v9579 = vunpack.c.l.b16 %v9352
    %v9580 = vunpack.c.h.b16 %v9352
    %v9581 = vunpack.c.l.b16 %v9353
    %v9582 = vunpack.c.h.b16 %v9353
    %v9583 = vunpack.c.l.b16 %v9354
    %v9584 = vunpack.c.h.b16 %v9354
    %v9585 = vunpack.c.l.b16 %v9355
    %v9586 = vunpack.c.h.b16 %v9355
    %v9587 = vunpack.c.l.b16 %v9356
    %v9588 = vunpack.c.h.b16 %v9356
    %v9589 = vunpack.c.l.b16 %v9357
    %v9590 = vunpack.c.h.b16 %v9357
    %v9591 = vunpack.c.l.b16 %v9358
    %v9592 = vunpack.c.h.b16 %v9358
    %v9593 = vunpack.c.l.b16 %v9359
    %v9594 = vunpack.c.h.b16 %v9359
    %v9595 = vunpack.c.l.b16 %v9360
    %v9596 = vunpack.c.h.b16 %v9360
    %v9597 = vunpack.c.l.b16 %v9361
    %v9598 = vunpack.c.h.b16 %v9361
    %v9599 = vunpack.c.l.b16 %v9362
    %v9600 = vunpack.c.h.b16 %v9362
    %v9601 = vunpack.c.l.b16 %v9363
    %v9602 = vunpack.c.h.b16 %v9363
    %v9603 = vunpack.c.l.b16 %v9364
    %v9604 = vunpack.c.h.b16 %v9364
    %v9605 = vunpack.c.l.b16 %v9365
    %v9606 = vunpack.c.h.b16 %v9365
    %v9607 = vunpack.c.l.b16 %v9366
    %v9608 = vunpack.c.h.b16 %v9366
    %v9609 = vunpack.c.l.b16 %v9367
    %v9610 = vunpack.c.h.b16 %v9367
    %v9611 = vunpack.c.l.b16 %v9368
    %v9612 = vunpack.c.h.b16 %v9368
    %v9613 = vunpack.c.l.b16 %v9369
    %v9614 = vunpack.c.h.b16 %v9369
    %v9615 = vunpack.c.l.b16 %v9370
    %v9616 = vunpack.c.h.b16 %v9370
    %v9617 = vunpack.c.l.b16 %v9371
    %v9618 = vunpack.c.h.b16 %v9371
    %v9619 = vunpack.c.l.b16 %v9372
    %v9620 = vunpack.c.h.b16 %v9372
    %v9621 = vunpack.c.l.b16 %v9373
    %v9622 = vunpack.c.h.b16 %v9373
    %v9623 = vunpack.c.l.b16 %v9374
    %v9624 = vunpack.c.h.b16 %v9374
    %v9625 = vunpack.c.l.b16 %v9375
    %v9626 = vunpack.c.h.b16 %v9375
    %v9627 = vunpack.c.l.b16 %v9376
    %v9628 = vunpack.c.h.b16 %v9376
    %v9629 = vunpack.c.l.b16 %v9377
    %v9630 = vunpack.c.h.b16 %v9377
    %v9631 = vunpack.c.l.b16 %v9378
    %v9632 = vunpack.c.h.b16 %v9378
    %v9633 = vunpack.c.l.b16 %v9379
    %v9634 = vunpack.c.h.b16 %v9379
    %v9635 = vunpack.c.l.b16 %v9380
    %v9636 = vunpack.c.h.b16 %v9380
    %v9637 = vunpack.c.l.b16 %v9381
    %v9638 = vunpack.c.h.b16 %v9381
    %v9639 = vunpack.c.l.b16 %v9382
    %v9640 = vunpack.c.h.b16 %v9382
    %v9641 = vunpack.c.l.b16 %v9383
    %v9642 = vunpack.c.h.b16 %v9383
    %v9643 = vunpack.c.l.b16 %v9384
    %v9644 = vunpack.c.h.b16 %v9384
    %v9645 = vunpack.c.l.b16 %v9385
    %v9646 = vunpack.c.h.b16 %v9385
    %v9647 = vunpack.c.l.b16 %v9386
    %v9648 = vunpack.c.h.b16 %v9386
    %v9649 = vunpack.c.l.b16 %v9387
    %v9650 = vunpack.c.h.b16 %v9387
    %v9651 = vunpack.c.l.b16 %v9388
    %v9652 = vunpack.c.h.b16 %v9388
    %v9653 = vunpack.c.l.b16 %v9389
    %v9654 = vunpack.c.h.b16 %v9389
    %v9655 = vunpack.c.l.b16 %v9390
    %v9656 = vunpack.c.h.b16 %v9390
    %v9657 = vunpack.c.l.b16 %v9391
    %v9658 = vunpack.c.h.b16 %v9391
    %v9659 = vunpack.c.l.b16 %v9392
    %v9660 = vunpack.c.h.b16 %v9392
    %v9661 = vunpack.c.l.b16 %v9393
    %v9662 = vunpack.c.h.b16 %v9393
    %v9663 = vunpack.c.l.b16 %v9394
    %v9664 = vunpack.c.h.b16 %v9394
    %v9665 = vunpack.c.l.b16 %v9395
    %v9666 = vunpack.c.h.b16 %v9395
    %v9667 = vunpack.c.l.b16 %v9396
    %v9668 = vunpack.c.h.b16 %v9396
    %v9669 = vunpack.c.l.b16 %v9397
    %v9670 = vunpack.c.h.b16 %v9397
    %v9671 = vunpack.c.l.b16 %v9398
    %v9672 = vunpack.c.h.b16 %v9398
    %v9673 = vunpack.c.l.b16 %v9399
    %v9674 = vunpack.c.h.b16 %v9399
    %v9675 = vunpack.c.l.b16 %v9400
    %v9676 = vunpack.c.h.b16 %v9400
    %v9677 = vunpack.c.l.b16 %v9401
    %v9678 = vunpack.c.h.b16 %v9401
    %v9679 = vunpack.c.l.b16 %v9402
    %v9680 = vunpack.c.h.b16 %v9402
    %v9681 = vunpack.c.l.b16 %v9403
    %v9682 = vunpack.c.h.b16 %v9403
    %v9683 = vunpack.c.l.b16 %v9404
    %v9684 = vunpack.c.h.b16 %v9404
    %v9685 = vunpack.c.l.b16 %v9405
    %v9686 = vunpack.c.h.b16 %v9405
    %v9687 = vunpack.c.l.b16 %v9406
    %v9688 = vunpack.c.h.b16 %v9406
    %v9689 = vunpack.c.l.b16 %v9407
    %v9690 = vunpack.c.h.b16 %v9407
    %v9691 = vunpack.c.l.b16 %v9408
    %v9692 = vunpack.c.h.b16 %v9408
    %v9693 = vunpack.c.l.b16 %v9409
    %v9694 = vunpack.c.h.b16 %v9409
    %v9695 = vunpack.c.l.b16 %v9410
    %v9696 = vunpack.c.h.b16 %v9410
    %v9697 = vunpack.c.l.b16 %v9411
    %v9698 = vunpack.c.h.b16 %v9411
    %v9699 = vunpack.c.l.b16 %v9412
    %v9700 = vunpack.c.h.b16 %v9412
    %v9701 = vunpack.c.l.b16 %v9413
    %v9702 = vunpack.c.h.b16 %v9413
    %v9703 = vunpack.c.l.b16 %v9414
    %v9704 = vunpack.c.h.b16 %v9414
    %v9705 = vunpack.c.l.b16 %v9415
    %v9706 = vunpack.c.h.b16 %v9415
    %v9707 = vunpack.c.l.b16 %v9416
    %v9708 = vunpack.c.h.b16 %v9416
    %v9709 = vunpack.c.l.b16 %v9417
    %v9710 = vunpack.c.h.b16 %v9417
    %v9711 = vunpack.c.l.b16 %v9418
    %v9712 = vunpack.c.h.b16 %v9418
    %v9713 = vunpack.c.l.b16 %v9419
    %v9714 = vunpack.c.h.b16 %v9419
    %v9715 = vunpack.c.l.b16 %v9420
    %v9716 = vunpack.c.h.b16 %v9420
    %v9717 = vunpack.c.l.b16 %v9421
    %v9718 = vunpack.c.h.b16 %v9421
    %v9719 = vunpack.c.l.b16 %v9422
    %v9720 = vunpack.c.h.b16 %v9422
    %v9721 = vunpack.c.l.b16 %v9423
    %v9722 = vunpack.c.h.b16 %v9423
    %v9723 = vunpack.c.l.b16 %v9424
    %v9724 = vunpack.c.h.b16 %v9424
    %v9725 = vunpack.c.l.b16 %v9425
    %v9726 = vunpack.c.h.b16 %v9425
    %v9727 = vunpack.c.l.b16 %v9426
    %v9728 = vunpack.c.h.b16 %v9426
    %v9729 = vunpack.c.l.b16 %v9427
    %v9730 = vunpack.c.h.b16 %v9427
    %v9731 = vunpack.c.l.b16 %v9428
    %v9732 = vunpack.c.h.b16 %v9428
    %v9733 = vunpack.c.l.b16 %v9429
    %v9734 = vunpack.c.h.b16 %v9429
    %v9735 = vunpack.c.l.b16 %v9430
    %v9736 = vunpack.c.h.b16 %v9430
    %v9737 = vunpack.c.l.b16 %v9431
    %v9738 = vunpack.c.h.b16 %v9431
    %v9739 = vunpack.c.l.b16 %v9432
    %v9740 = vunpack.c.h.b16 %v9432
    %v9741 = vunpack.c.l.b16 %v9433
    %v9742 = vunpack.c.h.b16 %v9433
    %v9743 = vunpack.c.l.b16 %v9434
    %v9744 = vunpack.c.h.b16 %v9434
    %v9745 = vunpack.c.l.b16 %v9435
    %v9746 = vunpack.c.h.b16 %v9435
    %v9747 = vunpack.c.l.b16 %v9436
    %v9748 = vunpack.c.h.b16 %v9436
    %v9749 = vunpack.c.l.b16 %v9437
    %v9750 = vunpack.c.h.b16 %v9437
    %v9751 = vunpack.c.l.b16 %v9438
    %v9752 = vunpack.c.h.b16 %v9438
    %v9753 = vunpack.c.l.b16 %v9439
    %v9754 = vunpack.c.h.b16 %v9439
    %v9755 = vunpack.c.l.b16 %v9440
    %v9756 = vunpack.c.h.b16 %v9440
    %v9757 = vunpack.c.l.b16 %v9441
    %v9758 = vunpack.c.h.b16 %v9441
    %v9759 = vunpack.c.l.b16 %v9442
    %v9760 = vunpack.c.h.b16 %v9442
    %v9761 = vunpack.c.l.b16 %v9443
    %v9762 = vunpack.c.h.b16 %v9443
    %v9763 = vunpack.c.l.b16 %v9444
    %v9764 = vunpack.c.h.b16 %v9444
    %v9765 = vunpack.c.l.b16 %v9445
    %v9766 = vunpack.c.h.b16 %v9445
    %v9767 = vunpack.c.l.b16 %v9446
    %v9768 = vunpack.c.h.b16 %v9446
    %v9769 = vunpack.c.l.b16 %v9447
    %v9770 = vunpack.c.h.b16 %v9447
    %v9771 = vunpack.c.l.b16 %v9448
    %v9772 = vunpack.c.h.b16 %v9448
    %v9773 = vunpack.c.l.b16 %v9449
    %v9774 = vunpack.c.h.b16 %v9449
    %v9775 = vunpack.c.l.b16 %v9450
    %v9776 = vunpack.c.h.b16 %v9450
    %v9777 = vunpack.c.l.b16 %v9451
    %v9778 = vunpack.c.h.b16 %v9451
    %v9779 = vunpack.c.l.b16 %v9452
    %v9780 = vunpack.c.h.b16 %v9452
    %v9781 = vunpack.c.l.b16 %v9453
    %v9782 = vunpack.c.h.b16 %v9453
    %v9783 = vunpack.c.l.b16 %v9454
    %v9784 = vunpack.c.h.b16 %v9454
    %v9785 = vunpack.c.l.b16 %v9455
    %v9786 = vunpack.c.h.b16 %v9455
    %v9787 = vunpack.c.l.b16 %v9456
    %v9788 = vunpack.c.h.b16 %v9456
    %v9789 = vunpack.c.l.b16 %v9457
    %v9790 = vunpack.c.h.b16 %v9457
    %v9791 = vunpack.c.l.b16 %v9458
    %v9792 = vunpack.c.h.b16 %v9458
    %v9793 = vunpack.c.l.b16 %v9459
    %v9794 = vunpack.c.h.b16 %v9459
    %v9795 = vunpack.c.l.b16 %v9460
    %v9796 = vunpack.c.h.b16 %v9460
    %v9797 = vpack.c.b16 %v9577, %v9573
    %v9798 = vpack.c.b16 %v9578, %v9574
    %v9799 = vpack.c.b16 %v9579, %v9575
    %v9800 = vpack.c.b16 %v9580, %v9576
    %v9801 = vpack.c.b16 %v9585, %v9581
    %v9802 = vpack.c.b16 %v9586, %v9582
    %v9803 = vpack.c.b16 %v9587, %v9583
    %v9804 = vpack.c.b16 %v9588, %v9584
    %v9805 = vpack.c.b16 %v9593, %v9589
    %v9806 = vpack.c.b16 %v9594, %v9590
    %v9807 = vpack.c.b16 %v9595, %v9591
    %v9808 = vpack.c.b16 %v9596, %v9592
    %v9809 = vpack.c.b16 %v9601, %v9597
    %v9810 = vpack.c.b16 %v9602, %v9598
    %v9811 = vpack.c.b16 %v9603, %v9599
    %v9812 = vpack.c.b16 %v9604, %v9600
    %v9813 = vpack.c.b16 %v9609, %v9605
    %v9814 = vpack.c.b16 %v9610, %v9606
    %v9815 = vpack.c.b16 %v9611, %v9607
    %v9816 = vpack.c.b16 %v9612, %v9608
    %v9817 = vpack.c.b16 %v9617, %v9613
    %v9818 = vpack.c.b16 %v9618, %v9614
    %v9819 = vpack.c.b16 %v9619, %v9615
    %v9820 = vpack.c.b16 %v9620, %v9616
    %v9821 = vpack.c.b16 %v9625, %v9621
    %v9822 = vpack.c.b16 %v9626, %v9622
    %v9823 = vpack.c.b16 %v9627, %v9623
    %v9824 = vpack.c.b16 %v9628, %v9624
    %v9825 = vpack.c.b16 %v9633, %v9629
    %v9826 = vpack.c.b16 %v9634, %v9630
    %v9827 = vpack.c.b16 %v9635, %v9631
    %v9828 = vpack.c.b16 %v9636, %v9632
    %v9829 = vpack.c.b16 %v9641, %v9637
    %v9830 = vpack.c.b16 %v9642, %v9638
    %v9831 = vpack.c.b16 %v9643, %v9639
    %v9832 = vpack.c.b16 %v9644, %v9640
    %v9833 = vpack.c.b16 %v9649, %v9645
    %v9834 = vpack.c.b16 %v9650, %v9646
    %v9835 = vpack.c.b16 %v9651, %v9647
    %v9836 = vpack.c.b16 %v9652, %v9648
    %v9837 = vpack.c.b16 %v9657, %v9653
    %v9838 = vpack.c.b16 %v9658, %v9654
    %v9839 = vpack.c.b16 %v9659, %v9655
    %v9840 = vpack.c.b16 %v9660, %v9656
    %v9841 = vpack.c.b16 %v9665, %v9661
    %v9842 = vpack.c.b16 %v9666, %v9662
    %v9843 = vpack.c.b16 %v9667, %v9663
    %v9844 = vpack.c.b16 %v9668, %v9664
    %v9845 = vpack.c.b16 %v9673, %v9669
    %v9846 = vpack.c.b16 %v9674, %v9670
    %v9847 = vpack.c.b16 %v9675, %v9671
    %v9848 = vpack.c.b16 %v9676, %v9672
    %v9849 = vpack.c.b16 %v9681, %v9677
    %v9850 = vpack.c.b16 %v9682, %v9678
    %v9851 = vpack.c.b16 %v9683, %v9679
    %v9852 = vpack.c.b16 %v9684, %v9680
    %v9853 = vpack.c.b16 %v9689, %v9685
    %v9854 = vpack.c.b16 %v9690, %v9686
    %v9855 = vpack.c.b16 %v9691, %v9687
    %v9856 = vpack.c.b16 %v9692, %v9688
    %v9857 = vpack.c.b16 %v9697, %v9693
    %v9858 = vpack.c.b16 %v9698, %v9694
    %v9859 = vpack.c.b16 %v9699, %v9695
    %v9860 = vpack.c.b16 %v9700, %v9696
    %v9861 = vpack.c.b16 %v9705, %v9701
    %v9862 = vpack.c.b16 %v9706, %v9702
    %v9863 = vpack.c.b16 %v9707, %v9703
    %v9864 = vpack.c.b16 %v9708, %v9704
    %v9865 = vpack.c.b16 %v9713, %v9709
    %v9866 = vpack.c.b16 %v9714, %v9710
    %v9867 = vpack.c.b16 %v9715, %v9711
    %v9868 = vpack.c.b16 %v9716, %v9712
    %v9869 = vpack.c.b16 %v9721, %v9717
    %v9870 = vpack.c.b16 %v9722, %v9718
    %v9871 = vpack.c.b16 %v9723, %v9719
    %v9872 = vpack.c.b16 %v9724, %v9720
    %v9873 = vpack.c.b16 %v9729, %v9725
    %v9874 = vpack.c.b16 %v9730, %v9726
    %v9875 = vpack.c.b16 %v9731, %v9727
    %v9876 = vpack.c.b16 %v9732, %v9728
    %v9877 = vpack.c.b16 %v9737, %v9733
    %v9878 = vpack.c.b16 %v9738, %v9734
    %v9879 = vpack.c.b16 %v9739, %v9735
    %v9880 = vpack.c.b16 %v9740, %v9736
    %v9881 = vpack.c.b16 %v9745, %v9741
    %v9882 = vpack.c.b16 %v9746, %v9742
    %v9883 = vpack.c.b16 %v9747, %v9743
    %v9884 = vpack.c.b16 %v9748, %v9744
    %v9885 = vpack.c.b16 %v9753, %v9749
    %v9886 = vpack.c.b16 %v9754, %v9750
    %v9887 = vpack.c.b16 %v9755, %v9751
    %v9888 = vpack.c.b16 %v9756, %v9752
    %v9889 = vpack.c.b16 %v9761, %v9757
    %v9890 = vpack.c.b16 %v9762, %v9758
    %v9891 = vpack.c.b16 %v9763, %v9759
    %v9892 = vpack.c.b16 %v9764, %v9760
    %v9893 = vpack.c.b16 %v9769, %v9765
    %v9894 = vpack.c.b16 %v9770, %v9766
    %v9895 = vpack.c.b16 %v9771, %v9767
    %v9896 = vpack.c.b16 %v9772, %v9768
    %v9897 = vpack.c.b16 %v9777, %v9773
    %v9898 = vpack.c.b16 %v9778, %v9774
    %v9899 = vpack.c.b16 %v9779, %v9775
    %v9900 = vpack.c.b16 %v9780, %v9776
    %v9901 = vpack.c.b16 %v9785, %v9781
    %v9902 = vpack.c.b16 %v9786, %v9782
    %v9903 = vpack.c.b16 %v9787, %v9783
    %v9904 = vpack.c.b16 %v9788, %v9784
    %v9905 = vpack.c.b16 %v9793, %v9789
    %v9906 = vpack.c.b16 %v9794, %v9790
    %v9907 = vpack.c.b16 %v9795, %v9791
    %v9908 = vpack.c.b16 %v9796, %v9792
    %10021 = vmatprep.subr.bf16.mxu0 %v9826
    %10022 = vmatpush1.bf16.msra.mxu0 %v9825
    %10023 = vmatprep.subr.bf16.mxu0 %v9822
    %10024 = vmatpush1.bf16.msra.mxu0 %v9821
    %10025 = vmatprep.subr.bf16.mxu0 %v9818
    %10026 = vmatpush1.bf16.msra.mxu0 %v9817
    %10027 = vmatprep.subr.bf16.mxu0 %v9814
    %10028 = vmatpush1.bf16.msra.mxu0 %v9813
    %10029 = vmatprep.subr.bf16.mxu0 %v9810
    %10030 = vmatpush1.bf16.msra.mxu0 %v9809
    %10031 = vmatprep.subr.bf16.mxu0 %v9806
    %10032 = vmatpush1.bf16.msra.mxu0 %v9805
    %10033 = vmatprep.subr.bf16.mxu0 %v9802
    %10034 = vmatpush1.bf16.msra.mxu0 %v9801
    %10035 = vmatprep.subr.bf16.mxu0 %v9798
    %10036 = vmatpush1.bf16.msra.mxu0 %v9797
    %10037 = vmatprep.subr.bf16.mxu0 %v9858
    %10038 = vmatpush2.bf16.msra.mxu0 %v9857
    %10039 = vmatprep.subr.bf16.mxu0 %v9854
    %10040 = vmatpush2.bf16.msra.mxu0 %v9853
    %10041 = vmatprep.subr.bf16.mxu0 %v9850
    %10042 = vmatpush2.bf16.msra.mxu0 %v9849
    %10043 = vmatprep.subr.bf16.mxu0 %v9846
    %10044 = vmatpush2.bf16.msra.mxu0 %v9845
    %10045 = vmatprep.subr.bf16.mxu0 %v9842
    %10046 = vmatpush2.bf16.msra.mxu0 %v9841
    %10047 = vmatprep.subr.bf16.mxu0 %v9838
    %10048 = vmatpush2.bf16.msra.mxu0 %v9837
    %10049 = vmatprep.subr.bf16.mxu0 %v9834
    %10050 = vmatpush2.bf16.msra.mxu0 %v9833
    %10051 = vmatprep.subr.bf16.mxu0 %v9830
    %10052 = vmatpush2.bf16.msra.mxu0 %v9829
    %10053 = vmatprep.mubr.bf16.mxu0 %v3581
    %10054 = vmatmul.mubr.bf16.gmra.mxu0 %v3580
    %v10055 = vpop.f32.mrf.mxu0
    %v10056 = vpop.f32.mrf.mxu0
    %v10057 = vpop.f32.mrf.mxu0
    %v10058 = vpop.f32.mrf.mxu0
    %10059 = vmatprep.mubr.bf16.mxu0 %v3585
    %10060 = vmatmul.mubr.bf16.gmra.mxu0 %v3584
    %v10061 = vpop.f32.mrf.mxu0
    %v10062 = vadd.f32 0.0, %v10061
    %v10063 = vpop.f32.mrf.mxu0
    %v10064 = vadd.f32 0.0, %v10063
    %v10065 = vpop.f32.mrf.mxu0
    %v10066 = vadd.f32 0.0, %v10065
    %v10067 = vpop.f32.mrf.mxu0
    %v10068 = vadd.f32 0.0, %v10067
    %10069 = vmatprep.mubr.bf16.mxu0 %v3589
    %10070 = vmatmul.mubr.bf16.gmra.mxu0 %v3588
    %v10071 = vpop.f32.mrf.mxu0
    %v10072 = vadd.f32 0.0, %v10071
    %v10073 = vpop.f32.mrf.mxu0
    %v10074 = vadd.f32 0.0, %v10073
    %v10075 = vpop.f32.mrf.mxu0
    %v10076 = vadd.f32 0.0, %v10075
    %v10077 = vpop.f32.mrf.mxu0
    %v10078 = vadd.f32 0.0, %v10077
    %10079 = vmatprep.mubr.bf16.mxu0 %v3593
    %10080 = vmatmul.mubr.bf16.gmra.mxu0 %v3592
    %v10081 = vpop.f32.mrf.mxu0
    %v10082 = vadd.f32 0.0, %v10081
    %v10083 = vpop.f32.mrf.mxu0
    %v10084 = vadd.f32 0.0, %v10083
    %v10085 = vpop.f32.mrf.mxu0
    %v10086 = vadd.f32 0.0, %v10085
    %v10087 = vpop.f32.mrf.mxu0
    %v10088 = vadd.f32 0.0, %v10087
    %10089 = vmatprep.mubr.bf16.mxu0 %v3597
    %10090 = vmatmul.mubr.bf16.gmra.mxu0 %v3596
    %v10091 = vpop.f32.mrf.mxu0
    %v10092 = vadd.f32 0.0, %v10091
    %v10093 = vpop.f32.mrf.mxu0
    %v10094 = vadd.f32 0.0, %v10093
    %v10095 = vpop.f32.mrf.mxu0
    %v10096 = vadd.f32 0.0, %v10095
    %v10097 = vpop.f32.mrf.mxu0
    %v10098 = vadd.f32 0.0, %v10097
    %10099 = vmatprep.mubr.bf16.mxu0 %v3601
    %10100 = vmatmul.mubr.bf16.gmra.mxu0 %v3600
    %v10101 = vpop.f32.mrf.mxu0
    %v10102 = vadd.f32 0.0, %v10101
    %v10103 = vpop.f32.mrf.mxu0
    %v10104 = vadd.f32 0.0, %v10103
    %v10105 = vpop.f32.mrf.mxu0
    %v10106 = vadd.f32 0.0, %v10105
    %v10107 = vpop.f32.mrf.mxu0
    %v10108 = vadd.f32 0.0, %v10107
    %10109 = vmatprep.mubr.bf16.mxu0 %v3605
    %10110 = vmatmul.mubr.bf16.gmra.mxu0 %v3604
    %v10111 = vpop.f32.mrf.mxu0
    %v10112 = vadd.f32 0.0, %v10111
    %v10113 = vpop.f32.mrf.mxu0
    %v10114 = vadd.f32 0.0, %v10113
    %v10115 = vpop.f32.mrf.mxu0
    %v10116 = vadd.f32 0.0, %v10115
    %v10117 = vpop.f32.mrf.mxu0
    %v10118 = vadd.f32 0.0, %v10117
    %10119 = vmatprep.mubr.bf16.mxu0 %v3609
    %10120 = vmatmul.mubr.bf16.gmra.mxu0 %v3608
    %v10121 = vpop.f32.mrf.mxu0
    %v10122 = vadd.f32 0.0, %v10121
    %v10123 = vpop.f32.mrf.mxu0
    %v10124 = vadd.f32 0.0, %v10123
    %v10125 = vpop.f32.mrf.mxu0
    %v10126 = vadd.f32 0.0, %v10125
    %v10127 = vpop.f32.mrf.mxu0
    %v10128 = vadd.f32 0.0, %v10127
    %10129 = vdwg.mxu0
    %10130 = vmatprep.subr.bf16.mxu0 %v9890
    %10131 = vmatpush1.bf16.msra.mxu0 %v9889
    %10132 = vmatprep.subr.bf16.mxu0 %v9886
    %10133 = vmatpush1.bf16.msra.mxu0 %v9885
    %10134 = vmatprep.subr.bf16.mxu0 %v9882
    %10135 = vmatpush1.bf16.msra.mxu0 %v9881
    %10136 = vmatprep.subr.bf16.mxu0 %v9878
    %10137 = vmatpush1.bf16.msra.mxu0 %v9877
    %10138 = vmatprep.subr.bf16.mxu0 %v9874
    %10139 = vmatpush1.bf16.msra.mxu0 %v9873
    %10140 = vmatprep.subr.bf16.mxu0 %v9870
    %10141 = vmatpush1.bf16.msra.mxu0 %v9869
    %10142 = vmatprep.subr.bf16.mxu0 %v9866
    %10143 = vmatpush1.bf16.msra.mxu0 %v9865
    %10144 = vmatprep.subr.bf16.mxu0 %v9862
    %10145 = vmatpush1.bf16.msra.mxu0 %v9861
    %10146 = vmatprep.subr.bf16.mxu0 0
    %10147 = vmatpush2.bf16.msra.mxu0 0
    %10148 = vmatprep.subr.bf16.mxu0 0
    %10149 = vmatpush2.bf16.msra.mxu0 0
    %10150 = vmatprep.subr.bf16.mxu0 0
    %10151 = vmatpush2.bf16.msra.mxu0 0
    %10152 = vmatprep.subr.bf16.mxu0 0
    %10153 = vmatpush2.bf16.msra.mxu0 0
    %10154 = vmatprep.subr.bf16.mxu0 %v9906
    %10155 = vmatpush2.bf16.msra.mxu0 %v9905
    %10156 = vmatprep.subr.bf16.mxu0 %v9902
    %10157 = vmatpush2.bf16.msra.mxu0 %v9901
    %10158 = vmatprep.subr.bf16.mxu0 %v9898
    %10159 = vmatpush2.bf16.msra.mxu0 %v9897
    %10160 = vmatprep.subr.bf16.mxu0 %v9894
    %10161 = vmatpush2.bf16.msra.mxu0 %v9893
    %10162 = vmatprep.mubr.bf16.mxu0 %v4285
    %10163 = vmatmul.mubr.bf16.gmra.mxu0 %v3582
    %v10164 = vpop.f32.mrf.mxu0
    %v10165 = vpop.f32.mrf.mxu0
    %v10166 = vpop.f32.mrf.mxu0
    %v10167 = vpop.f32.mrf.mxu0
    %10168 = vmatprep.mubr.bf16.mxu0 %v4288
    %10169 = vmatmul.mubr.bf16.gmra.mxu0 %v3586
    %v10170 = vpop.f32.mrf.mxu0
    %v10171 = vadd.f32 %v10062, %v10170
    %v10172 = vpop.f32.mrf.mxu0
    %v10173 = vadd.f32 %v10064, %v10172
    %v10174 = vpop.f32.mrf.mxu0
    %v10175 = vadd.f32 %v10066, %v10174
    %v10176 = vpop.f32.mrf.mxu0
    %v10177 = vadd.f32 %v10068, %v10176
    %10178 = vmatprep.mubr.bf16.mxu0 %v4291
    %10179 = vmatmul.mubr.bf16.gmra.mxu0 %v3590
    %v10180 = vpop.f32.mrf.mxu0
    %v10181 = vadd.f32 %v10072, %v10180
    %v10182 = vpop.f32.mrf.mxu0
    %v10183 = vadd.f32 %v10074, %v10182
    %v10184 = vpop.f32.mrf.mxu0
    %v10185 = vadd.f32 %v10076, %v10184
    %v10186 = vpop.f32.mrf.mxu0
    %v10187 = vadd.f32 %v10078, %v10186
    %10188 = vmatprep.mubr.bf16.mxu0 %v4294
    %10189 = vmatmul.mubr.bf16.gmra.mxu0 %v3594
    %v10190 = vpop.f32.mrf.mxu0
    %v10191 = vadd.f32 %v10082, %v10190
    %v10192 = vpop.f32.mrf.mxu0
    %v10193 = vadd.f32 %v10084, %v10192
    %v10194 = vpop.f32.mrf.mxu0
    %v10195 = vadd.f32 %v10086, %v10194
    %v10196 = vpop.f32.mrf.mxu0
    %v10197 = vadd.f32 %v10088, %v10196
    %10198 = vmatprep.mubr.bf16.mxu0 %v4297
    %10199 = vmatmul.mubr.bf16.gmra.mxu0 %v3598
    %v10200 = vpop.f32.mrf.mxu0
    %v10201 = vadd.f32 %v10092, %v10200
    %v10202 = vpop.f32.mrf.mxu0
    %v10203 = vadd.f32 %v10094, %v10202
    %v10204 = vpop.f32.mrf.mxu0
    %v10205 = vadd.f32 %v10096, %v10204
    %v10206 = vpop.f32.mrf.mxu0
    %v10207 = vadd.f32 %v10098, %v10206
    %10208 = vmatprep.mubr.bf16.mxu0 %v4300
    %10209 = vmatmul.mubr.bf16.gmra.mxu0 %v3602
    %v10210 = vpop.f32.mrf.mxu0
    %v10211 = vadd.f32 %v10102, %v10210
    %v10212 = vpop.f32.mrf.mxu0
    %v10213 = vadd.f32 %v10104, %v10212
    %v10214 = vpop.f32.mrf.mxu0
    %v10215 = vadd.f32 %v10106, %v10214
    %v10216 = vpop.f32.mrf.mxu0
    %v10217 = vadd.f32 %v10108, %v10216
    %10218 = vmatprep.mubr.bf16.mxu0 %v4303
    %10219 = vmatmul.mubr.bf16.gmra.mxu0 %v3606
    %v10220 = vpop.f32.mrf.mxu0
    %v10221 = vadd.f32 %v10112, %v10220
    %v10222 = vpop.f32.mrf.mxu0
    %v10223 = vadd.f32 %v10114, %v10222
    %v10224 = vpop.f32.mrf.mxu0
    %v10225 = vadd.f32 %v10116, %v10224
    %v10226 = vpop.f32.mrf.mxu0
    %v10227 = vadd.f32 %v10118, %v10226
    %10228 = vmatprep.mubr.bf16.mxu0 %v4306
    %10229 = vmatmul.mubr.bf16.gmra.mxu0 %v3610
    %v10230 = vpop.f32.mrf.mxu0
    %v10231 = vadd.f32 %v10122, %v10230
    %v10232 = vpop.f32.mrf.mxu0
    %v10233 = vadd.f32 %v10124, %v10232
    %v10234 = vpop.f32.mrf.mxu0
    %v10235 = vadd.f32 %v10126, %v10234
    %v10236 = vpop.f32.mrf.mxu0
    %v10237 = vadd.f32 %v10128, %v10236
    %10238 = vdwg.mxu0
    %10239 = vmatprep.subr.bf16.mxu0 %v9828
    %10240 = vmatpush1.bf16.msra.mxu0 %v9827
    %10241 = vmatprep.subr.bf16.mxu0 %v9824
    %10242 = vmatpush1.bf16.msra.mxu0 %v9823
    %10243 = vmatprep.subr.bf16.mxu0 %v9820
    %10244 = vmatpush1.bf16.msra.mxu0 %v9819
    %10245 = vmatprep.subr.bf16.mxu0 %v9816
    %10246 = vmatpush1.bf16.msra.mxu0 %v9815
    %10247 = vmatprep.subr.bf16.mxu0 %v9812
    %10248 = vmatpush1.bf16.msra.mxu0 %v9811
    %10249 = vmatprep.subr.bf16.mxu0 %v9808
    %10250 = vmatpush1.bf16.msra.mxu0 %v9807
    %10251 = vmatprep.subr.bf16.mxu0 %v9804
    %10252 = vmatpush1.bf16.msra.mxu0 %v9803
    %10253 = vmatprep.subr.bf16.mxu0 %v9800
    %10254 = vmatpush1.bf16.msra.mxu0 %v9799
    %10255 = vmatprep.subr.bf16.mxu0 %v9860
    %10256 = vmatpush2.bf16.msra.mxu0 %v9859
    %10257 = vmatprep.subr.bf16.mxu0 %v9856
    %10258 = vmatpush2.bf16.msra.mxu0 %v9855
    %10259 = vmatprep.subr.bf16.mxu0 %v9852
    %10260 = vmatpush2.bf16.msra.mxu0 %v9851
    %10261 = vmatprep.subr.bf16.mxu0 %v9848
    %10262 = vmatpush2.bf16.msra.mxu0 %v9847
    %10263 = vmatprep.subr.bf16.mxu0 %v9844
    %10264 = vmatpush2.bf16.msra.mxu0 %v9843
    %10265 = vmatprep.subr.bf16.mxu0 %v9840
    %10266 = vmatpush2.bf16.msra.mxu0 %v9839
    %10267 = vmatprep.subr.bf16.mxu0 %v9836
    %10268 = vmatpush2.bf16.msra.mxu0 %v9835
    %10269 = vmatprep.subr.bf16.mxu0 %v9832
    %10270 = vmatpush2.bf16.msra.mxu0 %v9831
    %10271 = vmatprep.mubr.bf16.mxu0 %v3581
    %10272 = vmatmul.mubr.bf16.gmra.mxu0 %v3580
    %v10273 = vpop.f32.mrf.mxu0
    %v10274 = vpop.f32.mrf.mxu0
    %v10275 = vpop.f32.mrf.mxu0
    %v10276 = vpop.f32.mrf.mxu0
    %10277 = vmatprep.mubr.bf16.mxu0 %v3585
    %10278 = vmatmul.mubr.bf16.gmra.mxu0 %v3584
    %v10279 = vpop.f32.mrf.mxu0
    %v10280 = vadd.f32 0.0, %v10279
    %v10281 = vpop.f32.mrf.mxu0
    %v10282 = vadd.f32 0.0, %v10281
    %v10283 = vpop.f32.mrf.mxu0
    %v10284 = vadd.f32 0.0, %v10283
    %v10285 = vpop.f32.mrf.mxu0
    %v10286 = vadd.f32 0.0, %v10285
    %10287 = vmatprep.mubr.bf16.mxu0 %v3589
    %10288 = vmatmul.mubr.bf16.gmra.mxu0 %v3588
    %v10289 = vpop.f32.mrf.mxu0
    %v10290 = vadd.f32 0.0, %v10289
    %v10291 = vpop.f32.mrf.mxu0
    %v10292 = vadd.f32 0.0, %v10291
    %v10293 = vpop.f32.mrf.mxu0
    %v10294 = vadd.f32 0.0, %v10293
    %v10295 = vpop.f32.mrf.mxu0
    %v10296 = vadd.f32 0.0, %v10295
    %10297 = vmatprep.mubr.bf16.mxu0 %v3593
    %10298 = vmatmul.mubr.bf16.gmra.mxu0 %v3592
    %v10299 = vpop.f32.mrf.mxu0
    %v10300 = vadd.f32 0.0, %v10299
    %v10301 = vpop.f32.mrf.mxu0
    %v10302 = vadd.f32 0.0, %v10301
    %v10303 = vpop.f32.mrf.mxu0
    %v10304 = vadd.f32 0.0, %v10303
    %v10305 = vpop.f32.mrf.mxu0
    %v10306 = vadd.f32 0.0, %v10305
    %10307 = vmatprep.mubr.bf16.mxu0 %v3597
    %10308 = vmatmul.mubr.bf16.gmra.mxu0 %v3596
    %v10309 = vpop.f32.mrf.mxu0
    %v10310 = vadd.f32 0.0, %v10309
    %v10311 = vpop.f32.mrf.mxu0
    %v10312 = vadd.f32 0.0, %v10311
    %v10313 = vpop.f32.mrf.mxu0
    %v10314 = vadd.f32 0.0, %v10313
    %v10315 = vpop.f32.mrf.mxu0
    %v10316 = vadd.f32 0.0, %v10315
    %10317 = vmatprep.mubr.bf16.mxu0 %v3601
    %10318 = vmatmul.mubr.bf16.gmra.mxu0 %v3600
    %v10319 = vpop.f32.mrf.mxu0
    %v10320 = vadd.f32 0.0, %v10319
    %v10321 = vpop.f32.mrf.mxu0
    %v10322 = vadd.f32 0.0, %v10321
    %v10323 = vpop.f32.mrf.mxu0
    %v10324 = vadd.f32 0.0, %v10323
    %v10325 = vpop.f32.mrf.mxu0
    %v10326 = vadd.f32 0.0, %v10325
    %10327 = vmatprep.mubr.bf16.mxu0 %v3605
    %10328 = vmatmul.mubr.bf16.gmra.mxu0 %v3604
    %v10329 = vpop.f32.mrf.mxu0
    %v10330 = vadd.f32 0.0, %v10329
    %v10331 = vpop.f32.mrf.mxu0
    %v10332 = vadd.f32 0.0, %v10331
    %v10333 = vpop.f32.mrf.mxu0
    %v10334 = vadd.f32 0.0, %v10333
    %v10335 = vpop.f32.mrf.mxu0
    %v10336 = vadd.f32 0.0, %v10335
    %10337 = vmatprep.mubr.bf16.mxu0 %v3609
    %10338 = vmatmul.mubr.bf16.gmra.mxu0 %v3608
    %v10339 = vpop.f32.mrf.mxu0
    %v10340 = vadd.f32 0.0, %v10339
    %v10341 = vpop.f32.mrf.mxu0
    %v10342 = vadd.f32 0.0, %v10341
    %v10343 = vpop.f32.mrf.mxu0
    %v10344 = vadd.f32 0.0, %v10343
    %v10345 = vpop.f32.mrf.mxu0
    %v10346 = vadd.f32 0.0, %v10345
    %10347 = vdwg.mxu0
    %10348 = vmatprep.subr.bf16.mxu0 %v9892
    %10349 = vmatpush1.bf16.msra.mxu0 %v9891
    %10350 = vmatprep.subr.bf16.mxu0 %v9888
    %10351 = vmatpush1.bf16.msra.mxu0 %v9887
    %10352 = vmatprep.subr.bf16.mxu0 %v9884
    %10353 = vmatpush1.bf16.msra.mxu0 %v9883
    %10354 = vmatprep.subr.bf16.mxu0 %v9880
    %10355 = vmatpush1.bf16.msra.mxu0 %v9879
    %10356 = vmatprep.subr.bf16.mxu0 %v9876
    %10357 = vmatpush1.bf16.msra.mxu0 %v9875
    %10358 = vmatprep.subr.bf16.mxu0 %v9872
    %10359 = vmatpush1.bf16.msra.mxu0 %v9871
    %10360 = vmatprep.subr.bf16.mxu0 %v9868
    %10361 = vmatpush1.bf16.msra.mxu0 %v9867
    %10362 = vmatprep.subr.bf16.mxu0 %v9864
    %10363 = vmatpush1.bf16.msra.mxu0 %v9863
    %10364 = vmatprep.subr.bf16.mxu0 0
    %10365 = vmatpush2.bf16.msra.mxu0 0
    %10366 = vmatprep.subr.bf16.mxu0 0
    %10367 = vmatpush2.bf16.msra.mxu0 0
    %10368 = vmatprep.subr.bf16.mxu0 0
    %10369 = vmatpush2.bf16.msra.mxu0 0
    %10370 = vmatprep.subr.bf16.mxu0 0
    %10371 = vmatpush2.bf16.msra.mxu0 0
    %10372 = vmatprep.subr.bf16.mxu0 %v9908
    %10373 = vmatpush2.bf16.msra.mxu0 %v9907
    %10374 = vmatprep.subr.bf16.mxu0 %v9904
    %10375 = vmatpush2.bf16.msra.mxu0 %v9903
    %10376 = vmatprep.subr.bf16.mxu0 %v9900
    %10377 = vmatpush2.bf16.msra.mxu0 %v9899
    %10378 = vmatprep.subr.bf16.mxu0 %v9896
    %10379 = vmatpush2.bf16.msra.mxu0 %v9895
    %10380 = vmatprep.mubr.bf16.mxu0 %v4285
    %10381 = vmatmul.mubr.bf16.gmra.mxu0 %v3582
    %v10382 = vpop.f32.mrf.mxu0
    %v10383 = vpop.f32.mrf.mxu0
    %v10384 = vpop.f32.mrf.mxu0
    %v10385 = vpop.f32.mrf.mxu0
    %10386 = vmatprep.mubr.bf16.mxu0 %v4288
    %10387 = vmatmul.mubr.bf16.gmra.mxu0 %v3586
    %v10388 = vpop.f32.mrf.mxu0
    %v10389 = vadd.f32 %v10280, %v10388
    %v10390 = vpop.f32.mrf.mxu0
    %v10391 = vadd.f32 %v10282, %v10390
    %v10392 = vpop.f32.mrf.mxu0
    %v10393 = vadd.f32 %v10284, %v10392
    %v10394 = vpop.f32.mrf.mxu0
    %v10395 = vadd.f32 %v10286, %v10394
    %10396 = vmatprep.mubr.bf16.mxu0 %v4291
    %10397 = vmatmul.mubr.bf16.gmra.mxu0 %v3590
    %v10398 = vpop.f32.mrf.mxu0
    %v10399 = vadd.f32 %v10290, %v10398
    %v10400 = vpop.f32.mrf.mxu0
    %v10401 = vadd.f32 %v10292, %v10400
    %v10402 = vpop.f32.mrf.mxu0
    %v10403 = vadd.f32 %v10294, %v10402
    %v10404 = vpop.f32.mrf.mxu0
    %v10405 = vadd.f32 %v10296, %v10404
    %10406 = vmatprep.mubr.bf16.mxu0 %v4294
    %10407 = vmatmul.mubr.bf16.gmra.mxu0 %v3594
    %v10408 = vpop.f32.mrf.mxu0
    %v10409 = vadd.f32 %v10300, %v10408
    %v10410 = vpop.f32.mrf.mxu0
    %v10411 = vadd.f32 %v10302, %v10410
    %v10412 = vpop.f32.mrf.mxu0
    %v10413 = vadd.f32 %v10304, %v10412
    %v10414 = vpop.f32.mrf.mxu0
    %v10415 = vadd.f32 %v10306, %v10414
    %10416 = vmatprep.mubr.bf16.mxu0 %v4297
    %10417 = vmatmul.mubr.bf16.gmra.mxu0 %v3598
    %v10418 = vpop.f32.mrf.mxu0
    %v10419 = vadd.f32 %v10310, %v10418
    %v10420 = vpop.f32.mrf.mxu0
    %v10421 = vadd.f32 %v10312, %v10420
    %v10422 = vpop.f32.mrf.mxu0
    %v10423 = vadd.f32 %v10314, %v10422
    %v10424 = vpop.f32.mrf.mxu0
    %v10425 = vadd.f32 %v10316, %v10424
    %10426 = vmatprep.mubr.bf16.mxu0 %v4300
    %10427 = vmatmul.mubr.bf16.gmra.mxu0 %v3602
    %v10428 = vpop.f32.mrf.mxu0
    %v10429 = vadd.f32 %v10320, %v10428
    %v10430 = vpop.f32.mrf.mxu0
    %v10431 = vadd.f32 %v10322, %v10430
    %v10432 = vpop.f32.mrf.mxu0
    %v10433 = vadd.f32 %v10324, %v10432
    %v10434 = vpop.f32.mrf.mxu0
    %v10435 = vadd.f32 %v10326, %v10434
    %10436 = vmatprep.mubr.bf16.mxu0 %v4303
    %10437 = vmatmul.mubr.bf16.gmra.mxu0 %v3606
    %v10438 = vpop.f32.mrf.mxu0
    %v10439 = vadd.f32 %v10330, %v10438
    %v10440 = vpop.f32.mrf.mxu0
    %v10441 = vadd.f32 %v10332, %v10440
    %v10442 = vpop.f32.mrf.mxu0
    %v10443 = vadd.f32 %v10334, %v10442
    %v10444 = vpop.f32.mrf.mxu0
    %v10445 = vadd.f32 %v10336, %v10444
    %10446 = vmatprep.mubr.bf16.mxu0 %v4306
    %10447 = vmatmul.mubr.bf16.gmra.mxu0 %v3610
    %v10448 = vpop.f32.mrf.mxu0
    %v10449 = vadd.f32 %v10340, %v10448
    %v10450 = vpop.f32.mrf.mxu0
    %v10451 = vadd.f32 %v10342, %v10450
    %v10452 = vpop.f32.mrf.mxu0
    %v10453 = vadd.f32 %v10344, %v10452
    %v10454 = vpop.f32.mrf.mxu0
    %v10455 = vadd.f32 %v10346, %v10454
    %10456 = vdwg.mxu0
    %v10457 = vadd.f32 %v9292, %v10171
    %v10458 = vadd.f32 %v9293, %v10173
    %v10459 = vadd.f32 %v9294, %v10389
    %v10460 = vadd.f32 %v9295, %v10391
    %v10461 = vadd.f32 %v9296, %v10175
    %v10462 = vadd.f32 %v9297, %v10177
    %v10463 = vadd.f32 %v9298, %v10393
    %v10464 = vadd.f32 %v9299, %v10395
    %v10465 = vadd.f32 %v9300, %v10181
    %v10466 = vadd.f32 %v9301, %v10183
    %v10467 = vadd.f32 %v9302, %v10399
    %v10468 = vadd.f32 %v9303, %v10401
    %v10469 = vadd.f32 %v9304, %v10185
    %v10470 = vadd.f32 %v9305, %v10187
    %v10471 = vadd.f32 %v9306, %v10403
    %v10472 = vadd.f32 %v9307, %v10405
    %v10473 = vadd.f32 %v9308, %v10191
    %v10474 = vadd.f32 %v9309, %v10193
    %v10475 = vadd.f32 %v9310, %v10409
    %v10476 = vadd.f32 %v9311, %v10411
    %v10477 = vadd.f32 %v9312, %v10195
    %v10478 = vadd.f32 %v9313, %v10197
    %v10479 = vadd.f32 %v9314, %v10413
    %v10480 = vadd.f32 %v9315, %v10415
    %v10481 = vadd.f32 %v9316, %v10201
    %v10482 = vadd.f32 %v9317, %v10203
    %v10483 = vadd.f32 %v9318, %v10419
    %v10484 = vadd.f32 %v9319, %v10421
    %v10485 = vadd.f32 %v9320, %v10205
    %v10486 = vadd.f32 %v9321, %v10207
    %v10487 = vadd.f32 %v9322, %v10423
    %v10488 = vadd.f32 %v9323, %v10425
    %v10489 = vadd.f32 %v9324, %v10211
    %v10490 = vadd.f32 %v9325, %v10213
    %v10491 = vadd.f32 %v9326, %v10429
    %v10492 = vadd.f32 %v9327, %v10431
    %v10493 = vadd.f32 %v9328, %v10215
    %v10494 = vadd.f32 %v9329, %v10217
    %v10495 = vadd.f32 %v9330, %v10433
    %v10496 = vadd.f32 %v9331, %v10435
    %v10497 = vadd.f32 %v9332, %v10221
    %v10498 = vadd.f32 %v9333, %v10223
    %v10499 = vadd.f32 %v9334, %v10439
    %v10500 = vadd.f32 %v9335, %v10441
    %v10501 = vadd.f32 %v9336, %v10225
    %v10502 = vadd.f32 %v9337, %v10227
    %v10503 = vadd.f32 %v9338, %v10443
    %v10504 = vadd.f32 %v9339, %v10445
    %v10505 = vadd.f32 %v9340, %v10231
    %v10506 = vadd.f32 %v9341, %v10233
    %v10507 = vadd.f32 %v9342, %v10449
    %v10508 = vadd.f32 %v9343, %v10451
    %v10509 = vadd.f32 %v9344, %v10235
    %v10510 = vadd.f32 %v9345, %v10237
    %v10511 = vadd.f32 %v9346, %v10453
    %v10512 = vadd.f32 %v9347, %v10455
    %v10513 = vmax.f32 %v7018, %v10457
    %v10514 = vmax.f32 %v7019, %v10458
    %v10515 = vmax.f32 %v7020, %v10459
    %v10516 = vmax.f32 %v7021, %v10460
    %v10517 = vmax.f32 %v7022, %v10461
    %v10518 = vmax.f32 %v7023, %v10462
    %v10519 = vmax.f32 %v7024, %v10463
    %v10520 = vmax.f32 %v7025, %v10464
    %v10521 = vmax.f32 %v7026, %v10465
    %v10522 = vmax.f32 %v7027, %v10466
    %v10523 = vmax.f32 %v7028, %v10467
    %v10524 = vmax.f32 %v7029, %v10468
    %v10525 = vmax.f32 %v7030, %v10469
    %v10526 = vmax.f32 %v7031, %v10470
    %v10527 = vmax.f32 %v7032, %v10471
    %v10528 = vmax.f32 %v7033, %v10472
    %v10529 = vmax.f32 %v7034, %v10473
    %v10530 = vmax.f32 %v7035, %v10474
    %v10531 = vmax.f32 %v7036, %v10475
    %v10532 = vmax.f32 %v7037, %v10476
    %v10533 = vmax.f32 %v7038, %v10477
    %v10534 = vmax.f32 %v7039, %v10478
    %v10535 = vmax.f32 %v7040, %v10479
    %v10536 = vmax.f32 %v7041, %v10480
    %v10537 = vmax.f32 %v7042, %v10481
    %v10538 = vmax.f32 %v7043, %v10482
    %v10539 = vmax.f32 %v7044, %v10483
    %v10540 = vmax.f32 %v7045, %v10484
    %v10541 = vmax.f32 %v7046, %v10485
    %v10542 = vmax.f32 %v7047, %v10486
    %v10543 = vmax.f32 %v7048, %v10487
    %v10544 = vmax.f32 %v7049, %v10488
    %v10545 = vmax.f32 %v7050, %v10489
    %v10546 = vmax.f32 %v7051, %v10490
    %v10547 = vmax.f32 %v7052, %v10491
    %v10548 = vmax.f32 %v7053, %v10492
    %v10549 = vmax.f32 %v7054, %v10493
    %v10550 = vmax.f32 %v7055, %v10494
    %v10551 = vmax.f32 %v7056, %v10495
    %v10552 = vmax.f32 %v7057, %v10496
    %v10553 = vmax.f32 %v7058, %v10497
    %v10554 = vmax.f32 %v7059, %v10498
    %v10555 = vmax.f32 %v7060, %v10499
    %v10556 = vmax.f32 %v7061, %v10500
    %v10557 = vmax.f32 %v7062, %v10501
    %v10558 = vmax.f32 %v7063, %v10502
    %v10559 = vmax.f32 %v7064, %v10503
    %v10560 = vmax.f32 %v7065, %v10504
    %v10561 = vmax.f32 %v7066, %v10505
    %v10562 = vmax.f32 %v7067, %v10506
    %v10563 = vmax.f32 %v7068, %v10507
    %v10564 = vmax.f32 %v7069, %v10508
    %v10565 = vmax.f32 %v7070, %v10509
    %v10566 = vmax.f32 %v7071, %v10510
    %v10567 = vmax.f32 %v7072, %v10511
    %v10568 = vmax.f32 %v7073, %v10512
    %v10569 = vmax.f32 %v10513, %v10517
    %v10570 = vmax.f32 %v10514, %v10518
    %v10571 = vmax.f32 %v10515, %v10519
    %v10572 = vmax.f32 %v10516, %v10520
    %v10573 = vmax.f32 %v10521, %v10525
    %v10574 = vmax.f32 %v10522, %v10526
    %v10575 = vmax.f32 %v10523, %v10527
    %v10576 = vmax.f32 %v10524, %v10528
    %v10577 = vmax.f32 %v10529, %v10533
    %v10578 = vmax.f32 %v10530, %v10534
    %v10579 = vmax.f32 %v10531, %v10535
    %v10580 = vmax.f32 %v10532, %v10536
    %v10581 = vmax.f32 %v10537, %v10541
    %v10582 = vmax.f32 %v10538, %v10542
    %v10583 = vmax.f32 %v10539, %v10543
    %v10584 = vmax.f32 %v10540, %v10544
    %v10585 = vmax.f32 %v10545, %v10549
    %v10586 = vmax.f32 %v10546, %v10550
    %v10587 = vmax.f32 %v10547, %v10551
    %v10588 = vmax.f32 %v10548, %v10552
    %v10589 = vmax.f32 %v10553, %v10557
    %v10590 = vmax.f32 %v10554, %v10558
    %v10591 = vmax.f32 %v10555, %v10559
    %v10592 = vmax.f32 %v10556, %v10560
    %v10593 = vmax.f32 %v10561, %v10565
    %v10594 = vmax.f32 %v10562, %v10566
    %v10595 = vmax.f32 %v10563, %v10567
    %v10596 = vmax.f32 %v10564, %v10568
    %v10597 = vld [vmem:[#allocation8] sm:$0xf]
    %v10599 = vlaneseq
    %v10600 = vshrl.u32 %v10599, 7
    %v10601 = vsub.s32 0, %v10600
    %v10602 = vrot.slane %v10597, %v10601
    %v10603 = vlaneseq
    %v10604 = vshrl.u32 %v10603, 7
    %v10605 = vsub.s32 1, %v10604
    %v10606 = vrot.slane %v10597, %v10605
    %v10607 = vlaneseq
    %v10608 = vshrl.u32 %v10607, 7
    %v10609 = vsub.s32 2, %v10608
    %v10610 = vrot.slane %v10597, %v10609
    %v10611 = vlaneseq
    %v10612 = vshrl.u32 %v10611, 7
    %v10613 = vsub.s32 3, %v10612
    %v10614 = vrot.slane %v10597, %v10613
    %v10619 = vadd.f32 %v10569, %v10602
    %v10620 = vadd.f32 %v10570, %v10606
    %v10621 = vadd.f32 %v10571, %v10610
    %v10622 = vadd.f32 %v10572, %v10614
    %v10623 = vadd.f32 %v10573, %v10602
    %v10624 = vadd.f32 %v10574, %v10606
    %v10625 = vadd.f32 %v10575, %v10610
    %v10626 = vadd.f32 %v10576, %v10614
    %v10627 = vadd.f32 %v10577, %v10602
    %v10628 = vadd.f32 %v10578, %v10606
    %v10629 = vadd.f32 %v10579, %v10610
    %v10630 = vadd.f32 %v10580, %v10614
    %v10631 = vadd.f32 %v10581, %v10602
    %v10632 = vadd.f32 %v10582, %v10606
    %v10633 = vadd.f32 %v10583, %v10610
    %v10634 = vadd.f32 %v10584, %v10614
    %v10635 = vadd.f32 %v10585, %v10602
    %v10636 = vadd.f32 %v10586, %v10606
    %v10637 = vadd.f32 %v10587, %v10610
    %v10638 = vadd.f32 %v10588, %v10614
    %v10639 = vadd.f32 %v10589, %v10602
    %v10640 = vadd.f32 %v10590, %v10606
    %v10641 = vadd.f32 %v10591, %v10610
    %v10642 = vadd.f32 %v10592, %v10614
    %v10643 = vadd.f32 %v10593, %v10602
    %v10644 = vadd.f32 %v10594, %v10606
    %v10645 = vadd.f32 %v10595, %v10610
    %v10646 = vadd.f32 %v10596, %v10614
    %v10647 = vmax.f32 %v10619, 0.0
    %v10648 = vmax.f32 %v10620, 0.0
    %v10649 = vmax.f32 %v10621, 0.0
    %v10650 = vmax.f32 %v10622, 0.0
    %v10651 = vmax.f32 %v10623, 0.0
    %v10652 = vmax.f32 %v10624, 0.0
    %v10653 = vmax.f32 %v10625, 0.0
    %v10654 = vmax.f32 %v10626, 0.0
    %v10655 = vmax.f32 %v10627, 0.0
    %v10656 = vmax.f32 %v10628, 0.0
    %v10657 = vmax.f32 %v10629, 0.0
    %v10658 = vmax.f32 %v10630, 0.0
    %v10659 = vmax.f32 %v10631, 0.0
    %v10660 = vmax.f32 %v10632, 0.0
    %v10661 = vmax.f32 %v10633, 0.0
    %v10662 = vmax.f32 %v10634, 0.0
    %v10663 = vmax.f32 %v10635, 0.0
    %v10664 = vmax.f32 %v10636, 0.0
    %v10665 = vmax.f32 %v10637, 0.0
    %v10666 = vmax.f32 %v10638, 0.0
    %v10667 = vmax.f32 %v10639, 0.0
    %v10668 = vmax.f32 %v10640, 0.0
    %v10669 = vmax.f32 %v10641, 0.0
    %v10670 = vmax.f32 %v10642, 0.0
    %v10671 = vmax.f32 %v10643, 0.0
    %v10672 = vmax.f32 %v10644, 0.0
    %v10673 = vmax.f32 %v10645, 0.0
    %v10674 = vmax.f32 %v10646, 0.0
    %v10675 = vpack.c.bf16 %v10647, %v10647
    %v10676 = vpack.c.bf16 %v10648, %v10648
    %v10677 = vpack.c.bf16 %v10649, %v10649
    %v10678 = vpack.c.bf16 %v10650, %v10650
    %v10679 = vpack.c.bf16 %v10651, %v10651
    %v10680 = vpack.c.bf16 %v10652, %v10652
    %v10681 = vpack.c.bf16 %v10653, %v10653
    %v10682 = vpack.c.bf16 %v10654, %v10654
    %v10683 = vpack.c.bf16 %v10655, %v10655
    %v10684 = vpack.c.bf16 %v10656, %v10656
    %v10685 = vpack.c.bf16 %v10657, %v10657
    %v10686 = vpack.c.bf16 %v10658, %v10658
    %v10687 = vpack.c.bf16 %v10659, %v10659
    %v10688 = vpack.c.bf16 %v10660, %v10660
    %v10689 = vpack.c.bf16 %v10661, %v10661
    %v10690 = vpack.c.bf16 %v10662, %v10662
    %v10691 = vpack.c.bf16 %v10663, %v10663
    %v10692 = vpack.c.bf16 %v10664, %v10664
    %v10693 = vpack.c.bf16 %v10665, %v10665
    %v10694 = vpack.c.bf16 %v10666, %v10666
    %v10695 = vpack.c.bf16 %v10667, %v10667
    %v10696 = vpack.c.bf16 %v10668, %v10668
    %v10697 = vpack.c.bf16 %v10669, %v10669
    %v10698 = vpack.c.bf16 %v10670, %v10670
    %v10699 = vpack.c.bf16 %v10671, %v10671
    %v10700 = vpack.c.bf16 %v10672, %v10672
    %v10701 = vpack.c.bf16 %v10673, %v10673
    %v10702 = vpack.c.bf16 %v10674, %v10674
    %v10703 = vld [vmem:[#allocation10] sm:$0xf]
    %v10704 = vld [vmem:[#allocation10 + $0x4] sm:$0xf]
    %v10705 = vld [vmem:[#allocation10 + $0x8] sm:$0xf]
    %v10706 = vld [vmem:[#allocation10 + $0xc] sm:$0xf]
    %v10707 = vld [vmem:[#allocation10 + $0x10] sm:$0xf]
    %v10708 = vld [vmem:[#allocation10 + $0x14] sm:$0xf]
    %v10709 = vld [vmem:[#allocation10 + $0x18] sm:$0xf]
    %v10710 = vld [vmem:[#allocation10 + $0x1c] sm:$0xf]
    %v10711 = vld [vmem:[#allocation10 + $0x20] sm:$0xf]
    %v10712 = vld [vmem:[#allocation10 + $0x24] sm:$0xf]
    %v10713 = vld [vmem:[#allocation10 + $0x28] sm:$0xf]
    %v10714 = vld [vmem:[#allocation10 + $0x2c] sm:$0xf]
    %v10715 = vld [vmem:[#allocation10 + $0x30] sm:$0xf]
    %v10716 = vld [vmem:[#allocation10 + $0x34] sm:$0xf]
    %v10717 = vld [vmem:[#allocation10 + $0x38] sm:$0xf]
    %v10718 = vld [vmem:[#allocation10 + $0x3c] sm:$0xf]
    %v10719 = vld [vmem:[#allocation10 + $0x40] sm:$0xf]
    %v10720 = vld [vmem:[#allocation10 + $0x44] sm:$0xf]
    %v10721 = vld [vmem:[#allocation10 + $0x48] sm:$0xf]
    %v10722 = vld [vmem:[#allocation10 + $0x4c] sm:$0xf]
    %v10723 = vld [vmem:[#allocation10 + $0x50] sm:$0xf]
    %v10724 = vld [vmem:[#allocation10 + $0x54] sm:$0xf]
    %v10725 = vld [vmem:[#allocation10 + $0x58] sm:$0xf]
    %v10726 = vld [vmem:[#allocation10 + $0x5c] sm:$0xf]
    %v10727 = vld [vmem:[#allocation10 + $0x60] sm:$0xf]
    %v10728 = vld [vmem:[#allocation10 + $0x64] sm:$0xf]
    %v10729 = vld [vmem:[#allocation10 + $0x68] sm:$0xf]
    %v10730 = vld [vmem:[#allocation10 + $0x6c] sm:$0xf]
    %v10731 = vld [vmem:[#allocation10 + $0x70] sm:$0xf]
    %v10732 = vld [vmem:[#allocation10 + $0x74] sm:$0xf]
    %v10733 = vld [vmem:[#allocation10 + $0x78] sm:$0xf]
    %v10734 = vld [vmem:[#allocation10 + $0x7c] sm:$0xf]
    %v10735 = vld [vmem:[#allocation10 + $0x80] sm:$0xf]
    %v10736 = vld [vmem:[#allocation10 + $0x84] sm:$0xf]
    %v10737 = vld [vmem:[#allocation10 + $0x88] sm:$0xf]
    %v10738 = vld [vmem:[#allocation10 + $0x8c] sm:$0xf]
    %v10739 = vld [vmem:[#allocation10 + $0x90] sm:$0xf]
    %v10740 = vld [vmem:[#allocation10 + $0x94] sm:$0xf]
    %v10741 = vld [vmem:[#allocation10 + $0x98] sm:$0xf]
    %v10742 = vld [vmem:[#allocation10 + $0x9c] sm:$0xf]
    %v10743 = vld [vmem:[#allocation10 + $0xa0] sm:$0xf]
    %v10744 = vld [vmem:[#allocation10 + $0xa4] sm:$0xf]
    %v10745 = vld [vmem:[#allocation10 + $0xa8] sm:$0xf]
    %v10746 = vld [vmem:[#allocation10 + $0xac] sm:$0xf]
    %v10747 = vld [vmem:[#allocation10 + $0xb0] sm:$0xf]
    %v10748 = vld [vmem:[#allocation10 + $0xb4] sm:$0xf]
    %v10749 = vld [vmem:[#allocation10 + $0xb8] sm:$0xf]
    %v10750 = vld [vmem:[#allocation10 + $0xbc] sm:$0xf]
    %v10751 = vld [vmem:[#allocation10 + $0xc0] sm:$0xf]
    %v10752 = vld [vmem:[#allocation10 + $0xc4] sm:$0xf]
    %v10753 = vld [vmem:[#allocation10 + $0xc8] sm:$0xf]
    %v10754 = vld [vmem:[#allocation10 + $0xcc] sm:$0xf]
    %v10755 = vld [vmem:[#allocation10 + $0xd0] sm:$0xf]
    %v10756 = vld [vmem:[#allocation10 + $0xd4] sm:$0xf]
    %v10757 = vld [vmem:[#allocation10 + $0xd8] sm:$0xf]
    %v10758 = vld [vmem:[#allocation10 + $0xdc] sm:$0xf]
    %s10759 = scalar_lea.vmem [#allocation10], 224
    %v10760 = vld [vmem:[%s10759] sm:$0xf]
    %v10761 = vld [vmem:[%s10759 + $0x4] sm:$0xf]
    %v10762 = vld [vmem:[%s10759 + $0x8] sm:$0xf]
    %v10763 = vld [vmem:[%s10759 + $0xc] sm:$0xf]
    %v10764 = vld [vmem:[%s10759 + $0x10] sm:$0xf]
    %v10765 = vld [vmem:[%s10759 + $0x14] sm:$0xf]
    %v10766 = vld [vmem:[%s10759 + $0x18] sm:$0xf]
    %v10767 = vld [vmem:[%s10759 + $0x1c] sm:$0xf]
    %v10768 = vld [vmem:[%s10759 + $0x20] sm:$0xf]
    %v10769 = vld [vmem:[%s10759 + $0x24] sm:$0xf]
    %v10770 = vld [vmem:[%s10759 + $0x28] sm:$0xf]
    %v10771 = vld [vmem:[%s10759 + $0x2c] sm:$0xf]
    %v10772 = vld [vmem:[%s10759 + $0x30] sm:$0xf]
    %v10773 = vld [vmem:[%s10759 + $0x34] sm:$0xf]
    %v10774 = vld [vmem:[%s10759 + $0x38] sm:$0xf]
    %v10775 = vld [vmem:[%s10759 + $0x3c] sm:$0xf]
    %v10776 = vld [vmem:[%s10759 + $0x40] sm:$0xf]
    %v10777 = vld [vmem:[%s10759 + $0x44] sm:$0xf]
    %v10778 = vld [vmem:[%s10759 + $0x48] sm:$0xf]
    %v10779 = vld [vmem:[%s10759 + $0x4c] sm:$0xf]
    %v10780 = vld [vmem:[%s10759 + $0x50] sm:$0xf]
    %v10781 = vld [vmem:[%s10759 + $0x54] sm:$0xf]
    %v10782 = vld [vmem:[%s10759 + $0x58] sm:$0xf]
    %v10783 = vld [vmem:[%s10759 + $0x5c] sm:$0xf]
    %v10784 = vld [vmem:[%s10759 + $0x60] sm:$0xf]
    %v10785 = vld [vmem:[%s10759 + $0x64] sm:$0xf]
    %v10786 = vld [vmem:[%s10759 + $0x68] sm:$0xf]
    %v10787 = vld [vmem:[%s10759 + $0x6c] sm:$0xf]
    %v10788 = vld [vmem:[%s10759 + $0x70] sm:$0xf]
    %v10789 = vld [vmem:[%s10759 + $0x74] sm:$0xf]
    %v10790 = vld [vmem:[%s10759 + $0x78] sm:$0xf]
    %v10791 = vld [vmem:[%s10759 + $0x7c] sm:$0xf]
    %v10792 = vld [vmem:[%s10759 + $0x80] sm:$0xf]
    %v10793 = vld [vmem:[%s10759 + $0x84] sm:$0xf]
    %v10794 = vld [vmem:[%s10759 + $0x88] sm:$0xf]
    %v10795 = vld [vmem:[%s10759 + $0x8c] sm:$0xf]
    %v10796 = vld [vmem:[%s10759 + $0x90] sm:$0xf]
    %v10797 = vld [vmem:[%s10759 + $0x94] sm:$0xf]
    %v10798 = vld [vmem:[%s10759 + $0x98] sm:$0xf]
    %v10799 = vld [vmem:[%s10759 + $0x9c] sm:$0xf]
    %v10800 = vld [vmem:[%s10759 + $0xa0] sm:$0xf]
    %v10801 = vld [vmem:[%s10759 + $0xa4] sm:$0xf]
    %v10802 = vld [vmem:[%s10759 + $0xa8] sm:$0xf]
    %v10803 = vld [vmem:[%s10759 + $0xac] sm:$0xf]
    %v10804 = vld [vmem:[%s10759 + $0xb0] sm:$0xf]
    %v10805 = vld [vmem:[%s10759 + $0xb4] sm:$0xf]
    %v10806 = vld [vmem:[%s10759 + $0xb8] sm:$0xf]
    %v10807 = vld [vmem:[%s10759 + $0xbc] sm:$0xf]
    %v10808 = vld [vmem:[%s10759 + $0xc0] sm:$0xf]
    %v10809 = vld [vmem:[%s10759 + $0xc4] sm:$0xf]
    %v10810 = vld [vmem:[%s10759 + $0xc8] sm:$0xf]
    %v10811 = vld [vmem:[%s10759 + $0xcc] sm:$0xf]
    %v10812 = vld [vmem:[%s10759 + $0xd0] sm:$0xf]
    %v10813 = vld [vmem:[%s10759 + $0xd4] sm:$0xf]
    %v10814 = vld [vmem:[%s10759 + $0xd8] sm:$0xf]
    %v10815 = vld [vmem:[%s10759 + $0xdc] sm:$0xf]
    %v10872 = vunpack.c.l.b16 %v10760
    %v10873 = vunpack.c.l.b16 %v10761
    %v10874 = vunpack.c.l.b16 %v10762
    %v10875 = vunpack.c.l.b16 %v10763
    %v10876 = vunpack.c.l.b16 %v10764
    %v10877 = vunpack.c.l.b16 %v10765
    %v10878 = vunpack.c.l.b16 %v10766
    %v10879 = vunpack.c.l.b16 %v10767
    %v10880 = vunpack.c.l.b16 %v10768
    %v10881 = vunpack.c.l.b16 %v10769
    %v10882 = vunpack.c.l.b16 %v10770
    %v10883 = vunpack.c.l.b16 %v10771
    %v10884 = vunpack.c.l.b16 %v10772
    %v10885 = vunpack.c.l.b16 %v10773
    %v10886 = vunpack.c.l.b16 %v10774
    %v10887 = vunpack.c.l.b16 %v10775
    %v10888 = vunpack.c.l.b16 %v10776
    %v10889 = vunpack.c.l.b16 %v10777
    %v10890 = vunpack.c.l.b16 %v10778
    %v10891 = vunpack.c.l.b16 %v10779
    %v10892 = vunpack.c.l.b16 %v10780
    %v10893 = vunpack.c.l.b16 %v10781
    %v10894 = vunpack.c.l.b16 %v10782
    %v10895 = vunpack.c.l.b16 %v10783
    %v10896 = vunpack.c.l.b16 %v10784
    %v10897 = vunpack.c.l.b16 %v10785
    %v10898 = vunpack.c.l.b16 %v10786
    %v10899 = vunpack.c.l.b16 %v10787
    %v10900 = vunpack.c.l.b16 %v10788
    %v10901 = vunpack.c.l.b16 %v10789
    %v10902 = vunpack.c.l.b16 %v10790
    %v10903 = vunpack.c.l.b16 %v10791
    %v10904 = vunpack.c.l.b16 %v10792
    %v10905 = vunpack.c.l.b16 %v10793
    %v10906 = vunpack.c.l.b16 %v10794
    %v10907 = vunpack.c.l.b16 %v10795
    %v10908 = vunpack.c.l.b16 %v10796
    %v10909 = vunpack.c.l.b16 %v10797
    %v10910 = vunpack.c.l.b16 %v10798
    %v10911 = vunpack.c.l.b16 %v10799
    %v10912 = vunpack.c.l.b16 %v10800
    %v10913 = vunpack.c.l.b16 %v10801
    %v10914 = vunpack.c.l.b16 %v10802
    %v10915 = vunpack.c.l.b16 %v10803
    %v10916 = vunpack.c.l.b16 %v10804
    %v10917 = vunpack.c.l.b16 %v10805
    %v10918 = vunpack.c.l.b16 %v10806
    %v10919 = vunpack.c.l.b16 %v10807
    %v10920 = vunpack.c.l.b16 %v10808
    %v10921 = vunpack.c.l.b16 %v10809
    %v10922 = vunpack.c.l.b16 %v10810
    %v10923 = vunpack.c.l.b16 %v10811
    %v10924 = vunpack.c.l.b16 %v10812
    %v10925 = vunpack.c.l.b16 %v10813
    %v10926 = vunpack.c.l.b16 %v10814
    %v10927 = vunpack.c.l.b16 %v10815
    %v10928 = vpack.c.b16 %v10873, %v10872
    %v10929 = vpack.c.b16 %v10875, %v10874
    %v10930 = vpack.c.b16 %v10877, %v10876
    %v10931 = vpack.c.b16 %v10879, %v10878
    %v10932 = vpack.c.b16 %v10881, %v10880
    %v10933 = vpack.c.b16 %v10883, %v10882
    %v10934 = vpack.c.b16 %v10885, %v10884
    %v10935 = vpack.c.b16 %v10887, %v10886
    %v10936 = vpack.c.b16 %v10889, %v10888
    %v10937 = vpack.c.b16 %v10891, %v10890
    %v10938 = vpack.c.b16 %v10893, %v10892
    %v10939 = vpack.c.b16 %v10895, %v10894
    %v10940 = vpack.c.b16 %v10897, %v10896
    %v10941 = vpack.c.b16 %v10899, %v10898
    %v10942 = vpack.c.b16 %v10901, %v10900
    %v10943 = vpack.c.b16 %v10903, %v10902
    %v10944 = vpack.c.b16 %v10905, %v10904
    %v10945 = vpack.c.b16 %v10907, %v10906
    %v10946 = vpack.c.b16 %v10909, %v10908
    %v10947 = vpack.c.b16 %v10911, %v10910
    %v10948 = vpack.c.b16 %v10913, %v10912
    %v10949 = vpack.c.b16 %v10915, %v10914
    %v10950 = vpack.c.b16 %v10917, %v10916
    %v10951 = vpack.c.b16 %v10919, %v10918
    %v10952 = vpack.c.b16 %v10921, %v10920
    %v10953 = vpack.c.b16 %v10923, %v10922
    %v10954 = vpack.c.b16 %v10925, %v10924
    %v10955 = vpack.c.b16 %v10927, %v10926
    %v10985 = vsel %vm3454, %v10682, 0
    %10987 = vmatprep.subr.bf16.mxu0 0
    %10988 = vmatpush1.bf16.msra.mxu0 %v10935
    %10989 = vmatprep.subr.bf16.mxu0 0
    %10990 = vmatpush1.bf16.msra.mxu0 %v10934
    %10991 = vmatprep.subr.bf16.mxu0 0
    %10992 = vmatpush1.bf16.msra.mxu0 %v10933
    %10993 = vmatprep.subr.bf16.mxu0 0
    %10994 = vmatpush1.bf16.msra.mxu0 %v10932
    %10995 = vmatprep.subr.bf16.mxu0 0
    %10996 = vmatpush1.bf16.msra.mxu0 %v10931
    %10997 = vmatprep.subr.bf16.mxu0 0
    %10998 = vmatpush1.bf16.msra.mxu0 %v10930
    %10999 = vmatprep.subr.bf16.mxu0 0
    %11000 = vmatpush1.bf16.msra.mxu0 %v10929
    %11001 = vmatprep.subr.bf16.mxu0 0
    %11002 = vmatpush1.bf16.msra.mxu0 %v10928
    %11003 = vmatprep.subr.bf16.mxu0 0
    %11004 = vmatpush2.bf16.msra.mxu0 %v10943
    %11005 = vmatprep.subr.bf16.mxu0 0
    %11006 = vmatpush2.bf16.msra.mxu0 %v10942
    %11007 = vmatprep.subr.bf16.mxu0 0
    %11008 = vmatpush2.bf16.msra.mxu0 %v10941
    %11009 = vmatprep.subr.bf16.mxu0 0
    %11010 = vmatpush2.bf16.msra.mxu0 %v10940
    %11011 = vmatprep.subr.bf16.mxu0 0
    %11012 = vmatpush2.bf16.msra.mxu0 %v10939
    %11013 = vmatprep.subr.bf16.mxu0 0
    %11014 = vmatpush2.bf16.msra.mxu0 %v10938
    %11015 = vmatprep.subr.bf16.mxu0 0
    %11016 = vmatpush2.bf16.msra.mxu0 %v10937
    %11017 = vmatprep.subr.bf16.mxu0 0
    %11018 = vmatpush2.bf16.msra.mxu0 %v10936
    %11019 = vmatprep.mubr.bf16.mxu0 %v10680
    %11020 = vmatmul.mubr.bf16.gmra.mxu0 %v10679
    %v11021 = vpop.f32.mrf.mxu0
    %v11022 = vadd.f32 0.0, %v11021
    %v11023 = vpop.f32.mrf.mxu0
    %v11024 = vpop.f32.mrf.mxu0
    %v11025 = vpop.f32.mrf.mxu0
    %11026 = vdwg.mxu0
    %11027 = vmatprep.subr.bf16.mxu0 0
    %11028 = vmatpush1.bf16.msra.mxu0 %v10951
    %11029 = vmatprep.subr.bf16.mxu0 0
    %11030 = vmatpush1.bf16.msra.mxu0 %v10950
    %11031 = vmatprep.subr.bf16.mxu0 0
    %11032 = vmatpush1.bf16.msra.mxu0 %v10949
    %11033 = vmatprep.subr.bf16.mxu0 0
    %11034 = vmatpush1.bf16.msra.mxu0 %v10948
    %11035 = vmatprep.subr.bf16.mxu0 0
    %11036 = vmatpush1.bf16.msra.mxu0 %v10947
    %11037 = vmatprep.subr.bf16.mxu0 0
    %11038 = vmatpush1.bf16.msra.mxu0 %v10946
    %11039 = vmatprep.subr.bf16.mxu0 0
    %11040 = vmatpush1.bf16.msra.mxu0 %v10945
    %11041 = vmatprep.subr.bf16.mxu0 0
    %11042 = vmatpush1.bf16.msra.mxu0 %v10944
    %11043 = vmatprep.subr.bf16.mxu0 0
    %11044 = vmatpush2.bf16.msra.mxu0 0
    %11045 = vmatprep.subr.bf16.mxu0 0
    %11046 = vmatpush2.bf16.msra.mxu0 0
    %11047 = vmatprep.subr.bf16.mxu0 0
    %11048 = vmatpush2.bf16.msra.mxu0 0
    %11049 = vmatprep.subr.bf16.mxu0 0
    %11050 = vmatpush2.bf16.msra.mxu0 0
    %11051 = vmatprep.subr.bf16.mxu0 0
    %11052 = vmatpush2.bf16.msra.mxu0 %v10955
    %11053 = vmatprep.subr.bf16.mxu0 0
    %11054 = vmatpush2.bf16.msra.mxu0 %v10954
    %11055 = vmatprep.subr.bf16.mxu0 0
    %11056 = vmatpush2.bf16.msra.mxu0 %v10953
    %11057 = vmatprep.subr.bf16.mxu0 0
    %11058 = vmatpush2.bf16.msra.mxu0 %v10952
    %11059 = vmatprep.mubr.bf16.mxu0 %v10985
    %11060 = vmatmul.mubr.bf16.gmra.mxu0 %v10681
    %v11061 = vpop.f32.mrf.mxu0
    %v11062 = vadd.f32 %v11022, %v11061
    %v11063 = vpop.f32.mrf.mxu0
    %v11064 = vpop.f32.mrf.mxu0
    %v11065 = vpop.f32.mrf.mxu0
    %11066 = vdwg.mxu0
    %v11123 = vunpack.c.l.b16 %v10703
    %v11124 = vunpack.c.l.b16 %v10704
    %v11125 = vunpack.c.l.b16 %v10705
    %v11126 = vunpack.c.l.b16 %v10706
    %v11127 = vunpack.c.l.b16 %v10707
    %v11128 = vunpack.c.l.b16 %v10708
    %v11129 = vunpack.c.l.b16 %v10709
    %v11130 = vunpack.c.l.b16 %v10710
    %v11131 = vunpack.c.l.b16 %v10711
    %v11132 = vunpack.c.l.b16 %v10712
    %v11133 = vunpack.c.l.b16 %v10713
    %v11134 = vunpack.c.l.b16 %v10714
    %v11135 = vunpack.c.l.b16 %v10715
    %v11136 = vunpack.c.l.b16 %v10716
    %v11137 = vunpack.c.l.b16 %v10717
    %v11138 = vunpack.c.l.b16 %v10718
    %v11139 = vunpack.c.l.b16 %v10719
    %v11140 = vunpack.c.l.b16 %v10720
    %v11141 = vunpack.c.l.b16 %v10721
    %v11142 = vunpack.c.l.b16 %v10722
    %v11143 = vunpack.c.l.b16 %v10723
    %v11144 = vunpack.c.l.b16 %v10724
    %v11145 = vunpack.c.l.b16 %v10725
    %v11146 = vunpack.c.l.b16 %v10726
    %v11147 = vunpack.c.l.b16 %v10727
    %v11148 = vunpack.c.l.b16 %v10728
    %v11149 = vunpack.c.l.b16 %v10729
    %v11150 = vunpack.c.l.b16 %v10730
    %v11151 = vunpack.c.l.b16 %v10731
    %v11152 = vunpack.c.l.b16 %v10732
    %v11153 = vunpack.c.l.b16 %v10733
    %v11154 = vunpack.c.l.b16 %v10734
    %v11155 = vunpack.c.l.b16 %v10735
    %v11156 = vunpack.c.l.b16 %v10736
    %v11157 = vunpack.c.l.b16 %v10737
    %v11158 = vunpack.c.l.b16 %v10738
    %v11159 = vunpack.c.l.b16 %v10739
    %v11160 = vunpack.c.l.b16 %v10740
    %v11161 = vunpack.c.l.b16 %v10741
    %v11162 = vunpack.c.l.b16 %v10742
    %v11163 = vunpack.c.l.b16 %v10743
    %v11164 = vunpack.c.l.b16 %v10744
    %v11165 = vunpack.c.l.b16 %v10745
    %v11166 = vunpack.c.l.b16 %v10746
    %v11167 = vunpack.c.l.b16 %v10747
    %v11168 = vunpack.c.l.b16 %v10748
    %v11169 = vunpack.c.l.b16 %v10749
    %v11170 = vunpack.c.l.b16 %v10750
    %v11171 = vunpack.c.l.b16 %v10751
    %v11172 = vunpack.c.l.b16 %v10752
    %v11173 = vunpack.c.l.b16 %v10753
    %v11174 = vunpack.c.l.b16 %v10754
    %v11175 = vunpack.c.l.b16 %v10755
    %v11176 = vunpack.c.l.b16 %v10756
    %v11177 = vunpack.c.l.b16 %v10757
    %v11178 = vunpack.c.l.b16 %v10758
    %v11179 = vpack.c.b16 %v11124, %v11123
    %v11180 = vpack.c.b16 %v11126, %v11125
    %v11181 = vpack.c.b16 %v11128, %v11127
    %v11182 = vpack.c.b16 %v11130, %v11129
    %v11183 = vpack.c.b16 %v11132, %v11131
    %v11184 = vpack.c.b16 %v11134, %v11133
    %v11185 = vpack.c.b16 %v11136, %v11135
    %v11186 = vpack.c.b16 %v11138, %v11137
    %v11187 = vpack.c.b16 %v11140, %v11139
    %v11188 = vpack.c.b16 %v11142, %v11141
    %v11189 = vpack.c.b16 %v11144, %v11143
    %v11190 = vpack.c.b16 %v11146, %v11145
    %v11191 = vpack.c.b16 %v11148, %v11147
    %v11192 = vpack.c.b16 %v11150, %v11149
    %v11193 = vpack.c.b16 %v11152, %v11151
    %v11194 = vpack.c.b16 %v11154, %v11153
    %v11195 = vpack.c.b16 %v11156, %v11155
    %v11196 = vpack.c.b16 %v11158, %v11157
    %v11197 = vpack.c.b16 %v11160, %v11159
    %v11198 = vpack.c.b16 %v11162, %v11161
    %v11199 = vpack.c.b16 %v11164, %v11163
    %v11200 = vpack.c.b16 %v11166, %v11165
    %v11201 = vpack.c.b16 %v11168, %v11167
    %v11202 = vpack.c.b16 %v11170, %v11169
    %v11203 = vpack.c.b16 %v11172, %v11171
    %v11204 = vpack.c.b16 %v11174, %v11173
    %v11205 = vpack.c.b16 %v11176, %v11175
    %v11206 = vpack.c.b16 %v11178, %v11177
    %v11236 = vsel %vm3454, %v10678, 0
    %11238 = vmatprep.subr.bf16.mxu0 0
    %11239 = vmatpush1.bf16.msra.mxu0 %v11186
    %11240 = vmatprep.subr.bf16.mxu0 0
    %11241 = vmatpush1.bf16.msra.mxu0 %v11185
    %11242 = vmatprep.subr.bf16.mxu0 0
    %11243 = vmatpush1.bf16.msra.mxu0 %v11184
    %11244 = vmatprep.subr.bf16.mxu0 0
    %11245 = vmatpush1.bf16.msra.mxu0 %v11183
    %11246 = vmatprep.subr.bf16.mxu0 0
    %11247 = vmatpush1.bf16.msra.mxu0 %v11182
    %11248 = vmatprep.subr.bf16.mxu0 0
    %11249 = vmatpush1.bf16.msra.mxu0 %v11181
    %11250 = vmatprep.subr.bf16.mxu0 0
    %11251 = vmatpush1.bf16.msra.mxu0 %v11180
    %11252 = vmatprep.subr.bf16.mxu0 0
    %11253 = vmatpush1.bf16.msra.mxu0 %v11179
    %11254 = vmatprep.subr.bf16.mxu0 0
    %11255 = vmatpush2.bf16.msra.mxu0 %v11194
    %11256 = vmatprep.subr.bf16.mxu0 0
    %11257 = vmatpush2.bf16.msra.mxu0 %v11193
    %11258 = vmatprep.subr.bf16.mxu0 0
    %11259 = vmatpush2.bf16.msra.mxu0 %v11192
    %11260 = vmatprep.subr.bf16.mxu0 0
    %11261 = vmatpush2.bf16.msra.mxu0 %v11191
    %11262 = vmatprep.subr.bf16.mxu0 0
    %11263 = vmatpush2.bf16.msra.mxu0 %v11190
    %11264 = vmatprep.subr.bf16.mxu0 0
    %11265 = vmatpush2.bf16.msra.mxu0 %v11189
    %11266 = vmatprep.subr.bf16.mxu0 0
    %11267 = vmatpush2.bf16.msra.mxu0 %v11188
    %11268 = vmatprep.subr.bf16.mxu0 0
    %11269 = vmatpush2.bf16.msra.mxu0 %v11187
    %11270 = vmatprep.mubr.bf16.mxu0 %v10676
    %11271 = vmatmul.mubr.bf16.gmra.mxu0 %v10675
    %v11272 = vpop.f32.mrf.mxu0
    %v11273 = vadd.f32 %v11062, %v11272
    %v11274 = vpop.f32.mrf.mxu0
    %v11275 = vpop.f32.mrf.mxu0
    %v11276 = vpop.f32.mrf.mxu0
    %11277 = vdwg.mxu0
    %11278 = vmatprep.subr.bf16.mxu0 0
    %11279 = vmatpush1.bf16.msra.mxu0 %v11202
    %11280 = vmatprep.subr.bf16.mxu0 0
    %11281 = vmatpush1.bf16.msra.mxu0 %v11201
    %11282 = vmatprep.subr.bf16.mxu0 0
    %11283 = vmatpush1.bf16.msra.mxu0 %v11200
    %11284 = vmatprep.subr.bf16.mxu0 0
    %11285 = vmatpush1.bf16.msra.mxu0 %v11199
    %11286 = vmatprep.subr.bf16.mxu0 0
    %11287 = vmatpush1.bf16.msra.mxu0 %v11198
    %11288 = vmatprep.subr.bf16.mxu0 0
    %11289 = vmatpush1.bf16.msra.mxu0 %v11197
    %11290 = vmatprep.subr.bf16.mxu0 0
    %11291 = vmatpush1.bf16.msra.mxu0 %v11196
    %11292 = vmatprep.subr.bf16.mxu0 0
    %11293 = vmatpush1.bf16.msra.mxu0 %v11195
    %11294 = vmatprep.subr.bf16.mxu0 0
    %11295 = vmatpush2.bf16.msra.mxu0 0
    %11296 = vmatprep.subr.bf16.mxu0 0
    %11297 = vmatpush2.bf16.msra.mxu0 0
    %11298 = vmatprep.subr.bf16.mxu0 0
    %11299 = vmatpush2.bf16.msra.mxu0 0
    %11300 = vmatprep.subr.bf16.mxu0 0
    %11301 = vmatpush2.bf16.msra.mxu0 0
    %11302 = vmatprep.subr.bf16.mxu0 0
    %11303 = vmatpush2.bf16.msra.mxu0 %v11206
    %11304 = vmatprep.subr.bf16.mxu0 0
    %11305 = vmatpush2.bf16.msra.mxu0 %v11205
    %11306 = vmatprep.subr.bf16.mxu0 0
    %11307 = vmatpush2.bf16.msra.mxu0 %v11204
    %11308 = vmatprep.subr.bf16.mxu0 0
    %11309 = vmatpush2.bf16.msra.mxu0 %v11203
    %11310 = vmatprep.mubr.bf16.mxu0 %v11236
    %11311 = vmatmul.mubr.bf16.gmra.mxu0 %v10677
    %v11312 = vpop.f32.mrf.mxu0
    %v11313 = vadd.f32 %v11273, %v11312
    %v11314 = vpop.f32.mrf.mxu0
    %v11315 = vpop.f32.mrf.mxu0
    %v11316 = vpop.f32.mrf.mxu0
    %11317 = vdwg.mxu0
    %s11318 = scalar_lea.vmem [#allocation10], 448
    %v11319 = vld [vmem:[%s11318] sm:$0xf]
    %v11320 = vld [vmem:[%s11318 + $0x4] sm:$0xf]
    %v11321 = vld [vmem:[%s11318 + $0x8] sm:$0xf]
    %v11322 = vld [vmem:[%s11318 + $0xc] sm:$0xf]
    %v11323 = vld [vmem:[%s11318 + $0x10] sm:$0xf]
    %v11324 = vld [vmem:[%s11318 + $0x14] sm:$0xf]
    %v11325 = vld [vmem:[%s11318 + $0x18] sm:$0xf]
    %v11326 = vld [vmem:[%s11318 + $0x1c] sm:$0xf]
    %v11327 = vld [vmem:[%s11318 + $0x20] sm:$0xf]
    %v11328 = vld [vmem:[%s11318 + $0x24] sm:$0xf]
    %v11329 = vld [vmem:[%s11318 + $0x28] sm:$0xf]
    %v11330 = vld [vmem:[%s11318 + $0x2c] sm:$0xf]
    %v11331 = vld [vmem:[%s11318 + $0x30] sm:$0xf]
    %v11332 = vld [vmem:[%s11318 + $0x34] sm:$0xf]
    %v11333 = vld [vmem:[%s11318 + $0x38] sm:$0xf]
    %v11334 = vld [vmem:[%s11318 + $0x3c] sm:$0xf]
    %v11335 = vld [vmem:[%s11318 + $0x40] sm:$0xf]
    %v11336 = vld [vmem:[%s11318 + $0x44] sm:$0xf]
    %v11337 = vld [vmem:[%s11318 + $0x48] sm:$0xf]
    %v11338 = vld [vmem:[%s11318 + $0x4c] sm:$0xf]
    %v11339 = vld [vmem:[%s11318 + $0x50] sm:$0xf]
    %v11340 = vld [vmem:[%s11318 + $0x54] sm:$0xf]
    %v11341 = vld [vmem:[%s11318 + $0x58] sm:$0xf]
    %v11342 = vld [vmem:[%s11318 + $0x5c] sm:$0xf]
    %v11343 = vld [vmem:[%s11318 + $0x60] sm:$0xf]
    %v11344 = vld [vmem:[%s11318 + $0x64] sm:$0xf]
    %v11345 = vld [vmem:[%s11318 + $0x68] sm:$0xf]
    %v11346 = vld [vmem:[%s11318 + $0x6c] sm:$0xf]
    %v11347 = vld [vmem:[%s11318 + $0x70] sm:$0xf]
    %v11348 = vld [vmem:[%s11318 + $0x74] sm:$0xf]
    %v11349 = vld [vmem:[%s11318 + $0x78] sm:$0xf]
    %v11350 = vld [vmem:[%s11318 + $0x7c] sm:$0xf]
    %v11351 = vld [vmem:[%s11318 + $0x80] sm:$0xf]
    %v11352 = vld [vmem:[%s11318 + $0x84] sm:$0xf]
    %v11353 = vld [vmem:[%s11318 + $0x88] sm:$0xf]
    %v11354 = vld [vmem:[%s11318 + $0x8c] sm:$0xf]
    %v11355 = vld [vmem:[%s11318 + $0x90] sm:$0xf]
    %v11356 = vld [vmem:[%s11318 + $0x94] sm:$0xf]
    %v11357 = vld [vmem:[%s11318 + $0x98] sm:$0xf]
    %v11358 = vld [vmem:[%s11318 + $0x9c] sm:$0xf]
    %v11359 = vld [vmem:[%s11318 + $0xa0] sm:$0xf]
    %v11360 = vld [vmem:[%s11318 + $0xa4] sm:$0xf]
    %v11361 = vld [vmem:[%s11318 + $0xa8] sm:$0xf]
    %v11362 = vld [vmem:[%s11318 + $0xac] sm:$0xf]
    %v11363 = vld [vmem:[%s11318 + $0xb0] sm:$0xf]
    %v11364 = vld [vmem:[%s11318 + $0xb4] sm:$0xf]
    %v11365 = vld [vmem:[%s11318 + $0xb8] sm:$0xf]
    %v11366 = vld [vmem:[%s11318 + $0xbc] sm:$0xf]
    %v11367 = vld [vmem:[%s11318 + $0xc0] sm:$0xf]
    %v11368 = vld [vmem:[%s11318 + $0xc4] sm:$0xf]
    %v11369 = vld [vmem:[%s11318 + $0xc8] sm:$0xf]
    %v11370 = vld [vmem:[%s11318 + $0xcc] sm:$0xf]
    %v11371 = vld [vmem:[%s11318 + $0xd0] sm:$0xf]
    %v11372 = vld [vmem:[%s11318 + $0xd4] sm:$0xf]
    %v11373 = vld [vmem:[%s11318 + $0xd8] sm:$0xf]
    %v11374 = vld [vmem:[%s11318 + $0xdc] sm:$0xf]
    %v11431 = vunpack.c.l.b16 %v11319
    %v11432 = vunpack.c.l.b16 %v11320
    %v11433 = vunpack.c.l.b16 %v11321
    %v11434 = vunpack.c.l.b16 %v11322
    %v11435 = vunpack.c.l.b16 %v11323
    %v11436 = vunpack.c.l.b16 %v11324
    %v11437 = vunpack.c.l.b16 %v11325
    %v11438 = vunpack.c.l.b16 %v11326
    %v11439 = vunpack.c.l.b16 %v11327
    %v11440 = vunpack.c.l.b16 %v11328
    %v11441 = vunpack.c.l.b16 %v11329
    %v11442 = vunpack.c.l.b16 %v11330
    %v11443 = vunpack.c.l.b16 %v11331
    %v11444 = vunpack.c.l.b16 %v11332
    %v11445 = vunpack.c.l.b16 %v11333
    %v11446 = vunpack.c.l.b16 %v11334
    %v11447 = vunpack.c.l.b16 %v11335
    %v11448 = vunpack.c.l.b16 %v11336
    %v11449 = vunpack.c.l.b16 %v11337
    %v11450 = vunpack.c.l.b16 %v11338
    %v11451 = vunpack.c.l.b16 %v11339
    %v11452 = vunpack.c.l.b16 %v11340
    %v11453 = vunpack.c.l.b16 %v11341
    %v11454 = vunpack.c.l.b16 %v11342
    %v11455 = vunpack.c.l.b16 %v11343
    %v11456 = vunpack.c.l.b16 %v11344
    %v11457 = vunpack.c.l.b16 %v11345
    %v11458 = vunpack.c.l.b16 %v11346
    %v11459 = vunpack.c.l.b16 %v11347
    %v11460 = vunpack.c.l.b16 %v11348
    %v11461 = vunpack.c.l.b16 %v11349
    %v11462 = vunpack.c.l.b16 %v11350
    %v11463 = vunpack.c.l.b16 %v11351
    %v11464 = vunpack.c.l.b16 %v11352
    %v11465 = vunpack.c.l.b16 %v11353
    %v11466 = vunpack.c.l.b16 %v11354
    %v11467 = vunpack.c.l.b16 %v11355
    %v11468 = vunpack.c.l.b16 %v11356
    %v11469 = vunpack.c.l.b16 %v11357
    %v11470 = vunpack.c.l.b16 %v11358
    %v11471 = vunpack.c.l.b16 %v11359
    %v11472 = vunpack.c.l.b16 %v11360
    %v11473 = vunpack.c.l.b16 %v11361
    %v11474 = vunpack.c.l.b16 %v11362
    %v11475 = vunpack.c.l.b16 %v11363
    %v11476 = vunpack.c.l.b16 %v11364
    %v11477 = vunpack.c.l.b16 %v11365
    %v11478 = vunpack.c.l.b16 %v11366
    %v11479 = vunpack.c.l.b16 %v11367
    %v11480 = vunpack.c.l.b16 %v11368
    %v11481 = vunpack.c.l.b16 %v11369
    %v11482 = vunpack.c.l.b16 %v11370
    %v11483 = vunpack.c.l.b16 %v11371
    %v11484 = vunpack.c.l.b16 %v11372
    %v11485 = vunpack.c.l.b16 %v11373
    %v11486 = vunpack.c.l.b16 %v11374
    %v11487 = vpack.c.b16 %v11432, %v11431
    %v11488 = vpack.c.b16 %v11434, %v11433
    %v11489 = vpack.c.b16 %v11436, %v11435
    %v11490 = vpack.c.b16 %v11438, %v11437
    %v11491 = vpack.c.b16 %v11440, %v11439
    %v11492 = vpack.c.b16 %v11442, %v11441
    %v11493 = vpack.c.b16 %v11444, %v11443
    %v11494 = vpack.c.b16 %v11446, %v11445
    %v11495 = vpack.c.b16 %v11448, %v11447
    %v11496 = vpack.c.b16 %v11450, %v11449
    %v11497 = vpack.c.b16 %v11452, %v11451
    %v11498 = vpack.c.b16 %v11454, %v11453
    %v11499 = vpack.c.b16 %v11456, %v11455
    %v11500 = vpack.c.b16 %v11458, %v11457
    %v11501 = vpack.c.b16 %v11460, %v11459
    %v11502 = vpack.c.b16 %v11462, %v11461
    %v11503 = vpack.c.b16 %v11464, %v11463
    %v11504 = vpack.c.b16 %v11466, %v11465
    %v11505 = vpack.c.b16 %v11468, %v11467
    %v11506 = vpack.c.b16 %v11470, %v11469
    %v11507 = vpack.c.b16 %v11472, %v11471
    %v11508 = vpack.c.b16 %v11474, %v11473
    %v11509 = vpack.c.b16 %v11476, %v11475
    %v11510 = vpack.c.b16 %v11478, %v11477
    %v11511 = vpack.c.b16 %v11480, %v11479
    %v11512 = vpack.c.b16 %v11482, %v11481
    %v11513 = vpack.c.b16 %v11484, %v11483
    %v11514 = vpack.c.b16 %v11486, %v11485
    %v11544 = vsel %vm3454, %v10686, 0
    %11546 = vmatprep.subr.bf16.mxu0 0
    %11547 = vmatpush1.bf16.msra.mxu0 %v11494
    %11548 = vmatprep.subr.bf16.mxu0 0
    %11549 = vmatpush1.bf16.msra.mxu0 %v11493
    %11550 = vmatprep.subr.bf16.mxu0 0
    %11551 = vmatpush1.bf16.msra.mxu0 %v11492
    %11552 = vmatprep.subr.bf16.mxu0 0
    %11553 = vmatpush1.bf16.msra.mxu0 %v11491
    %11554 = vmatprep.subr.bf16.mxu0 0
    %11555 = vmatpush1.bf16.msra.mxu0 %v11490
    %11556 = vmatprep.subr.bf16.mxu0 0
    %11557 = vmatpush1.bf16.msra.mxu0 %v11489
    %11558 = vmatprep.subr.bf16.mxu0 0
    %11559 = vmatpush1.bf16.msra.mxu0 %v11488
    %11560 = vmatprep.subr.bf16.mxu0 0
    %11561 = vmatpush1.bf16.msra.mxu0 %v11487
    %11562 = vmatprep.subr.bf16.mxu0 0
    %11563 = vmatpush2.bf16.msra.mxu0 %v11502
    %11564 = vmatprep.subr.bf16.mxu0 0
    %11565 = vmatpush2.bf16.msra.mxu0 %v11501
    %11566 = vmatprep.subr.bf16.mxu0 0
    %11567 = vmatpush2.bf16.msra.mxu0 %v11500
    %11568 = vmatprep.subr.bf16.mxu0 0
    %11569 = vmatpush2.bf16.msra.mxu0 %v11499
    %11570 = vmatprep.subr.bf16.mxu0 0
    %11571 = vmatpush2.bf16.msra.mxu0 %v11498
    %11572 = vmatprep.subr.bf16.mxu0 0
    %11573 = vmatpush2.bf16.msra.mxu0 %v11497
    %11574 = vmatprep.subr.bf16.mxu0 0
    %11575 = vmatpush2.bf16.msra.mxu0 %v11496
    %11576 = vmatprep.subr.bf16.mxu0 0
    %11577 = vmatpush2.bf16.msra.mxu0 %v11495
    %11578 = vmatprep.mubr.bf16.mxu0 %v10684
    %11579 = vmatmul.mubr.bf16.gmra.mxu0 %v10683
    %v11580 = vpop.f32.mrf.mxu0
    %v11581 = vadd.f32 0.0, %v11580
    %v11582 = vpop.f32.mrf.mxu0
    %v11583 = vpop.f32.mrf.mxu0
    %v11584 = vpop.f32.mrf.mxu0
    %11585 = vdwg.mxu0
    %11586 = vmatprep.subr.bf16.mxu0 0
    %11587 = vmatpush1.bf16.msra.mxu0 %v11510
    %11588 = vmatprep.subr.bf16.mxu0 0
    %11589 = vmatpush1.bf16.msra.mxu0 %v11509
    %11590 = vmatprep.subr.bf16.mxu0 0
    %11591 = vmatpush1.bf16.msra.mxu0 %v11508
    %11592 = vmatprep.subr.bf16.mxu0 0
    %11593 = vmatpush1.bf16.msra.mxu0 %v11507
    %11594 = vmatprep.subr.bf16.mxu0 0
    %11595 = vmatpush1.bf16.msra.mxu0 %v11506
    %11596 = vmatprep.subr.bf16.mxu0 0
    %11597 = vmatpush1.bf16.msra.mxu0 %v11505
    %11598 = vmatprep.subr.bf16.mxu0 0
    %11599 = vmatpush1.bf16.msra.mxu0 %v11504
    %11600 = vmatprep.subr.bf16.mxu0 0
    %11601 = vmatpush1.bf16.msra.mxu0 %v11503
    %11602 = vmatprep.subr.bf16.mxu0 0
    %11603 = vmatpush2.bf16.msra.mxu0 0
    %11604 = vmatprep.subr.bf16.mxu0 0
    %11605 = vmatpush2.bf16.msra.mxu0 0
    %11606 = vmatprep.subr.bf16.mxu0 0
    %11607 = vmatpush2.bf16.msra.mxu0 0
    %11608 = vmatprep.subr.bf16.mxu0 0
    %11609 = vmatpush2.bf16.msra.mxu0 0
    %11610 = vmatprep.subr.bf16.mxu0 0
    %11611 = vmatpush2.bf16.msra.mxu0 %v11514
    %11612 = vmatprep.subr.bf16.mxu0 0
    %11613 = vmatpush2.bf16.msra.mxu0 %v11513
    %11614 = vmatprep.subr.bf16.mxu0 0
    %11615 = vmatpush2.bf16.msra.mxu0 %v11512
    %11616 = vmatprep.subr.bf16.mxu0 0
    %11617 = vmatpush2.bf16.msra.mxu0 %v11511
    %11618 = vmatprep.mubr.bf16.mxu0 %v11544
    %11619 = vmatmul.mubr.bf16.gmra.mxu0 %v10685
    %v11620 = vpop.f32.mrf.mxu0
    %v11621 = vadd.f32 %v11581, %v11620
    %v11622 = vpop.f32.mrf.mxu0
    %v11623 = vpop.f32.mrf.mxu0
    %v11624 = vpop.f32.mrf.mxu0
    %11625 = vdwg.mxu0
    %v11626 = vadd.f32 %v11313, %v11621
    %s11627 = scalar_lea.vmem [#allocation10], 672
    %v11628 = vld [vmem:[%s11627] sm:$0xf]
    %v11629 = vld [vmem:[%s11627 + $0x4] sm:$0xf]
    %v11630 = vld [vmem:[%s11627 + $0x8] sm:$0xf]
    %v11631 = vld [vmem:[%s11627 + $0xc] sm:$0xf]
    %v11632 = vld [vmem:[%s11627 + $0x10] sm:$0xf]
    %v11633 = vld [vmem:[%s11627 + $0x14] sm:$0xf]
    %v11634 = vld [vmem:[%s11627 + $0x18] sm:$0xf]
    %v11635 = vld [vmem:[%s11627 + $0x1c] sm:$0xf]
    %v11636 = vld [vmem:[%s11627 + $0x20] sm:$0xf]
    %v11637 = vld [vmem:[%s11627 + $0x24] sm:$0xf]
    %v11638 = vld [vmem:[%s11627 + $0x28] sm:$0xf]
    %v11639 = vld [vmem:[%s11627 + $0x2c] sm:$0xf]
    %v11640 = vld [vmem:[%s11627 + $0x30] sm:$0xf]
    %v11641 = vld [vmem:[%s11627 + $0x34] sm:$0xf]
    %v11642 = vld [vmem:[%s11627 + $0x38] sm:$0xf]
    %v11643 = vld [vmem:[%s11627 + $0x3c] sm:$0xf]
    %v11644 = vld [vmem:[%s11627 + $0x40] sm:$0xf]
    %v11645 = vld [vmem:[%s11627 + $0x44] sm:$0xf]
    %v11646 = vld [vmem:[%s11627 + $0x48] sm:$0xf]
    %v11647 = vld [vmem:[%s11627 + $0x4c] sm:$0xf]
    %v11648 = vld [vmem:[%s11627 + $0x50] sm:$0xf]
    %v11649 = vld [vmem:[%s11627 + $0x54] sm:$0xf]
    %v11650 = vld [vmem:[%s11627 + $0x58] sm:$0xf]
    %v11651 = vld [vmem:[%s11627 + $0x5c] sm:$0xf]
    %v11652 = vld [vmem:[%s11627 + $0x60] sm:$0xf]
    %v11653 = vld [vmem:[%s11627 + $0x64] sm:$0xf]
    %v11654 = vld [vmem:[%s11627 + $0x68] sm:$0xf]
    %v11655 = vld [vmem:[%s11627 + $0x6c] sm:$0xf]
    %v11656 = vld [vmem:[%s11627 + $0x70] sm:$0xf]
    %v11657 = vld [vmem:[%s11627 + $0x74] sm:$0xf]
    %v11658 = vld [vmem:[%s11627 + $0x78] sm:$0xf]
    %v11659 = vld [vmem:[%s11627 + $0x7c] sm:$0xf]
    %v11660 = vld [vmem:[%s11627 + $0x80] sm:$0xf]
    %v11661 = vld [vmem:[%s11627 + $0x84] sm:$0xf]
    %v11662 = vld [vmem:[%s11627 + $0x88] sm:$0xf]
    %v11663 = vld [vmem:[%s11627 + $0x8c] sm:$0xf]
    %v11664 = vld [vmem:[%s11627 + $0x90] sm:$0xf]
    %v11665 = vld [vmem:[%s11627 + $0x94] sm:$0xf]
    %v11666 = vld [vmem:[%s11627 + $0x98] sm:$0xf]
    %v11667 = vld [vmem:[%s11627 + $0x9c] sm:$0xf]
    %v11668 = vld [vmem:[%s11627 + $0xa0] sm:$0xf]
    %v11669 = vld [vmem:[%s11627 + $0xa4] sm:$0xf]
    %v11670 = vld [vmem:[%s11627 + $0xa8] sm:$0xf]
    %v11671 = vld [vmem:[%s11627 + $0xac] sm:$0xf]
    %v11672 = vld [vmem:[%s11627 + $0xb0] sm:$0xf]
    %v11673 = vld [vmem:[%s11627 + $0xb4] sm:$0xf]
    %v11674 = vld [vmem:[%s11627 + $0xb8] sm:$0xf]
    %v11675 = vld [vmem:[%s11627 + $0xbc] sm:$0xf]
    %v11676 = vld [vmem:[%s11627 + $0xc0] sm:$0xf]
    %v11677 = vld [vmem:[%s11627 + $0xc4] sm:$0xf]
    %v11678 = vld [vmem:[%s11627 + $0xc8] sm:$0xf]
    %v11679 = vld [vmem:[%s11627 + $0xcc] sm:$0xf]
    %v11680 = vld [vmem:[%s11627 + $0xd0] sm:$0xf]
    %v11681 = vld [vmem:[%s11627 + $0xd4] sm:$0xf]
    %v11682 = vld [vmem:[%s11627 + $0xd8] sm:$0xf]
    %v11683 = vld [vmem:[%s11627 + $0xdc] sm:$0xf]
    %v11740 = vunpack.c.l.b16 %v11628
    %v11741 = vunpack.c.l.b16 %v11629
    %v11742 = vunpack.c.l.b16 %v11630
    %v11743 = vunpack.c.l.b16 %v11631
    %v11744 = vunpack.c.l.b16 %v11632
    %v11745 = vunpack.c.l.b16 %v11633
    %v11746 = vunpack.c.l.b16 %v11634
    %v11747 = vunpack.c.l.b16 %v11635
    %v11748 = vunpack.c.l.b16 %v11636
    %v11749 = vunpack.c.l.b16 %v11637
    %v11750 = vunpack.c.l.b16 %v11638
    %v11751 = vunpack.c.l.b16 %v11639
    %v11752 = vunpack.c.l.b16 %v11640
    %v11753 = vunpack.c.l.b16 %v11641
    %v11754 = vunpack.c.l.b16 %v11642
    %v11755 = vunpack.c.l.b16 %v11643
    %v11756 = vunpack.c.l.b16 %v11644
    %v11757 = vunpack.c.l.b16 %v11645
    %v11758 = vunpack.c.l.b16 %v11646
    %v11759 = vunpack.c.l.b16 %v11647
    %v11760 = vunpack.c.l.b16 %v11648
    %v11761 = vunpack.c.l.b16 %v11649
    %v11762 = vunpack.c.l.b16 %v11650
    %v11763 = vunpack.c.l.b16 %v11651
    %v11764 = vunpack.c.l.b16 %v11652
    %v11765 = vunpack.c.l.b16 %v11653
    %v11766 = vunpack.c.l.b16 %v11654
    %v11767 = vunpack.c.l.b16 %v11655
    %v11768 = vunpack.c.l.b16 %v11656
    %v11769 = vunpack.c.l.b16 %v11657
    %v11770 = vunpack.c.l.b16 %v11658
    %v11771 = vunpack.c.l.b16 %v11659
    %v11772 = vunpack.c.l.b16 %v11660
    %v11773 = vunpack.c.l.b16 %v11661
    %v11774 = vunpack.c.l.b16 %v11662
    %v11775 = vunpack.c.l.b16 %v11663
    %v11776 = vunpack.c.l.b16 %v11664
    %v11777 = vunpack.c.l.b16 %v11665
    %v11778 = vunpack.c.l.b16 %v11666
    %v11779 = vunpack.c.l.b16 %v11667
    %v11780 = vunpack.c.l.b16 %v11668
    %v11781 = vunpack.c.l.b16 %v11669
    %v11782 = vunpack.c.l.b16 %v11670
    %v11783 = vunpack.c.l.b16 %v11671
    %v11784 = vunpack.c.l.b16 %v11672
    %v11785 = vunpack.c.l.b16 %v11673
    %v11786 = vunpack.c.l.b16 %v11674
    %v11787 = vunpack.c.l.b16 %v11675
    %v11788 = vunpack.c.l.b16 %v11676
    %v11789 = vunpack.c.l.b16 %v11677
    %v11790 = vunpack.c.l.b16 %v11678
    %v11791 = vunpack.c.l.b16 %v11679
    %v11792 = vunpack.c.l.b16 %v11680
    %v11793 = vunpack.c.l.b16 %v11681
    %v11794 = vunpack.c.l.b16 %v11682
    %v11795 = vunpack.c.l.b16 %v11683
    %v11796 = vpack.c.b16 %v11741, %v11740
    %v11797 = vpack.c.b16 %v11743, %v11742
    %v11798 = vpack.c.b16 %v11745, %v11744
    %v11799 = vpack.c.b16 %v11747, %v11746
    %v11800 = vpack.c.b16 %v11749, %v11748
    %v11801 = vpack.c.b16 %v11751, %v11750
    %v11802 = vpack.c.b16 %v11753, %v11752
    %v11803 = vpack.c.b16 %v11755, %v11754
    %v11804 = vpack.c.b16 %v11757, %v11756
    %v11805 = vpack.c.b16 %v11759, %v11758
    %v11806 = vpack.c.b16 %v11761, %v11760
    %v11807 = vpack.c.b16 %v11763, %v11762
    %v11808 = vpack.c.b16 %v11765, %v11764
    %v11809 = vpack.c.b16 %v11767, %v11766
    %v11810 = vpack.c.b16 %v11769, %v11768
    %v11811 = vpack.c.b16 %v11771, %v11770
    %v11812 = vpack.c.b16 %v11773, %v11772
    %v11813 = vpack.c.b16 %v11775, %v11774
    %v11814 = vpack.c.b16 %v11777, %v11776
    %v11815 = vpack.c.b16 %v11779, %v11778
    %v11816 = vpack.c.b16 %v11781, %v11780
    %v11817 = vpack.c.b16 %v11783, %v11782
    %v11818 = vpack.c.b16 %v11785, %v11784
    %v11819 = vpack.c.b16 %v11787, %v11786
    %v11820 = vpack.c.b16 %v11789, %v11788
    %v11821 = vpack.c.b16 %v11791, %v11790
    %v11822 = vpack.c.b16 %v11793, %v11792
    %v11823 = vpack.c.b16 %v11795, %v11794
    %v11853 = vsel %vm3454, %v10690, 0
    %11855 = vmatprep.subr.bf16.mxu0 0
    %11856 = vmatpush1.bf16.msra.mxu0 %v11803
    %11857 = vmatprep.subr.bf16.mxu0 0
    %11858 = vmatpush1.bf16.msra.mxu0 %v11802
    %11859 = vmatprep.subr.bf16.mxu0 0
    %11860 = vmatpush1.bf16.msra.mxu0 %v11801
    %11861 = vmatprep.subr.bf16.mxu0 0
    %11862 = vmatpush1.bf16.msra.mxu0 %v11800
    %11863 = vmatprep.subr.bf16.mxu0 0
    %11864 = vmatpush1.bf16.msra.mxu0 %v11799
    %11865 = vmatprep.subr.bf16.mxu0 0
    %11866 = vmatpush1.bf16.msra.mxu0 %v11798
    %11867 = vmatprep.subr.bf16.mxu0 0
    %11868 = vmatpush1.bf16.msra.mxu0 %v11797
    %11869 = vmatprep.subr.bf16.mxu0 0
    %11870 = vmatpush1.bf16.msra.mxu0 %v11796
    %11871 = vmatprep.subr.bf16.mxu0 0
    %11872 = vmatpush2.bf16.msra.mxu0 %v11811
    %11873 = vmatprep.subr.bf16.mxu0 0
    %11874 = vmatpush2.bf16.msra.mxu0 %v11810
    %11875 = vmatprep.subr.bf16.mxu0 0
    %11876 = vmatpush2.bf16.msra.mxu0 %v11809
    %11877 = vmatprep.subr.bf16.mxu0 0
    %11878 = vmatpush2.bf16.msra.mxu0 %v11808
    %11879 = vmatprep.subr.bf16.mxu0 0
    %11880 = vmatpush2.bf16.msra.mxu0 %v11807
    %11881 = vmatprep.subr.bf16.mxu0 0
    %11882 = vmatpush2.bf16.msra.mxu0 %v11806
    %11883 = vmatprep.subr.bf16.mxu0 0
    %11884 = vmatpush2.bf16.msra.mxu0 %v11805
    %11885 = vmatprep.subr.bf16.mxu0 0
    %11886 = vmatpush2.bf16.msra.mxu0 %v11804
    %11887 = vmatprep.mubr.bf16.mxu0 %v10688
    %11888 = vmatmul.mubr.bf16.gmra.mxu0 %v10687
    %v11889 = vpop.f32.mrf.mxu0
    %v11890 = vadd.f32 0.0, %v11889
    %v11891 = vpop.f32.mrf.mxu0
    %v11892 = vpop.f32.mrf.mxu0
    %v11893 = vpop.f32.mrf.mxu0
    %11894 = vdwg.mxu0
    %11895 = vmatprep.subr.bf16.mxu0 0
    %11896 = vmatpush1.bf16.msra.mxu0 %v11819
    %11897 = vmatprep.subr.bf16.mxu0 0
    %11898 = vmatpush1.bf16.msra.mxu0 %v11818
    %11899 = vmatprep.subr.bf16.mxu0 0
    %11900 = vmatpush1.bf16.msra.mxu0 %v11817
    %11901 = vmatprep.subr.bf16.mxu0 0
    %11902 = vmatpush1.bf16.msra.mxu0 %v11816
    %11903 = vmatprep.subr.bf16.mxu0 0
    %11904 = vmatpush1.bf16.msra.mxu0 %v11815
    %11905 = vmatprep.subr.bf16.mxu0 0
    %11906 = vmatpush1.bf16.msra.mxu0 %v11814
    %11907 = vmatprep.subr.bf16.mxu0 0
    %11908 = vmatpush1.bf16.msra.mxu0 %v11813
    %11909 = vmatprep.subr.bf16.mxu0 0
    %11910 = vmatpush1.bf16.msra.mxu0 %v11812
    %11911 = vmatprep.subr.bf16.mxu0 0
    %11912 = vmatpush2.bf16.msra.mxu0 0
    %11913 = vmatprep.subr.bf16.mxu0 0
    %11914 = vmatpush2.bf16.msra.mxu0 0
    %11915 = vmatprep.subr.bf16.mxu0 0
    %11916 = vmatpush2.bf16.msra.mxu0 0
    %11917 = vmatprep.subr.bf16.mxu0 0
    %11918 = vmatpush2.bf16.msra.mxu0 0
    %11919 = vmatprep.subr.bf16.mxu0 0
    %11920 = vmatpush2.bf16.msra.mxu0 %v11823
    %11921 = vmatprep.subr.bf16.mxu0 0
    %11922 = vmatpush2.bf16.msra.mxu0 %v11822
    %11923 = vmatprep.subr.bf16.mxu0 0
    %11924 = vmatpush2.bf16.msra.mxu0 %v11821
    %11925 = vmatprep.subr.bf16.mxu0 0
    %11926 = vmatpush2.bf16.msra.mxu0 %v11820
    %11927 = vmatprep.mubr.bf16.mxu0 %v11853
    %11928 = vmatmul.mubr.bf16.gmra.mxu0 %v10689
    %v11929 = vpop.f32.mrf.mxu0
    %v11930 = vadd.f32 %v11890, %v11929
    %v11931 = vpop.f32.mrf.mxu0
    %v11932 = vpop.f32.mrf.mxu0
    %v11933 = vpop.f32.mrf.mxu0
    %11934 = vdwg.mxu0
    %v11935 = vadd.f32 %v11626, %v11930
    %s11936 = scalar_lea.vmem [#allocation10], 896
    %v11937 = vld [vmem:[%s11936] sm:$0xf]
    %v11938 = vld [vmem:[%s11936 + $0x4] sm:$0xf]
    %v11939 = vld [vmem:[%s11936 + $0x8] sm:$0xf]
    %v11940 = vld [vmem:[%s11936 + $0xc] sm:$0xf]
    %v11941 = vld [vmem:[%s11936 + $0x10] sm:$0xf]
    %v11942 = vld [vmem:[%s11936 + $0x14] sm:$0xf]
    %v11943 = vld [vmem:[%s11936 + $0x18] sm:$0xf]
    %v11944 = vld [vmem:[%s11936 + $0x1c] sm:$0xf]
    %v11945 = vld [vmem:[%s11936 + $0x20] sm:$0xf]
    %v11946 = vld [vmem:[%s11936 + $0x24] sm:$0xf]
    %v11947 = vld [vmem:[%s11936 + $0x28] sm:$0xf]
    %v11948 = vld [vmem:[%s11936 + $0x2c] sm:$0xf]
    %v11949 = vld [vmem:[%s11936 + $0x30] sm:$0xf]
    %v11950 = vld [vmem:[%s11936 + $0x34] sm:$0xf]
    %v11951 = vld [vmem:[%s11936 + $0x38] sm:$0xf]
    %v11952 = vld [vmem:[%s11936 + $0x3c] sm:$0xf]
    %v11953 = vld [vmem:[%s11936 + $0x40] sm:$0xf]
    %v11954 = vld [vmem:[%s11936 + $0x44] sm:$0xf]
    %v11955 = vld [vmem:[%s11936 + $0x48] sm:$0xf]
    %v11956 = vld [vmem:[%s11936 + $0x4c] sm:$0xf]
    %v11957 = vld [vmem:[%s11936 + $0x50] sm:$0xf]
    %v11958 = vld [vmem:[%s11936 + $0x54] sm:$0xf]
    %v11959 = vld [vmem:[%s11936 + $0x58] sm:$0xf]
    %v11960 = vld [vmem:[%s11936 + $0x5c] sm:$0xf]
    %v11961 = vld [vmem:[%s11936 + $0x60] sm:$0xf]
    %v11962 = vld [vmem:[%s11936 + $0x64] sm:$0xf]
    %v11963 = vld [vmem:[%s11936 + $0x68] sm:$0xf]
    %v11964 = vld [vmem:[%s11936 + $0x6c] sm:$0xf]
    %v11965 = vld [vmem:[%s11936 + $0x70] sm:$0xf]
    %v11966 = vld [vmem:[%s11936 + $0x74] sm:$0xf]
    %v11967 = vld [vmem:[%s11936 + $0x78] sm:$0xf]
    %v11968 = vld [vmem:[%s11936 + $0x7c] sm:$0xf]
    %v11969 = vld [vmem:[%s11936 + $0x80] sm:$0xf]
    %v11970 = vld [vmem:[%s11936 + $0x84] sm:$0xf]
    %v11971 = vld [vmem:[%s11936 + $0x88] sm:$0xf]
    %v11972 = vld [vmem:[%s11936 + $0x8c] sm:$0xf]
    %v11973 = vld [vmem:[%s11936 + $0x90] sm:$0xf]
    %v11974 = vld [vmem:[%s11936 + $0x94] sm:$0xf]
    %v11975 = vld [vmem:[%s11936 + $0x98] sm:$0xf]
    %v11976 = vld [vmem:[%s11936 + $0x9c] sm:$0xf]
    %v11977 = vld [vmem:[%s11936 + $0xa0] sm:$0xf]
    %v11978 = vld [vmem:[%s11936 + $0xa4] sm:$0xf]
    %v11979 = vld [vmem:[%s11936 + $0xa8] sm:$0xf]
    %v11980 = vld [vmem:[%s11936 + $0xac] sm:$0xf]
    %v11981 = vld [vmem:[%s11936 + $0xb0] sm:$0xf]
    %v11982 = vld [vmem:[%s11936 + $0xb4] sm:$0xf]
    %v11983 = vld [vmem:[%s11936 + $0xb8] sm:$0xf]
    %v11984 = vld [vmem:[%s11936 + $0xbc] sm:$0xf]
    %v11985 = vld [vmem:[%s11936 + $0xc0] sm:$0xf]
    %v11986 = vld [vmem:[%s11936 + $0xc4] sm:$0xf]
    %v11987 = vld [vmem:[%s11936 + $0xc8] sm:$0xf]
    %v11988 = vld [vmem:[%s11936 + $0xcc] sm:$0xf]
    %v11989 = vld [vmem:[%s11936 + $0xd0] sm:$0xf]
    %v11990 = vld [vmem:[%s11936 + $0xd4] sm:$0xf]
    %v11991 = vld [vmem:[%s11936 + $0xd8] sm:$0xf]
    %v11992 = vld [vmem:[%s11936 + $0xdc] sm:$0xf]
    %v12049 = vunpack.c.l.b16 %v11937
    %v12050 = vunpack.c.l.b16 %v11938
    %v12051 = vunpack.c.l.b16 %v11939
    %v12052 = vunpack.c.l.b16 %v11940
    %v12053 = vunpack.c.l.b16 %v11941
    %v12054 = vunpack.c.l.b16 %v11942
    %v12055 = vunpack.c.l.b16 %v11943
    %v12056 = vunpack.c.l.b16 %v11944
    %v12057 = vunpack.c.l.b16 %v11945
    %v12058 = vunpack.c.l.b16 %v11946
    %v12059 = vunpack.c.l.b16 %v11947
    %v12060 = vunpack.c.l.b16 %v11948
    %v12061 = vunpack.c.l.b16 %v11949
    %v12062 = vunpack.c.l.b16 %v11950
    %v12063 = vunpack.c.l.b16 %v11951
    %v12064 = vunpack.c.l.b16 %v11952
    %v12065 = vunpack.c.l.b16 %v11953
    %v12066 = vunpack.c.l.b16 %v11954
    %v12067 = vunpack.c.l.b16 %v11955
    %v12068 = vunpack.c.l.b16 %v11956
    %v12069 = vunpack.c.l.b16 %v11957
    %v12070 = vunpack.c.l.b16 %v11958
    %v12071 = vunpack.c.l.b16 %v11959
    %v12072 = vunpack.c.l.b16 %v11960
    %v12073 = vunpack.c.l.b16 %v11961
    %v12074 = vunpack.c.l.b16 %v11962
    %v12075 = vunpack.c.l.b16 %v11963
    %v12076 = vunpack.c.l.b16 %v11964
    %v12077 = vunpack.c.l.b16 %v11965
    %v12078 = vunpack.c.l.b16 %v11966
    %v12079 = vunpack.c.l.b16 %v11967
    %v12080 = vunpack.c.l.b16 %v11968
    %v12081 = vunpack.c.l.b16 %v11969
    %v12082 = vunpack.c.l.b16 %v11970
    %v12083 = vunpack.c.l.b16 %v11971
    %v12084 = vunpack.c.l.b16 %v11972
    %v12085 = vunpack.c.l.b16 %v11973
    %v12086 = vunpack.c.l.b16 %v11974
    %v12087 = vunpack.c.l.b16 %v11975
    %v12088 = vunpack.c.l.b16 %v11976
    %v12089 = vunpack.c.l.b16 %v11977
    %v12090 = vunpack.c.l.b16 %v11978
    %v12091 = vunpack.c.l.b16 %v11979
    %v12092 = vunpack.c.l.b16 %v11980
    %v12093 = vunpack.c.l.b16 %v11981
    %v12094 = vunpack.c.l.b16 %v11982
    %v12095 = vunpack.c.l.b16 %v11983
    %v12096 = vunpack.c.l.b16 %v11984
    %v12097 = vunpack.c.l.b16 %v11985
    %v12098 = vunpack.c.l.b16 %v11986
    %v12099 = vunpack.c.l.b16 %v11987
    %v12100 = vunpack.c.l.b16 %v11988
    %v12101 = vunpack.c.l.b16 %v11989
    %v12102 = vunpack.c.l.b16 %v11990
    %v12103 = vunpack.c.l.b16 %v11991
    %v12104 = vunpack.c.l.b16 %v11992
    %v12105 = vpack.c.b16 %v12050, %v12049
    %v12106 = vpack.c.b16 %v12052, %v12051
    %v12107 = vpack.c.b16 %v12054, %v12053
    %v12108 = vpack.c.b16 %v12056, %v12055
    %v12109 = vpack.c.b16 %v12058, %v12057
    %v12110 = vpack.c.b16 %v12060, %v12059
    %v12111 = vpack.c.b16 %v12062, %v12061
    %v12112 = vpack.c.b16 %v12064, %v12063
    %v12113 = vpack.c.b16 %v12066, %v12065
    %v12114 = vpack.c.b16 %v12068, %v12067
    %v12115 = vpack.c.b16 %v12070, %v12069
    %v12116 = vpack.c.b16 %v12072, %v12071
    %v12117 = vpack.c.b16 %v12074, %v12073
    %v12118 = vpack.c.b16 %v12076, %v12075
    %v12119 = vpack.c.b16 %v12078, %v12077
    %v12120 = vpack.c.b16 %v12080, %v12079
    %v12121 = vpack.c.b16 %v12082, %v12081
    %v12122 = vpack.c.b16 %v12084, %v12083
    %v12123 = vpack.c.b16 %v12086, %v12085
    %v12124 = vpack.c.b16 %v12088, %v12087
    %v12125 = vpack.c.b16 %v12090, %v12089
    %v12126 = vpack.c.b16 %v12092, %v12091
    %v12127 = vpack.c.b16 %v12094, %v12093
    %v12128 = vpack.c.b16 %v12096, %v12095
    %v12129 = vpack.c.b16 %v12098, %v12097
    %v12130 = vpack.c.b16 %v12100, %v12099
    %v12131 = vpack.c.b16 %v12102, %v12101
    %v12132 = vpack.c.b16 %v12104, %v12103
    %v12162 = vsel %vm3454, %v10694, 0
    %12164 = vmatprep.subr.bf16.mxu0 0
    %12165 = vmatpush1.bf16.msra.mxu0 %v12112
    %12166 = vmatprep.subr.bf16.mxu0 0
    %12167 = vmatpush1.bf16.msra.mxu0 %v12111
    %12168 = vmatprep.subr.bf16.mxu0 0
    %12169 = vmatpush1.bf16.msra.mxu0 %v12110
    %12170 = vmatprep.subr.bf16.mxu0 0
    %12171 = vmatpush1.bf16.msra.mxu0 %v12109
    %12172 = vmatprep.subr.bf16.mxu0 0
    %12173 = vmatpush1.bf16.msra.mxu0 %v12108
    %12174 = vmatprep.subr.bf16.mxu0 0
    %12175 = vmatpush1.bf16.msra.mxu0 %v12107
    %12176 = vmatprep.subr.bf16.mxu0 0
    %12177 = vmatpush1.bf16.msra.mxu0 %v12106
    %12178 = vmatprep.subr.bf16.mxu0 0
    %12179 = vmatpush1.bf16.msra.mxu0 %v12105
    %12180 = vmatprep.subr.bf16.mxu0 0
    %12181 = vmatpush2.bf16.msra.mxu0 %v12120
    %12182 = vmatprep.subr.bf16.mxu0 0
    %12183 = vmatpush2.bf16.msra.mxu0 %v12119
    %12184 = vmatprep.subr.bf16.mxu0 0
    %12185 = vmatpush2.bf16.msra.mxu0 %v12118
    %12186 = vmatprep.subr.bf16.mxu0 0
    %12187 = vmatpush2.bf16.msra.mxu0 %v12117
    %12188 = vmatprep.subr.bf16.mxu0 0
    %12189 = vmatpush2.bf16.msra.mxu0 %v12116
    %12190 = vmatprep.subr.bf16.mxu0 0
    %12191 = vmatpush2.bf16.msra.mxu0 %v12115
    %12192 = vmatprep.subr.bf16.mxu0 0
    %12193 = vmatpush2.bf16.msra.mxu0 %v12114
    %12194 = vmatprep.subr.bf16.mxu0 0
    %12195 = vmatpush2.bf16.msra.mxu0 %v12113
    %12196 = vmatprep.mubr.bf16.mxu0 %v10692
    %12197 = vmatmul.mubr.bf16.gmra.mxu0 %v10691
    %v12198 = vpop.f32.mrf.mxu0
    %v12199 = vadd.f32 0.0, %v12198
    %v12200 = vpop.f32.mrf.mxu0
    %v12201 = vpop.f32.mrf.mxu0
    %v12202 = vpop.f32.mrf.mxu0
    %12203 = vdwg.mxu0
    %12204 = vmatprep.subr.bf16.mxu0 0
    %12205 = vmatpush1.bf16.msra.mxu0 %v12128
    %12206 = vmatprep.subr.bf16.mxu0 0
    %12207 = vmatpush1.bf16.msra.mxu0 %v12127
    %12208 = vmatprep.subr.bf16.mxu0 0
    %12209 = vmatpush1.bf16.msra.mxu0 %v12126
    %12210 = vmatprep.subr.bf16.mxu0 0
    %12211 = vmatpush1.bf16.msra.mxu0 %v12125
    %12212 = vmatprep.subr.bf16.mxu0 0
    %12213 = vmatpush1.bf16.msra.mxu0 %v12124
    %12214 = vmatprep.subr.bf16.mxu0 0
    %12215 = vmatpush1.bf16.msra.mxu0 %v12123
    %12216 = vmatprep.subr.bf16.mxu0 0
    %12217 = vmatpush1.bf16.msra.mxu0 %v12122
    %12218 = vmatprep.subr.bf16.mxu0 0
    %12219 = vmatpush1.bf16.msra.mxu0 %v12121
    %12220 = vmatprep.subr.bf16.mxu0 0
    %12221 = vmatpush2.bf16.msra.mxu0 0
    %12222 = vmatprep.subr.bf16.mxu0 0
    %12223 = vmatpush2.bf16.msra.mxu0 0
    %12224 = vmatprep.subr.bf16.mxu0 0
    %12225 = vmatpush2.bf16.msra.mxu0 0
    %12226 = vmatprep.subr.bf16.mxu0 0
    %12227 = vmatpush2.bf16.msra.mxu0 0
    %12228 = vmatprep.subr.bf16.mxu0 0
    %12229 = vmatpush2.bf16.msra.mxu0 %v12132
    %12230 = vmatprep.subr.bf16.mxu0 0
    %12231 = vmatpush2.bf16.msra.mxu0 %v12131
    %12232 = vmatprep.subr.bf16.mxu0 0
    %12233 = vmatpush2.bf16.msra.mxu0 %v12130
    %12234 = vmatprep.subr.bf16.mxu0 0
    %12235 = vmatpush2.bf16.msra.mxu0 %v12129
    %12236 = vmatprep.mubr.bf16.mxu0 %v12162
    %12237 = vmatmul.mubr.bf16.gmra.mxu0 %v10693
    %v12238 = vpop.f32.mrf.mxu0
    %v12239 = vadd.f32 %v12199, %v12238
    %v12240 = vpop.f32.mrf.mxu0
    %v12241 = vpop.f32.mrf.mxu0
    %v12242 = vpop.f32.mrf.mxu0
    %12243 = vdwg.mxu0
    %v12244 = vadd.f32 %v11935, %v12239
    %s12245 = scalar_lea.vmem [#allocation10], 1120
    %v12246 = vld [vmem:[%s12245] sm:$0xf]
    %v12247 = vld [vmem:[%s12245 + $0x4] sm:$0xf]
    %v12248 = vld [vmem:[%s12245 + $0x8] sm:$0xf]
    %v12249 = vld [vmem:[%s12245 + $0xc] sm:$0xf]
    %v12250 = vld [vmem:[%s12245 + $0x10] sm:$0xf]
    %v12251 = vld [vmem:[%s12245 + $0x14] sm:$0xf]
    %v12252 = vld [vmem:[%s12245 + $0x18] sm:$0xf]
    %v12253 = vld [vmem:[%s12245 + $0x1c] sm:$0xf]
    %v12254 = vld [vmem:[%s12245 + $0x20] sm:$0xf]
    %v12255 = vld [vmem:[%s12245 + $0x24] sm:$0xf]
    %v12256 = vld [vmem:[%s12245 + $0x28] sm:$0xf]
    %v12257 = vld [vmem:[%s12245 + $0x2c] sm:$0xf]
    %v12258 = vld [vmem:[%s12245 + $0x30] sm:$0xf]
    %v12259 = vld [vmem:[%s12245 + $0x34] sm:$0xf]
    %v12260 = vld [vmem:[%s12245 + $0x38] sm:$0xf]
    %v12261 = vld [vmem:[%s12245 + $0x3c] sm:$0xf]
    %v12262 = vld [vmem:[%s12245 + $0x40] sm:$0xf]
    %v12263 = vld [vmem:[%s12245 + $0x44] sm:$0xf]
    %v12264 = vld [vmem:[%s12245 + $0x48] sm:$0xf]
    %v12265 = vld [vmem:[%s12245 + $0x4c] sm:$0xf]
    %v12266 = vld [vmem:[%s12245 + $0x50] sm:$0xf]
    %v12267 = vld [vmem:[%s12245 + $0x54] sm:$0xf]
    %v12268 = vld [vmem:[%s12245 + $0x58] sm:$0xf]
    %v12269 = vld [vmem:[%s12245 + $0x5c] sm:$0xf]
    %v12270 = vld [vmem:[%s12245 + $0x60] sm:$0xf]
    %v12271 = vld [vmem:[%s12245 + $0x64] sm:$0xf]
    %v12272 = vld [vmem:[%s12245 + $0x68] sm:$0xf]
    %v12273 = vld [vmem:[%s12245 + $0x6c] sm:$0xf]
    %v12274 = vld [vmem:[%s12245 + $0x70] sm:$0xf]
    %v12275 = vld [vmem:[%s12245 + $0x74] sm:$0xf]
    %v12276 = vld [vmem:[%s12245 + $0x78] sm:$0xf]
    %v12277 = vld [vmem:[%s12245 + $0x7c] sm:$0xf]
    %v12278 = vld [vmem:[%s12245 + $0x80] sm:$0xf]
    %v12279 = vld [vmem:[%s12245 + $0x84] sm:$0xf]
    %v12280 = vld [vmem:[%s12245 + $0x88] sm:$0xf]
    %v12281 = vld [vmem:[%s12245 + $0x8c] sm:$0xf]
    %v12282 = vld [vmem:[%s12245 + $0x90] sm:$0xf]
    %v12283 = vld [vmem:[%s12245 + $0x94] sm:$0xf]
    %v12284 = vld [vmem:[%s12245 + $0x98] sm:$0xf]
    %v12285 = vld [vmem:[%s12245 + $0x9c] sm:$0xf]
    %v12286 = vld [vmem:[%s12245 + $0xa0] sm:$0xf]
    %v12287 = vld [vmem:[%s12245 + $0xa4] sm:$0xf]
    %v12288 = vld [vmem:[%s12245 + $0xa8] sm:$0xf]
    %v12289 = vld [vmem:[%s12245 + $0xac] sm:$0xf]
    %v12290 = vld [vmem:[%s12245 + $0xb0] sm:$0xf]
    %v12291 = vld [vmem:[%s12245 + $0xb4] sm:$0xf]
    %v12292 = vld [vmem:[%s12245 + $0xb8] sm:$0xf]
    %v12293 = vld [vmem:[%s12245 + $0xbc] sm:$0xf]
    %v12294 = vld [vmem:[%s12245 + $0xc0] sm:$0xf]
    %v12295 = vld [vmem:[%s12245 + $0xc4] sm:$0xf]
    %v12296 = vld [vmem:[%s12245 + $0xc8] sm:$0xf]
    %v12297 = vld [vmem:[%s12245 + $0xcc] sm:$0xf]
    %v12298 = vld [vmem:[%s12245 + $0xd0] sm:$0xf]
    %v12299 = vld [vmem:[%s12245 + $0xd4] sm:$0xf]
    %v12300 = vld [vmem:[%s12245 + $0xd8] sm:$0xf]
    %v12301 = vld [vmem:[%s12245 + $0xdc] sm:$0xf]
    %v12358 = vunpack.c.l.b16 %v12246
    %v12359 = vunpack.c.l.b16 %v12247
    %v12360 = vunpack.c.l.b16 %v12248
    %v12361 = vunpack.c.l.b16 %v12249
    %v12362 = vunpack.c.l.b16 %v12250
    %v12363 = vunpack.c.l.b16 %v12251
    %v12364 = vunpack.c.l.b16 %v12252
    %v12365 = vunpack.c.l.b16 %v12253
    %v12366 = vunpack.c.l.b16 %v12254
    %v12367 = vunpack.c.l.b16 %v12255
    %v12368 = vunpack.c.l.b16 %v12256
    %v12369 = vunpack.c.l.b16 %v12257
    %v12370 = vunpack.c.l.b16 %v12258
    %v12371 = vunpack.c.l.b16 %v12259
    %v12372 = vunpack.c.l.b16 %v12260
    %v12373 = vunpack.c.l.b16 %v12261
    %v12374 = vunpack.c.l.b16 %v12262
    %v12375 = vunpack.c.l.b16 %v12263
    %v12376 = vunpack.c.l.b16 %v12264
    %v12377 = vunpack.c.l.b16 %v12265
    %v12378 = vunpack.c.l.b16 %v12266
    %v12379 = vunpack.c.l.b16 %v12267
    %v12380 = vunpack.c.l.b16 %v12268
    %v12381 = vunpack.c.l.b16 %v12269
    %v12382 = vunpack.c.l.b16 %v12270
    %v12383 = vunpack.c.l.b16 %v12271
    %v12384 = vunpack.c.l.b16 %v12272
    %v12385 = vunpack.c.l.b16 %v12273
    %v12386 = vunpack.c.l.b16 %v12274
    %v12387 = vunpack.c.l.b16 %v12275
    %v12388 = vunpack.c.l.b16 %v12276
    %v12389 = vunpack.c.l.b16 %v12277
    %v12390 = vunpack.c.l.b16 %v12278
    %v12391 = vunpack.c.l.b16 %v12279
    %v12392 = vunpack.c.l.b16 %v12280
    %v12393 = vunpack.c.l.b16 %v12281
    %v12394 = vunpack.c.l.b16 %v12282
    %v12395 = vunpack.c.l.b16 %v12283
    %v12396 = vunpack.c.l.b16 %v12284
    %v12397 = vunpack.c.l.b16 %v12285
    %v12398 = vunpack.c.l.b16 %v12286
    %v12399 = vunpack.c.l.b16 %v12287
    %v12400 = vunpack.c.l.b16 %v12288
    %v12401 = vunpack.c.l.b16 %v12289
    %v12402 = vunpack.c.l.b16 %v12290
    %v12403 = vunpack.c.l.b16 %v12291
    %v12404 = vunpack.c.l.b16 %v12292
    %v12405 = vunpack.c.l.b16 %v12293
    %v12406 = vunpack.c.l.b16 %v12294
    %v12407 = vunpack.c.l.b16 %v12295
    %v12408 = vunpack.c.l.b16 %v12296
    %v12409 = vunpack.c.l.b16 %v12297
    %v12410 = vunpack.c.l.b16 %v12298
    %v12411 = vunpack.c.l.b16 %v12299
    %v12412 = vunpack.c.l.b16 %v12300
    %v12413 = vunpack.c.l.b16 %v12301
    %v12414 = vpack.c.b16 %v12359, %v12358
    %v12415 = vpack.c.b16 %v12361, %v12360
    %v12416 = vpack.c.b16 %v12363, %v12362
    %v12417 = vpack.c.b16 %v12365, %v12364
    %v12418 = vpack.c.b16 %v12367, %v12366
    %v12419 = vpack.c.b16 %v12369, %v12368
    %v12420 = vpack.c.b16 %v12371, %v12370
    %v12421 = vpack.c.b16 %v12373, %v12372
    %v12422 = vpack.c.b16 %v12375, %v12374
    %v12423 = vpack.c.b16 %v12377, %v12376
    %v12424 = vpack.c.b16 %v12379, %v12378
    %v12425 = vpack.c.b16 %v12381, %v12380
    %v12426 = vpack.c.b16 %v12383, %v12382
    %v12427 = vpack.c.b16 %v12385, %v12384
    %v12428 = vpack.c.b16 %v12387, %v12386
    %v12429 = vpack.c.b16 %v12389, %v12388
    %v12430 = vpack.c.b16 %v12391, %v12390
    %v12431 = vpack.c.b16 %v12393, %v12392
    %v12432 = vpack.c.b16 %v12395, %v12394
    %v12433 = vpack.c.b16 %v12397, %v12396
    %v12434 = vpack.c.b16 %v12399, %v12398
    %v12435 = vpack.c.b16 %v12401, %v12400
    %v12436 = vpack.c.b16 %v12403, %v12402
    %v12437 = vpack.c.b16 %v12405, %v12404
    %v12438 = vpack.c.b16 %v12407, %v12406
    %v12439 = vpack.c.b16 %v12409, %v12408
    %v12440 = vpack.c.b16 %v12411, %v12410
    %v12441 = vpack.c.b16 %v12413, %v12412
    %v12471 = vsel %vm3454, %v10698, 0
    %12473 = vmatprep.subr.bf16.mxu0 0
    %12474 = vmatpush1.bf16.msra.mxu0 %v12421
    %12475 = vmatprep.subr.bf16.mxu0 0
    %12476 = vmatpush1.bf16.msra.mxu0 %v12420
    %12477 = vmatprep.subr.bf16.mxu0 0
    %12478 = vmatpush1.bf16.msra.mxu0 %v12419
    %12479 = vmatprep.subr.bf16.mxu0 0
    %12480 = vmatpush1.bf16.msra.mxu0 %v12418
    %12481 = vmatprep.subr.bf16.mxu0 0
    %12482 = vmatpush1.bf16.msra.mxu0 %v12417
    %12483 = vmatprep.subr.bf16.mxu0 0
    %12484 = vmatpush1.bf16.msra.mxu0 %v12416
    %12485 = vmatprep.subr.bf16.mxu0 0
    %12486 = vmatpush1.bf16.msra.mxu0 %v12415
    %12487 = vmatprep.subr.bf16.mxu0 0
    %12488 = vmatpush1.bf16.msra.mxu0 %v12414
    %12489 = vmatprep.subr.bf16.mxu0 0
    %12490 = vmatpush2.bf16.msra.mxu0 %v12429
    %12491 = vmatprep.subr.bf16.mxu0 0
    %12492 = vmatpush2.bf16.msra.mxu0 %v12428
    %12493 = vmatprep.subr.bf16.mxu0 0
    %12494 = vmatpush2.bf16.msra.mxu0 %v12427
    %12495 = vmatprep.subr.bf16.mxu0 0
    %12496 = vmatpush2.bf16.msra.mxu0 %v12426
    %12497 = vmatprep.subr.bf16.mxu0 0
    %12498 = vmatpush2.bf16.msra.mxu0 %v12425
    %12499 = vmatprep.subr.bf16.mxu0 0
    %12500 = vmatpush2.bf16.msra.mxu0 %v12424
    %12501 = vmatprep.subr.bf16.mxu0 0
    %12502 = vmatpush2.bf16.msra.mxu0 %v12423
    %12503 = vmatprep.subr.bf16.mxu0 0
    %12504 = vmatpush2.bf16.msra.mxu0 %v12422
    %12505 = vmatprep.mubr.bf16.mxu0 %v10696
    %12506 = vmatmul.mubr.bf16.gmra.mxu0 %v10695
    %v12507 = vpop.f32.mrf.mxu0
    %v12508 = vadd.f32 0.0, %v12507
    %v12509 = vpop.f32.mrf.mxu0
    %v12510 = vpop.f32.mrf.mxu0
    %v12511 = vpop.f32.mrf.mxu0
    %12512 = vdwg.mxu0
    %12513 = vmatprep.subr.bf16.mxu0 0
    %12514 = vmatpush1.bf16.msra.mxu0 %v12437
    %12515 = vmatprep.subr.bf16.mxu0 0
    %12516 = vmatpush1.bf16.msra.mxu0 %v12436
    %12517 = vmatprep.subr.bf16.mxu0 0
    %12518 = vmatpush1.bf16.msra.mxu0 %v12435
    %12519 = vmatprep.subr.bf16.mxu0 0
    %12520 = vmatpush1.bf16.msra.mxu0 %v12434
    %12521 = vmatprep.subr.bf16.mxu0 0
    %12522 = vmatpush1.bf16.msra.mxu0 %v12433
    %12523 = vmatprep.subr.bf16.mxu0 0
    %12524 = vmatpush1.bf16.msra.mxu0 %v12432
    %12525 = vmatprep.subr.bf16.mxu0 0
    %12526 = vmatpush1.bf16.msra.mxu0 %v12431
    %12527 = vmatprep.subr.bf16.mxu0 0
    %12528 = vmatpush1.bf16.msra.mxu0 %v12430
    %12529 = vmatprep.subr.bf16.mxu0 0
    %12530 = vmatpush2.bf16.msra.mxu0 0
    %12531 = vmatprep.subr.bf16.mxu0 0
    %12532 = vmatpush2.bf16.msra.mxu0 0
    %12533 = vmatprep.subr.bf16.mxu0 0
    %12534 = vmatpush2.bf16.msra.mxu0 0
    %12535 = vmatprep.subr.bf16.mxu0 0
    %12536 = vmatpush2.bf16.msra.mxu0 0
    %12537 = vmatprep.subr.bf16.mxu0 0
    %12538 = vmatpush2.bf16.msra.mxu0 %v12441
    %12539 = vmatprep.subr.bf16.mxu0 0
    %12540 = vmatpush2.bf16.msra.mxu0 %v12440
    %12541 = vmatprep.subr.bf16.mxu0 0
    %12542 = vmatpush2.bf16.msra.mxu0 %v12439
    %12543 = vmatprep.subr.bf16.mxu0 0
    %12544 = vmatpush2.bf16.msra.mxu0 %v12438
    %12545 = vmatprep.mubr.bf16.mxu0 %v12471
    %12546 = vmatmul.mubr.bf16.gmra.mxu0 %v10697
    %v12547 = vpop.f32.mrf.mxu0
    %v12548 = vadd.f32 %v12508, %v12547
    %v12549 = vpop.f32.mrf.mxu0
    %v12550 = vpop.f32.mrf.mxu0
    %v12551 = vpop.f32.mrf.mxu0
    %12552 = vdwg.mxu0
    %v12553 = vadd.f32 %v12244, %v12548
    %s12554 = scalar_lea.vmem [#allocation10], 1344
    %v12555 = vld [vmem:[%s12554] sm:$0xf]
    %v12556 = vld [vmem:[%s12554 + $0x4] sm:$0xf]
    %v12557 = vld [vmem:[%s12554 + $0x8] sm:$0xf]
    %v12558 = vld [vmem:[%s12554 + $0xc] sm:$0xf]
    %v12559 = vld [vmem:[%s12554 + $0x10] sm:$0xf]
    %v12560 = vld [vmem:[%s12554 + $0x14] sm:$0xf]
    %v12561 = vld [vmem:[%s12554 + $0x18] sm:$0xf]
    %v12562 = vld [vmem:[%s12554 + $0x1c] sm:$0xf]
    %v12563 = vld [vmem:[%s12554 + $0x20] sm:$0xf]
    %v12564 = vld [vmem:[%s12554 + $0x24] sm:$0xf]
    %v12565 = vld [vmem:[%s12554 + $0x28] sm:$0xf]
    %v12566 = vld [vmem:[%s12554 + $0x2c] sm:$0xf]
    %v12567 = vld [vmem:[%s12554 + $0x30] sm:$0xf]
    %v12568 = vld [vmem:[%s12554 + $0x34] sm:$0xf]
    %v12569 = vld [vmem:[%s12554 + $0x38] sm:$0xf]
    %v12570 = vld [vmem:[%s12554 + $0x3c] sm:$0xf]
    %v12571 = vld [vmem:[%s12554 + $0x40] sm:$0xf]
    %v12572 = vld [vmem:[%s12554 + $0x44] sm:$0xf]
    %v12573 = vld [vmem:[%s12554 + $0x48] sm:$0xf]
    %v12574 = vld [vmem:[%s12554 + $0x4c] sm:$0xf]
    %v12575 = vld [vmem:[%s12554 + $0x50] sm:$0xf]
    %v12576 = vld [vmem:[%s12554 + $0x54] sm:$0xf]
    %v12577 = vld [vmem:[%s12554 + $0x58] sm:$0xf]
    %v12578 = vld [vmem:[%s12554 + $0x5c] sm:$0xf]
    %v12579 = vld [vmem:[%s12554 + $0x60] sm:$0xf]
    %v12580 = vld [vmem:[%s12554 + $0x64] sm:$0xf]
    %v12581 = vld [vmem:[%s12554 + $0x68] sm:$0xf]
    %v12582 = vld [vmem:[%s12554 + $0x6c] sm:$0xf]
    %v12583 = vld [vmem:[%s12554 + $0x70] sm:$0xf]
    %v12584 = vld [vmem:[%s12554 + $0x74] sm:$0xf]
    %v12585 = vld [vmem:[%s12554 + $0x78] sm:$0xf]
    %v12586 = vld [vmem:[%s12554 + $0x7c] sm:$0xf]
    %v12587 = vld [vmem:[%s12554 + $0x80] sm:$0xf]
    %v12588 = vld [vmem:[%s12554 + $0x84] sm:$0xf]
    %v12589 = vld [vmem:[%s12554 + $0x88] sm:$0xf]
    %v12590 = vld [vmem:[%s12554 + $0x8c] sm:$0xf]
    %v12591 = vld [vmem:[%s12554 + $0x90] sm:$0xf]
    %v12592 = vld [vmem:[%s12554 + $0x94] sm:$0xf]
    %v12593 = vld [vmem:[%s12554 + $0x98] sm:$0xf]
    %v12594 = vld [vmem:[%s12554 + $0x9c] sm:$0xf]
    %v12595 = vld [vmem:[%s12554 + $0xa0] sm:$0xf]
    %v12596 = vld [vmem:[%s12554 + $0xa4] sm:$0xf]
    %v12597 = vld [vmem:[%s12554 + $0xa8] sm:$0xf]
    %v12598 = vld [vmem:[%s12554 + $0xac] sm:$0xf]
    %v12599 = vld [vmem:[%s12554 + $0xb0] sm:$0xf]
    %v12600 = vld [vmem:[%s12554 + $0xb4] sm:$0xf]
    %v12601 = vld [vmem:[%s12554 + $0xb8] sm:$0xf]
    %v12602 = vld [vmem:[%s12554 + $0xbc] sm:$0xf]
    %v12603 = vld [vmem:[%s12554 + $0xc0] sm:$0xf]
    %v12604 = vld [vmem:[%s12554 + $0xc4] sm:$0xf]
    %v12605 = vld [vmem:[%s12554 + $0xc8] sm:$0xf]
    %v12606 = vld [vmem:[%s12554 + $0xcc] sm:$0xf]
    %v12607 = vld [vmem:[%s12554 + $0xd0] sm:$0xf]
    %v12608 = vld [vmem:[%s12554 + $0xd4] sm:$0xf]
    %v12609 = vld [vmem:[%s12554 + $0xd8] sm:$0xf]
    %v12610 = vld [vmem:[%s12554 + $0xdc] sm:$0xf]
    %v12667 = vunpack.c.l.b16 %v12555
    %v12668 = vunpack.c.l.b16 %v12556
    %v12669 = vunpack.c.l.b16 %v12557
    %v12670 = vunpack.c.l.b16 %v12558
    %v12671 = vunpack.c.l.b16 %v12559
    %v12672 = vunpack.c.l.b16 %v12560
    %v12673 = vunpack.c.l.b16 %v12561
    %v12674 = vunpack.c.l.b16 %v12562
    %v12675 = vunpack.c.l.b16 %v12563
    %v12676 = vunpack.c.l.b16 %v12564
    %v12677 = vunpack.c.l.b16 %v12565
    %v12678 = vunpack.c.l.b16 %v12566
    %v12679 = vunpack.c.l.b16 %v12567
    %v12680 = vunpack.c.l.b16 %v12568
    %v12681 = vunpack.c.l.b16 %v12569
    %v12682 = vunpack.c.l.b16 %v12570
    %v12683 = vunpack.c.l.b16 %v12571
    %v12684 = vunpack.c.l.b16 %v12572
    %v12685 = vunpack.c.l.b16 %v12573
    %v12686 = vunpack.c.l.b16 %v12574
    %v12687 = vunpack.c.l.b16 %v12575
    %v12688 = vunpack.c.l.b16 %v12576
    %v12689 = vunpack.c.l.b16 %v12577
    %v12690 = vunpack.c.l.b16 %v12578
    %v12691 = vunpack.c.l.b16 %v12579
    %v12692 = vunpack.c.l.b16 %v12580
    %v12693 = vunpack.c.l.b16 %v12581
    %v12694 = vunpack.c.l.b16 %v12582
    %v12695 = vunpack.c.l.b16 %v12583
    %v12696 = vunpack.c.l.b16 %v12584
    %v12697 = vunpack.c.l.b16 %v12585
    %v12698 = vunpack.c.l.b16 %v12586
    %v12699 = vunpack.c.l.b16 %v12587
    %v12700 = vunpack.c.l.b16 %v12588
    %v12701 = vunpack.c.l.b16 %v12589
    %v12702 = vunpack.c.l.b16 %v12590
    %v12703 = vunpack.c.l.b16 %v12591
    %v12704 = vunpack.c.l.b16 %v12592
    %v12705 = vunpack.c.l.b16 %v12593
    %v12706 = vunpack.c.l.b16 %v12594
    %v12707 = vunpack.c.l.b16 %v12595
    %v12708 = vunpack.c.l.b16 %v12596
    %v12709 = vunpack.c.l.b16 %v12597
    %v12710 = vunpack.c.l.b16 %v12598
    %v12711 = vunpack.c.l.b16 %v12599
    %v12712 = vunpack.c.l.b16 %v12600
    %v12713 = vunpack.c.l.b16 %v12601
    %v12714 = vunpack.c.l.b16 %v12602
    %v12715 = vunpack.c.l.b16 %v12603
    %v12716 = vunpack.c.l.b16 %v12604
    %v12717 = vunpack.c.l.b16 %v12605
    %v12718 = vunpack.c.l.b16 %v12606
    %v12719 = vunpack.c.l.b16 %v12607
    %v12720 = vunpack.c.l.b16 %v12608
    %v12721 = vunpack.c.l.b16 %v12609
    %v12722 = vunpack.c.l.b16 %v12610
    %v12723 = vpack.c.b16 %v12668, %v12667
    %v12724 = vpack.c.b16 %v12670, %v12669
    %v12725 = vpack.c.b16 %v12672, %v12671
    %v12726 = vpack.c.b16 %v12674, %v12673
    %v12727 = vpack.c.b16 %v12676, %v12675
    %v12728 = vpack.c.b16 %v12678, %v12677
    %v12729 = vpack.c.b16 %v12680, %v12679
    %v12730 = vpack.c.b16 %v12682, %v12681
    %v12731 = vpack.c.b16 %v12684, %v12683
    %v12732 = vpack.c.b16 %v12686, %v12685
    %v12733 = vpack.c.b16 %v12688, %v12687
    %v12734 = vpack.c.b16 %v12690, %v12689
    %v12735 = vpack.c.b16 %v12692, %v12691
    %v12736 = vpack.c.b16 %v12694, %v12693
    %v12737 = vpack.c.b16 %v12696, %v12695
    %v12738 = vpack.c.b16 %v12698, %v12697
    %v12739 = vpack.c.b16 %v12700, %v12699
    %v12740 = vpack.c.b16 %v12702, %v12701
    %v12741 = vpack.c.b16 %v12704, %v12703
    %v12742 = vpack.c.b16 %v12706, %v12705
    %v12743 = vpack.c.b16 %v12708, %v12707
    %v12744 = vpack.c.b16 %v12710, %v12709
    %v12745 = vpack.c.b16 %v12712, %v12711
    %v12746 = vpack.c.b16 %v12714, %v12713
    %v12747 = vpack.c.b16 %v12716, %v12715
    %v12748 = vpack.c.b16 %v12718, %v12717
    %v12749 = vpack.c.b16 %v12720, %v12719
    %v12750 = vpack.c.b16 %v12722, %v12721
    %v12780 = vsel %vm3454, %v10702, 0
    %12782 = vmatprep.subr.bf16.mxu0 0
    %12783 = vmatpush1.bf16.msra.mxu0 %v12730
    %12784 = vmatprep.subr.bf16.mxu0 0
    %12785 = vmatpush1.bf16.msra.mxu0 %v12729
    %12786 = vmatprep.subr.bf16.mxu0 0
    %12787 = vmatpush1.bf16.msra.mxu0 %v12728
    %12788 = vmatprep.subr.bf16.mxu0 0
    %12789 = vmatpush1.bf16.msra.mxu0 %v12727
    %12790 = vmatprep.subr.bf16.mxu0 0
    %12791 = vmatpush1.bf16.msra.mxu0 %v12726
    %12792 = vmatprep.subr.bf16.mxu0 0
    %12793 = vmatpush1.bf16.msra.mxu0 %v12725
    %12794 = vmatprep.subr.bf16.mxu0 0
    %12795 = vmatpush1.bf16.msra.mxu0 %v12724
    %12796 = vmatprep.subr.bf16.mxu0 0
    %12797 = vmatpush1.bf16.msra.mxu0 %v12723
    %12798 = vmatprep.subr.bf16.mxu0 0
    %12799 = vmatpush2.bf16.msra.mxu0 %v12738
    %12800 = vmatprep.subr.bf16.mxu0 0
    %12801 = vmatpush2.bf16.msra.mxu0 %v12737
    %12802 = vmatprep.subr.bf16.mxu0 0
    %12803 = vmatpush2.bf16.msra.mxu0 %v12736
    %12804 = vmatprep.subr.bf16.mxu0 0
    %12805 = vmatpush2.bf16.msra.mxu0 %v12735
    %12806 = vmatprep.subr.bf16.mxu0 0
    %12807 = vmatpush2.bf16.msra.mxu0 %v12734
    %12808 = vmatprep.subr.bf16.mxu0 0
    %12809 = vmatpush2.bf16.msra.mxu0 %v12733
    %12810 = vmatprep.subr.bf16.mxu0 0
    %12811 = vmatpush2.bf16.msra.mxu0 %v12732
    %12812 = vmatprep.subr.bf16.mxu0 0
    %12813 = vmatpush2.bf16.msra.mxu0 %v12731
    %12814 = vmatprep.mubr.bf16.mxu0 %v10700
    %12815 = vmatmul.mubr.bf16.gmra.mxu0 %v10699
    %v12816 = vpop.f32.mrf.mxu0
    %v12817 = vadd.f32 0.0, %v12816
    %v12818 = vpop.f32.mrf.mxu0
    %v12819 = vpop.f32.mrf.mxu0
    %v12820 = vpop.f32.mrf.mxu0
    %12821 = vdwg.mxu0
    %12822 = vmatprep.subr.bf16.mxu0 0
    %12823 = vmatpush1.bf16.msra.mxu0 %v12746
    %12824 = vmatprep.subr.bf16.mxu0 0
    %12825 = vmatpush1.bf16.msra.mxu0 %v12745
    %12826 = vmatprep.subr.bf16.mxu0 0
    %12827 = vmatpush1.bf16.msra.mxu0 %v12744
    %12828 = vmatprep.subr.bf16.mxu0 0
    %12829 = vmatpush1.bf16.msra.mxu0 %v12743
    %12830 = vmatprep.subr.bf16.mxu0 0
    %12831 = vmatpush1.bf16.msra.mxu0 %v12742
    %12832 = vmatprep.subr.bf16.mxu0 0
    %12833 = vmatpush1.bf16.msra.mxu0 %v12741
    %12834 = vmatprep.subr.bf16.mxu0 0
    %12835 = vmatpush1.bf16.msra.mxu0 %v12740
    %12836 = vmatprep.subr.bf16.mxu0 0
    %12837 = vmatpush1.bf16.msra.mxu0 %v12739
    %12838 = vmatprep.subr.bf16.mxu0 0
    %12839 = vmatpush2.bf16.msra.mxu0 0
    %12840 = vmatprep.subr.bf16.mxu0 0
    %12841 = vmatpush2.bf16.msra.mxu0 0
    %12842 = vmatprep.subr.bf16.mxu0 0
    %12843 = vmatpush2.bf16.msra.mxu0 0
    %12844 = vmatprep.subr.bf16.mxu0 0
    %12845 = vmatpush2.bf16.msra.mxu0 0
    %12846 = vmatprep.subr.bf16.mxu0 0
    %12847 = vmatpush2.bf16.msra.mxu0 %v12750
    %12848 = vmatprep.subr.bf16.mxu0 0
    %12849 = vmatpush2.bf16.msra.mxu0 %v12749
    %12850 = vmatprep.subr.bf16.mxu0 0
    %12851 = vmatpush2.bf16.msra.mxu0 %v12748
    %12852 = vmatprep.subr.bf16.mxu0 0
    %12853 = vmatpush2.bf16.msra.mxu0 %v12747
    %12854 = vmatprep.mubr.bf16.mxu0 %v12780
    %12855 = vmatmul.mubr.bf16.gmra.mxu0 %v10701
    %v12856 = vpop.f32.mrf.mxu0
    %v12857 = vadd.f32 %v12817, %v12856
    %v12858 = vpop.f32.mrf.mxu0
    %v12859 = vpop.f32.mrf.mxu0
    %v12860 = vpop.f32.mrf.mxu0
    %12861 = vdwg.mxu0
    %v12862 = vadd.f32 %v12553, %v12857
    %v12863 = vld [vmem:[#allocation11] sm:$0x1]
    %v12865 = vlaneseq
    %v12866 = vshrl.u32 %v12865, 7
    %v12867 = vsub.s32 0, %v12866
    %v12868 = vrot.slane %v12863, %v12867
    %v12870 = vadd.f32 %v12862, %v12868
    %v12871 = vmax.f32 %v12870, 0.0
    %v12872 = vpack.c.bf16 %v12871, %v12871
    %v12873 = vld [vmem:[%s7] sm:$0xf]
    %v12874 = vld [vmem:[%s7 + $0x4] sm:$0xf]
    %v12875 = vld [vmem:[%s7 + $0x8] sm:$0xf]
    %v12876 = vld [vmem:[%s7 + $0xc] sm:$0xf]
    %v12877 = vld [vmem:[%s7 + $0x10] sm:$0xf]
    %v12878 = vld [vmem:[%s7 + $0x14] sm:$0xf]
    %v12879 = vld [vmem:[%s7 + $0x18] sm:$0xf]
    %v12880 = vld [vmem:[%s7 + $0x1c] sm:$0xf]
    %v12881 = vld [vmem:[%s7 + $0x20] sm:$0xf]
    %v12882 = vld [vmem:[%s7 + $0x24] sm:$0xf]
    %v12883 = vld [vmem:[%s7 + $0x28] sm:$0xf]
    %v12884 = vld [vmem:[%s7 + $0x2c] sm:$0xf]
    %v12885 = vld [vmem:[%s7 + $0x30] sm:$0xf]
    %v12886 = vld [vmem:[%s7 + $0x34] sm:$0xf]
    %v12887 = vld [vmem:[%s7 + $0x38] sm:$0xf]
    %v12888 = vld [vmem:[%s7 + $0x3c] sm:$0xf]
    %v12889 = vld [vmem:[#allocation13] sm:$0x1]
    %v12891 = vlaneseq
    %v12892 = vshrl.u32 %v12891, 7
    %v12893 = vsub.s32 0, %v12892
    %v12894 = vrot.slane %v12889, %v12893
    %v12912 = vunpack.c.l.b16 %v12873
    %v12913 = vunpack.c.l.b16 %v12874
    %v12914 = vunpack.c.l.b16 %v12875
    %v12915 = vunpack.c.l.b16 %v12876
    %v12916 = vunpack.c.l.b16 %v12877
    %v12917 = vunpack.c.l.b16 %v12878
    %v12918 = vunpack.c.l.b16 %v12879
    %v12919 = vunpack.c.l.b16 %v12880
    %v12920 = vunpack.c.l.b16 %v12881
    %v12921 = vunpack.c.l.b16 %v12882
    %v12922 = vunpack.c.l.b16 %v12883
    %v12923 = vunpack.c.l.b16 %v12884
    %v12924 = vunpack.c.l.b16 %v12885
    %v12925 = vunpack.c.l.b16 %v12886
    %v12926 = vunpack.c.l.b16 %v12887
    %v12927 = vunpack.c.l.b16 %v12888
    %v12928 = vpack.c.b16 %v12913, %v12912
    %v12929 = vpack.c.b16 %v12915, %v12914
    %v12930 = vpack.c.b16 %v12917, %v12916
    %v12931 = vpack.c.b16 %v12919, %v12918
    %v12932 = vpack.c.b16 %v12921, %v12920
    %v12933 = vpack.c.b16 %v12923, %v12922
    %v12934 = vpack.c.b16 %v12925, %v12924
    %v12935 = vpack.c.b16 %v12927, %v12926
    %12944 = vmatprep.subr.bf16.mxu0 0
    %12945 = vmatpush1.bf16.msra.mxu0 %v12935
    %12946 = vmatprep.subr.bf16.mxu0 0
    %12947 = vmatpush1.bf16.msra.mxu0 %v12934
    %12948 = vmatprep.subr.bf16.mxu0 0
    %12949 = vmatpush1.bf16.msra.mxu0 %v12933
    %12950 = vmatprep.subr.bf16.mxu0 0
    %12951 = vmatpush1.bf16.msra.mxu0 %v12932
    %12952 = vmatprep.subr.bf16.mxu0 0
    %12953 = vmatpush1.bf16.msra.mxu0 %v12931
    %12954 = vmatprep.subr.bf16.mxu0 0
    %12955 = vmatpush1.bf16.msra.mxu0 %v12930
    %12956 = vmatprep.subr.bf16.mxu0 0
    %12957 = vmatpush1.bf16.msra.mxu0 %v12929
    %12958 = vmatprep.subr.bf16.mxu0 0
    %12959 = vmatpush1.bf16.msra.mxu0 %v12928
    %12960 = vmatprep.subr.bf16.mxu0 0
    %12961 = vmatpush2.bf16.msra.mxu0 0
    %12962 = vmatprep.subr.bf16.mxu0 0
    %12963 = vmatpush2.bf16.msra.mxu0 0
    %12964 = vmatprep.subr.bf16.mxu0 0
    %12965 = vmatpush2.bf16.msra.mxu0 0
    %12966 = vmatprep.subr.bf16.mxu0 0
    %12967 = vmatpush2.bf16.msra.mxu0 0
    %12968 = vmatprep.subr.bf16.mxu0 0
    %12969 = vmatpush2.bf16.msra.mxu0 0
    %12970 = vmatprep.subr.bf16.mxu0 0
    %12971 = vmatpush2.bf16.msra.mxu0 0
    %12972 = vmatprep.subr.bf16.mxu0 0
    %12973 = vmatpush2.bf16.msra.mxu0 0
    %12974 = vmatprep.subr.bf16.mxu0 0
    %12975 = vmatpush2.bf16.msra.mxu0 0
    %12976 = vmatprep.mubr.bf16.mxu0 0
    %12977 = vmatmul.mubr.bf16.gmra.mxu0 %v12872
    %v12978 = vpop.f32.mrf.mxu0
    %v12979 = vadd.f32 %v12894, %v12978
    %v12980 = vpop.f32.mrf.mxu0
    %v12981 = vpop.f32.mrf.mxu0
    %v12982 = vpop.f32.mrf.mxu0
    %12983 = vdwg.mxu0
    %vm12984 = vcmask 80896
    %12985 = vst.msk [vmem:[%s9] sm:$0xff] %vm12984, %v12979
    // Predicated region
    $region66: #{cnn_forward.1} parent=1 // pred_check
      _
    $region67: #{cnn_forward.1} parent=1 // pred_check_branch
      %12987 = sbr.rel (0) target = $region69
    $region68: #{cnn_forward.1} parent=1 // pred_region
      _
    $region69: #{cnn_forward.1} parent=1 // pred_fallthru
      _
    // Predicated region
    $region70: #{cnn_forward.1} parent=1 // pred_check
      _
    $region71: #{cnn_forward.1} parent=1 // pred_check_branch
      %12989 = sbr.rel (0) target = $region73
    $region72: #{cnn_forward.1} parent=1 // pred_region
      _
    $region73: #{cnn_forward.1} parent=1 // pred_fallthru
      _
    %12990 = vsyncpa [#allocation4], 1
    %12991 = vsyncpa [#allocation6], 1
    %12992 = vsyncpa [#allocation9], 1
    %12993 = vsyncpa [#allocation12], 1

</llo_original>
